<compile_context>
chip_gen: v7x
topology: tpu7x:2x2x1
jax: 0.10.0
libtpu: 0.0.40
codegen_flags: <defaults>
</compile_context>

<pallas_src>
import functools

import jax
import jax.numpy as jnp
import numpy as np
from jax.experimental import pallas as pl
from jax.experimental.pallas import tpu as pltpu

EPS = 1e-5
LANE = 128


def _round_up(x, m):
    return (x + m - 1) // m * m


# ----------------------------- in-kernel helpers -----------------------------

def _halo_pad_store(pad_ref, val):
    """Store `val` into the interior of `pad_ref`, zeroing ONLY the 1-wide halo.

    (Previous version zeroed the whole buffer and then overwrote the interior,
    i.e. ~2x the store traffic on the pad buffers.)
    """
    n, hp, wp, c = pad_ref.shape
    h, w = hp - 2, wp - 2
    zrow = jnp.zeros((n, 1, wp, c), pad_ref.dtype)
    pad_ref[:, 0:1, :, :] = zrow                     # top halo row (full width)
    pad_ref[:, h + 1:h + 2, :, :] = zrow             # bottom halo row
    zcol = jnp.zeros((n, h, 1, c), pad_ref.dtype)
    pad_ref[:, 1:h + 1, 0:1, :] = zcol               # left halo column
    pad_ref[:, 1:h + 1, w + 1:w + 2, :] = zcol       # right halo column
    pad_ref[:, 1:h + 1, 1:w + 1, :] = val            # interior


def _im2col_3x3(src_ref, n, ho, wo, stride):
    """im2col for a 3x3 / padding=1 conv.

    src_ref: (n, hp, wp, c) halo-padded f32 VMEM ref with c a multiple of 128.
    Returns the (n*ho*wo, 9*c) patch matrix as bf16 (MXU input dtype); the
    concatenation is lane-aligned because c % 128 == 0.
    TODO(synk): the kw in {1,2} taps are sublane-misaligned slices; replacing them
    with aligned loads + pltpu.roll (XLU slot) is a further optimization.
    """
    c = src_ref.shape[-1]
    taps = []
    for kh in range(3):
        for kw in range(3):
            if stride == 1:
                win = src_ref[:, kh:kh + ho, kw:kw + wo, :]
            else:
                # TODO(synk): stride > 1 path (strided ref read) is not exercised here.
                win = src_ref[:, kh:kh + (ho - 1) * stride + 1:stride,
                              kw:kw + (wo - 1) * stride + 1:stride, :]
            taps.append(win.astype(jnp.bfloat16).reshape(n * ho * wo, c))
    return jnp.concatenate(taps, axis=-1)


def _conv_bn(patch, w_ref, g_ref, b_ref):
    """conv-as-matmul (bf16 inputs, f32 accumulation) + training-mode BatchNorm,
    folded into a per-channel scale/shift so only 2 full-matrix VPU passes touch z.

    Centered two-pass variance (matches nn.BatchNorm2d, avoids cancellation).
    Padded channels have zero weights and gamma=beta=0, so they stay exactly 0.
    """
    z = jnp.dot(patch, w_ref[...], preferred_element_type=jnp.float32)
    inv_m = 1.0 / z.shape[0]
    mean = jnp.sum(z, axis=0, keepdims=True) * inv_m
    var = jnp.sum(jnp.square(z - mean), axis=0, keepdims=True) * inv_m
    scale = g_ref[...] * jax.lax.rsqrt(var + EPS)
    shift = b_ref[...] - mean * scale
    return z * scale + shift


# --------------------------------- kernels -----------------------------------

def _block_down_kernel(x_ref, w1d_ref, g1d_ref, b1d_ref, w2_ref, g2_ref, b2_ref,
                       out_ref, xpad_ref, y1pad_ref,
                       *, n, h, w, ho, wo, cp, stride):
    """Fused Block, downsample branch: relu(bn2(conv2(relu(bn1(conv1 x)))) + bnd(convd x))."""
    # Spatial halo padding of x in VMEM (halo strips only, no full-buffer zero).
    _halo_pad_store(xpad_ref, x_ref[...])

    # conv1 and the downsample conv share patch1 and run as ONE K=9*Cin_p matmul
    # with a 2*cp-wide RHS (w1 | wd); BN stats are per-column so one fused pass works.
    patch1 = _im2col_3x3(xpad_ref, n, ho, wo, stride)
    z = _conv_bn(patch1, w1d_ref, g1d_ref, b1d_ref)      # (M, 2*cp)
    y1 = jnp.maximum(z[:, :cp], 0.0)                      # relu(bn1(conv1 x))
    res = z[:, cp:]                                       # bnd(convd x)

    # Stage fusion: y1 never leaves VMEM; write it halo-padded for conv2.
    _halo_pad_store(y1pad_ref, y1.reshape(n, ho, wo, cp))

    # conv2 -> bn2.
    patch2 = _im2col_3x3(y1pad_ref, n, ho, wo, 1)
    y2 = _conv_bn(patch2, w2_ref, g2_ref, b2_ref)

    out_ref[...] = jnp.maximum(y2 + res, 0.0).reshape(n, ho, wo, cp)


def _block_id_kernel(x_ref, w1_ref, g1_ref, b1_ref, w2_ref, g2_ref, b2_ref,
                     out_ref, xpad_ref, y1pad_ref,
                     *, n, h, w, ho, wo, cp, stride):
    """Fused Block, identity-residual branch (stride == 1, cin == cout)."""
    _halo_pad_store(xpad_ref, x_ref[...])

    patch1 = _im2col_3x3(xpad_ref, n, ho, wo, stride)
    y1 = jnp.maximum(_conv_bn(patch1, w1_ref, g1_ref, b1_ref), 0.0)

    _halo_pad_store(y1pad_ref, y1.reshape(n, ho, wo, cp))

    patch2 = _im2col_3x3(y1pad_ref, n, ho, wo, 1)
    y2 = _conv_bn(patch2, w2_ref, g2_ref, b2_ref)

    # Identity residual straight from the (exact f32) input ref -- no pad re-read.
    res = x_ref[...].reshape(n * ho * wo, cp)

    out_ref[...] = jnp.maximum(y2 + res, 0.0).reshape(n, ho, wo, cp)


# --------------------------------- wrapper -----------------------------------

def _vmem_specs(k):
    return [pl.BlockSpec(memory_space=pltpu.MemorySpace.VMEM) for _ in range(k)]


def block_forward(x_nhwc, params, stride=1):
    """Block forward. x_nhwc: (N, H, W, Cin) f32 -> (N, Ho, Wo, Cout) f32."""
    n, h, w, cin = x_nhwc.shape
    cout = params["w1"].shape[-1]
    ho = (h + 2 - 3) // stride + 1
    wo = (w + 2 - 3) // stride + 1
    has_down = (stride != 1) or (cin != cout)
    cin_p = _round_up(cin, LANE)   # lane-dense input channels
    cp = _round_up(cout, LANE)     # lane-dense output channels

    # One-time, weight-sized prep: flatten 3x3 taps into the im2col weight matrix,
    # pad channels to the 128-lane boundary, cast conv weights to bf16 for the MXU.
    # gamma/beta are padded with zeros so padded channels stay exactly 0 end-to-end.
    def prep_w(wk, ci_p):
        _, _, ci, co = wk.shape
        full = jnp.zeros((3, 3, ci_p, cp), jnp.float32).at[:, :, :ci, :co].set(wk)
        return full.reshape(9 * ci_p, cp).astype(jnp.bfloat16)

    def prep_gb(v):
        return jnp.zeros((1, cp), jnp.float32).at[0, :v.shape[0]].set(v)

    w1 = prep_w(params["w1"], cin_p)
    g1, b1 = prep_gb(params["g1"]), prep_gb(params["b1"])
    w2 = prep_w(params["w2"], cp)
    g2, b2 = prep_gb(params["g2"]), prep_gb(params["b2"])

    # Channel pad of x to the lane boundary (no-op when cin % 128 == 0); the spatial
    # halo padding is done inside the kernel, in VMEM.
    if cin_p != cin:
        x_p = jnp.pad(x_nhwc, ((0, 0), (0, 0), (0, 0), (0, cin_p - cin)))
    else:
        x_p = x_nhwc

    scratch = [pltpu.VMEM((n, h + 2, w + 2, cin_p), jnp.float32),   # halo-padded x
               pltpu.VMEM((n, ho + 2, wo + 2, cp), jnp.float32)]    # halo-padded y1
    out_shape = jax.ShapeDtypeStruct((n, ho, wo, cp), jnp.float32)  # lane-dense store
    statics = dict(n=n, h=h, w=w, ho=ho, wo=wo, cp=cp, stride=stride)

    if has_down:
        # Fuse conv1 and the downsample conv into one 2*cp-wide RHS.
        wd = prep_w(params["wd"], cin_p)
        gd, bd = prep_gb(params["gd"]), prep_gb(params["bd"])
        w1d = jnp.concatenate([w1, wd], axis=-1)        # (9*cin_p, 2*cp) bf16
        g1d = jnp.concatenate([g1, gd], axis=-1)        # (1, 2*cp)
        b1d = jnp.concatenate([b1, bd], axis=-1)
        out_p = pl.pallas_call(
            functools.partial(_block_down_kernel, **statics),
            out_shape=out_shape,
            in_specs=_vmem_specs(7),
            out_specs=pl.BlockSpec(memory_space=pltpu.MemorySpace.VMEM),
            scratch_shapes=scratch,
        )(x_p, w1d, g1d, b1d, w2, g2, b2)
    else:
        out_p = pl.pallas_call(
            functools.partial(_block_id_kernel, **statics),
            out_shape=out_shape,
            in_specs=_vmem_specs(7),
            out_specs=pl.BlockSpec(memory_space=pltpu.MemorySpace.VMEM),
            scratch_shapes=scratch,
        )(x_p, w1, g1, b1, w2, g2, b2)

    # Skip the trailing channel slice when the pad is a no-op (cout % 128 == 0).
    return out_p if cp == cout else out_p[..., :cout]


# ------------------------------ pure-JAX reference ---------------------------

def _conv3x3_ref(x, wk, stride, matmul_dtype):
    return jax.lax.conv_general_dilated(
        x.astype(matmul_dtype), wk.astype(matmul_dtype),
        window_strides=(stride, stride), padding=((1, 1), (1, 1)),
        dimension_numbers=("NHWC", "HWIO", "NHWC"),
        preferred_element_type=jnp.float32)


def _bn_ref(x, gamma, beta):
    mean = jnp.mean(x, axis=(0, 1, 2), keepdims=True)
    var = jnp.mean(jnp.square(x - mean), axis=(0, 1, 2), keepdims=True)
    return (x - mean) * jax.lax.rsqrt(var + EPS) * gamma + beta


def block_forward_ref(x, params, stride=1, matmul_dtype=jnp.float32):
    """Reference Block forward; matmul_dtype selects the conv input precision."""
    cin = x.shape[-1]
    cout = params["w1"].shape[-1]
    out = jnp.maximum(_bn_ref(_conv3x3_ref(x, params["w1"], stride, matmul_dtype),
                              params["g1"], params["b1"]), 0.0)
    out = _bn_ref(_conv3x3_ref(out, params["w2"], 1, matmul_dtype),
                  params["g2"], params["b2"])
    if stride != 1 or cin != cout:
        temp = _bn_ref(_conv3x3_ref(x, params["wd"], stride, matmul_dtype),
                       params["gd"], params["bd"])
    else:
        temp = x
    return jnp.maximum(out + temp, 0.0)


# ------------------------------- parameter init -------------------------------

def init_params(key, cin, cout, stride):
    ks = jax.random.split(key, 8)
    p = {
        "w1": 0.1 * jax.random.normal(ks[0], (3, 3, cin, cout), jnp.float32),
        "g1": 1.0 + 0.1 * jax.random.normal(ks[1], (cout,), jnp.float32),
        "b1": 0.1 * jax.random.normal(ks[2], (cout,), jnp.float32),
        "w2": 0.1 * jax.random.normal(ks[3], (3, 3, cout, cout), jnp.float32),
        "g2": 1.0 + 0.1 * jax.random.normal(ks[4], (cout,), jnp.float32),
        "b2": 0.1 * jax.random.normal(ks[5], (cout,), jnp.float32),
    }
    if stride != 1 or cin != cout:
        p["wd"] = 0.1 * jax.random.normal(ks[6], (3, 3, cin, cout), jnp.float32)
        p["gd"] = 1.0 + 0.05 * jax.random.normal(ks[7], (cout,), jnp.float32)
        p["bd"] = jnp.zeros((cout,), jnp.float32)
    return p


# ----------------------------------- main -------------------------------------

if __name__ == "__main__":
    key = jax.random.PRNGKey(0)
    kx, kp1, kp2 = jax.random.split(key, 3)

    # PyTorch-style NCHW input at small shapes.
    n, cin, h, w = 2, 4, 16, 16
    x_nchw = jax.random.normal(kx, (n, cin, h, w), jnp.float32)
    x_nhwc = jnp.transpose(x_nchw, (0, 2, 3, 1))

    # Case 1: inch != outch -> downsample (CONV) residual branch.
    cout = 8
    params_d = init_params(kp1, cin, cout, stride=1)
    out_d = jax.block_until_ready(block_forward(x_nhwc, params_d, stride=1))
    ref_d_bf16 = block_forward_ref(x_nhwc, params_d, 1, matmul_dtype=jnp.bfloat16)
    ref_d_f32 = block_forward_ref(x_nhwc, params_d, 1, matmul_dtype=jnp.float32)

    # Case 2: inch == outch, stride == 1 -> identity residual branch.
    params_i = init_params(kp2, cin, cin, stride=1)
    out_i = jax.block_until_ready(block_forward(x_nhwc, params_i, stride=1))
    ref_i_bf16 = block_forward_ref(x_nhwc, params_i, 1, matmul_dtype=jnp.bfloat16)
    ref_i_f32 = block_forward_ref(x_nhwc, params_i, 1, matmul_dtype=jnp.float32)

    assert out_d.shape == (n, h, w, cout), out_d.shape
    assert out_i.shape == (n, h, w, cin), out_i.shape

    # Tight check vs a reference using the same bf16 MXU input precision / f32 accumulate.
    np.testing.assert_allclose(np.asarray(out_d), np.asarray(ref_d_bf16), atol=5e-3, rtol=5e-3)
    np.testing.assert_allclose(np.asarray(out_i), np.asarray(ref_i_bf16), atol=5e-3, rtol=5e-3)
    # Loose sanity bound vs the exact-f32 module math (bounds the bf16 matmul drift).
    np.testing.assert_allclose(np.asarray(out_d), np.asarray(ref_d_f32), atol=1e-1, rtol=1e-1)
    np.testing.assert_allclose(np.asarray(out_i), np.asarray(ref_i_f32), atol=1e-1, rtol=1e-1)

    err_d = float(jnp.max(jnp.abs(out_d - ref_d_f32)))
    err_i = float(jnp.max(jnp.abs(out_i - ref_i_f32)))
    print(f"max|err| vs f32 reference: downsample-branch = {err_d:.3e}, "
          f"identity-branch = {err_i:.3e}")
    print("KERNEL_OK")
</pallas_src>

<mosaic_0001>
module attributes {stable_mosaic.version = 11 : i64} {
  func.func @_block_down_kernel(%arg0: memref<2x16x16x128xf32, #tpu.memory_space<vmem>>, %arg1: memref<1152x256xbf16, #tpu.memory_space<vmem>>, %arg2: memref<1x256xf32, #tpu.memory_space<vmem>>, %arg3: memref<1x256xf32, #tpu.memory_space<vmem>>, %arg4: memref<1152x128xbf16, #tpu.memory_space<vmem>>, %arg5: memref<1x128xf32, #tpu.memory_space<vmem>>, %arg6: memref<1x128xf32, #tpu.memory_space<vmem>>, %arg7: memref<2x16x16x128xf32, #tpu.memory_space<vmem>>, %arg8: memref<2x18x18x128xf32, #tpu.memory_space<vmem>>, %arg9: memref<2x18x18x128xf32, #tpu.memory_space<vmem>>) attributes {dimension_semantics = [], scalar_prefetch = 0 : i64, scratch_operands = 2 : i64, tpu.core_type = #tpu.core_type<tc>} {
    %c0 = arith.constant 0 : index
    %c0_0 = arith.constant 0 : index
    %c0_1 = arith.constant 0 : index
    %c0_2 = arith.constant 0 : index
    %0 = vector.load %arg0[%c0, %c0_0, %c0_1, %c0_2] : memref<2x16x16x128xf32, #tpu.memory_space<vmem>>, vector<2x16x16x128xf32>
    %cst = arith.constant 0.000000e+00 : f32
    %1 = vector.broadcast %cst : f32 to vector<2x1x18x128xf32>
    %c0_3 = arith.constant 0 : index
    %c0_4 = arith.constant 0 : index
    %c0_5 = arith.constant 0 : index
    %c0_6 = arith.constant 0 : index
    %2 = vector.load %arg8[%c0_3, %c0_4, %c0_5, %c0_6] : memref<2x18x18x128xf32, #tpu.memory_space<vmem>>, vector<2x1x18x128xf32>
    tpu.vector_store %arg8[%c0_3, %c0_4, %c0_5, %c0_6], %1 {strides = array<i32>} : memref<2x18x18x128xf32, #tpu.memory_space<vmem>>, vector<2x1x18x128xf32>,
    %c0_7 = arith.constant 0 : index
    %c17 = arith.constant 17 : index
    %c0_8 = arith.constant 0 : index
    %c0_9 = arith.constant 0 : index
    %3 = vector.load %arg8[%c0_7, %c17, %c0_8, %c0_9] : memref<2x18x18x128xf32, #tpu.memory_space<vmem>>, vector<2x1x18x128xf32>
    tpu.vector_store %arg8[%c0_7, %c17, %c0_8, %c0_9], %1 {strides = array<i32>} : memref<2x18x18x128xf32, #tpu.memory_space<vmem>>, vector<2x1x18x128xf32>,
    %cst_10 = arith.constant 0.000000e+00 : f32
    %4 = vector.broadcast %cst_10 : f32 to vector<2x16x1x128xf32>
    %c0_11 = arith.constant 0 : index
    %c1 = arith.constant 1 : index
    %c0_12 = arith.constant 0 : index
    %c0_13 = arith.constant 0 : index
    %5 = vector.load %arg8[%c0_11, %c1, %c0_12, %c0_13] : memref<2x18x18x128xf32, #tpu.memory_space<vmem>>, vector<2x16x1x128xf32>
    tpu.vector_store %arg8[%c0_11, %c1, %c0_12, %c0_13], %4 {strides = array<i32>} : memref<2x18x18x128xf32, #tpu.memory_space<vmem>>, vector<2x16x1x128xf32>,
    %c0_14 = arith.constant 0 : index
    %c1_15 = arith.constant 1 : index
    %c17_16 = arith.constant 17 : index
    %c0_17 = arith.constant 0 : index
    %6 = vector.load %arg8[%c0_14, %c1_15, %c17_16, %c0_17] : memref<2x18x18x128xf32, #tpu.memory_space<vmem>>, vector<2x16x1x128xf32>
    tpu.vector_store %arg8[%c0_14, %c1_15, %c17_16, %c0_17], %4 {strides = array<i32>} : memref<2x18x18x128xf32, #tpu.memory_space<vmem>>, vector<2x16x1x128xf32>,
    %c0_18 = arith.constant 0 : index
    %c1_19 = arith.constant 1 : index
    %c1_20 = arith.constant 1 : index
    %c0_21 = arith.constant 0 : index
    %7 = vector.load %arg8[%c0_18, %c1_19, %c1_20, %c0_21] : memref<2x18x18x128xf32, #tpu.memory_space<vmem>>, vector<2x16x16x128xf32>
    tpu.vector_store %arg8[%c0_18, %c1_19, %c1_20, %c0_21], %0 {strides = array<i32>} : memref<2x18x18x128xf32, #tpu.memory_space<vmem>>, vector<2x16x16x128xf32>,
    %c0_22 = arith.constant 0 : index
    %c0_23 = arith.constant 0 : index
    %c0_24 = arith.constant 0 : index
    %c0_25 = arith.constant 0 : index
    %8 = vector.load %arg8[%c0_22, %c0_23, %c0_24, %c0_25] : memref<2x18x18x128xf32, #tpu.memory_space<vmem>>, vector<2x16x16x128xf32>
    %9 = arith.truncf %8 : vector<2x16x16x128xf32> to vector<2x16x16x128xbf16>
    %10 = vector.shape_cast %9 : vector<2x16x16x128xbf16> to vector<512x128xbf16>
    %c0_26 = arith.constant 0 : index
    %c0_27 = arith.constant 0 : index
    %c1_28 = arith.constant 1 : index
    %c0_29 = arith.constant 0 : index
    %11 = vector.load %arg8[%c0_26, %c0_27, %c1_28, %c0_29] : memref<2x18x18x128xf32, #tpu.memory_space<vmem>>, vector<2x16x16x128xf32>
    %12 = arith.truncf %11 : vector<2x16x16x128xf32> to vector<2x16x16x128xbf16>
    %13 = vector.shape_cast %12 : vector<2x16x16x128xbf16> to vector<512x128xbf16>
    %c0_30 = arith.constant 0 : index
    %c0_31 = arith.constant 0 : index
    %c2 = arith.constant 2 : index
    %c0_32 = arith.constant 0 : index
    %14 = vector.load %arg8[%c0_30, %c0_31, %c2, %c0_32] : memref<2x18x18x128xf32, #tpu.memory_space<vmem>>, vector<2x16x16x128xf32>
    %15 = arith.truncf %14 : vector<2x16x16x128xf32> to vector<2x16x16x128xbf16>
    %16 = vector.shape_cast %15 : vector<2x16x16x128xbf16> to vector<512x128xbf16>
    %c0_33 = arith.constant 0 : index
    %c1_34 = arith.constant 1 : index
    %c0_35 = arith.constant 0 : index
    %c0_36 = arith.constant 0 : index
    %17 = vector.load %arg8[%c0_33, %c1_34, %c0_35, %c0_36] : memref<2x18x18x128xf32, #tpu.memory_space<vmem>>, vector<2x16x16x128xf32>
    %18 = arith.truncf %17 : vector<2x16x16x128xf32> to vector<2x16x16x128xbf16>
    %19 = vector.shape_cast %18 : vector<2x16x16x128xbf16> to vector<512x128xbf16>
    %c0_37 = arith.constant 0 : index
    %c1_38 = arith.constant 1 : index
    %c1_39 = arith.constant 1 : index
    %c0_40 = arith.constant 0 : index
    %20 = vector.load %arg8[%c0_37, %c1_38, %c1_39, %c0_40] : memref<2x18x18x128xf32, #tpu.memory_space<vmem>>, vector<2x16x16x128xf32>
    %21 = arith.truncf %20 : vector<2x16x16x128xf32> to vector<2x16x16x128xbf16>
    %22 = vector.shape_cast %21 : vector<2x16x16x128xbf16> to vector<512x128xbf16>
    %c0_41 = arith.constant 0 : index
    %c1_42 = arith.constant 1 : index
    %c2_43 = arith.constant 2 : index
    %c0_44 = arith.constant 0 : index
    %23 = vector.load %arg8[%c0_41, %c1_42, %c2_43, %c0_44] : memref<2x18x18x128xf32, #tpu.memory_space<vmem>>, vector<2x16x16x128xf32>
    %24 = arith.truncf %23 : vector<2x16x16x128xf32> to vector<2x16x16x128xbf16>
    %25 = vector.shape_cast %24 : vector<2x16x16x128xbf16> to vector<512x128xbf16>
    %c0_45 = arith.constant 0 : index
    %c2_46 = arith.constant 2 : index
    %c0_47 = arith.constant 0 : index
    %c0_48 = arith.constant 0 : index
    %26 = vector.load %arg8[%c0_45, %c2_46, %c0_47, %c0_48] : memref<2x18x18x128xf32, #tpu.memory_space<vmem>>, vector<2x16x16x128xf32>
    %27 = arith.truncf %26 : vector<2x16x16x128xf32> to vector<2x16x16x128xbf16>
    %28 = vector.shape_cast %27 : vector<2x16x16x128xbf16> to vector<512x128xbf16>
    %c0_49 = arith.constant 0 : index
    %c2_50 = arith.constant 2 : index
    %c1_51 = arith.constant 1 : index
    %c0_52 = arith.constant 0 : index
    %29 = vector.load %arg8[%c0_49, %c2_50, %c1_51, %c0_52] : memref<2x18x18x128xf32, #tpu.memory_space<vmem>>, vector<2x16x16x128xf32>
    %30 = arith.truncf %29 : vector<2x16x16x128xf32> to vector<2x16x16x128xbf16>
    %31 = vector.shape_cast %30 : vector<2x16x16x128xbf16> to vector<512x128xbf16>
    %c0_53 = arith.constant 0 : index
    %c2_54 = arith.constant 2 : index
    %c2_55 = arith.constant 2 : index
    %c0_56 = arith.constant 0 : index
    %32 = vector.load %arg8[%c0_53, %c2_54, %c2_55, %c0_56] : memref<2x18x18x128xf32, #tpu.memory_space<vmem>>, vector<2x16x16x128xf32>
    %33 = arith.truncf %32 : vector<2x16x16x128xf32> to vector<2x16x16x128xbf16>
    %34 = vector.shape_cast %33 : vector<2x16x16x128xbf16> to vector<512x128xbf16>
    %35 = tpu.concatenate %10, %13, %16, %19, %22, %25, %28, %31, %34 in 1 : vector<512x128xbf16>, vector<512x128xbf16>, vector<512x128xbf16>, vector<512x128xbf16>, vector<512x128xbf16>, vector<512x128xbf16>, vector<512x128xbf16>, vector<512x128xbf16>, vector<512x128xbf16> -> vector<512x1152xbf16>
    %c0_57 = arith.constant 0 : index
    %c0_58 = arith.constant 0 : index
    %36 = vector.load %arg1[%c0_57, %c0_58] : memref<1152x256xbf16, #tpu.memory_space<vmem>>, vector<1152x256xbf16>
    %cst_59 = arith.constant dense<0.000000e+00> : vector<512x256xf32>
    %37 = tpu.matmul %35, %36, %cst_59 {dimension_numbers = #tpu.dot_dimension_numbers<[1], [0], [0], [1], [0, 0, 1, 1], [], []>} : vector<512x1152xbf16>, vector<1152x256xbf16>, vector<512x256xf32> -> vector<512x256xf32>
    %cst_60 = arith.constant dense<0.000000e+00> : vector<256xf32>
    %38 = vector.multi_reduction <add>, %37, %cst_60 [0] : vector<512x256xf32> to vector<256xf32>
    %39 = vector.shape_cast %38 : vector<256xf32> to vector<1x256xf32>
    %cst_61 = arith.constant 0.001953125 : f32
    %40 = vector.broadcast %cst_61 : f32 to vector<1x256xf32>
    %41 = arith.mulf %39, %40 : vector<1x256xf32>
    %42 = vector.broadcast %41 : vector<1x256xf32> to vector<512x256xf32>
    %43 = arith.subf %37, %42 : vector<512x256xf32>
    %44 = arith.mulf %43, %43 : vector<512x256xf32>
    %cst_62 = arith.constant dense<0.000000e+00> : vector<256xf32>
    %45 = vector.multi_reduction <add>, %44, %cst_62 [0] : vector<512x256xf32> to vector<256xf32>
    %46 = vector.shape_cast %45 : vector<256xf32> to vector<1x256xf32>
    %cst_63 = arith.constant 0.001953125 : f32
    %47 = vector.broadcast %cst_63 : f32 to vector<1x256xf32>
    %48 = arith.mulf %46, %47 : vector<1x256xf32>
    %c0_64 = arith.constant 0 : index
    %c0_65 = arith.constant 0 : index
    %49 = vector.load %arg2[%c0_64, %c0_65] : memref<1x256xf32, #tpu.memory_space<vmem>>, vector<1x256xf32>
    %cst_66 = arith.constant 9.99999974E-6 : f32
    %50 = vector.broadcast %cst_66 : f32 to vector<1x256xf32>
    %51 = arith.addf %48, %50 : vector<1x256xf32>
    %52 = math.rsqrt %51 : vector<1x256xf32>
    %53 = arith.mulf %49, %52 : vector<1x256xf32>
    %c0_67 = arith.constant 0 : index
    %c0_68 = arith.constant 0 : index
    %54 = vector.load %arg3[%c0_67, %c0_68] : memref<1x256xf32, #tpu.memory_space<vmem>>, vector<1x256xf32>
    %55 = arith.mulf %41, %53 : vector<1x256xf32>
    %56 = arith.subf %54, %55 : vector<1x256xf32>
    %57 = vector.broadcast %53 : vector<1x256xf32> to vector<512x256xf32>
    %58 = arith.mulf %37, %57 : vector<512x256xf32>
    %59 = vector.broadcast %56 : vector<1x256xf32> to vector<512x256xf32>
    %60 = arith.addf %58, %59 : vector<512x256xf32>
    %61 = vector.extract_strided_slice %60 {offsets = [0, 0], sizes = [512, 128], strides = [1, 1]} : vector<512x256xf32> to vector<512x128xf32>
    %cst_69 = arith.constant 0.000000e+00 : f32
    %62 = vector.broadcast %cst_69 : f32 to vector<512x128xf32>
    %63 = arith.maximumf %61, %62 : vector<512x128xf32>
    %64 = vector.extract_strided_slice %60 {offsets = [0, 128], sizes = [512, 128], strides = [1, 1]} : vector<512x256xf32> to vector<512x128xf32>
    %65 = vector.shape_cast %63 : vector<512x128xf32> to vector<2x16x16x128xf32>
    %cst_70 = arith.constant 0.000000e+00 : f32
    %66 = vector.broadcast %cst_70 : f32 to vector<2x1x18x128xf32>
    %c0_71 = arith.constant 0 : index
    %c0_72 = arith.constant 0 : index
    %c0_73 = arith.constant 0 : index
    %c0_74 = arith.constant 0 : index
    %67 = vector.load %arg9[%c0_71, %c0_72, %c0_73, %c0_74] : memref<2x18x18x128xf32, #tpu.memory_space<vmem>>, vector<2x1x18x128xf32>
    tpu.vector_store %arg9[%c0_71, %c0_72, %c0_73, %c0_74], %66 {strides = array<i32>} : memref<2x18x18x128xf32, #tpu.memory_space<vmem>>, vector<2x1x18x128xf32>,
    %c0_75 = arith.constant 0 : index
    %c17_76 = arith.constant 17 : index
    %c0_77 = arith.constant 0 : index
    %c0_78 = arith.constant 0 : index
    %68 = vector.load %arg9[%c0_75, %c17_76, %c0_77, %c0_78] : memref<2x18x18x128xf32, #tpu.memory_space<vmem>>, vector<2x1x18x128xf32>
    tpu.vector_store %arg9[%c0_75, %c17_76, %c0_77, %c0_78], %66 {strides = array<i32>} : memref<2x18x18x128xf32, #tpu.memory_space<vmem>>, vector<2x1x18x128xf32>,
    %cst_79 = arith.constant 0.000000e+00 : f32
    %69 = vector.broadcast %cst_79 : f32 to vector<2x16x1x128xf32>
    %c0_80 = arith.constant 0 : index
    %c1_81 = arith.constant 1 : index
    %c0_82 = arith.constant 0 : index
    %c0_83 = arith.constant 0 : index
    %70 = vector.load %arg9[%c0_80, %c1_81, %c0_82, %c0_83] : memref<2x18x18x128xf32, #tpu.memory_space<vmem>>, vector<2x16x1x128xf32>
    tpu.vector_store %arg9[%c0_80, %c1_81, %c0_82, %c0_83], %69 {strides = array<i32>} : memref<2x18x18x128xf32, #tpu.memory_space<vmem>>, vector<2x16x1x128xf32>,
    %c0_84 = arith.constant 0 : index
    %c1_85 = arith.constant 1 : index
    %c17_86 = arith.constant 17 : index
    %c0_87 = arith.constant 0 : index
    %71 = vector.load %arg9[%c0_84, %c1_85, %c17_86, %c0_87] : memref<2x18x18x128xf32, #tpu.memory_space<vmem>>, vector<2x16x1x128xf32>
    tpu.vector_store %arg9[%c0_84, %c1_85, %c17_86, %c0_87], %69 {strides = array<i32>} : memref<2x18x18x128xf32, #tpu.memory_space<vmem>>, vector<2x16x1x128xf32>,
    %c0_88 = arith.constant 0 : index
    %c1_89 = arith.constant 1 : index
    %c1_90 = arith.constant 1 : index
    %c0_91 = arith.constant 0 : index
    %72 = vector.load %arg9[%c0_88, %c1_89, %c1_90, %c0_91] : memref<2x18x18x128xf32, #tpu.memory_space<vmem>>, vector<2x16x16x128xf32>
    tpu.vector_store %arg9[%c0_88, %c1_89, %c1_90, %c0_91], %65 {strides = array<i32>} : memref<2x18x18x128xf32, #tpu.memory_space<vmem>>, vector<2x16x16x128xf32>,
    %c0_92 = arith.constant 0 : index
    %c0_93 = arith.constant 0 : index
    %c0_94 = arith.constant 0 : index
    %c0_95 = arith.constant 0 : index
    %73 = vector.load %arg9[%c0_92, %c0_93, %c0_94, %c0_95] : memref<2x18x18x128xf32, #tpu.memory_space<vmem>>, vector<2x16x16x128xf32>
    %74 = arith.truncf %73 : vector<2x16x16x128xf32> to vector<2x16x16x128xbf16>
    %75 = vector.shape_cast %74 : vector<2x16x16x128xbf16> to vector<512x128xbf16>
    %c0_96 = arith.constant 0 : index
    %c0_97 = arith.constant 0 : index
    %c1_98 = arith.constant 1 : index
    %c0_99 = arith.constant 0 : index
    %76 = vector.load %arg9[%c0_96, %c0_97, %c1_98, %c0_99] : memref<2x18x18x128xf32, #tpu.memory_space<vmem>>, vector<2x16x16x128xf32>
    %77 = arith.truncf %76 : vector<2x16x16x128xf32> to vector<2x16x16x128xbf16>
    %78 = vector.shape_cast %77 : vector<2x16x16x128xbf16> to vector<512x128xbf16>
    %c0_100 = arith.constant 0 : index
    %c0_101 = arith.constant 0 : index
    %c2_102 = arith.constant 2 : index
    %c0_103 = arith.constant 0 : index
    %79 = vector.load %arg9[%c0_100, %c0_101, %c2_102, %c0_103] : memref<2x18x18x128xf32, #tpu.memory_space<vmem>>, vector<2x16x16x128xf32>
    %80 = arith.truncf %79 : vector<2x16x16x128xf32> to vector<2x16x16x128xbf16>
    %81 = vector.shape_cast %80 : vector<2x16x16x128xbf16> to vector<512x128xbf16>
    %c0_104 = arith.constant 0 : index
    %c1_105 = arith.constant 1 : index
    %c0_106 = arith.constant 0 : index
    %c0_107 = arith.constant 0 : index
    %82 = vector.load %arg9[%c0_104, %c1_105, %c0_106, %c0_107] : memref<2x18x18x128xf32, #tpu.memory_space<vmem>>, vector<2x16x16x128xf32>
    %83 = arith.truncf %82 : vector<2x16x16x128xf32> to vector<2x16x16x128xbf16>
    %84 = vector.shape_cast %83 : vector<2x16x16x128xbf16> to vector<512x128xbf16>
    %c0_108 = arith.constant 0 : index
    %c1_109 = arith.constant 1 : index
    %c1_110 = arith.constant 1 : index
    %c0_111 = arith.constant 0 : index
    %85 = vector.load %arg9[%c0_108, %c1_109, %c1_110, %c0_111] : memref<2x18x18x128xf32, #tpu.memory_space<vmem>>, vector<2x16x16x128xf32>
    %86 = arith.truncf %85 : vector<2x16x16x128xf32> to vector<2x16x16x128xbf16>
    %87 = vector.shape_cast %86 : vector<2x16x16x128xbf16> to vector<512x128xbf16>
    %c0_112 = arith.constant 0 : index
    %c1_113 = arith.constant 1 : index
    %c2_114 = arith.constant 2 : index
    %c0_115 = arith.constant 0 : index
    %88 = vector.load %arg9[%c0_112, %c1_113, %c2_114, %c0_115] : memref<2x18x18x128xf32, #tpu.memory_space<vmem>>, vector<2x16x16x128xf32>
    %89 = arith.truncf %88 : vector<2x16x16x128xf32> to vector<2x16x16x128xbf16>
    %90 = vector.shape_cast %89 : vector<2x16x16x128xbf16> to vector<512x128xbf16>
    %c0_116 = arith.constant 0 : index
    %c2_117 = arith.constant 2 : index
    %c0_118 = arith.constant 0 : index
    %c0_119 = arith.constant 0 : index
    %91 = vector.load %arg9[%c0_116, %c2_117, %c0_118, %c0_119] : memref<2x18x18x128xf32, #tpu.memory_space<vmem>>, vector<2x16x16x128xf32>
    %92 = arith.truncf %91 : vector<2x16x16x128xf32> to vector<2x16x16x128xbf16>
    %93 = vector.shape_cast %92 : vector<2x16x16x128xbf16> to vector<512x128xbf16>
    %c0_120 = arith.constant 0 : index
    %c2_121 = arith.constant 2 : index
    %c1_122 = arith.constant 1 : index
    %c0_123 = arith.constant 0 : index
    %94 = vector.load %arg9[%c0_120, %c2_121, %c1_122, %c0_123] : memref<2x18x18x128xf32, #tpu.memory_space<vmem>>, vector<2x16x16x128xf32>
    %95 = arith.truncf %94 : vector<2x16x16x128xf32> to vector<2x16x16x128xbf16>
    %96 = vector.shape_cast %95 : vector<2x16x16x128xbf16> to vector<512x128xbf16>
    %c0_124 = arith.constant 0 : index
    %c2_125 = arith.constant 2 : index
    %c2_126 = arith.constant 2 : index
    %c0_127 = arith.constant 0 : index
    %97 = vector.load %arg9[%c0_124, %c2_125, %c2_126, %c0_127] : memref<2x18x18x128xf32, #tpu.memory_space<vmem>>, vector<2x16x16x128xf32>
    %98 = arith.truncf %97 : vector<2x16x16x128xf32> to vector<2x16x16x128xbf16>
    %99 = vector.shape_cast %98 : vector<2x16x16x128xbf16> to vector<512x128xbf16>
    %100 = tpu.concatenate %75, %78, %81, %84, %87, %90, %93, %96, %99 in 1 : vector<512x128xbf16>, vector<512x128xbf16>, vector<512x128xbf16>, vector<512x128xbf16>, vector<512x128xbf16>, vector<512x128xbf16>, vector<512x128xbf16>, vector<512x128xbf16>, vector<512x128xbf16> -> vector<512x1152xbf16>
    %c0_128 = arith.constant 0 : index
    %c0_129 = arith.constant 0 : index
    %101 = vector.load %arg4[%c0_128, %c0_129] : memref<1152x128xbf16, #tpu.memory_space<vmem>>, vector<1152x128xbf16>
    %cst_130 = arith.constant dense<0.000000e+00> : vector<512x128xf32>
    %102 = tpu.matmul %100, %101, %cst_130 {dimension_numbers = #tpu.dot_dimension_numbers<[1], [0], [0], [1], [0, 0, 1, 1], [], []>} : vector<512x1152xbf16>, vector<1152x128xbf16>, vector<512x128xf32> -> vector<512x128xf32>
    %cst_131 = arith.constant dense<0.000000e+00> : vector<128xf32>
    %103 = vector.multi_reduction <add>, %102, %cst_131 [0] : vector<512x128xf32> to vector<128xf32>
    %104 = vector.shape_cast %103 : vector<128xf32> to vector<1x128xf32>
    %cst_132 = arith.constant 0.001953125 : f32
    %105 = vector.broadcast %cst_132 : f32 to vector<1x128xf32>
    %106 = arith.mulf %104, %105 : vector<1x128xf32>
    %107 = vector.broadcast %106 : vector<1x128xf32> to vector<512x128xf32>
    %108 = arith.subf %102, %107 : vector<512x128xf32>
    %109 = arith.mulf %108, %108 : vector<512x128xf32>
    %cst_133 = arith.constant dense<0.000000e+00> : vector<128xf32>
    %110 = vector.multi_reduction <add>, %109, %cst_133 [0] : vector<512x128xf32> to vector<128xf32>
    %111 = vector.shape_cast %110 : vector<128xf32> to vector<1x128xf32>
    %cst_134 = arith.constant 0.001953125 : f32
    %112 = vector.broadcast %cst_134 : f32 to vector<1x128xf32>
    %113 = arith.mulf %111, %112 : vector<1x128xf32>
    %c0_135 = arith.constant 0 : index
    %c0_136 = arith.constant 0 : index
    %114 = vector.load %arg5[%c0_135, %c0_136] : memref<1x128xf32, #tpu.memory_space<vmem>>, vector<1x128xf32>
    %cst_137 = arith.constant 9.99999974E-6 : f32
    %115 = vector.broadcast %cst_137 : f32 to vector<1x128xf32>
    %116 = arith.addf %113, %115 : vector<1x128xf32>
    %117 = math.rsqrt %116 : vector<1x128xf32>
    %118 = arith.mulf %114, %117 : vector<1x128xf32>
    %c0_138 = arith.constant 0 : index
    %c0_139 = arith.constant 0 : index
    %119 = vector.load %arg6[%c0_138, %c0_139] : memref<1x128xf32, #tpu.memory_space<vmem>>, vector<1x128xf32>
    %120 = arith.mulf %106, %118 : vector<1x128xf32>
    %121 = arith.subf %119, %120 : vector<1x128xf32>
    %122 = vector.broadcast %118 : vector<1x128xf32> to vector<512x128xf32>
    %123 = arith.mulf %102, %122 : vector<512x128xf32>
    %124 = vector.broadcast %121 : vector<1x128xf32> to vector<512x128xf32>
    %125 = arith.addf %123, %124 : vector<512x128xf32>
    %126 = arith.addf %125, %64 : vector<512x128xf32>
    %cst_140 = arith.constant 0.000000e+00 : f32
    %127 = vector.broadcast %cst_140 : f32 to vector<512x128xf32>
    %128 = arith.maximumf %126, %127 : vector<512x128xf32>
    %129 = vector.shape_cast %128 : vector<512x128xf32> to vector<2x16x16x128xf32>
    %c0_141 = arith.constant 0 : index
    %c0_142 = arith.constant 0 : index
    %c0_143 = arith.constant 0 : index
    %c0_144 = arith.constant 0 : index
    %130 = vector.load %arg7[%c0_141, %c0_142, %c0_143, %c0_144] : memref<2x16x16x128xf32, #tpu.memory_space<vmem>>, vector<2x16x16x128xf32>
    tpu.vector_store %arg7[%c0_141, %c0_142, %c0_143, %c0_144], %129 {strides = array<i32>} : memref<2x16x16x128xf32, #tpu.memory_space<vmem>>, vector<2x16x16x128xf32>,
    return
  }
}

</mosaic_0001>

<llo_original>
// kernel: tpu_custom_call.1
$region0: #{tpu_custom_call.1}
  #allocation0 [shape = 'u32[]', space=smem, size = 0x4, offset = 0x4, fixed_abs, tag = 'smem constant byte address 0x4 - core index']
  #allocation1 [shape = 'u32[144,128]{1,0:T(1,128)}', space=vmem, size = 0x12000, scoped, tag = 'internal scratch']
  #allocation2 [shape = 'f32[2,18,18,128]{3,2,1,0:T(8,128)}', space=vmem, size = 0x6c000, scoped, tag = 'scratch operand']
  #allocation3 [shape = 'f32[2,18,18,128]{3,2,1,0:T(8,128)}', space=vmem, size = 0x6c000, scoped, tag = 'scratch operand']
  %s0 = inlined_call_operand.hbm [shape: f32[2,16,16,128], index: 0, kind: input, shape index: {}]
  %s1 = inlined_call_operand.hbm [shape: bf16[1152,256], index: 1, kind: input, shape index: {}]
  %s2 = inlined_call_operand.vmem [shape: f32[1,256], index: 2, kind: input, shape index: {}]
  %s3 = inlined_call_operand.vmem [shape: f32[1,256], index: 3, kind: input, shape index: {}]
  %s4 = inlined_call_operand.hbm [shape: bf16[1152,128], index: 4, kind: input, shape index: {}]
  %s5 = inlined_call_operand.vmem [shape: f32[1,128], index: 5, kind: input, shape index: {}]
  %s6 = inlined_call_operand.vmem [shape: f32[1,128], index: 6, kind: input, shape index: {}]
  %s7 = inlined_call_operand.hbm [shape: f32[2,16,16,128], index: 7, kind: output, shape index: {}]
  %s8 = sld [smem:[#allocation0]]
  $region50: #{tpu_custom_call.1} parent=0
    _
  %s10 = ssub.s32 1, %s8
  %s11 = scalar_select 0, %s10, %s8
  $region1: #{tpu_custom_call.1} parent=0
    #allocation4 [shape = 'u8[262144]{0}', space=vmem, size = 0x40000, scoped, tag = 'input window, operand 0, single buffered']
    #allocation5 [shape = 's32[1]{0}', space=sflag, size = 0x4, scoped, tag = 'scoped memory for tpu_custom_call.1']
    #allocation6 [shape = 's32[1]{0}', space=sflag, size = 0x4, scoped, tag = 'scoped memory for tpu_custom_call.1']
    #allocation7 [shape = 'u8[589824]{0}', space=vmem, size = 0x90000, scoped, tag = 'input window, operand 1, single buffered']
    #allocation8 [shape = 's32[1]{0}', space=sflag, size = 0x4, scoped, tag = 'scoped memory for tpu_custom_call.1']
    #allocation9 [shape = 'u8[294912]{0}', space=vmem, size = 0x48000, scoped, tag = 'input window, operand 4, single buffered']
    #allocation10 [shape = 'u8[262144]{0}', space=vmem, size = 0x40000, scoped, tag = 'output window, operand 0, single buffered']
    %12 = vsyncpa [#allocation5], 0
    %13 = vsyncpa [#allocation8], 0
    %14 = vsyncpa [#allocation6], 0
    // Predicated region
    $region2: #{tpu_custom_call.1} parent=1 // pred_check
      _
    $region3: #{tpu_custom_call.1} parent=1 // pred_check_branch
      %16 = sbr.rel (0) target = $region5
    $region4: #{tpu_custom_call.1} parent=1 // pred_region
      %s18 = ssub.s32 8192, 8192
      %19 = vsyncadd [#allocation5], %s18
      %s20 = sshll.u32 [#allocation4], 4
      %s21 = int_to_ptr.vmem [resolvable:$true] %s20
      %26 = dma.hbm_to_vmem [thread:$0]  %s0, 8192, %s21, [#allocation5], 128, 128, 8
    $region5: #{tpu_custom_call.1} parent=1 // pred_fallthru
      _
    // Predicated region
    $region6: #{tpu_custom_call.1} parent=1 // pred_check
      _
    $region7: #{tpu_custom_call.1} parent=1 // pred_check_branch
      %28 = sbr.rel (0) target = $region9
    $region8: #{tpu_custom_call.1} parent=1 // pred_region
      %s30 = ssub.s32 18432, 18432
      %31 = vsyncadd [#allocation8], %s30
      %s32 = sshll.u32 [#allocation7], 4
      %s33 = int_to_ptr.vmem [resolvable:$true] %s32
      %38 = dma.hbm_to_vmem [thread:$0]  %s1, 18432, %s33, [#allocation8], 128, 128, 8
    $region9: #{tpu_custom_call.1} parent=1 // pred_fallthru
      _
    // Predicated region
    $region10: #{tpu_custom_call.1} parent=1 // pred_check
      _
    $region11: #{tpu_custom_call.1} parent=1 // pred_check_branch
      %40 = sbr.rel (0) target = $region13
    $region12: #{tpu_custom_call.1} parent=1 // pred_region
      _
    $region13: #{tpu_custom_call.1} parent=1 // pred_fallthru
      _
    // Predicated region
    $region14: #{tpu_custom_call.1} parent=1 // pred_check
      _
    $region15: #{tpu_custom_call.1} parent=1 // pred_check_branch
      %42 = sbr.rel (0) target = $region17
    $region16: #{tpu_custom_call.1} parent=1 // pred_region
      _
    $region17: #{tpu_custom_call.1} parent=1 // pred_fallthru
      _
    // Predicated region
    $region18: #{tpu_custom_call.1} parent=1 // pred_check
      _
    $region19: #{tpu_custom_call.1} parent=1 // pred_check_branch
      %44 = sbr.rel (0) target = $region21
    $region20: #{tpu_custom_call.1} parent=1 // pred_region
      %s46 = ssub.s32 9216, 9216
      %47 = vsyncadd [#allocation8], %s46
      %s48 = sshll.u32 [#allocation9], 4
      %s49 = int_to_ptr.vmem [resolvable:$true] %s48
      %54 = dma.hbm_to_vmem [thread:$0]  %s4, 9216, %s49, [#allocation8], 64, 64, 4
    $region21: #{tpu_custom_call.1} parent=1 // pred_fallthru
      _
    // Predicated region
    $region22: #{tpu_custom_call.1} parent=1 // pred_check
      _
    $region23: #{tpu_custom_call.1} parent=1 // pred_check_branch
      %56 = sbr.rel (0) target = $region25
    $region24: #{tpu_custom_call.1} parent=1 // pred_region
      _
    $region25: #{tpu_custom_call.1} parent=1 // pred_fallthru
      _
    // Predicated region
    $region26: #{tpu_custom_call.1} parent=1 // pred_check
      _
    $region27: #{tpu_custom_call.1} parent=1 // pred_check_branch
      %58 = sbr.rel (0) target = $region29
    $region28: #{tpu_custom_call.1} parent=1 // pred_region
      _
    $region29: #{tpu_custom_call.1} parent=1 // pred_fallthru
      _
    // Predicated region
    $region30: #{tpu_custom_call.1} parent=1 // pred_check
      _
    $region31: #{tpu_custom_call.1} parent=1 // pred_check_branch
      %60 = sbr.rel (0) target = $region33
    $region32: #{tpu_custom_call.1} parent=1 // pred_region
      %61 = dma.done [#allocation5], 8192
    $region33: #{tpu_custom_call.1} parent=1 // pred_fallthru
      _
    // Predicated region
    $region34: #{tpu_custom_call.1} parent=1 // pred_check
      _
    $region35: #{tpu_custom_call.1} parent=1 // pred_check_branch
      %63 = sbr.rel (0) target = $region37
    $region36: #{tpu_custom_call.1} parent=1 // pred_region
      %64 = dma.done [#allocation8], 18432
    $region37: #{tpu_custom_call.1} parent=1 // pred_fallthru
      _
    // Predicated region
    $region38: #{tpu_custom_call.1} parent=1 // pred_check
      _
    $region39: #{tpu_custom_call.1} parent=1 // pred_check_branch
      %66 = sbr.rel (0) target = $region41
    $region40: #{tpu_custom_call.1} parent=1 // pred_region
      %67 = dma.done [#allocation8], 9216
    $region41: #{tpu_custom_call.1} parent=1 // pred_fallthru
      _
    %v69 = vld [vmem:[#allocation4] sm:$0xff]
    %v70 = vld [vmem:[#allocation4 + $0x8] sm:$0xff]
    %v71 = vld [vmem:[#allocation4 + $0x10] sm:$0xff]
    %v72 = vld [vmem:[#allocation4 + $0x18] sm:$0xff]
    %v73 = vld [vmem:[#allocation4 + $0x20] sm:$0xff]
    %v74 = vld [vmem:[#allocation4 + $0x28] sm:$0xff]
    %v75 = vld [vmem:[#allocation4 + $0x30] sm:$0xff]
    %v76 = vld [vmem:[#allocation4 + $0x38] sm:$0xff]
    %v77 = vld [vmem:[#allocation4 + $0x40] sm:$0xff]
    %v78 = vld [vmem:[#allocation4 + $0x48] sm:$0xff]
    %v79 = vld [vmem:[#allocation4 + $0x50] sm:$0xff]
    %v80 = vld [vmem:[#allocation4 + $0x58] sm:$0xff]
    %v81 = vld [vmem:[#allocation4 + $0x60] sm:$0xff]
    %v82 = vld [vmem:[#allocation4 + $0x68] sm:$0xff]
    %v83 = vld [vmem:[#allocation4 + $0x70] sm:$0xff]
    %v84 = vld [vmem:[#allocation4 + $0x78] sm:$0xff]
    %v85 = vld [vmem:[#allocation4 + $0x80] sm:$0xff]
    %v86 = vld [vmem:[#allocation4 + $0x88] sm:$0xff]
    %v87 = vld [vmem:[#allocation4 + $0x90] sm:$0xff]
    %v88 = vld [vmem:[#allocation4 + $0x98] sm:$0xff]
    %v89 = vld [vmem:[#allocation4 + $0xa0] sm:$0xff]
    %v90 = vld [vmem:[#allocation4 + $0xa8] sm:$0xff]
    %v91 = vld [vmem:[#allocation4 + $0xb0] sm:$0xff]
    %v92 = vld [vmem:[#allocation4 + $0xb8] sm:$0xff]
    %v93 = vld [vmem:[#allocation4 + $0xc0] sm:$0xff]
    %v94 = vld [vmem:[#allocation4 + $0xc8] sm:$0xff]
    %v95 = vld [vmem:[#allocation4 + $0xd0] sm:$0xff]
    %v96 = vld [vmem:[#allocation4 + $0xd8] sm:$0xff]
    %v97 = vld [vmem:[#allocation4 + $0xe0] sm:$0xff]
    %v98 = vld [vmem:[#allocation4 + $0xe8] sm:$0xff]
    %v99 = vld [vmem:[#allocation4 + $0xf0] sm:$0xff]
    %v100 = vld [vmem:[#allocation4 + $0xf8] sm:$0xff]
    %v101 = vld [vmem:[#allocation4 + $0x100] sm:$0xff]
    %v102 = vld [vmem:[#allocation4 + $0x108] sm:$0xff]
    %v103 = vld [vmem:[#allocation4 + $0x110] sm:$0xff]
    %v104 = vld [vmem:[#allocation4 + $0x118] sm:$0xff]
    %v105 = vld [vmem:[#allocation4 + $0x120] sm:$0xff]
    %v106 = vld [vmem:[#allocation4 + $0x128] sm:$0xff]
    %v107 = vld [vmem:[#allocation4 + $0x130] sm:$0xff]
    %v108 = vld [vmem:[#allocation4 + $0x138] sm:$0xff]
    %v109 = vld [vmem:[#allocation4 + $0x140] sm:$0xff]
    %v110 = vld [vmem:[#allocation4 + $0x148] sm:$0xff]
    %v111 = vld [vmem:[#allocation4 + $0x150] sm:$0xff]
    %v112 = vld [vmem:[#allocation4 + $0x158] sm:$0xff]
    %v113 = vld [vmem:[#allocation4 + $0x160] sm:$0xff]
    %v114 = vld [vmem:[#allocation4 + $0x168] sm:$0xff]
    %v115 = vld [vmem:[#allocation4 + $0x170] sm:$0xff]
    %v116 = vld [vmem:[#allocation4 + $0x178] sm:$0xff]
    %v117 = vld [vmem:[#allocation4 + $0x180] sm:$0xff]
    %v118 = vld [vmem:[#allocation4 + $0x188] sm:$0xff]
    %v119 = vld [vmem:[#allocation4 + $0x190] sm:$0xff]
    %v120 = vld [vmem:[#allocation4 + $0x198] sm:$0xff]
    %v121 = vld [vmem:[#allocation4 + $0x1a0] sm:$0xff]
    %v122 = vld [vmem:[#allocation4 + $0x1a8] sm:$0xff]
    %v123 = vld [vmem:[#allocation4 + $0x1b0] sm:$0xff]
    %v124 = vld [vmem:[#allocation4 + $0x1b8] sm:$0xff]
    %v125 = vld [vmem:[#allocation4 + $0x1c0] sm:$0xff]
    %v126 = vld [vmem:[#allocation4 + $0x1c8] sm:$0xff]
    %v127 = vld [vmem:[#allocation4 + $0x1d0] sm:$0xff]
    %v128 = vld [vmem:[#allocation4 + $0x1d8] sm:$0xff]
    %v129 = vld [vmem:[#allocation4 + $0x1e0] sm:$0xff]
    %v130 = vld [vmem:[#allocation4 + $0x1e8] sm:$0xff]
    %v131 = vld [vmem:[#allocation4 + $0x1f0] sm:$0xff]
    %v132 = vld [vmem:[#allocation4 + $0x1f8] sm:$0xff]
    %133 = vst [vmem:[#allocation2] sm:$0xff] 0.0
    %134 = vst [vmem:[#allocation2 + $0x8] sm:$0xff] 0.0
    %135 = vst [vmem:[#allocation2 + $0x10] sm:$0x3] 0.0
    %136 = vst [vmem:[#allocation2 + $0x1b0] sm:$0xff] 0.0
    %137 = vst [vmem:[#allocation2 + $0x1b8] sm:$0xff] 0.0
    %138 = vst [vmem:[#allocation2 + $0x1c0] sm:$0x3] 0.0
    %s139 = scalar_lea.vmem [#allocation2], 408
    %140 = vst [vmem:[%s139] sm:$0xff] 0.0
    %141 = vst [vmem:[%s139 + $0x8] sm:$0xff] 0.0
    %142 = vst [vmem:[%s139 + $0x10] sm:$0x3] 0.0
    %143 = vst [vmem:[%s139 + $0x1b0] sm:$0xff] 0.0
    %144 = vst [vmem:[%s139 + $0x1b8] sm:$0xff] 0.0
    %145 = vst [vmem:[%s139 + $0x1c0] sm:$0x3] 0.0
    %s146 = scalar_lea.vmem [#allocation2], 24
    %147 = vst [vmem:[%s146] sm:$0x1] 0.0
    %148 = vst [vmem:[%s146 + $0x18] sm:$0x1] 0.0
    %149 = vst [vmem:[%s146 + $0x30] sm:$0x1] 0.0
    %150 = vst [vmem:[%s146 + $0x48] sm:$0x1] 0.0
    %151 = vst [vmem:[%s146 + $0x60] sm:$0x1] 0.0
    %152 = vst [vmem:[%s146 + $0x78] sm:$0x1] 0.0
    %153 = vst [vmem:[%s146 + $0x90] sm:$0x1] 0.0
    %154 = vst [vmem:[%s146 + $0xa8] sm:$0x1] 0.0
    %155 = vst [vmem:[%s146 + $0xc0] sm:$0x1] 0.0
    %156 = vst [vmem:[%s146 + $0xd8] sm:$0x1] 0.0
    %157 = vst [vmem:[%s146 + $0xf0] sm:$0x1] 0.0
    %158 = vst [vmem:[%s146 + $0x108] sm:$0x1] 0.0
    %159 = vst [vmem:[%s146 + $0x120] sm:$0x1] 0.0
    %160 = vst [vmem:[%s146 + $0x138] sm:$0x1] 0.0
    %161 = vst [vmem:[%s146 + $0x150] sm:$0x1] 0.0
    %162 = vst [vmem:[%s146 + $0x168] sm:$0x1] 0.0
    %163 = vst [vmem:[%s146 + $0x1b0] sm:$0x1] 0.0
    %164 = vst [vmem:[%s146 + $0x1c8] sm:$0x1] 0.0
    %165 = vst [vmem:[%s146 + $0x1e0] sm:$0x1] 0.0
    %166 = vst [vmem:[%s146 + $0x1f8] sm:$0x1] 0.0
    %167 = vst [vmem:[%s146 + $0x210] sm:$0x1] 0.0
    %168 = vst [vmem:[%s146 + $0x228] sm:$0x1] 0.0
    %169 = vst [vmem:[%s146 + $0x240] sm:$0x1] 0.0
    %170 = vst [vmem:[%s146 + $0x258] sm:$0x1] 0.0
    %171 = vst [vmem:[%s146 + $0x270] sm:$0x1] 0.0
    %172 = vst [vmem:[%s146 + $0x288] sm:$0x1] 0.0
    %173 = vst [vmem:[%s146 + $0x2a0] sm:$0x1] 0.0
    %174 = vst [vmem:[%s146 + $0x2b8] sm:$0x1] 0.0
    %175 = vst [vmem:[%s146 + $0x2d0] sm:$0x1] 0.0
    %176 = vst [vmem:[%s146 + $0x2e8] sm:$0x1] 0.0
    %177 = vst [vmem:[%s146 + $0x300] sm:$0x1] 0.0
    %178 = vst [vmem:[%s146 + $0x318] sm:$0x1] 0.0
    %179 = vst [vmem:[%s146 + $0x11] sm:$0x1] 0.0
    %180 = vst [vmem:[%s146 + $0x29] sm:$0x1] 0.0
    %181 = vst [vmem:[%s146 + $0x41] sm:$0x1] 0.0
    %182 = vst [vmem:[%s146 + $0x59] sm:$0x1] 0.0
    %183 = vst [vmem:[%s146 + $0x71] sm:$0x1] 0.0
    %184 = vst [vmem:[%s146 + $0x89] sm:$0x1] 0.0
    %185 = vst [vmem:[%s146 + $0xa1] sm:$0x1] 0.0
    %186 = vst [vmem:[%s146 + $0xb9] sm:$0x1] 0.0
    %187 = vst [vmem:[%s146 + $0xd1] sm:$0x1] 0.0
    %188 = vst [vmem:[%s146 + $0xe9] sm:$0x1] 0.0
    %189 = vst [vmem:[%s146 + $0x101] sm:$0x1] 0.0
    %190 = vst [vmem:[%s146 + $0x119] sm:$0x1] 0.0
    %191 = vst [vmem:[%s146 + $0x131] sm:$0x1] 0.0
    %192 = vst [vmem:[%s146 + $0x149] sm:$0x1] 0.0
    %193 = vst [vmem:[%s146 + $0x161] sm:$0x1] 0.0
    %194 = vst [vmem:[%s146 + $0x179] sm:$0x1] 0.0
    %195 = vst [vmem:[%s146 + $0x1c1] sm:$0x1] 0.0
    %196 = vst [vmem:[%s146 + $0x1d9] sm:$0x1] 0.0
    %197 = vst [vmem:[%s146 + $0x1f1] sm:$0x1] 0.0
    %198 = vst [vmem:[%s146 + $0x209] sm:$0x1] 0.0
    %199 = vst [vmem:[%s146 + $0x221] sm:$0x1] 0.0
    %200 = vst [vmem:[%s146 + $0x239] sm:$0x1] 0.0
    %201 = vst [vmem:[%s146 + $0x251] sm:$0x1] 0.0
    %202 = vst [vmem:[%s146 + $0x269] sm:$0x1] 0.0
    %203 = vst [vmem:[%s146 + $0x281] sm:$0x1] 0.0
    %204 = vst [vmem:[%s146 + $0x299] sm:$0x1] 0.0
    %205 = vst [vmem:[%s146 + $0x2b1] sm:$0x1] 0.0
    %206 = vst [vmem:[%s146 + $0x2c9] sm:$0x1] 0.0
    %207 = vst [vmem:[%s146 + $0x2e1] sm:$0x1] 0.0
    %208 = vst [vmem:[%s146 + $0x2f9] sm:$0x1] 0.0
    %209 = vst [vmem:[%s146 + $0x311] sm:$0x1] 0.0
    %210 = vst [vmem:[%s146 + $0x329] sm:$0x1] 0.0
    %211 = vst [vmem:[%s146 + $0x1] sm:$0xff] %v69
    %212 = vst [vmem:[%s146 + $0x9] sm:$0xff] %v70
    %213 = vst [vmem:[%s146 + $0x19] sm:$0xff] %v71
    %214 = vst [vmem:[%s146 + $0x21] sm:$0xff] %v72
    %215 = vst [vmem:[%s146 + $0x31] sm:$0xff] %v73
    %216 = vst [vmem:[%s146 + $0x39] sm:$0xff] %v74
    %217 = vst [vmem:[%s146 + $0x49] sm:$0xff] %v75
    %218 = vst [vmem:[%s146 + $0x51] sm:$0xff] %v76
    %219 = vst [vmem:[%s146 + $0x61] sm:$0xff] %v77
    %220 = vst [vmem:[%s146 + $0x69] sm:$0xff] %v78
    %221 = vst [vmem:[%s146 + $0x79] sm:$0xff] %v79
    %222 = vst [vmem:[%s146 + $0x81] sm:$0xff] %v80
    %223 = vst [vmem:[%s146 + $0x91] sm:$0xff] %v81
    %224 = vst [vmem:[%s146 + $0x99] sm:$0xff] %v82
    %225 = vst [vmem:[%s146 + $0xa9] sm:$0xff] %v83
    %226 = vst [vmem:[%s146 + $0xb1] sm:$0xff] %v84
    %227 = vst [vmem:[%s146 + $0xc1] sm:$0xff] %v85
    %228 = vst [vmem:[%s146 + $0xc9] sm:$0xff] %v86
    %229 = vst [vmem:[%s146 + $0xd9] sm:$0xff] %v87
    %230 = vst [vmem:[%s146 + $0xe1] sm:$0xff] %v88
    %231 = vst [vmem:[%s146 + $0xf1] sm:$0xff] %v89
    %232 = vst [vmem:[%s146 + $0xf9] sm:$0xff] %v90
    %233 = vst [vmem:[%s146 + $0x109] sm:$0xff] %v91
    %234 = vst [vmem:[%s146 + $0x111] sm:$0xff] %v92
    %235 = vst [vmem:[%s146 + $0x121] sm:$0xff] %v93
    %236 = vst [vmem:[%s146 + $0x129] sm:$0xff] %v94
    %237 = vst [vmem:[%s146 + $0x139] sm:$0xff] %v95
    %238 = vst [vmem:[%s146 + $0x141] sm:$0xff] %v96
    %239 = vst [vmem:[%s146 + $0x151] sm:$0xff] %v97
    %240 = vst [vmem:[%s146 + $0x159] sm:$0xff] %v98
    %241 = vst [vmem:[%s146 + $0x169] sm:$0xff] %v99
    %242 = vst [vmem:[%s146 + $0x171] sm:$0xff] %v100
    %243 = vst [vmem:[%s146 + $0x1b1] sm:$0xff] %v101
    %244 = vst [vmem:[%s146 + $0x1b9] sm:$0xff] %v102
    %245 = vst [vmem:[%s146 + $0x1c9] sm:$0xff] %v103
    %246 = vst [vmem:[%s146 + $0x1d1] sm:$0xff] %v104
    %247 = vst [vmem:[%s146 + $0x1e1] sm:$0xff] %v105
    %248 = vst [vmem:[%s146 + $0x1e9] sm:$0xff] %v106
    %249 = vst [vmem:[%s146 + $0x1f9] sm:$0xff] %v107
    %250 = vst [vmem:[%s146 + $0x201] sm:$0xff] %v108
    %251 = vst [vmem:[%s146 + $0x211] sm:$0xff] %v109
    %252 = vst [vmem:[%s146 + $0x219] sm:$0xff] %v110
    %253 = vst [vmem:[%s146 + $0x229] sm:$0xff] %v111
    %254 = vst [vmem:[%s146 + $0x231] sm:$0xff] %v112
    %255 = vst [vmem:[%s146 + $0x241] sm:$0xff] %v113
    %256 = vst [vmem:[%s146 + $0x249] sm:$0xff] %v114
    %257 = vst [vmem:[%s146 + $0x259] sm:$0xff] %v115
    %258 = vst [vmem:[%s146 + $0x261] sm:$0xff] %v116
    %259 = vst [vmem:[%s146 + $0x271] sm:$0xff] %v117
    %260 = vst [vmem:[%s146 + $0x279] sm:$0xff] %v118
    %261 = vst [vmem:[%s146 + $0x289] sm:$0xff] %v119
    %262 = vst [vmem:[%s146 + $0x291] sm:$0xff] %v120
    %263 = vst [vmem:[%s146 + $0x2a1] sm:$0xff] %v121
    %264 = vst [vmem:[%s146 + $0x2a9] sm:$0xff] %v122
    %265 = vst [vmem:[%s146 + $0x2b9] sm:$0xff] %v123
    %266 = vst [vmem:[%s146 + $0x2c1] sm:$0xff] %v124
    %267 = vst [vmem:[%s146 + $0x2d1] sm:$0xff] %v125
    %268 = vst [vmem:[%s146 + $0x2d9] sm:$0xff] %v126
    %269 = vst [vmem:[%s146 + $0x2e9] sm:$0xff] %v127
    %270 = vst [vmem:[%s146 + $0x2f1] sm:$0xff] %v128
    %271 = vst [vmem:[%s146 + $0x301] sm:$0xff] %v129
    %272 = vst [vmem:[%s146 + $0x309] sm:$0xff] %v130
    %273 = vst [vmem:[%s146 + $0x319] sm:$0xff] %v131
    %274 = vst [vmem:[%s146 + $0x321] sm:$0xff] %v132
    %v275 = vld [vmem:[#allocation2] sm:$0xff]
    %v276 = vld [vmem:[#allocation2 + $0x8] sm:$0xff]
    %v277 = vld [vmem:[#allocation2 + $0x18] sm:$0xff]
    %v278 = vld [vmem:[#allocation2 + $0x20] sm:$0xff]
    %v279 = vld [vmem:[#allocation2 + $0x30] sm:$0xff]
    %v280 = vld [vmem:[#allocation2 + $0x38] sm:$0xff]
    %v281 = vld [vmem:[#allocation2 + $0x48] sm:$0xff]
    %v282 = vld [vmem:[#allocation2 + $0x50] sm:$0xff]
    %v283 = vld [vmem:[#allocation2 + $0x60] sm:$0xff]
    %v284 = vld [vmem:[#allocation2 + $0x68] sm:$0xff]
    %v285 = vld [vmem:[#allocation2 + $0x78] sm:$0xff]
    %v286 = vld [vmem:[#allocation2 + $0x80] sm:$0xff]
    %v287 = vld [vmem:[#allocation2 + $0x90] sm:$0xff]
    %v288 = vld [vmem:[#allocation2 + $0x98] sm:$0xff]
    %v289 = vld [vmem:[#allocation2 + $0xa8] sm:$0xff]
    %v290 = vld [vmem:[#allocation2 + $0xb0] sm:$0xff]
    %v291 = vld [vmem:[#allocation2 + $0xc0] sm:$0xff]
    %v292 = vld [vmem:[#allocation2 + $0xc8] sm:$0xff]
    %v293 = vld [vmem:[#allocation2 + $0xd8] sm:$0xff]
    %v294 = vld [vmem:[#allocation2 + $0xe0] sm:$0xff]
    %v295 = vld [vmem:[#allocation2 + $0xf0] sm:$0xff]
    %v296 = vld [vmem:[#allocation2 + $0xf8] sm:$0xff]
    %v297 = vld [vmem:[#allocation2 + $0x108] sm:$0xff]
    %v298 = vld [vmem:[#allocation2 + $0x110] sm:$0xff]
    %v299 = vld [vmem:[#allocation2 + $0x120] sm:$0xff]
    %v300 = vld [vmem:[#allocation2 + $0x128] sm:$0xff]
    %v301 = vld [vmem:[#allocation2 + $0x138] sm:$0xff]
    %v302 = vld [vmem:[#allocation2 + $0x140] sm:$0xff]
    %v303 = vld [vmem:[#allocation2 + $0x150] sm:$0xff]
    %v304 = vld [vmem:[#allocation2 + $0x158] sm:$0xff]
    %v305 = vld [vmem:[#allocation2 + $0x168] sm:$0xff]
    %v306 = vld [vmem:[#allocation2 + $0x170] sm:$0xff]
    %v307 = vld [vmem:[#allocation2 + $0x1b0] sm:$0xff]
    %v308 = vld [vmem:[#allocation2 + $0x1b8] sm:$0xff]
    %v309 = vld [vmem:[#allocation2 + $0x1c8] sm:$0xff]
    %v310 = vld [vmem:[#allocation2 + $0x1d0] sm:$0xff]
    %v311 = vld [vmem:[#allocation2 + $0x1e0] sm:$0xff]
    %v312 = vld [vmem:[#allocation2 + $0x1e8] sm:$0xff]
    %v313 = vld [vmem:[#allocation2 + $0x1f8] sm:$0xff]
    %v314 = vld [vmem:[#allocation2 + $0x200] sm:$0xff]
    %v315 = vld [vmem:[#allocation2 + $0x210] sm:$0xff]
    %v316 = vld [vmem:[#allocation2 + $0x218] sm:$0xff]
    %v317 = vld [vmem:[#allocation2 + $0x228] sm:$0xff]
    %v318 = vld [vmem:[#allocation2 + $0x230] sm:$0xff]
    %v319 = vld [vmem:[#allocation2 + $0x240] sm:$0xff]
    %v320 = vld [vmem:[#allocation2 + $0x248] sm:$0xff]
    %v321 = vld [vmem:[#allocation2 + $0x258] sm:$0xff]
    %v322 = vld [vmem:[#allocation2 + $0x260] sm:$0xff]
    %v323 = vld [vmem:[#allocation2 + $0x270] sm:$0xff]
    %v324 = vld [vmem:[#allocation2 + $0x278] sm:$0xff]
    %v325 = vld [vmem:[#allocation2 + $0x288] sm:$0xff]
    %v326 = vld [vmem:[#allocation2 + $0x290] sm:$0xff]
    %v327 = vld [vmem:[#allocation2 + $0x2a0] sm:$0xff]
    %v328 = vld [vmem:[#allocation2 + $0x2a8] sm:$0xff]
    %v329 = vld [vmem:[#allocation2 + $0x2b8] sm:$0xff]
    %v330 = vld [vmem:[#allocation2 + $0x2c0] sm:$0xff]
    %v331 = vld [vmem:[#allocation2 + $0x2d0] sm:$0xff]
    %v332 = vld [vmem:[#allocation2 + $0x2d8] sm:$0xff]
    %v333 = vld [vmem:[#allocation2 + $0x2e8] sm:$0xff]
    %v334 = vld [vmem:[#allocation2 + $0x2f0] sm:$0xff]
    %v335 = vld [vmem:[#allocation2 + $0x300] sm:$0xff]
    %v336 = vld [vmem:[#allocation2 + $0x308] sm:$0xff]
    %v337 = vld [vmem:[#allocation2 + $0x318] sm:$0xff]
    %v338 = vld [vmem:[#allocation2 + $0x320] sm:$0xff]
    %v339 = vpack.c.bf16 %v276, %v275
    %v340 = vpack.c.bf16 %v278, %v277
    %v341 = vpack.c.bf16 %v280, %v279
    %v342 = vpack.c.bf16 %v282, %v281
    %v343 = vpack.c.bf16 %v284, %v283
    %v344 = vpack.c.bf16 %v286, %v285
    %v345 = vpack.c.bf16 %v288, %v287
    %v346 = vpack.c.bf16 %v290, %v289
    %v347 = vpack.c.bf16 %v292, %v291
    %v348 = vpack.c.bf16 %v294, %v293
    %v349 = vpack.c.bf16 %v296, %v295
    %v350 = vpack.c.bf16 %v298, %v297
    %v351 = vpack.c.bf16 %v300, %v299
    %v352 = vpack.c.bf16 %v302, %v301
    %v353 = vpack.c.bf16 %v304, %v303
    %v354 = vpack.c.bf16 %v306, %v305
    %v355 = vpack.c.bf16 %v308, %v307
    %v356 = vpack.c.bf16 %v310, %v309
    %v357 = vpack.c.bf16 %v312, %v311
    %v358 = vpack.c.bf16 %v314, %v313
    %v359 = vpack.c.bf16 %v316, %v315
    %v360 = vpack.c.bf16 %v318, %v317
    %v361 = vpack.c.bf16 %v320, %v319
    %v362 = vpack.c.bf16 %v322, %v321
    %v363 = vpack.c.bf16 %v324, %v323
    %v364 = vpack.c.bf16 %v326, %v325
    %v365 = vpack.c.bf16 %v328, %v327
    %v366 = vpack.c.bf16 %v330, %v329
    %v367 = vpack.c.bf16 %v332, %v331
    %v368 = vpack.c.bf16 %v334, %v333
    %v369 = vpack.c.bf16 %v336, %v335
    %v370 = vpack.c.bf16 %v338, %v337
    %v371 = vld [vmem:[#allocation2 + $0x1] sm:$0xff]
    %v372 = vld [vmem:[#allocation2 + $0x9] sm:$0xff]
    %v373 = vld [vmem:[#allocation2 + $0x19] sm:$0xff]
    %v374 = vld [vmem:[#allocation2 + $0x21] sm:$0xff]
    %v375 = vld [vmem:[#allocation2 + $0x31] sm:$0xff]
    %v376 = vld [vmem:[#allocation2 + $0x39] sm:$0xff]
    %v377 = vld [vmem:[#allocation2 + $0x49] sm:$0xff]
    %v378 = vld [vmem:[#allocation2 + $0x51] sm:$0xff]
    %v379 = vld [vmem:[#allocation2 + $0x61] sm:$0xff]
    %v380 = vld [vmem:[#allocation2 + $0x69] sm:$0xff]
    %v381 = vld [vmem:[#allocation2 + $0x79] sm:$0xff]
    %v382 = vld [vmem:[#allocation2 + $0x81] sm:$0xff]
    %v383 = vld [vmem:[#allocation2 + $0x91] sm:$0xff]
    %v384 = vld [vmem:[#allocation2 + $0x99] sm:$0xff]
    %v385 = vld [vmem:[#allocation2 + $0xa9] sm:$0xff]
    %v386 = vld [vmem:[#allocation2 + $0xb1] sm:$0xff]
    %v387 = vld [vmem:[#allocation2 + $0xc1] sm:$0xff]
    %v388 = vld [vmem:[#allocation2 + $0xc9] sm:$0xff]
    %v389 = vld [vmem:[#allocation2 + $0xd9] sm:$0xff]
    %v390 = vld [vmem:[#allocation2 + $0xe1] sm:$0xff]
    %v391 = vld [vmem:[#allocation2 + $0xf1] sm:$0xff]
    %v392 = vld [vmem:[#allocation2 + $0xf9] sm:$0xff]
    %v393 = vld [vmem:[#allocation2 + $0x109] sm:$0xff]
    %v394 = vld [vmem:[#allocation2 + $0x111] sm:$0xff]
    %v395 = vld [vmem:[#allocation2 + $0x121] sm:$0xff]
    %v396 = vld [vmem:[#allocation2 + $0x129] sm:$0xff]
    %v397 = vld [vmem:[#allocation2 + $0x139] sm:$0xff]
    %v398 = vld [vmem:[#allocation2 + $0x141] sm:$0xff]
    %v399 = vld [vmem:[#allocation2 + $0x151] sm:$0xff]
    %v400 = vld [vmem:[#allocation2 + $0x159] sm:$0xff]
    %v401 = vld [vmem:[#allocation2 + $0x169] sm:$0xff]
    %v402 = vld [vmem:[#allocation2 + $0x171] sm:$0xff]
    %v403 = vld [vmem:[#allocation2 + $0x1b1] sm:$0xff]
    %v404 = vld [vmem:[#allocation2 + $0x1b9] sm:$0xff]
    %v405 = vld [vmem:[#allocation2 + $0x1c9] sm:$0xff]
    %v406 = vld [vmem:[#allocation2 + $0x1d1] sm:$0xff]
    %v407 = vld [vmem:[#allocation2 + $0x1e1] sm:$0xff]
    %v408 = vld [vmem:[#allocation2 + $0x1e9] sm:$0xff]
    %v409 = vld [vmem:[#allocation2 + $0x1f9] sm:$0xff]
    %v410 = vld [vmem:[#allocation2 + $0x201] sm:$0xff]
    %v411 = vld [vmem:[#allocation2 + $0x211] sm:$0xff]
    %v412 = vld [vmem:[#allocation2 + $0x219] sm:$0xff]
    %v413 = vld [vmem:[#allocation2 + $0x229] sm:$0xff]
    %v414 = vld [vmem:[#allocation2 + $0x231] sm:$0xff]
    %v415 = vld [vmem:[#allocation2 + $0x241] sm:$0xff]
    %v416 = vld [vmem:[#allocation2 + $0x249] sm:$0xff]
    %v417 = vld [vmem:[#allocation2 + $0x259] sm:$0xff]
    %v418 = vld [vmem:[#allocation2 + $0x261] sm:$0xff]
    %v419 = vld [vmem:[#allocation2 + $0x271] sm:$0xff]
    %v420 = vld [vmem:[#allocation2 + $0x279] sm:$0xff]
    %v421 = vld [vmem:[#allocation2 + $0x289] sm:$0xff]
    %v422 = vld [vmem:[#allocation2 + $0x291] sm:$0xff]
    %v423 = vld [vmem:[#allocation2 + $0x2a1] sm:$0xff]
    %v424 = vld [vmem:[#allocation2 + $0x2a9] sm:$0xff]
    %v425 = vld [vmem:[#allocation2 + $0x2b9] sm:$0xff]
    %v426 = vld [vmem:[#allocation2 + $0x2c1] sm:$0xff]
    %v427 = vld [vmem:[#allocation2 + $0x2d1] sm:$0xff]
    %v428 = vld [vmem:[#allocation2 + $0x2d9] sm:$0xff]
    %v429 = vld [vmem:[#allocation2 + $0x2e9] sm:$0xff]
    %v430 = vld [vmem:[#allocation2 + $0x2f1] sm:$0xff]
    %v431 = vld [vmem:[#allocation2 + $0x301] sm:$0xff]
    %v432 = vld [vmem:[#allocation2 + $0x309] sm:$0xff]
    %v433 = vld [vmem:[#allocation2 + $0x319] sm:$0xff]
    %v434 = vld [vmem:[#allocation2 + $0x321] sm:$0xff]
    %v435 = vpack.c.bf16 %v372, %v371
    %v436 = vpack.c.bf16 %v374, %v373
    %v437 = vpack.c.bf16 %v376, %v375
    %v438 = vpack.c.bf16 %v378, %v377
    %v439 = vpack.c.bf16 %v380, %v379
    %v440 = vpack.c.bf16 %v382, %v381
    %v441 = vpack.c.bf16 %v384, %v383
    %v442 = vpack.c.bf16 %v386, %v385
    %v443 = vpack.c.bf16 %v388, %v387
    %v444 = vpack.c.bf16 %v390, %v389
    %v445 = vpack.c.bf16 %v392, %v391
    %v446 = vpack.c.bf16 %v394, %v393
    %v447 = vpack.c.bf16 %v396, %v395
    %v448 = vpack.c.bf16 %v398, %v397
    %v449 = vpack.c.bf16 %v400, %v399
    %v450 = vpack.c.bf16 %v402, %v401
    %v451 = vpack.c.bf16 %v404, %v403
    %v452 = vpack.c.bf16 %v406, %v405
    %v453 = vpack.c.bf16 %v408, %v407
    %v454 = vpack.c.bf16 %v410, %v409
    %v455 = vpack.c.bf16 %v412, %v411
    %v456 = vpack.c.bf16 %v414, %v413
    %v457 = vpack.c.bf16 %v416, %v415
    %v458 = vpack.c.bf16 %v418, %v417
    %v459 = vpack.c.bf16 %v420, %v419
    %v460 = vpack.c.bf16 %v422, %v421
    %v461 = vpack.c.bf16 %v424, %v423
    %v462 = vpack.c.bf16 %v426, %v425
    %v463 = vpack.c.bf16 %v428, %v427
    %v464 = vpack.c.bf16 %v430, %v429
    %v465 = vpack.c.bf16 %v432, %v431
    %v466 = vpack.c.bf16 %v434, %v433
    %v467 = vld [vmem:[#allocation2 + $0x2] sm:$0xff]
    %v468 = vld [vmem:[#allocation2 + $0xa] sm:$0xff]
    %v469 = vld [vmem:[#allocation2 + $0x1a] sm:$0xff]
    %v470 = vld [vmem:[#allocation2 + $0x22] sm:$0xff]
    %v471 = vld [vmem:[#allocation2 + $0x32] sm:$0xff]
    %v472 = vld [vmem:[#allocation2 + $0x3a] sm:$0xff]
    %v473 = vld [vmem:[#allocation2 + $0x4a] sm:$0xff]
    %v474 = vld [vmem:[#allocation2 + $0x52] sm:$0xff]
    %v475 = vld [vmem:[#allocation2 + $0x62] sm:$0xff]
    %v476 = vld [vmem:[#allocation2 + $0x6a] sm:$0xff]
    %v477 = vld [vmem:[#allocation2 + $0x7a] sm:$0xff]
    %v478 = vld [vmem:[#allocation2 + $0x82] sm:$0xff]
    %v479 = vld [vmem:[#allocation2 + $0x92] sm:$0xff]
    %v480 = vld [vmem:[#allocation2 + $0x9a] sm:$0xff]
    %v481 = vld [vmem:[#allocation2 + $0xaa] sm:$0xff]
    %v482 = vld [vmem:[#allocation2 + $0xb2] sm:$0xff]
    %v483 = vld [vmem:[#allocation2 + $0xc2] sm:$0xff]
    %v484 = vld [vmem:[#allocation2 + $0xca] sm:$0xff]
    %v485 = vld [vmem:[#allocation2 + $0xda] sm:$0xff]
    %v486 = vld [vmem:[#allocation2 + $0xe2] sm:$0xff]
    %v487 = vld [vmem:[#allocation2 + $0xf2] sm:$0xff]
    %v488 = vld [vmem:[#allocation2 + $0xfa] sm:$0xff]
    %v489 = vld [vmem:[#allocation2 + $0x10a] sm:$0xff]
    %v490 = vld [vmem:[#allocation2 + $0x112] sm:$0xff]
    %v491 = vld [vmem:[#allocation2 + $0x122] sm:$0xff]
    %v492 = vld [vmem:[#allocation2 + $0x12a] sm:$0xff]
    %v493 = vld [vmem:[#allocation2 + $0x13a] sm:$0xff]
    %v494 = vld [vmem:[#allocation2 + $0x142] sm:$0xff]
    %v495 = vld [vmem:[#allocation2 + $0x152] sm:$0xff]
    %v496 = vld [vmem:[#allocation2 + $0x15a] sm:$0xff]
    %v497 = vld [vmem:[#allocation2 + $0x16a] sm:$0xff]
    %v498 = vld [vmem:[#allocation2 + $0x172] sm:$0xff]
    %v499 = vld [vmem:[#allocation2 + $0x1b2] sm:$0xff]
    %v500 = vld [vmem:[#allocation2 + $0x1ba] sm:$0xff]
    %v501 = vld [vmem:[#allocation2 + $0x1ca] sm:$0xff]
    %v502 = vld [vmem:[#allocation2 + $0x1d2] sm:$0xff]
    %v503 = vld [vmem:[#allocation2 + $0x1e2] sm:$0xff]
    %v504 = vld [vmem:[#allocation2 + $0x1ea] sm:$0xff]
    %v505 = vld [vmem:[#allocation2 + $0x1fa] sm:$0xff]
    %v506 = vld [vmem:[#allocation2 + $0x202] sm:$0xff]
    %v507 = vld [vmem:[#allocation2 + $0x212] sm:$0xff]
    %v508 = vld [vmem:[#allocation2 + $0x21a] sm:$0xff]
    %v509 = vld [vmem:[#allocation2 + $0x22a] sm:$0xff]
    %v510 = vld [vmem:[#allocation2 + $0x232] sm:$0xff]
    %v511 = vld [vmem:[#allocation2 + $0x242] sm:$0xff]
    %v512 = vld [vmem:[#allocation2 + $0x24a] sm:$0xff]
    %v513 = vld [vmem:[#allocation2 + $0x25a] sm:$0xff]
    %v514 = vld [vmem:[#allocation2 + $0x262] sm:$0xff]
    %v515 = vld [vmem:[#allocation2 + $0x272] sm:$0xff]
    %v516 = vld [vmem:[#allocation2 + $0x27a] sm:$0xff]
    %v517 = vld [vmem:[#allocation2 + $0x28a] sm:$0xff]
    %v518 = vld [vmem:[#allocation2 + $0x292] sm:$0xff]
    %v519 = vld [vmem:[#allocation2 + $0x2a2] sm:$0xff]
    %v520 = vld [vmem:[#allocation2 + $0x2aa] sm:$0xff]
    %v521 = vld [vmem:[#allocation2 + $0x2ba] sm:$0xff]
    %v522 = vld [vmem:[#allocation2 + $0x2c2] sm:$0xff]
    %v523 = vld [vmem:[#allocation2 + $0x2d2] sm:$0xff]
    %v524 = vld [vmem:[#allocation2 + $0x2da] sm:$0xff]
    %v525 = vld [vmem:[#allocation2 + $0x2ea] sm:$0xff]
    %v526 = vld [vmem:[#allocation2 + $0x2f2] sm:$0xff]
    %v527 = vld [vmem:[#allocation2 + $0x302] sm:$0xff]
    %v528 = vld [vmem:[#allocation2 + $0x30a] sm:$0xff]
    %v529 = vld [vmem:[#allocation2 + $0x31a] sm:$0xff]
    %v530 = vld [vmem:[#allocation2 + $0x322] sm:$0xff]
    %v531 = vpack.c.bf16 %v468, %v467
    %v532 = vpack.c.bf16 %v470, %v469
    %v533 = vpack.c.bf16 %v472, %v471
    %v534 = vpack.c.bf16 %v474, %v473
    %v535 = vpack.c.bf16 %v476, %v475
    %v536 = vpack.c.bf16 %v478, %v477
    %v537 = vpack.c.bf16 %v480, %v479
    %v538 = vpack.c.bf16 %v482, %v481
    %v539 = vpack.c.bf16 %v484, %v483
    %v540 = vpack.c.bf16 %v486, %v485
    %v541 = vpack.c.bf16 %v488, %v487
    %v542 = vpack.c.bf16 %v490, %v489
    %v543 = vpack.c.bf16 %v492, %v491
    %v544 = vpack.c.bf16 %v494, %v493
    %v545 = vpack.c.bf16 %v496, %v495
    %v546 = vpack.c.bf16 %v498, %v497
    %v547 = vpack.c.bf16 %v500, %v499
    %v548 = vpack.c.bf16 %v502, %v501
    %v549 = vpack.c.bf16 %v504, %v503
    %v550 = vpack.c.bf16 %v506, %v505
    %v551 = vpack.c.bf16 %v508, %v507
    %v552 = vpack.c.bf16 %v510, %v509
    %v553 = vpack.c.bf16 %v512, %v511
    %v554 = vpack.c.bf16 %v514, %v513
    %v555 = vpack.c.bf16 %v516, %v515
    %v556 = vpack.c.bf16 %v518, %v517
    %v557 = vpack.c.bf16 %v520, %v519
    %v558 = vpack.c.bf16 %v522, %v521
    %v559 = vpack.c.bf16 %v524, %v523
    %v560 = vpack.c.bf16 %v526, %v525
    %v561 = vpack.c.bf16 %v528, %v527
    %v562 = vpack.c.bf16 %v530, %v529
    %v563 = vld [vmem:[%s146] sm:$0xff]
    %v564 = vld [vmem:[%s146 + $0x8] sm:$0xff]
    %v565 = vld [vmem:[%s146 + $0x18] sm:$0xff]
    %v566 = vld [vmem:[%s146 + $0x20] sm:$0xff]
    %v567 = vld [vmem:[%s146 + $0x30] sm:$0xff]
    %v568 = vld [vmem:[%s146 + $0x38] sm:$0xff]
    %v569 = vld [vmem:[%s146 + $0x48] sm:$0xff]
    %v570 = vld [vmem:[%s146 + $0x50] sm:$0xff]
    %v571 = vld [vmem:[%s146 + $0x60] sm:$0xff]
    %v572 = vld [vmem:[%s146 + $0x68] sm:$0xff]
    %v573 = vld [vmem:[%s146 + $0x78] sm:$0xff]
    %v574 = vld [vmem:[%s146 + $0x80] sm:$0xff]
    %v575 = vld [vmem:[%s146 + $0x90] sm:$0xff]
    %v576 = vld [vmem:[%s146 + $0x98] sm:$0xff]
    %v577 = vld [vmem:[%s146 + $0xa8] sm:$0xff]
    %v578 = vld [vmem:[%s146 + $0xb0] sm:$0xff]
    %v579 = vld [vmem:[%s146 + $0xc0] sm:$0xff]
    %v580 = vld [vmem:[%s146 + $0xc8] sm:$0xff]
    %v581 = vld [vmem:[%s146 + $0xd8] sm:$0xff]
    %v582 = vld [vmem:[%s146 + $0xe0] sm:$0xff]
    %v583 = vld [vmem:[%s146 + $0xf0] sm:$0xff]
    %v584 = vld [vmem:[%s146 + $0xf8] sm:$0xff]
    %v585 = vld [vmem:[%s146 + $0x108] sm:$0xff]
    %v586 = vld [vmem:[%s146 + $0x110] sm:$0xff]
    %v587 = vld [vmem:[%s146 + $0x120] sm:$0xff]
    %v588 = vld [vmem:[%s146 + $0x128] sm:$0xff]
    %v589 = vld [vmem:[%s146 + $0x138] sm:$0xff]
    %v590 = vld [vmem:[%s146 + $0x140] sm:$0xff]
    %v591 = vld [vmem:[%s146 + $0x150] sm:$0xff]
    %v592 = vld [vmem:[%s146 + $0x158] sm:$0xff]
    %v593 = vld [vmem:[%s146 + $0x168] sm:$0xff]
    %v594 = vld [vmem:[%s146 + $0x170] sm:$0xff]
    %v595 = vld [vmem:[%s146 + $0x1b0] sm:$0xff]
    %v596 = vld [vmem:[%s146 + $0x1b8] sm:$0xff]
    %v597 = vld [vmem:[%s146 + $0x1c8] sm:$0xff]
    %v598 = vld [vmem:[%s146 + $0x1d0] sm:$0xff]
    %v599 = vld [vmem:[%s146 + $0x1e0] sm:$0xff]
    %v600 = vld [vmem:[%s146 + $0x1e8] sm:$0xff]
    %v601 = vld [vmem:[%s146 + $0x1f8] sm:$0xff]
    %v602 = vld [vmem:[%s146 + $0x200] sm:$0xff]
    %v603 = vld [vmem:[%s146 + $0x210] sm:$0xff]
    %v604 = vld [vmem:[%s146 + $0x218] sm:$0xff]
    %v605 = vld [vmem:[%s146 + $0x228] sm:$0xff]
    %v606 = vld [vmem:[%s146 + $0x230] sm:$0xff]
    %v607 = vld [vmem:[%s146 + $0x240] sm:$0xff]
    %v608 = vld [vmem:[%s146 + $0x248] sm:$0xff]
    %v609 = vld [vmem:[%s146 + $0x258] sm:$0xff]
    %v610 = vld [vmem:[%s146 + $0x260] sm:$0xff]
    %v611 = vld [vmem:[%s146 + $0x270] sm:$0xff]
    %v612 = vld [vmem:[%s146 + $0x278] sm:$0xff]
    %v613 = vld [vmem:[%s146 + $0x288] sm:$0xff]
    %v614 = vld [vmem:[%s146 + $0x290] sm:$0xff]
    %v615 = vld [vmem:[%s146 + $0x2a0] sm:$0xff]
    %v616 = vld [vmem:[%s146 + $0x2a8] sm:$0xff]
    %v617 = vld [vmem:[%s146 + $0x2b8] sm:$0xff]
    %v618 = vld [vmem:[%s146 + $0x2c0] sm:$0xff]
    %v619 = vld [vmem:[%s146 + $0x2d0] sm:$0xff]
    %v620 = vld [vmem:[%s146 + $0x2d8] sm:$0xff]
    %v621 = vld [vmem:[%s146 + $0x2e8] sm:$0xff]
    %v622 = vld [vmem:[%s146 + $0x2f0] sm:$0xff]
    %v623 = vld [vmem:[%s146 + $0x300] sm:$0xff]
    %v624 = vld [vmem:[%s146 + $0x308] sm:$0xff]
    %v625 = vld [vmem:[%s146 + $0x318] sm:$0xff]
    %v626 = vld [vmem:[%s146 + $0x320] sm:$0xff]
    %v627 = vpack.c.bf16 %v564, %v563
    %v628 = vpack.c.bf16 %v566, %v565
    %v629 = vpack.c.bf16 %v568, %v567
    %v630 = vpack.c.bf16 %v570, %v569
    %v631 = vpack.c.bf16 %v572, %v571
    %v632 = vpack.c.bf16 %v574, %v573
    %v633 = vpack.c.bf16 %v576, %v575
    %v634 = vpack.c.bf16 %v578, %v577
    %v635 = vpack.c.bf16 %v580, %v579
    %v636 = vpack.c.bf16 %v582, %v581
    %v637 = vpack.c.bf16 %v584, %v583
    %v638 = vpack.c.bf16 %v586, %v585
    %v639 = vpack.c.bf16 %v588, %v587
    %v640 = vpack.c.bf16 %v590, %v589
    %v641 = vpack.c.bf16 %v592, %v591
    %v642 = vpack.c.bf16 %v594, %v593
    %v643 = vpack.c.bf16 %v596, %v595
    %v644 = vpack.c.bf16 %v598, %v597
    %v645 = vpack.c.bf16 %v600, %v599
    %v646 = vpack.c.bf16 %v602, %v601
    %v647 = vpack.c.bf16 %v604, %v603
    %v648 = vpack.c.bf16 %v606, %v605
    %v649 = vpack.c.bf16 %v608, %v607
    %v650 = vpack.c.bf16 %v610, %v609
    %v651 = vpack.c.bf16 %v612, %v611
    %v652 = vpack.c.bf16 %v614, %v613
    %v653 = vpack.c.bf16 %v616, %v615
    %v654 = vpack.c.bf16 %v618, %v617
    %v655 = vpack.c.bf16 %v620, %v619
    %v656 = vpack.c.bf16 %v622, %v621
    %v657 = vpack.c.bf16 %v624, %v623
    %v658 = vpack.c.bf16 %v626, %v625
    %v659 = vld [vmem:[%s146 + $0x1] sm:$0xff]
    %v660 = vld [vmem:[%s146 + $0x9] sm:$0xff]
    %v661 = vld [vmem:[%s146 + $0x19] sm:$0xff]
    %v662 = vld [vmem:[%s146 + $0x21] sm:$0xff]
    %v663 = vld [vmem:[%s146 + $0x31] sm:$0xff]
    %v664 = vld [vmem:[%s146 + $0x39] sm:$0xff]
    %v665 = vld [vmem:[%s146 + $0x49] sm:$0xff]
    %v666 = vld [vmem:[%s146 + $0x51] sm:$0xff]
    %v667 = vld [vmem:[%s146 + $0x61] sm:$0xff]
    %v668 = vld [vmem:[%s146 + $0x69] sm:$0xff]
    %v669 = vld [vmem:[%s146 + $0x79] sm:$0xff]
    %v670 = vld [vmem:[%s146 + $0x81] sm:$0xff]
    %v671 = vld [vmem:[%s146 + $0x91] sm:$0xff]
    %v672 = vld [vmem:[%s146 + $0x99] sm:$0xff]
    %v673 = vld [vmem:[%s146 + $0xa9] sm:$0xff]
    %v674 = vld [vmem:[%s146 + $0xb1] sm:$0xff]
    %v675 = vld [vmem:[%s146 + $0xc1] sm:$0xff]
    %v676 = vld [vmem:[%s146 + $0xc9] sm:$0xff]
    %v677 = vld [vmem:[%s146 + $0xd9] sm:$0xff]
    %v678 = vld [vmem:[%s146 + $0xe1] sm:$0xff]
    %v679 = vld [vmem:[%s146 + $0xf1] sm:$0xff]
    %v680 = vld [vmem:[%s146 + $0xf9] sm:$0xff]
    %v681 = vld [vmem:[%s146 + $0x109] sm:$0xff]
    %v682 = vld [vmem:[%s146 + $0x111] sm:$0xff]
    %v683 = vld [vmem:[%s146 + $0x121] sm:$0xff]
    %v684 = vld [vmem:[%s146 + $0x129] sm:$0xff]
    %v685 = vld [vmem:[%s146 + $0x139] sm:$0xff]
    %v686 = vld [vmem:[%s146 + $0x141] sm:$0xff]
    %v687 = vld [vmem:[%s146 + $0x151] sm:$0xff]
    %v688 = vld [vmem:[%s146 + $0x159] sm:$0xff]
    %v689 = vld [vmem:[%s146 + $0x169] sm:$0xff]
    %v690 = vld [vmem:[%s146 + $0x171] sm:$0xff]
    %v691 = vld [vmem:[%s146 + $0x1b1] sm:$0xff]
    %v692 = vld [vmem:[%s146 + $0x1b9] sm:$0xff]
    %v693 = vld [vmem:[%s146 + $0x1c9] sm:$0xff]
    %v694 = vld [vmem:[%s146 + $0x1d1] sm:$0xff]
    %v695 = vld [vmem:[%s146 + $0x1e1] sm:$0xff]
    %v696 = vld [vmem:[%s146 + $0x1e9] sm:$0xff]
    %v697 = vld [vmem:[%s146 + $0x1f9] sm:$0xff]
    %v698 = vld [vmem:[%s146 + $0x201] sm:$0xff]
    %v699 = vld [vmem:[%s146 + $0x211] sm:$0xff]
    %v700 = vld [vmem:[%s146 + $0x219] sm:$0xff]
    %v701 = vld [vmem:[%s146 + $0x229] sm:$0xff]
    %v702 = vld [vmem:[%s146 + $0x231] sm:$0xff]
    %v703 = vld [vmem:[%s146 + $0x241] sm:$0xff]
    %v704 = vld [vmem:[%s146 + $0x249] sm:$0xff]
    %v705 = vld [vmem:[%s146 + $0x259] sm:$0xff]
    %v706 = vld [vmem:[%s146 + $0x261] sm:$0xff]
    %v707 = vld [vmem:[%s146 + $0x271] sm:$0xff]
    %v708 = vld [vmem:[%s146 + $0x279] sm:$0xff]
    %v709 = vld [vmem:[%s146 + $0x289] sm:$0xff]
    %v710 = vld [vmem:[%s146 + $0x291] sm:$0xff]
    %v711 = vld [vmem:[%s146 + $0x2a1] sm:$0xff]
    %v712 = vld [vmem:[%s146 + $0x2a9] sm:$0xff]
    %v713 = vld [vmem:[%s146 + $0x2b9] sm:$0xff]
    %v714 = vld [vmem:[%s146 + $0x2c1] sm:$0xff]
    %v715 = vld [vmem:[%s146 + $0x2d1] sm:$0xff]
    %v716 = vld [vmem:[%s146 + $0x2d9] sm:$0xff]
    %v717 = vld [vmem:[%s146 + $0x2e9] sm:$0xff]
    %v718 = vld [vmem:[%s146 + $0x2f1] sm:$0xff]
    %v719 = vld [vmem:[%s146 + $0x301] sm:$0xff]
    %v720 = vld [vmem:[%s146 + $0x309] sm:$0xff]
    %v721 = vld [vmem:[%s146 + $0x319] sm:$0xff]
    %v722 = vld [vmem:[%s146 + $0x321] sm:$0xff]
    %v723 = vpack.c.bf16 %v660, %v659
    %v724 = vpack.c.bf16 %v662, %v661
    %v725 = vpack.c.bf16 %v664, %v663
    %v726 = vpack.c.bf16 %v666, %v665
    %v727 = vpack.c.bf16 %v668, %v667
    %v728 = vpack.c.bf16 %v670, %v669
    %v729 = vpack.c.bf16 %v672, %v671
    %v730 = vpack.c.bf16 %v674, %v673
    %v731 = vpack.c.bf16 %v676, %v675
    %v732 = vpack.c.bf16 %v678, %v677
    %v733 = vpack.c.bf16 %v680, %v679
    %v734 = vpack.c.bf16 %v682, %v681
    %v735 = vpack.c.bf16 %v684, %v683
    %v736 = vpack.c.bf16 %v686, %v685
    %v737 = vpack.c.bf16 %v688, %v687
    %v738 = vpack.c.bf16 %v690, %v689
    %v739 = vpack.c.bf16 %v692, %v691
    %v740 = vpack.c.bf16 %v694, %v693
    %v741 = vpack.c.bf16 %v696, %v695
    %v742 = vpack.c.bf16 %v698, %v697
    %v743 = vpack.c.bf16 %v700, %v699
    %v744 = vpack.c.bf16 %v702, %v701
    %v745 = vpack.c.bf16 %v704, %v703
    %v746 = vpack.c.bf16 %v706, %v705
    %v747 = vpack.c.bf16 %v708, %v707
    %v748 = vpack.c.bf16 %v710, %v709
    %v749 = vpack.c.bf16 %v712, %v711
    %v750 = vpack.c.bf16 %v714, %v713
    %v751 = vpack.c.bf16 %v716, %v715
    %v752 = vpack.c.bf16 %v718, %v717
    %v753 = vpack.c.bf16 %v720, %v719
    %v754 = vpack.c.bf16 %v722, %v721
    %v755 = vld [vmem:[%s146 + $0x2] sm:$0xff]
    %v756 = vld [vmem:[%s146 + $0xa] sm:$0xff]
    %v757 = vld [vmem:[%s146 + $0x1a] sm:$0xff]
    %v758 = vld [vmem:[%s146 + $0x22] sm:$0xff]
    %v759 = vld [vmem:[%s146 + $0x32] sm:$0xff]
    %v760 = vld [vmem:[%s146 + $0x3a] sm:$0xff]
    %v761 = vld [vmem:[%s146 + $0x4a] sm:$0xff]
    %v762 = vld [vmem:[%s146 + $0x52] sm:$0xff]
    %v763 = vld [vmem:[%s146 + $0x62] sm:$0xff]
    %v764 = vld [vmem:[%s146 + $0x6a] sm:$0xff]
    %v765 = vld [vmem:[%s146 + $0x7a] sm:$0xff]
    %v766 = vld [vmem:[%s146 + $0x82] sm:$0xff]
    %v767 = vld [vmem:[%s146 + $0x92] sm:$0xff]
    %v768 = vld [vmem:[%s146 + $0x9a] sm:$0xff]
    %v769 = vld [vmem:[%s146 + $0xaa] sm:$0xff]
    %v770 = vld [vmem:[%s146 + $0xb2] sm:$0xff]
    %v771 = vld [vmem:[%s146 + $0xc2] sm:$0xff]
    %v772 = vld [vmem:[%s146 + $0xca] sm:$0xff]
    %v773 = vld [vmem:[%s146 + $0xda] sm:$0xff]
    %v774 = vld [vmem:[%s146 + $0xe2] sm:$0xff]
    %v775 = vld [vmem:[%s146 + $0xf2] sm:$0xff]
    %v776 = vld [vmem:[%s146 + $0xfa] sm:$0xff]
    %v777 = vld [vmem:[%s146 + $0x10a] sm:$0xff]
    %v778 = vld [vmem:[%s146 + $0x112] sm:$0xff]
    %v779 = vld [vmem:[%s146 + $0x122] sm:$0xff]
    %v780 = vld [vmem:[%s146 + $0x12a] sm:$0xff]
    %v781 = vld [vmem:[%s146 + $0x13a] sm:$0xff]
    %v782 = vld [vmem:[%s146 + $0x142] sm:$0xff]
    %v783 = vld [vmem:[%s146 + $0x152] sm:$0xff]
    %v784 = vld [vmem:[%s146 + $0x15a] sm:$0xff]
    %v785 = vld [vmem:[%s146 + $0x16a] sm:$0xff]
    %v786 = vld [vmem:[%s146 + $0x172] sm:$0xff]
    %v787 = vld [vmem:[%s146 + $0x1b2] sm:$0xff]
    %v788 = vld [vmem:[%s146 + $0x1ba] sm:$0xff]
    %v789 = vld [vmem:[%s146 + $0x1ca] sm:$0xff]
    %v790 = vld [vmem:[%s146 + $0x1d2] sm:$0xff]
    %v791 = vld [vmem:[%s146 + $0x1e2] sm:$0xff]
    %v792 = vld [vmem:[%s146 + $0x1ea] sm:$0xff]
    %v793 = vld [vmem:[%s146 + $0x1fa] sm:$0xff]
    %v794 = vld [vmem:[%s146 + $0x202] sm:$0xff]
    %v795 = vld [vmem:[%s146 + $0x212] sm:$0xff]
    %v796 = vld [vmem:[%s146 + $0x21a] sm:$0xff]
    %v797 = vld [vmem:[%s146 + $0x22a] sm:$0xff]
    %v798 = vld [vmem:[%s146 + $0x232] sm:$0xff]
    %v799 = vld [vmem:[%s146 + $0x242] sm:$0xff]
    %v800 = vld [vmem:[%s146 + $0x24a] sm:$0xff]
    %v801 = vld [vmem:[%s146 + $0x25a] sm:$0xff]
    %v802 = vld [vmem:[%s146 + $0x262] sm:$0xff]
    %v803 = vld [vmem:[%s146 + $0x272] sm:$0xff]
    %v804 = vld [vmem:[%s146 + $0x27a] sm:$0xff]
    %v805 = vld [vmem:[%s146 + $0x28a] sm:$0xff]
    %v806 = vld [vmem:[%s146 + $0x292] sm:$0xff]
    %v807 = vld [vmem:[%s146 + $0x2a2] sm:$0xff]
    %v808 = vld [vmem:[%s146 + $0x2aa] sm:$0xff]
    %v809 = vld [vmem:[%s146 + $0x2ba] sm:$0xff]
    %v810 = vld [vmem:[%s146 + $0x2c2] sm:$0xff]
    %v811 = vld [vmem:[%s146 + $0x2d2] sm:$0xff]
    %v812 = vld [vmem:[%s146 + $0x2da] sm:$0xff]
    %v813 = vld [vmem:[%s146 + $0x2ea] sm:$0xff]
    %v814 = vld [vmem:[%s146 + $0x2f2] sm:$0xff]
    %v815 = vld [vmem:[%s146 + $0x302] sm:$0xff]
    %v816 = vld [vmem:[%s146 + $0x30a] sm:$0xff]
    %v817 = vld [vmem:[%s146 + $0x31a] sm:$0xff]
    %v818 = vld [vmem:[%s146 + $0x322] sm:$0xff]
    %v819 = vpack.c.bf16 %v756, %v755
    %v820 = vpack.c.bf16 %v758, %v757
    %v821 = vpack.c.bf16 %v760, %v759
    %v822 = vpack.c.bf16 %v762, %v761
    %v823 = vpack.c.bf16 %v764, %v763
    %v824 = vpack.c.bf16 %v766, %v765
    %v825 = vpack.c.bf16 %v768, %v767
    %v826 = vpack.c.bf16 %v770, %v769
    %v827 = vpack.c.bf16 %v772, %v771
    %v828 = vpack.c.bf16 %v774, %v773
    %v829 = vpack.c.bf16 %v776, %v775
    %v830 = vpack.c.bf16 %v778, %v777
    %v831 = vpack.c.bf16 %v780, %v779
    %v832 = vpack.c.bf16 %v782, %v781
    %v833 = vpack.c.bf16 %v784, %v783
    %v834 = vpack.c.bf16 %v786, %v785
    %v835 = vpack.c.bf16 %v788, %v787
    %v836 = vpack.c.bf16 %v790, %v789
    %v837 = vpack.c.bf16 %v792, %v791
    %v838 = vpack.c.bf16 %v794, %v793
    %v839 = vpack.c.bf16 %v796, %v795
    %v840 = vpack.c.bf16 %v798, %v797
    %v841 = vpack.c.bf16 %v800, %v799
    %v842 = vpack.c.bf16 %v802, %v801
    %v843 = vpack.c.bf16 %v804, %v803
    %v844 = vpack.c.bf16 %v806, %v805
    %v845 = vpack.c.bf16 %v808, %v807
    %v846 = vpack.c.bf16 %v810, %v809
    %v847 = vpack.c.bf16 %v812, %v811
    %v848 = vpack.c.bf16 %v814, %v813
    %v849 = vpack.c.bf16 %v816, %v815
    %v850 = vpack.c.bf16 %v818, %v817
    %s851 = scalar_lea.vmem [#allocation2], 48
    %v852 = vld [vmem:[%s851] sm:$0xff]
    %v853 = vld [vmem:[%s851 + $0x8] sm:$0xff]
    %v854 = vld [vmem:[%s851 + $0x18] sm:$0xff]
    %v855 = vld [vmem:[%s851 + $0x20] sm:$0xff]
    %v856 = vld [vmem:[%s851 + $0x30] sm:$0xff]
    %v857 = vld [vmem:[%s851 + $0x38] sm:$0xff]
    %v858 = vld [vmem:[%s851 + $0x48] sm:$0xff]
    %v859 = vld [vmem:[%s851 + $0x50] sm:$0xff]
    %v860 = vld [vmem:[%s851 + $0x60] sm:$0xff]
    %v861 = vld [vmem:[%s851 + $0x68] sm:$0xff]
    %v862 = vld [vmem:[%s851 + $0x78] sm:$0xff]
    %v863 = vld [vmem:[%s851 + $0x80] sm:$0xff]
    %v864 = vld [vmem:[%s851 + $0x90] sm:$0xff]
    %v865 = vld [vmem:[%s851 + $0x98] sm:$0xff]
    %v866 = vld [vmem:[%s851 + $0xa8] sm:$0xff]
    %v867 = vld [vmem:[%s851 + $0xb0] sm:$0xff]
    %v868 = vld [vmem:[%s851 + $0xc0] sm:$0xff]
    %v869 = vld [vmem:[%s851 + $0xc8] sm:$0xff]
    %v870 = vld [vmem:[%s851 + $0xd8] sm:$0xff]
    %v871 = vld [vmem:[%s851 + $0xe0] sm:$0xff]
    %v872 = vld [vmem:[%s851 + $0xf0] sm:$0xff]
    %v873 = vld [vmem:[%s851 + $0xf8] sm:$0xff]
    %v874 = vld [vmem:[%s851 + $0x108] sm:$0xff]
    %v875 = vld [vmem:[%s851 + $0x110] sm:$0xff]
    %v876 = vld [vmem:[%s851 + $0x120] sm:$0xff]
    %v877 = vld [vmem:[%s851 + $0x128] sm:$0xff]
    %v878 = vld [vmem:[%s851 + $0x138] sm:$0xff]
    %v879 = vld [vmem:[%s851 + $0x140] sm:$0xff]
    %v880 = vld [vmem:[%s851 + $0x150] sm:$0xff]
    %v881 = vld [vmem:[%s851 + $0x158] sm:$0xff]
    %v882 = vld [vmem:[%s851 + $0x168] sm:$0xff]
    %v883 = vld [vmem:[%s851 + $0x170] sm:$0xff]
    %v884 = vld [vmem:[%s851 + $0x1b0] sm:$0xff]
    %v885 = vld [vmem:[%s851 + $0x1b8] sm:$0xff]
    %v886 = vld [vmem:[%s851 + $0x1c8] sm:$0xff]
    %v887 = vld [vmem:[%s851 + $0x1d0] sm:$0xff]
    %v888 = vld [vmem:[%s851 + $0x1e0] sm:$0xff]
    %v889 = vld [vmem:[%s851 + $0x1e8] sm:$0xff]
    %v890 = vld [vmem:[%s851 + $0x1f8] sm:$0xff]
    %v891 = vld [vmem:[%s851 + $0x200] sm:$0xff]
    %v892 = vld [vmem:[%s851 + $0x210] sm:$0xff]
    %v893 = vld [vmem:[%s851 + $0x218] sm:$0xff]
    %v894 = vld [vmem:[%s851 + $0x228] sm:$0xff]
    %v895 = vld [vmem:[%s851 + $0x230] sm:$0xff]
    %v896 = vld [vmem:[%s851 + $0x240] sm:$0xff]
    %v897 = vld [vmem:[%s851 + $0x248] sm:$0xff]
    %v898 = vld [vmem:[%s851 + $0x258] sm:$0xff]
    %v899 = vld [vmem:[%s851 + $0x260] sm:$0xff]
    %v900 = vld [vmem:[%s851 + $0x270] sm:$0xff]
    %v901 = vld [vmem:[%s851 + $0x278] sm:$0xff]
    %v902 = vld [vmem:[%s851 + $0x288] sm:$0xff]
    %v903 = vld [vmem:[%s851 + $0x290] sm:$0xff]
    %v904 = vld [vmem:[%s851 + $0x2a0] sm:$0xff]
    %v905 = vld [vmem:[%s851 + $0x2a8] sm:$0xff]
    %v906 = vld [vmem:[%s851 + $0x2b8] sm:$0xff]
    %v907 = vld [vmem:[%s851 + $0x2c0] sm:$0xff]
    %v908 = vld [vmem:[%s851 + $0x2d0] sm:$0xff]
    %v909 = vld [vmem:[%s851 + $0x2d8] sm:$0xff]
    %v910 = vld [vmem:[%s851 + $0x2e8] sm:$0xff]
    %v911 = vld [vmem:[%s851 + $0x2f0] sm:$0xff]
    %v912 = vld [vmem:[%s851 + $0x300] sm:$0xff]
    %v913 = vld [vmem:[%s851 + $0x308] sm:$0xff]
    %v914 = vld [vmem:[%s851 + $0x318] sm:$0xff]
    %v915 = vld [vmem:[%s851 + $0x320] sm:$0xff]
    %v916 = vpack.c.bf16 %v853, %v852
    %v917 = vpack.c.bf16 %v855, %v854
    %v918 = vpack.c.bf16 %v857, %v856
    %v919 = vpack.c.bf16 %v859, %v858
    %v920 = vpack.c.bf16 %v861, %v860
    %v921 = vpack.c.bf16 %v863, %v862
    %v922 = vpack.c.bf16 %v865, %v864
    %v923 = vpack.c.bf16 %v867, %v866
    %v924 = vpack.c.bf16 %v869, %v868
    %v925 = vpack.c.bf16 %v871, %v870
    %v926 = vpack.c.bf16 %v873, %v872
    %v927 = vpack.c.bf16 %v875, %v874
    %v928 = vpack.c.bf16 %v877, %v876
    %v929 = vpack.c.bf16 %v879, %v878
    %v930 = vpack.c.bf16 %v881, %v880
    %v931 = vpack.c.bf16 %v883, %v882
    %v932 = vpack.c.bf16 %v885, %v884
    %v933 = vpack.c.bf16 %v887, %v886
    %v934 = vpack.c.bf16 %v889, %v888
    %v935 = vpack.c.bf16 %v891, %v890
    %v936 = vpack.c.bf16 %v893, %v892
    %v937 = vpack.c.bf16 %v895, %v894
    %v938 = vpack.c.bf16 %v897, %v896
    %v939 = vpack.c.bf16 %v899, %v898
    %v940 = vpack.c.bf16 %v901, %v900
    %v941 = vpack.c.bf16 %v903, %v902
    %v942 = vpack.c.bf16 %v905, %v904
    %v943 = vpack.c.bf16 %v907, %v906
    %v944 = vpack.c.bf16 %v909, %v908
    %v945 = vpack.c.bf16 %v911, %v910
    %v946 = vpack.c.bf16 %v913, %v912
    %v947 = vpack.c.bf16 %v915, %v914
    %v948 = vld [vmem:[%s851 + $0x1] sm:$0xff]
    %v949 = vld [vmem:[%s851 + $0x9] sm:$0xff]
    %v950 = vld [vmem:[%s851 + $0x19] sm:$0xff]
    %v951 = vld [vmem:[%s851 + $0x21] sm:$0xff]
    %v952 = vld [vmem:[%s851 + $0x31] sm:$0xff]
    %v953 = vld [vmem:[%s851 + $0x39] sm:$0xff]
    %v954 = vld [vmem:[%s851 + $0x49] sm:$0xff]
    %v955 = vld [vmem:[%s851 + $0x51] sm:$0xff]
    %v956 = vld [vmem:[%s851 + $0x61] sm:$0xff]
    %v957 = vld [vmem:[%s851 + $0x69] sm:$0xff]
    %v958 = vld [vmem:[%s851 + $0x79] sm:$0xff]
    %v959 = vld [vmem:[%s851 + $0x81] sm:$0xff]
    %v960 = vld [vmem:[%s851 + $0x91] sm:$0xff]
    %v961 = vld [vmem:[%s851 + $0x99] sm:$0xff]
    %v962 = vld [vmem:[%s851 + $0xa9] sm:$0xff]
    %v963 = vld [vmem:[%s851 + $0xb1] sm:$0xff]
    %v964 = vld [vmem:[%s851 + $0xc1] sm:$0xff]
    %v965 = vld [vmem:[%s851 + $0xc9] sm:$0xff]
    %v966 = vld [vmem:[%s851 + $0xd9] sm:$0xff]
    %v967 = vld [vmem:[%s851 + $0xe1] sm:$0xff]
    %v968 = vld [vmem:[%s851 + $0xf1] sm:$0xff]
    %v969 = vld [vmem:[%s851 + $0xf9] sm:$0xff]
    %v970 = vld [vmem:[%s851 + $0x109] sm:$0xff]
    %v971 = vld [vmem:[%s851 + $0x111] sm:$0xff]
    %v972 = vld [vmem:[%s851 + $0x121] sm:$0xff]
    %v973 = vld [vmem:[%s851 + $0x129] sm:$0xff]
    %v974 = vld [vmem:[%s851 + $0x139] sm:$0xff]
    %v975 = vld [vmem:[%s851 + $0x141] sm:$0xff]
    %v976 = vld [vmem:[%s851 + $0x151] sm:$0xff]
    %v977 = vld [vmem:[%s851 + $0x159] sm:$0xff]
    %v978 = vld [vmem:[%s851 + $0x169] sm:$0xff]
    %v979 = vld [vmem:[%s851 + $0x171] sm:$0xff]
    %v980 = vld [vmem:[%s851 + $0x1b1] sm:$0xff]
    %v981 = vld [vmem:[%s851 + $0x1b9] sm:$0xff]
    %v982 = vld [vmem:[%s851 + $0x1c9] sm:$0xff]
    %v983 = vld [vmem:[%s851 + $0x1d1] sm:$0xff]
    %v984 = vld [vmem:[%s851 + $0x1e1] sm:$0xff]
    %v985 = vld [vmem:[%s851 + $0x1e9] sm:$0xff]
    %v986 = vld [vmem:[%s851 + $0x1f9] sm:$0xff]
    %v987 = vld [vmem:[%s851 + $0x201] sm:$0xff]
    %v988 = vld [vmem:[%s851 + $0x211] sm:$0xff]
    %v989 = vld [vmem:[%s851 + $0x219] sm:$0xff]
    %v990 = vld [vmem:[%s851 + $0x229] sm:$0xff]
    %v991 = vld [vmem:[%s851 + $0x231] sm:$0xff]
    %v992 = vld [vmem:[%s851 + $0x241] sm:$0xff]
    %v993 = vld [vmem:[%s851 + $0x249] sm:$0xff]
    %v994 = vld [vmem:[%s851 + $0x259] sm:$0xff]
    %v995 = vld [vmem:[%s851 + $0x261] sm:$0xff]
    %v996 = vld [vmem:[%s851 + $0x271] sm:$0xff]
    %v997 = vld [vmem:[%s851 + $0x279] sm:$0xff]
    %v998 = vld [vmem:[%s851 + $0x289] sm:$0xff]
    %v999 = vld [vmem:[%s851 + $0x291] sm:$0xff]
    %v1000 = vld [vmem:[%s851 + $0x2a1] sm:$0xff]
    %v1001 = vld [vmem:[%s851 + $0x2a9] sm:$0xff]
    %v1002 = vld [vmem:[%s851 + $0x2b9] sm:$0xff]
    %v1003 = vld [vmem:[%s851 + $0x2c1] sm:$0xff]
    %v1004 = vld [vmem:[%s851 + $0x2d1] sm:$0xff]
    %v1005 = vld [vmem:[%s851 + $0x2d9] sm:$0xff]
    %v1006 = vld [vmem:[%s851 + $0x2e9] sm:$0xff]
    %v1007 = vld [vmem:[%s851 + $0x2f1] sm:$0xff]
    %v1008 = vld [vmem:[%s851 + $0x301] sm:$0xff]
    %v1009 = vld [vmem:[%s851 + $0x309] sm:$0xff]
    %v1010 = vld [vmem:[%s851 + $0x319] sm:$0xff]
    %v1011 = vld [vmem:[%s851 + $0x321] sm:$0xff]
    %v1012 = vpack.c.bf16 %v949, %v948
    %v1013 = vpack.c.bf16 %v951, %v950
    %v1014 = vpack.c.bf16 %v953, %v952
    %v1015 = vpack.c.bf16 %v955, %v954
    %v1016 = vpack.c.bf16 %v957, %v956
    %v1017 = vpack.c.bf16 %v959, %v958
    %v1018 = vpack.c.bf16 %v961, %v960
    %v1019 = vpack.c.bf16 %v963, %v962
    %v1020 = vpack.c.bf16 %v965, %v964
    %v1021 = vpack.c.bf16 %v967, %v966
    %v1022 = vpack.c.bf16 %v969, %v968
    %v1023 = vpack.c.bf16 %v971, %v970
    %v1024 = vpack.c.bf16 %v973, %v972
    %v1025 = vpack.c.bf16 %v975, %v974
    %v1026 = vpack.c.bf16 %v977, %v976
    %v1027 = vpack.c.bf16 %v979, %v978
    %v1028 = vpack.c.bf16 %v981, %v980
    %v1029 = vpack.c.bf16 %v983, %v982
    %v1030 = vpack.c.bf16 %v985, %v984
    %v1031 = vpack.c.bf16 %v987, %v986
    %v1032 = vpack.c.bf16 %v989, %v988
    %v1033 = vpack.c.bf16 %v991, %v990
    %v1034 = vpack.c.bf16 %v993, %v992
    %v1035 = vpack.c.bf16 %v995, %v994
    %v1036 = vpack.c.bf16 %v997, %v996
    %v1037 = vpack.c.bf16 %v999, %v998
    %v1038 = vpack.c.bf16 %v1001, %v1000
    %v1039 = vpack.c.bf16 %v1003, %v1002
    %v1040 = vpack.c.bf16 %v1005, %v1004
    %v1041 = vpack.c.bf16 %v1007, %v1006
    %v1042 = vpack.c.bf16 %v1009, %v1008
    %v1043 = vpack.c.bf16 %v1011, %v1010
    %v1044 = vld [vmem:[%s851 + $0x2] sm:$0xff]
    %v1045 = vld [vmem:[%s851 + $0xa] sm:$0xff]
    %v1046 = vld [vmem:[%s851 + $0x1a] sm:$0xff]
    %v1047 = vld [vmem:[%s851 + $0x22] sm:$0xff]
    %v1048 = vld [vmem:[%s851 + $0x32] sm:$0xff]
    %v1049 = vld [vmem:[%s851 + $0x3a] sm:$0xff]
    %v1050 = vld [vmem:[%s851 + $0x4a] sm:$0xff]
    %v1051 = vld [vmem:[%s851 + $0x52] sm:$0xff]
    %v1052 = vld [vmem:[%s851 + $0x62] sm:$0xff]
    %v1053 = vld [vmem:[%s851 + $0x6a] sm:$0xff]
    %v1054 = vld [vmem:[%s851 + $0x7a] sm:$0xff]
    %v1055 = vld [vmem:[%s851 + $0x82] sm:$0xff]
    %v1056 = vld [vmem:[%s851 + $0x92] sm:$0xff]
    %v1057 = vld [vmem:[%s851 + $0x9a] sm:$0xff]
    %v1058 = vld [vmem:[%s851 + $0xaa] sm:$0xff]
    %v1059 = vld [vmem:[%s851 + $0xb2] sm:$0xff]
    %v1060 = vld [vmem:[%s851 + $0xc2] sm:$0xff]
    %v1061 = vld [vmem:[%s851 + $0xca] sm:$0xff]
    %v1062 = vld [vmem:[%s851 + $0xda] sm:$0xff]
    %v1063 = vld [vmem:[%s851 + $0xe2] sm:$0xff]
    %v1064 = vld [vmem:[%s851 + $0xf2] sm:$0xff]
    %v1065 = vld [vmem:[%s851 + $0xfa] sm:$0xff]
    %v1066 = vld [vmem:[%s851 + $0x10a] sm:$0xff]
    %v1067 = vld [vmem:[%s851 + $0x112] sm:$0xff]
    %v1068 = vld [vmem:[%s851 + $0x122] sm:$0xff]
    %v1069 = vld [vmem:[%s851 + $0x12a] sm:$0xff]
    %v1070 = vld [vmem:[%s851 + $0x13a] sm:$0xff]
    %v1071 = vld [vmem:[%s851 + $0x142] sm:$0xff]
    %v1072 = vld [vmem:[%s851 + $0x152] sm:$0xff]
    %v1073 = vld [vmem:[%s851 + $0x15a] sm:$0xff]
    %v1074 = vld [vmem:[%s851 + $0x16a] sm:$0xff]
    %v1075 = vld [vmem:[%s851 + $0x172] sm:$0xff]
    %v1076 = vld [vmem:[%s851 + $0x1b2] sm:$0xff]
    %v1077 = vld [vmem:[%s851 + $0x1ba] sm:$0xff]
    %v1078 = vld [vmem:[%s851 + $0x1ca] sm:$0xff]
    %v1079 = vld [vmem:[%s851 + $0x1d2] sm:$0xff]
    %v1080 = vld [vmem:[%s851 + $0x1e2] sm:$0xff]
    %v1081 = vld [vmem:[%s851 + $0x1ea] sm:$0xff]
    %v1082 = vld [vmem:[%s851 + $0x1fa] sm:$0xff]
    %v1083 = vld [vmem:[%s851 + $0x202] sm:$0xff]
    %v1084 = vld [vmem:[%s851 + $0x212] sm:$0xff]
    %v1085 = vld [vmem:[%s851 + $0x21a] sm:$0xff]
    %v1086 = vld [vmem:[%s851 + $0x22a] sm:$0xff]
    %v1087 = vld [vmem:[%s851 + $0x232] sm:$0xff]
    %v1088 = vld [vmem:[%s851 + $0x242] sm:$0xff]
    %v1089 = vld [vmem:[%s851 + $0x24a] sm:$0xff]
    %v1090 = vld [vmem:[%s851 + $0x25a] sm:$0xff]
    %v1091 = vld [vmem:[%s851 + $0x262] sm:$0xff]
    %v1092 = vld [vmem:[%s851 + $0x272] sm:$0xff]
    %v1093 = vld [vmem:[%s851 + $0x27a] sm:$0xff]
    %v1094 = vld [vmem:[%s851 + $0x28a] sm:$0xff]
    %v1095 = vld [vmem:[%s851 + $0x292] sm:$0xff]
    %v1096 = vld [vmem:[%s851 + $0x2a2] sm:$0xff]
    %v1097 = vld [vmem:[%s851 + $0x2aa] sm:$0xff]
    %v1098 = vld [vmem:[%s851 + $0x2ba] sm:$0xff]
    %v1099 = vld [vmem:[%s851 + $0x2c2] sm:$0xff]
    %v1100 = vld [vmem:[%s851 + $0x2d2] sm:$0xff]
    %v1101 = vld [vmem:[%s851 + $0x2da] sm:$0xff]
    %v1102 = vld [vmem:[%s851 + $0x2ea] sm:$0xff]
    %v1103 = vld [vmem:[%s851 + $0x2f2] sm:$0xff]
    %v1104 = vld [vmem:[%s851 + $0x302] sm:$0xff]
    %v1105 = vld [vmem:[%s851 + $0x30a] sm:$0xff]
    %v1106 = vld [vmem:[%s851 + $0x31a] sm:$0xff]
    %v1107 = vld [vmem:[%s851 + $0x322] sm:$0xff]
    %v1108 = vpack.c.bf16 %v1045, %v1044
    %v1109 = vpack.c.bf16 %v1047, %v1046
    %v1110 = vpack.c.bf16 %v1049, %v1048
    %v1111 = vpack.c.bf16 %v1051, %v1050
    %v1112 = vpack.c.bf16 %v1053, %v1052
    %v1113 = vpack.c.bf16 %v1055, %v1054
    %v1114 = vpack.c.bf16 %v1057, %v1056
    %v1115 = vpack.c.bf16 %v1059, %v1058
    %v1116 = vpack.c.bf16 %v1061, %v1060
    %v1117 = vpack.c.bf16 %v1063, %v1062
    %v1118 = vpack.c.bf16 %v1065, %v1064
    %v1119 = vpack.c.bf16 %v1067, %v1066
    %v1120 = vpack.c.bf16 %v1069, %v1068
    %v1121 = vpack.c.bf16 %v1071, %v1070
    %v1122 = vpack.c.bf16 %v1073, %v1072
    %v1123 = vpack.c.bf16 %v1075, %v1074
    %v1124 = vpack.c.bf16 %v1077, %v1076
    %v1125 = vpack.c.bf16 %v1079, %v1078
    %v1126 = vpack.c.bf16 %v1081, %v1080
    %v1127 = vpack.c.bf16 %v1083, %v1082
    %v1128 = vpack.c.bf16 %v1085, %v1084
    %v1129 = vpack.c.bf16 %v1087, %v1086
    %v1130 = vpack.c.bf16 %v1089, %v1088
    %v1131 = vpack.c.bf16 %v1091, %v1090
    %v1132 = vpack.c.bf16 %v1093, %v1092
    %v1133 = vpack.c.bf16 %v1095, %v1094
    %v1134 = vpack.c.bf16 %v1097, %v1096
    %v1135 = vpack.c.bf16 %v1099, %v1098
    %v1136 = vpack.c.bf16 %v1101, %v1100
    %v1137 = vpack.c.bf16 %v1103, %v1102
    %v1138 = vpack.c.bf16 %v1105, %v1104
    %v1139 = vpack.c.bf16 %v1107, %v1106
    %v1140 = vld [vmem:[#allocation7] sm:$0xff]
    %v1141 = vld [vmem:[#allocation7 + $0x8] sm:$0xff]
    %v1142 = vld [vmem:[#allocation7 + $0x10] sm:$0xff]
    %v1143 = vld [vmem:[#allocation7 + $0x18] sm:$0xff]
    %v1144 = vld [vmem:[#allocation7 + $0x20] sm:$0xff]
    %v1145 = vld [vmem:[#allocation7 + $0x28] sm:$0xff]
    %v1146 = vld [vmem:[#allocation7 + $0x30] sm:$0xff]
    %v1147 = vld [vmem:[#allocation7 + $0x38] sm:$0xff]
    %v1148 = vld [vmem:[#allocation7 + $0x40] sm:$0xff]
    %v1149 = vld [vmem:[#allocation7 + $0x48] sm:$0xff]
    %v1150 = vld [vmem:[#allocation7 + $0x50] sm:$0xff]
    %v1151 = vld [vmem:[#allocation7 + $0x58] sm:$0xff]
    %v1152 = vld [vmem:[#allocation7 + $0x60] sm:$0xff]
    %v1153 = vld [vmem:[#allocation7 + $0x68] sm:$0xff]
    %v1154 = vld [vmem:[#allocation7 + $0x70] sm:$0xff]
    %v1155 = vld [vmem:[#allocation7 + $0x78] sm:$0xff]
    %v1156 = vld [vmem:[#allocation7 + $0x80] sm:$0xff]
    %v1157 = vld [vmem:[#allocation7 + $0x88] sm:$0xff]
    %v1158 = vld [vmem:[#allocation7 + $0x90] sm:$0xff]
    %v1159 = vld [vmem:[#allocation7 + $0x98] sm:$0xff]
    %v1160 = vld [vmem:[#allocation7 + $0xa0] sm:$0xff]
    %v1161 = vld [vmem:[#allocation7 + $0xa8] sm:$0xff]
    %v1162 = vld [vmem:[#allocation7 + $0xb0] sm:$0xff]
    %v1163 = vld [vmem:[#allocation7 + $0xb8] sm:$0xff]
    %v1164 = vld [vmem:[#allocation7 + $0xc0] sm:$0xff]
    %v1165 = vld [vmem:[#allocation7 + $0xc8] sm:$0xff]
    %v1166 = vld [vmem:[#allocation7 + $0xd0] sm:$0xff]
    %v1167 = vld [vmem:[#allocation7 + $0xd8] sm:$0xff]
    %v1168 = vld [vmem:[#allocation7 + $0xe0] sm:$0xff]
    %v1169 = vld [vmem:[#allocation7 + $0xe8] sm:$0xff]
    %v1170 = vld [vmem:[#allocation7 + $0xf0] sm:$0xff]
    %v1171 = vld [vmem:[#allocation7 + $0xf8] sm:$0xff]
    %v1172 = vld [vmem:[#allocation7 + $0x100] sm:$0xff]
    %v1173 = vld [vmem:[#allocation7 + $0x108] sm:$0xff]
    %v1174 = vld [vmem:[#allocation7 + $0x110] sm:$0xff]
    %v1175 = vld [vmem:[#allocation7 + $0x118] sm:$0xff]
    %v1176 = vld [vmem:[#allocation7 + $0x120] sm:$0xff]
    %v1177 = vld [vmem:[#allocation7 + $0x128] sm:$0xff]
    %v1178 = vld [vmem:[#allocation7 + $0x130] sm:$0xff]
    %v1179 = vld [vmem:[#allocation7 + $0x138] sm:$0xff]
    %v1180 = vld [vmem:[#allocation7 + $0x140] sm:$0xff]
    %v1181 = vld [vmem:[#allocation7 + $0x148] sm:$0xff]
    %v1182 = vld [vmem:[#allocation7 + $0x150] sm:$0xff]
    %v1183 = vld [vmem:[#allocation7 + $0x158] sm:$0xff]
    %v1184 = vld [vmem:[#allocation7 + $0x160] sm:$0xff]
    %v1185 = vld [vmem:[#allocation7 + $0x168] sm:$0xff]
    %v1186 = vld [vmem:[#allocation7 + $0x170] sm:$0xff]
    %v1187 = vld [vmem:[#allocation7 + $0x178] sm:$0xff]
    %v1188 = vld [vmem:[#allocation7 + $0x180] sm:$0xff]
    %v1189 = vld [vmem:[#allocation7 + $0x188] sm:$0xff]
    %v1190 = vld [vmem:[#allocation7 + $0x190] sm:$0xff]
    %v1191 = vld [vmem:[#allocation7 + $0x198] sm:$0xff]
    %v1192 = vld [vmem:[#allocation7 + $0x1a0] sm:$0xff]
    %v1193 = vld [vmem:[#allocation7 + $0x1a8] sm:$0xff]
    %v1194 = vld [vmem:[#allocation7 + $0x1b0] sm:$0xff]
    %v1195 = vld [vmem:[#allocation7 + $0x1b8] sm:$0xff]
    %v1196 = vld [vmem:[#allocation7 + $0x1c0] sm:$0xff]
    %v1197 = vld [vmem:[#allocation7 + $0x1c8] sm:$0xff]
    %v1198 = vld [vmem:[#allocation7 + $0x1d0] sm:$0xff]
    %v1199 = vld [vmem:[#allocation7 + $0x1d8] sm:$0xff]
    %v1200 = vld [vmem:[#allocation7 + $0x1e0] sm:$0xff]
    %v1201 = vld [vmem:[#allocation7 + $0x1e8] sm:$0xff]
    %v1202 = vld [vmem:[#allocation7 + $0x1f0] sm:$0xff]
    %v1203 = vld [vmem:[#allocation7 + $0x1f8] sm:$0xff]
    %v1204 = vld [vmem:[#allocation7 + $0x200] sm:$0xff]
    %v1205 = vld [vmem:[#allocation7 + $0x208] sm:$0xff]
    %v1206 = vld [vmem:[#allocation7 + $0x210] sm:$0xff]
    %v1207 = vld [vmem:[#allocation7 + $0x218] sm:$0xff]
    %v1208 = vld [vmem:[#allocation7 + $0x220] sm:$0xff]
    %v1209 = vld [vmem:[#allocation7 + $0x228] sm:$0xff]
    %v1210 = vld [vmem:[#allocation7 + $0x230] sm:$0xff]
    %v1211 = vld [vmem:[#allocation7 + $0x238] sm:$0xff]
    %v1212 = vld [vmem:[#allocation7 + $0x240] sm:$0xff]
    %v1213 = vld [vmem:[#allocation7 + $0x248] sm:$0xff]
    %v1214 = vld [vmem:[#allocation7 + $0x250] sm:$0xff]
    %v1215 = vld [vmem:[#allocation7 + $0x258] sm:$0xff]
    %v1216 = vld [vmem:[#allocation7 + $0x260] sm:$0xff]
    %v1217 = vld [vmem:[#allocation7 + $0x268] sm:$0xff]
    %v1218 = vld [vmem:[#allocation7 + $0x270] sm:$0xff]
    %v1219 = vld [vmem:[#allocation7 + $0x278] sm:$0xff]
    %v1220 = vld [vmem:[#allocation7 + $0x280] sm:$0xff]
    %v1221 = vld [vmem:[#allocation7 + $0x288] sm:$0xff]
    %v1222 = vld [vmem:[#allocation7 + $0x290] sm:$0xff]
    %v1223 = vld [vmem:[#allocation7 + $0x298] sm:$0xff]
    %v1224 = vld [vmem:[#allocation7 + $0x2a0] sm:$0xff]
    %v1225 = vld [vmem:[#allocation7 + $0x2a8] sm:$0xff]
    %v1226 = vld [vmem:[#allocation7 + $0x2b0] sm:$0xff]
    %v1227 = vld [vmem:[#allocation7 + $0x2b8] sm:$0xff]
    %v1228 = vld [vmem:[#allocation7 + $0x2c0] sm:$0xff]
    %v1229 = vld [vmem:[#allocation7 + $0x2c8] sm:$0xff]
    %v1230 = vld [vmem:[#allocation7 + $0x2d0] sm:$0xff]
    %v1231 = vld [vmem:[#allocation7 + $0x2d8] sm:$0xff]
    %v1232 = vld [vmem:[#allocation7 + $0x2e0] sm:$0xff]
    %v1233 = vld [vmem:[#allocation7 + $0x2e8] sm:$0xff]
    %v1234 = vld [vmem:[#allocation7 + $0x2f0] sm:$0xff]
    %v1235 = vld [vmem:[#allocation7 + $0x2f8] sm:$0xff]
    %v1236 = vld [vmem:[#allocation7 + $0x300] sm:$0xff]
    %v1237 = vld [vmem:[#allocation7 + $0x308] sm:$0xff]
    %v1238 = vld [vmem:[#allocation7 + $0x310] sm:$0xff]
    %v1239 = vld [vmem:[#allocation7 + $0x318] sm:$0xff]
    %v1240 = vld [vmem:[#allocation7 + $0x320] sm:$0xff]
    %v1241 = vld [vmem:[#allocation7 + $0x328] sm:$0xff]
    %v1242 = vld [vmem:[#allocation7 + $0x330] sm:$0xff]
    %v1243 = vld [vmem:[#allocation7 + $0x338] sm:$0xff]
    %v1244 = vld [vmem:[#allocation7 + $0x340] sm:$0xff]
    %v1245 = vld [vmem:[#allocation7 + $0x348] sm:$0xff]
    %v1246 = vld [vmem:[#allocation7 + $0x350] sm:$0xff]
    %v1247 = vld [vmem:[#allocation7 + $0x358] sm:$0xff]
    %v1248 = vld [vmem:[#allocation7 + $0x360] sm:$0xff]
    %v1249 = vld [vmem:[#allocation7 + $0x368] sm:$0xff]
    %v1250 = vld [vmem:[#allocation7 + $0x370] sm:$0xff]
    %v1251 = vld [vmem:[#allocation7 + $0x378] sm:$0xff]
    %v1252 = vld [vmem:[#allocation7 + $0x380] sm:$0xff]
    %v1253 = vld [vmem:[#allocation7 + $0x388] sm:$0xff]
    %v1254 = vld [vmem:[#allocation7 + $0x390] sm:$0xff]
    %v1255 = vld [vmem:[#allocation7 + $0x398] sm:$0xff]
    %v1256 = vld [vmem:[#allocation7 + $0x3a0] sm:$0xff]
    %v1257 = vld [vmem:[#allocation7 + $0x3a8] sm:$0xff]
    %v1258 = vld [vmem:[#allocation7 + $0x3b0] sm:$0xff]
    %v1259 = vld [vmem:[#allocation7 + $0x3b8] sm:$0xff]
    %v1260 = vld [vmem:[#allocation7 + $0x3c0] sm:$0xff]
    %v1261 = vld [vmem:[#allocation7 + $0x3c8] sm:$0xff]
    %v1262 = vld [vmem:[#allocation7 + $0x3d0] sm:$0xff]
    %v1263 = vld [vmem:[#allocation7 + $0x3d8] sm:$0xff]
    %v1264 = vld [vmem:[#allocation7 + $0x3e0] sm:$0xff]
    %v1265 = vld [vmem:[#allocation7 + $0x3e8] sm:$0xff]
    %v1266 = vld [vmem:[#allocation7 + $0x3f0] sm:$0xff]
    %v1267 = vld [vmem:[#allocation7 + $0x3f8] sm:$0xff]
    %v1268 = vld [vmem:[#allocation7 + $0x400] sm:$0xff]
    %v1269 = vld [vmem:[#allocation7 + $0x408] sm:$0xff]
    %v1270 = vld [vmem:[#allocation7 + $0x410] sm:$0xff]
    %v1271 = vld [vmem:[#allocation7 + $0x418] sm:$0xff]
    %v1272 = vld [vmem:[#allocation7 + $0x420] sm:$0xff]
    %v1273 = vld [vmem:[#allocation7 + $0x428] sm:$0xff]
    %v1274 = vld [vmem:[#allocation7 + $0x430] sm:$0xff]
    %v1275 = vld [vmem:[#allocation7 + $0x438] sm:$0xff]
    %v1276 = vld [vmem:[#allocation7 + $0x440] sm:$0xff]
    %v1277 = vld [vmem:[#allocation7 + $0x448] sm:$0xff]
    %v1278 = vld [vmem:[#allocation7 + $0x450] sm:$0xff]
    %v1279 = vld [vmem:[#allocation7 + $0x458] sm:$0xff]
    %v1280 = vld [vmem:[#allocation7 + $0x460] sm:$0xff]
    %v1281 = vld [vmem:[#allocation7 + $0x468] sm:$0xff]
    %v1282 = vld [vmem:[#allocation7 + $0x470] sm:$0xff]
    %v1283 = vld [vmem:[#allocation7 + $0x478] sm:$0xff]
    %v1428 = vunpack.c.l.b16 %v1140
    %v1429 = vunpack.c.h.b16 %v1140
    %v1430 = vunpack.c.l.b16 %v1141
    %v1431 = vunpack.c.h.b16 %v1141
    %v1432 = vunpack.c.l.b16 %v1142
    %v1433 = vunpack.c.h.b16 %v1142
    %v1434 = vunpack.c.l.b16 %v1143
    %v1435 = vunpack.c.h.b16 %v1143
    %v1436 = vunpack.c.l.b16 %v1144
    %v1437 = vunpack.c.h.b16 %v1144
    %v1438 = vunpack.c.l.b16 %v1145
    %v1439 = vunpack.c.h.b16 %v1145
    %v1440 = vunpack.c.l.b16 %v1146
    %v1441 = vunpack.c.h.b16 %v1146
    %v1442 = vunpack.c.l.b16 %v1147
    %v1443 = vunpack.c.h.b16 %v1147
    %v1444 = vunpack.c.l.b16 %v1148
    %v1445 = vunpack.c.h.b16 %v1148
    %v1446 = vunpack.c.l.b16 %v1149
    %v1447 = vunpack.c.h.b16 %v1149
    %v1448 = vunpack.c.l.b16 %v1150
    %v1449 = vunpack.c.h.b16 %v1150
    %v1450 = vunpack.c.l.b16 %v1151
    %v1451 = vunpack.c.h.b16 %v1151
    %v1452 = vunpack.c.l.b16 %v1152
    %v1453 = vunpack.c.h.b16 %v1152
    %v1454 = vunpack.c.l.b16 %v1153
    %v1455 = vunpack.c.h.b16 %v1153
    %v1456 = vunpack.c.l.b16 %v1154
    %v1457 = vunpack.c.h.b16 %v1154
    %v1458 = vunpack.c.l.b16 %v1155
    %v1459 = vunpack.c.h.b16 %v1155
    %v1460 = vunpack.c.l.b16 %v1156
    %v1461 = vunpack.c.h.b16 %v1156
    %v1462 = vunpack.c.l.b16 %v1157
    %v1463 = vunpack.c.h.b16 %v1157
    %v1464 = vunpack.c.l.b16 %v1158
    %v1465 = vunpack.c.h.b16 %v1158
    %v1466 = vunpack.c.l.b16 %v1159
    %v1467 = vunpack.c.h.b16 %v1159
    %v1468 = vunpack.c.l.b16 %v1160
    %v1469 = vunpack.c.h.b16 %v1160
    %v1470 = vunpack.c.l.b16 %v1161
    %v1471 = vunpack.c.h.b16 %v1161
    %v1472 = vunpack.c.l.b16 %v1162
    %v1473 = vunpack.c.h.b16 %v1162
    %v1474 = vunpack.c.l.b16 %v1163
    %v1475 = vunpack.c.h.b16 %v1163
    %v1476 = vunpack.c.l.b16 %v1164
    %v1477 = vunpack.c.h.b16 %v1164
    %v1478 = vunpack.c.l.b16 %v1165
    %v1479 = vunpack.c.h.b16 %v1165
    %v1480 = vunpack.c.l.b16 %v1166
    %v1481 = vunpack.c.h.b16 %v1166
    %v1482 = vunpack.c.l.b16 %v1167
    %v1483 = vunpack.c.h.b16 %v1167
    %v1484 = vunpack.c.l.b16 %v1168
    %v1485 = vunpack.c.h.b16 %v1168
    %v1486 = vunpack.c.l.b16 %v1169
    %v1487 = vunpack.c.h.b16 %v1169
    %v1488 = vunpack.c.l.b16 %v1170
    %v1489 = vunpack.c.h.b16 %v1170
    %v1490 = vunpack.c.l.b16 %v1171
    %v1491 = vunpack.c.h.b16 %v1171
    %v1492 = vunpack.c.l.b16 %v1172
    %v1493 = vunpack.c.h.b16 %v1172
    %v1494 = vunpack.c.l.b16 %v1173
    %v1495 = vunpack.c.h.b16 %v1173
    %v1496 = vunpack.c.l.b16 %v1174
    %v1497 = vunpack.c.h.b16 %v1174
    %v1498 = vunpack.c.l.b16 %v1175
    %v1499 = vunpack.c.h.b16 %v1175
    %v1500 = vunpack.c.l.b16 %v1176
    %v1501 = vunpack.c.h.b16 %v1176
    %v1502 = vunpack.c.l.b16 %v1177
    %v1503 = vunpack.c.h.b16 %v1177
    %v1504 = vunpack.c.l.b16 %v1178
    %v1505 = vunpack.c.h.b16 %v1178
    %v1506 = vunpack.c.l.b16 %v1179
    %v1507 = vunpack.c.h.b16 %v1179
    %v1508 = vunpack.c.l.b16 %v1180
    %v1509 = vunpack.c.h.b16 %v1180
    %v1510 = vunpack.c.l.b16 %v1181
    %v1511 = vunpack.c.h.b16 %v1181
    %v1512 = vunpack.c.l.b16 %v1182
    %v1513 = vunpack.c.h.b16 %v1182
    %v1514 = vunpack.c.l.b16 %v1183
    %v1515 = vunpack.c.h.b16 %v1183
    %v1516 = vunpack.c.l.b16 %v1184
    %v1517 = vunpack.c.h.b16 %v1184
    %v1518 = vunpack.c.l.b16 %v1185
    %v1519 = vunpack.c.h.b16 %v1185
    %v1520 = vunpack.c.l.b16 %v1186
    %v1521 = vunpack.c.h.b16 %v1186
    %v1522 = vunpack.c.l.b16 %v1187
    %v1523 = vunpack.c.h.b16 %v1187
    %v1524 = vunpack.c.l.b16 %v1188
    %v1525 = vunpack.c.h.b16 %v1188
    %v1526 = vunpack.c.l.b16 %v1189
    %v1527 = vunpack.c.h.b16 %v1189
    %v1528 = vunpack.c.l.b16 %v1190
    %v1529 = vunpack.c.h.b16 %v1190
    %v1530 = vunpack.c.l.b16 %v1191
    %v1531 = vunpack.c.h.b16 %v1191
    %v1532 = vunpack.c.l.b16 %v1192
    %v1533 = vunpack.c.h.b16 %v1192
    %v1534 = vunpack.c.l.b16 %v1193
    %v1535 = vunpack.c.h.b16 %v1193
    %v1536 = vunpack.c.l.b16 %v1194
    %v1537 = vunpack.c.h.b16 %v1194
    %v1538 = vunpack.c.l.b16 %v1195
    %v1539 = vunpack.c.h.b16 %v1195
    %v1540 = vunpack.c.l.b16 %v1196
    %v1541 = vunpack.c.h.b16 %v1196
    %v1542 = vunpack.c.l.b16 %v1197
    %v1543 = vunpack.c.h.b16 %v1197
    %v1544 = vunpack.c.l.b16 %v1198
    %v1545 = vunpack.c.h.b16 %v1198
    %v1546 = vunpack.c.l.b16 %v1199
    %v1547 = vunpack.c.h.b16 %v1199
    %v1548 = vunpack.c.l.b16 %v1200
    %v1549 = vunpack.c.h.b16 %v1200
    %v1550 = vunpack.c.l.b16 %v1201
    %v1551 = vunpack.c.h.b16 %v1201
    %v1552 = vunpack.c.l.b16 %v1202
    %v1553 = vunpack.c.h.b16 %v1202
    %v1554 = vunpack.c.l.b16 %v1203
    %v1555 = vunpack.c.h.b16 %v1203
    %v1556 = vunpack.c.l.b16 %v1204
    %v1557 = vunpack.c.h.b16 %v1204
    %v1558 = vunpack.c.l.b16 %v1205
    %v1559 = vunpack.c.h.b16 %v1205
    %v1560 = vunpack.c.l.b16 %v1206
    %v1561 = vunpack.c.h.b16 %v1206
    %v1562 = vunpack.c.l.b16 %v1207
    %v1563 = vunpack.c.h.b16 %v1207
    %v1564 = vunpack.c.l.b16 %v1208
    %v1565 = vunpack.c.h.b16 %v1208
    %v1566 = vunpack.c.l.b16 %v1209
    %v1567 = vunpack.c.h.b16 %v1209
    %v1568 = vunpack.c.l.b16 %v1210
    %v1569 = vunpack.c.h.b16 %v1210
    %v1570 = vunpack.c.l.b16 %v1211
    %v1571 = vunpack.c.h.b16 %v1211
    %v1572 = vunpack.c.l.b16 %v1212
    %v1573 = vunpack.c.h.b16 %v1212
    %v1574 = vunpack.c.l.b16 %v1213
    %v1575 = vunpack.c.h.b16 %v1213
    %v1576 = vunpack.c.l.b16 %v1214
    %v1577 = vunpack.c.h.b16 %v1214
    %v1578 = vunpack.c.l.b16 %v1215
    %v1579 = vunpack.c.h.b16 %v1215
    %v1580 = vunpack.c.l.b16 %v1216
    %v1581 = vunpack.c.h.b16 %v1216
    %v1582 = vunpack.c.l.b16 %v1217
    %v1583 = vunpack.c.h.b16 %v1217
    %v1584 = vunpack.c.l.b16 %v1218
    %v1585 = vunpack.c.h.b16 %v1218
    %v1586 = vunpack.c.l.b16 %v1219
    %v1587 = vunpack.c.h.b16 %v1219
    %v1588 = vunpack.c.l.b16 %v1220
    %v1589 = vunpack.c.h.b16 %v1220
    %v1590 = vunpack.c.l.b16 %v1221
    %v1591 = vunpack.c.h.b16 %v1221
    %v1592 = vunpack.c.l.b16 %v1222
    %v1593 = vunpack.c.h.b16 %v1222
    %v1594 = vunpack.c.l.b16 %v1223
    %v1595 = vunpack.c.h.b16 %v1223
    %v1596 = vunpack.c.l.b16 %v1224
    %v1597 = vunpack.c.h.b16 %v1224
    %v1598 = vunpack.c.l.b16 %v1225
    %v1599 = vunpack.c.h.b16 %v1225
    %v1600 = vunpack.c.l.b16 %v1226
    %v1601 = vunpack.c.h.b16 %v1226
    %v1602 = vunpack.c.l.b16 %v1227
    %v1603 = vunpack.c.h.b16 %v1227
    %v1604 = vunpack.c.l.b16 %v1228
    %v1605 = vunpack.c.h.b16 %v1228
    %v1606 = vunpack.c.l.b16 %v1229
    %v1607 = vunpack.c.h.b16 %v1229
    %v1608 = vunpack.c.l.b16 %v1230
    %v1609 = vunpack.c.h.b16 %v1230
    %v1610 = vunpack.c.l.b16 %v1231
    %v1611 = vunpack.c.h.b16 %v1231
    %v1612 = vunpack.c.l.b16 %v1232
    %v1613 = vunpack.c.h.b16 %v1232
    %v1614 = vunpack.c.l.b16 %v1233
    %v1615 = vunpack.c.h.b16 %v1233
    %v1616 = vunpack.c.l.b16 %v1234
    %v1617 = vunpack.c.h.b16 %v1234
    %v1618 = vunpack.c.l.b16 %v1235
    %v1619 = vunpack.c.h.b16 %v1235
    %v1620 = vunpack.c.l.b16 %v1236
    %v1621 = vunpack.c.h.b16 %v1236
    %v1622 = vunpack.c.l.b16 %v1237
    %v1623 = vunpack.c.h.b16 %v1237
    %v1624 = vunpack.c.l.b16 %v1238
    %v1625 = vunpack.c.h.b16 %v1238
    %v1626 = vunpack.c.l.b16 %v1239
    %v1627 = vunpack.c.h.b16 %v1239
    %v1628 = vunpack.c.l.b16 %v1240
    %v1629 = vunpack.c.h.b16 %v1240
    %v1630 = vunpack.c.l.b16 %v1241
    %v1631 = vunpack.c.h.b16 %v1241
    %v1632 = vunpack.c.l.b16 %v1242
    %v1633 = vunpack.c.h.b16 %v1242
    %v1634 = vunpack.c.l.b16 %v1243
    %v1635 = vunpack.c.h.b16 %v1243
    %v1636 = vunpack.c.l.b16 %v1244
    %v1637 = vunpack.c.h.b16 %v1244
    %v1638 = vunpack.c.l.b16 %v1245
    %v1639 = vunpack.c.h.b16 %v1245
    %v1640 = vunpack.c.l.b16 %v1246
    %v1641 = vunpack.c.h.b16 %v1246
    %v1642 = vunpack.c.l.b16 %v1247
    %v1643 = vunpack.c.h.b16 %v1247
    %v1644 = vunpack.c.l.b16 %v1248
    %v1645 = vunpack.c.h.b16 %v1248
    %v1646 = vunpack.c.l.b16 %v1249
    %v1647 = vunpack.c.h.b16 %v1249
    %v1648 = vunpack.c.l.b16 %v1250
    %v1649 = vunpack.c.h.b16 %v1250
    %v1650 = vunpack.c.l.b16 %v1251
    %v1651 = vunpack.c.h.b16 %v1251
    %v1652 = vunpack.c.l.b16 %v1252
    %v1653 = vunpack.c.h.b16 %v1252
    %v1654 = vunpack.c.l.b16 %v1253
    %v1655 = vunpack.c.h.b16 %v1253
    %v1656 = vunpack.c.l.b16 %v1254
    %v1657 = vunpack.c.h.b16 %v1254
    %v1658 = vunpack.c.l.b16 %v1255
    %v1659 = vunpack.c.h.b16 %v1255
    %v1660 = vunpack.c.l.b16 %v1256
    %v1661 = vunpack.c.h.b16 %v1256
    %v1662 = vunpack.c.l.b16 %v1257
    %v1663 = vunpack.c.h.b16 %v1257
    %v1664 = vunpack.c.l.b16 %v1258
    %v1665 = vunpack.c.h.b16 %v1258
    %v1666 = vunpack.c.l.b16 %v1259
    %v1667 = vunpack.c.h.b16 %v1259
    %v1668 = vunpack.c.l.b16 %v1260
    %v1669 = vunpack.c.h.b16 %v1260
    %v1670 = vunpack.c.l.b16 %v1261
    %v1671 = vunpack.c.h.b16 %v1261
    %v1672 = vunpack.c.l.b16 %v1262
    %v1673 = vunpack.c.h.b16 %v1262
    %v1674 = vunpack.c.l.b16 %v1263
    %v1675 = vunpack.c.h.b16 %v1263
    %v1676 = vunpack.c.l.b16 %v1264
    %v1677 = vunpack.c.h.b16 %v1264
    %v1678 = vunpack.c.l.b16 %v1265
    %v1679 = vunpack.c.h.b16 %v1265
    %v1680 = vunpack.c.l.b16 %v1266
    %v1681 = vunpack.c.h.b16 %v1266
    %v1682 = vunpack.c.l.b16 %v1267
    %v1683 = vunpack.c.h.b16 %v1267
    %v1684 = vunpack.c.l.b16 %v1268
    %v1685 = vunpack.c.h.b16 %v1268
    %v1686 = vunpack.c.l.b16 %v1269
    %v1687 = vunpack.c.h.b16 %v1269
    %v1688 = vunpack.c.l.b16 %v1270
    %v1689 = vunpack.c.h.b16 %v1270
    %v1690 = vunpack.c.l.b16 %v1271
    %v1691 = vunpack.c.h.b16 %v1271
    %v1692 = vunpack.c.l.b16 %v1272
    %v1693 = vunpack.c.h.b16 %v1272
    %v1694 = vunpack.c.l.b16 %v1273
    %v1695 = vunpack.c.h.b16 %v1273
    %v1696 = vunpack.c.l.b16 %v1274
    %v1697 = vunpack.c.h.b16 %v1274
    %v1698 = vunpack.c.l.b16 %v1275
    %v1699 = vunpack.c.h.b16 %v1275
    %v1700 = vunpack.c.l.b16 %v1276
    %v1701 = vunpack.c.h.b16 %v1276
    %v1702 = vunpack.c.l.b16 %v1277
    %v1703 = vunpack.c.h.b16 %v1277
    %v1704 = vunpack.c.l.b16 %v1278
    %v1705 = vunpack.c.h.b16 %v1278
    %v1706 = vunpack.c.l.b16 %v1279
    %v1707 = vunpack.c.h.b16 %v1279
    %v1708 = vunpack.c.l.b16 %v1280
    %v1709 = vunpack.c.h.b16 %v1280
    %v1710 = vunpack.c.l.b16 %v1281
    %v1711 = vunpack.c.h.b16 %v1281
    %v1712 = vunpack.c.l.b16 %v1282
    %v1713 = vunpack.c.h.b16 %v1282
    %v1714 = vunpack.c.l.b16 %v1283
    %v1715 = vunpack.c.h.b16 %v1283
    %v1716 = vpack.c.b16 %v1430, %v1428
    %v1717 = vpack.c.b16 %v1431, %v1429
    %v1718 = vpack.c.b16 %v1434, %v1432
    %v1719 = vpack.c.b16 %v1435, %v1433
    %v1720 = vpack.c.b16 %v1438, %v1436
    %v1721 = vpack.c.b16 %v1439, %v1437
    %v1722 = vpack.c.b16 %v1442, %v1440
    %v1723 = vpack.c.b16 %v1443, %v1441
    %v1724 = vpack.c.b16 %v1446, %v1444
    %v1725 = vpack.c.b16 %v1447, %v1445
    %v1726 = vpack.c.b16 %v1450, %v1448
    %v1727 = vpack.c.b16 %v1451, %v1449
    %v1728 = vpack.c.b16 %v1454, %v1452
    %v1729 = vpack.c.b16 %v1455, %v1453
    %v1730 = vpack.c.b16 %v1458, %v1456
    %v1731 = vpack.c.b16 %v1459, %v1457
    %v1732 = vpack.c.b16 %v1462, %v1460
    %v1733 = vpack.c.b16 %v1463, %v1461
    %v1734 = vpack.c.b16 %v1466, %v1464
    %v1735 = vpack.c.b16 %v1467, %v1465
    %v1736 = vpack.c.b16 %v1470, %v1468
    %v1737 = vpack.c.b16 %v1471, %v1469
    %v1738 = vpack.c.b16 %v1474, %v1472
    %v1739 = vpack.c.b16 %v1475, %v1473
    %v1740 = vpack.c.b16 %v1478, %v1476
    %v1741 = vpack.c.b16 %v1479, %v1477
    %v1742 = vpack.c.b16 %v1482, %v1480
    %v1743 = vpack.c.b16 %v1483, %v1481
    %v1744 = vpack.c.b16 %v1486, %v1484
    %v1745 = vpack.c.b16 %v1487, %v1485
    %v1746 = vpack.c.b16 %v1490, %v1488
    %v1747 = vpack.c.b16 %v1491, %v1489
    %v1748 = vpack.c.b16 %v1494, %v1492
    %v1749 = vpack.c.b16 %v1495, %v1493
    %v1750 = vpack.c.b16 %v1498, %v1496
    %v1751 = vpack.c.b16 %v1499, %v1497
    %v1752 = vpack.c.b16 %v1502, %v1500
    %v1753 = vpack.c.b16 %v1503, %v1501
    %v1754 = vpack.c.b16 %v1506, %v1504
    %v1755 = vpack.c.b16 %v1507, %v1505
    %v1756 = vpack.c.b16 %v1510, %v1508
    %v1757 = vpack.c.b16 %v1511, %v1509
    %v1758 = vpack.c.b16 %v1514, %v1512
    %v1759 = vpack.c.b16 %v1515, %v1513
    %v1760 = vpack.c.b16 %v1518, %v1516
    %v1761 = vpack.c.b16 %v1519, %v1517
    %v1762 = vpack.c.b16 %v1522, %v1520
    %v1763 = vpack.c.b16 %v1523, %v1521
    %v1764 = vpack.c.b16 %v1526, %v1524
    %v1765 = vpack.c.b16 %v1527, %v1525
    %v1766 = vpack.c.b16 %v1530, %v1528
    %v1767 = vpack.c.b16 %v1531, %v1529
    %v1768 = vpack.c.b16 %v1534, %v1532
    %v1769 = vpack.c.b16 %v1535, %v1533
    %v1770 = vpack.c.b16 %v1538, %v1536
    %v1771 = vpack.c.b16 %v1539, %v1537
    %v1772 = vpack.c.b16 %v1542, %v1540
    %v1773 = vpack.c.b16 %v1543, %v1541
    %v1774 = vpack.c.b16 %v1546, %v1544
    %v1775 = vpack.c.b16 %v1547, %v1545
    %v1776 = vpack.c.b16 %v1550, %v1548
    %v1777 = vpack.c.b16 %v1551, %v1549
    %v1778 = vpack.c.b16 %v1554, %v1552
    %v1779 = vpack.c.b16 %v1555, %v1553
    %v1780 = vpack.c.b16 %v1558, %v1556
    %v1781 = vpack.c.b16 %v1559, %v1557
    %v1782 = vpack.c.b16 %v1562, %v1560
    %v1783 = vpack.c.b16 %v1563, %v1561
    %v1784 = vpack.c.b16 %v1566, %v1564
    %v1785 = vpack.c.b16 %v1567, %v1565
    %v1786 = vpack.c.b16 %v1570, %v1568
    %v1787 = vpack.c.b16 %v1571, %v1569
    %v1788 = vpack.c.b16 %v1574, %v1572
    %v1789 = vpack.c.b16 %v1575, %v1573
    %v1790 = vpack.c.b16 %v1578, %v1576
    %v1791 = vpack.c.b16 %v1579, %v1577
    %v1792 = vpack.c.b16 %v1582, %v1580
    %v1793 = vpack.c.b16 %v1583, %v1581
    %v1794 = vpack.c.b16 %v1586, %v1584
    %v1795 = vpack.c.b16 %v1587, %v1585
    %v1796 = vpack.c.b16 %v1590, %v1588
    %v1797 = vpack.c.b16 %v1591, %v1589
    %v1798 = vpack.c.b16 %v1594, %v1592
    %v1799 = vpack.c.b16 %v1595, %v1593
    %v1800 = vpack.c.b16 %v1598, %v1596
    %v1801 = vpack.c.b16 %v1599, %v1597
    %v1802 = vpack.c.b16 %v1602, %v1600
    %v1803 = vpack.c.b16 %v1603, %v1601
    %v1804 = vpack.c.b16 %v1606, %v1604
    %v1805 = vpack.c.b16 %v1607, %v1605
    %v1806 = vpack.c.b16 %v1610, %v1608
    %v1807 = vpack.c.b16 %v1611, %v1609
    %v1808 = vpack.c.b16 %v1614, %v1612
    %v1809 = vpack.c.b16 %v1615, %v1613
    %v1810 = vpack.c.b16 %v1618, %v1616
    %v1811 = vpack.c.b16 %v1619, %v1617
    %v1812 = vpack.c.b16 %v1622, %v1620
    %v1813 = vpack.c.b16 %v1623, %v1621
    %v1814 = vpack.c.b16 %v1626, %v1624
    %v1815 = vpack.c.b16 %v1627, %v1625
    %v1816 = vpack.c.b16 %v1630, %v1628
    %v1817 = vpack.c.b16 %v1631, %v1629
    %v1818 = vpack.c.b16 %v1634, %v1632
    %v1819 = vpack.c.b16 %v1635, %v1633
    %v1820 = vpack.c.b16 %v1638, %v1636
    %v1821 = vpack.c.b16 %v1639, %v1637
    %v1822 = vpack.c.b16 %v1642, %v1640
    %v1823 = vpack.c.b16 %v1643, %v1641
    %v1824 = vpack.c.b16 %v1646, %v1644
    %v1825 = vpack.c.b16 %v1647, %v1645
    %v1826 = vpack.c.b16 %v1650, %v1648
    %v1827 = vpack.c.b16 %v1651, %v1649
    %v1828 = vpack.c.b16 %v1654, %v1652
    %v1829 = vpack.c.b16 %v1655, %v1653
    %v1830 = vpack.c.b16 %v1658, %v1656
    %v1831 = vpack.c.b16 %v1659, %v1657
    %v1832 = vpack.c.b16 %v1662, %v1660
    %v1833 = vpack.c.b16 %v1663, %v1661
    %v1834 = vpack.c.b16 %v1666, %v1664
    %v1835 = vpack.c.b16 %v1667, %v1665
    %v1836 = vpack.c.b16 %v1670, %v1668
    %v1837 = vpack.c.b16 %v1671, %v1669
    %v1838 = vpack.c.b16 %v1674, %v1672
    %v1839 = vpack.c.b16 %v1675, %v1673
    %v1840 = vpack.c.b16 %v1678, %v1676
    %v1841 = vpack.c.b16 %v1679, %v1677
    %v1842 = vpack.c.b16 %v1682, %v1680
    %v1843 = vpack.c.b16 %v1683, %v1681
    %v1844 = vpack.c.b16 %v1686, %v1684
    %v1845 = vpack.c.b16 %v1687, %v1685
    %v1846 = vpack.c.b16 %v1690, %v1688
    %v1847 = vpack.c.b16 %v1691, %v1689
    %v1848 = vpack.c.b16 %v1694, %v1692
    %v1849 = vpack.c.b16 %v1695, %v1693
    %v1850 = vpack.c.b16 %v1698, %v1696
    %v1851 = vpack.c.b16 %v1699, %v1697
    %v1852 = vpack.c.b16 %v1702, %v1700
    %v1853 = vpack.c.b16 %v1703, %v1701
    %v1854 = vpack.c.b16 %v1706, %v1704
    %v1855 = vpack.c.b16 %v1707, %v1705
    %v1856 = vpack.c.b16 %v1710, %v1708
    %v1857 = vpack.c.b16 %v1711, %v1709
    %v1858 = vpack.c.b16 %v1714, %v1712
    %v1859 = vpack.c.b16 %v1715, %v1713
    %2004 = vmatprep.subr.bf16.mxu0 %v1717
    %2005 = vmatpush1.bf16.msra.mxu0 %v1716
    %2006 = vmatprep.subr.bf16.mxu0 %v1719
    %2007 = vmatpush1.bf16.msra.mxu0 %v1718
    %2008 = vmatprep.subr.bf16.mxu0 %v1721
    %2009 = vmatpush1.bf16.msra.mxu0 %v1720
    %2010 = vmatprep.subr.bf16.mxu0 %v1723
    %2011 = vmatpush1.bf16.msra.mxu0 %v1722
    %2012 = vmatprep.subr.bf16.mxu0 %v1725
    %2013 = vmatpush1.bf16.msra.mxu0 %v1724
    %2014 = vmatprep.subr.bf16.mxu0 %v1727
    %2015 = vmatpush1.bf16.msra.mxu0 %v1726
    %2016 = vmatprep.subr.bf16.mxu0 %v1729
    %2017 = vmatpush1.bf16.msra.mxu0 %v1728
    %2018 = vmatprep.subr.bf16.mxu0 %v1731
    %2019 = vmatpush1.bf16.msra.mxu0 %v1730
    %2020 = vmatprep.subr.bf16.mxu0 %v1733
    %2021 = vmatpush1.bf16.msra.mxu0 %v1732
    %2022 = vmatprep.subr.bf16.mxu0 %v1735
    %2023 = vmatpush1.bf16.msra.mxu0 %v1734
    %2024 = vmatprep.subr.bf16.mxu0 %v1737
    %2025 = vmatpush1.bf16.msra.mxu0 %v1736
    %2026 = vmatprep.subr.bf16.mxu0 %v1739
    %2027 = vmatpush1.bf16.msra.mxu0 %v1738
    %2028 = vmatprep.subr.bf16.mxu0 %v1741
    %2029 = vmatpush1.bf16.msra.mxu0 %v1740
    %2030 = vmatprep.subr.bf16.mxu0 %v1743
    %2031 = vmatpush1.bf16.msra.mxu0 %v1742
    %2032 = vmatprep.subr.bf16.mxu0 %v1745
    %2033 = vmatpush1.bf16.msra.mxu0 %v1744
    %2034 = vmatprep.subr.bf16.mxu0 %v1747
    %2035 = vmatpush1.bf16.msra.mxu0 %v1746
    %2036 = vmatprep.mubr.bf16.mxu0 %v435
    %2037 = vmatmul.mubr.bf16.gmra.mrb[0].mxu0 %v339
    %v2038 = vpop.f32.mrb[0].mxu0
    %v2039 = vadd.f32 0.0, %v2038
    %v2040 = vpop.f32.mrb[0].mxu0
    %v2041 = vadd.f32 0.0, %v2040
    %v2042 = vpop.f32.mrb[0].mxu0
    %v2043 = vadd.f32 0.0, %v2042
    %v2044 = vpop.f32.mrb[0].mxu0
    %v2045 = vadd.f32 0.0, %v2044
    %2046 = vmatprep.mubr.bf16.mxu0 %v436
    %2047 = vmatmul.mubr.bf16.gmra.mrb[0].mxu0 %v340
    %v2048 = vpop.f32.mrb[0].mxu0
    %v2049 = vadd.f32 0.0, %v2048
    %v2050 = vpop.f32.mrb[0].mxu0
    %v2051 = vadd.f32 0.0, %v2050
    %v2052 = vpop.f32.mrb[0].mxu0
    %v2053 = vadd.f32 0.0, %v2052
    %v2054 = vpop.f32.mrb[0].mxu0
    %v2055 = vadd.f32 0.0, %v2054
    %2056 = vmatprep.mubr.bf16.mxu0 %v437
    %2057 = vmatmul.mubr.bf16.gmra.mrb[0].mxu0 %v341
    %v2058 = vpop.f32.mrb[0].mxu0
    %v2059 = vadd.f32 0.0, %v2058
    %v2060 = vpop.f32.mrb[0].mxu0
    %v2061 = vadd.f32 0.0, %v2060
    %v2062 = vpop.f32.mrb[0].mxu0
    %v2063 = vadd.f32 0.0, %v2062
    %v2064 = vpop.f32.mrb[0].mxu0
    %v2065 = vadd.f32 0.0, %v2064
    %2066 = vmatprep.mubr.bf16.mxu0 %v438
    %2067 = vmatmul.mubr.bf16.gmra.mrb[0].mxu0 %v342
    %v2068 = vpop.f32.mrb[0].mxu0
    %v2069 = vadd.f32 0.0, %v2068
    %v2070 = vpop.f32.mrb[0].mxu0
    %v2071 = vadd.f32 0.0, %v2070
    %v2072 = vpop.f32.mrb[0].mxu0
    %v2073 = vadd.f32 0.0, %v2072
    %v2074 = vpop.f32.mrb[0].mxu0
    %v2075 = vadd.f32 0.0, %v2074
    %2076 = vmatprep.mubr.bf16.mxu0 %v439
    %2077 = vmatmul.mubr.bf16.gmra.mrb[0].mxu0 %v343
    %v2078 = vpop.f32.mrb[0].mxu0
    %v2079 = vadd.f32 0.0, %v2078
    %v2080 = vpop.f32.mrb[0].mxu0
    %v2081 = vadd.f32 0.0, %v2080
    %v2082 = vpop.f32.mrb[0].mxu0
    %v2083 = vadd.f32 0.0, %v2082
    %v2084 = vpop.f32.mrb[0].mxu0
    %v2085 = vadd.f32 0.0, %v2084
    %2086 = vmatprep.mubr.bf16.mxu0 %v440
    %2087 = vmatmul.mubr.bf16.gmra.mrb[0].mxu0 %v344
    %v2088 = vpop.f32.mrb[0].mxu0
    %v2089 = vadd.f32 0.0, %v2088
    %v2090 = vpop.f32.mrb[0].mxu0
    %v2091 = vadd.f32 0.0, %v2090
    %v2092 = vpop.f32.mrb[0].mxu0
    %v2093 = vadd.f32 0.0, %v2092
    %v2094 = vpop.f32.mrb[0].mxu0
    %v2095 = vadd.f32 0.0, %v2094
    %2096 = vmatprep.mubr.bf16.mxu0 %v441
    %2097 = vmatmul.mubr.bf16.gmra.mrb[0].mxu0 %v345
    %v2098 = vpop.f32.mrb[0].mxu0
    %v2099 = vadd.f32 0.0, %v2098
    %v2100 = vpop.f32.mrb[0].mxu0
    %v2101 = vadd.f32 0.0, %v2100
    %v2102 = vpop.f32.mrb[0].mxu0
    %v2103 = vadd.f32 0.0, %v2102
    %v2104 = vpop.f32.mrb[0].mxu0
    %v2105 = vadd.f32 0.0, %v2104
    %2106 = vmatprep.mubr.bf16.mxu0 %v442
    %2107 = vmatmul.mubr.bf16.gmra.mrb[0].mxu0 %v346
    %v2108 = vpop.f32.mrb[0].mxu0
    %v2109 = vadd.f32 0.0, %v2108
    %v2110 = vpop.f32.mrb[0].mxu0
    %v2111 = vadd.f32 0.0, %v2110
    %v2112 = vpop.f32.mrb[0].mxu0
    %v2113 = vadd.f32 0.0, %v2112
    %v2114 = vpop.f32.mrb[0].mxu0
    %v2115 = vadd.f32 0.0, %v2114
    %2116 = vmatprep.mubr.bf16.mxu0 %v443
    %2117 = vmatmul.mubr.bf16.gmra.mrb[0].mxu0 %v347
    %v2118 = vpop.f32.mrb[0].mxu0
    %v2119 = vadd.f32 0.0, %v2118
    %v2120 = vpop.f32.mrb[0].mxu0
    %v2121 = vadd.f32 0.0, %v2120
    %v2122 = vpop.f32.mrb[0].mxu0
    %v2123 = vadd.f32 0.0, %v2122
    %v2124 = vpop.f32.mrb[0].mxu0
    %v2125 = vadd.f32 0.0, %v2124
    %2126 = vmatprep.mubr.bf16.mxu0 %v444
    %2127 = vmatmul.mubr.bf16.gmra.mrb[0].mxu0 %v348
    %v2128 = vpop.f32.mrb[0].mxu0
    %v2129 = vadd.f32 0.0, %v2128
    %v2130 = vpop.f32.mrb[0].mxu0
    %v2131 = vadd.f32 0.0, %v2130
    %v2132 = vpop.f32.mrb[0].mxu0
    %v2133 = vadd.f32 0.0, %v2132
    %v2134 = vpop.f32.mrb[0].mxu0
    %v2135 = vadd.f32 0.0, %v2134
    %2136 = vmatprep.mubr.bf16.mxu0 %v445
    %2137 = vmatmul.mubr.bf16.gmra.mrb[0].mxu0 %v349
    %v2138 = vpop.f32.mrb[0].mxu0
    %v2139 = vadd.f32 0.0, %v2138
    %v2140 = vpop.f32.mrb[0].mxu0
    %v2141 = vadd.f32 0.0, %v2140
    %v2142 = vpop.f32.mrb[0].mxu0
    %v2143 = vadd.f32 0.0, %v2142
    %v2144 = vpop.f32.mrb[0].mxu0
    %v2145 = vadd.f32 0.0, %v2144
    %2146 = vmatprep.mubr.bf16.mxu0 %v446
    %2147 = vmatmul.mubr.bf16.gmra.mrb[0].mxu0 %v350
    %v2148 = vpop.f32.mrb[0].mxu0
    %v2149 = vadd.f32 0.0, %v2148
    %v2150 = vpop.f32.mrb[0].mxu0
    %v2151 = vadd.f32 0.0, %v2150
    %v2152 = vpop.f32.mrb[0].mxu0
    %v2153 = vadd.f32 0.0, %v2152
    %v2154 = vpop.f32.mrb[0].mxu0
    %v2155 = vadd.f32 0.0, %v2154
    %2156 = vmatprep.mubr.bf16.mxu0 %v447
    %2157 = vmatmul.mubr.bf16.gmra.mrb[0].mxu0 %v351
    %v2158 = vpop.f32.mrb[0].mxu0
    %v2159 = vadd.f32 0.0, %v2158
    %v2160 = vpop.f32.mrb[0].mxu0
    %v2161 = vadd.f32 0.0, %v2160
    %v2162 = vpop.f32.mrb[0].mxu0
    %v2163 = vadd.f32 0.0, %v2162
    %v2164 = vpop.f32.mrb[0].mxu0
    %v2165 = vadd.f32 0.0, %v2164
    %2166 = vmatprep.mubr.bf16.mxu0 %v448
    %2167 = vmatmul.mubr.bf16.gmra.mrb[0].mxu0 %v352
    %v2168 = vpop.f32.mrb[0].mxu0
    %v2169 = vadd.f32 0.0, %v2168
    %v2170 = vpop.f32.mrb[0].mxu0
    %v2171 = vadd.f32 0.0, %v2170
    %v2172 = vpop.f32.mrb[0].mxu0
    %v2173 = vadd.f32 0.0, %v2172
    %v2174 = vpop.f32.mrb[0].mxu0
    %v2175 = vadd.f32 0.0, %v2174
    %2176 = vmatprep.mubr.bf16.mxu0 %v449
    %2177 = vmatmul.mubr.bf16.gmra.mrb[0].mxu0 %v353
    %v2178 = vpop.f32.mrb[0].mxu0
    %v2179 = vadd.f32 0.0, %v2178
    %v2180 = vpop.f32.mrb[0].mxu0
    %v2181 = vadd.f32 0.0, %v2180
    %v2182 = vpop.f32.mrb[0].mxu0
    %v2183 = vadd.f32 0.0, %v2182
    %v2184 = vpop.f32.mrb[0].mxu0
    %v2185 = vadd.f32 0.0, %v2184
    %2186 = vmatprep.mubr.bf16.mxu0 %v450
    %2187 = vmatmul.mubr.bf16.gmra.mrb[0].mxu0 %v354
    %v2188 = vpop.f32.mrb[0].mxu0
    %v2189 = vadd.f32 0.0, %v2188
    %v2190 = vpop.f32.mrb[0].mxu0
    %v2191 = vadd.f32 0.0, %v2190
    %v2192 = vpop.f32.mrb[0].mxu0
    %v2193 = vadd.f32 0.0, %v2192
    %v2194 = vpop.f32.mrb[0].mxu0
    %v2195 = vadd.f32 0.0, %v2194
    %2196 = vmatprep.mubr.bf16.mxu0 %v451
    %2197 = vmatmul.mubr.bf16.gmra.mrb[0].mxu0 %v355
    %v2198 = vpop.f32.mrb[0].mxu0
    %v2199 = vadd.f32 0.0, %v2198
    %v2200 = vpop.f32.mrb[0].mxu0
    %v2201 = vadd.f32 0.0, %v2200
    %v2202 = vpop.f32.mrb[0].mxu0
    %v2203 = vadd.f32 0.0, %v2202
    %v2204 = vpop.f32.mrb[0].mxu0
    %v2205 = vadd.f32 0.0, %v2204
    %2206 = vmatprep.mubr.bf16.mxu0 %v452
    %2207 = vmatmul.mubr.bf16.gmra.mrb[0].mxu0 %v356
    %v2208 = vpop.f32.mrb[0].mxu0
    %v2209 = vadd.f32 0.0, %v2208
    %v2210 = vpop.f32.mrb[0].mxu0
    %v2211 = vadd.f32 0.0, %v2210
    %v2212 = vpop.f32.mrb[0].mxu0
    %v2213 = vadd.f32 0.0, %v2212
    %v2214 = vpop.f32.mrb[0].mxu0
    %v2215 = vadd.f32 0.0, %v2214
    %2216 = vmatprep.mubr.bf16.mxu0 %v453
    %2217 = vmatmul.mubr.bf16.gmra.mrb[0].mxu0 %v357
    %v2218 = vpop.f32.mrb[0].mxu0
    %v2219 = vadd.f32 0.0, %v2218
    %v2220 = vpop.f32.mrb[0].mxu0
    %v2221 = vadd.f32 0.0, %v2220
    %v2222 = vpop.f32.mrb[0].mxu0
    %v2223 = vadd.f32 0.0, %v2222
    %v2224 = vpop.f32.mrb[0].mxu0
    %v2225 = vadd.f32 0.0, %v2224
    %2226 = vmatprep.mubr.bf16.mxu0 %v454
    %2227 = vmatmul.mubr.bf16.gmra.mrb[0].mxu0 %v358
    %v2228 = vpop.f32.mrb[0].mxu0
    %v2229 = vadd.f32 0.0, %v2228
    %v2230 = vpop.f32.mrb[0].mxu0
    %v2231 = vadd.f32 0.0, %v2230
    %v2232 = vpop.f32.mrb[0].mxu0
    %v2233 = vadd.f32 0.0, %v2232
    %v2234 = vpop.f32.mrb[0].mxu0
    %v2235 = vadd.f32 0.0, %v2234
    %2236 = vmatprep.mubr.bf16.mxu0 %v455
    %2237 = vmatmul.mubr.bf16.gmra.mrb[0].mxu0 %v359
    %v2238 = vpop.f32.mrb[0].mxu0
    %v2239 = vadd.f32 0.0, %v2238
    %v2240 = vpop.f32.mrb[0].mxu0
    %v2241 = vadd.f32 0.0, %v2240
    %v2242 = vpop.f32.mrb[0].mxu0
    %v2243 = vadd.f32 0.0, %v2242
    %v2244 = vpop.f32.mrb[0].mxu0
    %v2245 = vadd.f32 0.0, %v2244
    %2246 = vmatprep.mubr.bf16.mxu0 %v456
    %2247 = vmatmul.mubr.bf16.gmra.mrb[0].mxu0 %v360
    %v2248 = vpop.f32.mrb[0].mxu0
    %v2249 = vadd.f32 0.0, %v2248
    %v2250 = vpop.f32.mrb[0].mxu0
    %v2251 = vadd.f32 0.0, %v2250
    %v2252 = vpop.f32.mrb[0].mxu0
    %v2253 = vadd.f32 0.0, %v2252
    %v2254 = vpop.f32.mrb[0].mxu0
    %v2255 = vadd.f32 0.0, %v2254
    %2256 = vmatprep.mubr.bf16.mxu0 %v457
    %2257 = vmatmul.mubr.bf16.gmra.mrb[0].mxu0 %v361
    %v2258 = vpop.f32.mrb[0].mxu0
    %v2259 = vadd.f32 0.0, %v2258
    %v2260 = vpop.f32.mrb[0].mxu0
    %v2261 = vadd.f32 0.0, %v2260
    %v2262 = vpop.f32.mrb[0].mxu0
    %v2263 = vadd.f32 0.0, %v2262
    %v2264 = vpop.f32.mrb[0].mxu0
    %v2265 = vadd.f32 0.0, %v2264
    %2266 = vmatprep.mubr.bf16.mxu0 %v458
    %2267 = vmatmul.mubr.bf16.gmra.mrb[0].mxu0 %v362
    %v2268 = vpop.f32.mrb[0].mxu0
    %v2269 = vadd.f32 0.0, %v2268
    %v2270 = vpop.f32.mrb[0].mxu0
    %v2271 = vadd.f32 0.0, %v2270
    %v2272 = vpop.f32.mrb[0].mxu0
    %v2273 = vadd.f32 0.0, %v2272
    %v2274 = vpop.f32.mrb[0].mxu0
    %v2275 = vadd.f32 0.0, %v2274
    %2276 = vmatprep.mubr.bf16.mxu0 %v459
    %2277 = vmatmul.mubr.bf16.gmra.mrb[0].mxu0 %v363
    %v2278 = vpop.f32.mrb[0].mxu0
    %v2279 = vadd.f32 0.0, %v2278
    %v2280 = vpop.f32.mrb[0].mxu0
    %v2281 = vadd.f32 0.0, %v2280
    %v2282 = vpop.f32.mrb[0].mxu0
    %v2283 = vadd.f32 0.0, %v2282
    %v2284 = vpop.f32.mrb[0].mxu0
    %v2285 = vadd.f32 0.0, %v2284
    %2286 = vmatprep.mubr.bf16.mxu0 %v460
    %2287 = vmatmul.mubr.bf16.gmra.mrb[0].mxu0 %v364
    %v2288 = vpop.f32.mrb[0].mxu0
    %v2289 = vadd.f32 0.0, %v2288
    %v2290 = vpop.f32.mrb[0].mxu0
    %v2291 = vadd.f32 0.0, %v2290
    %v2292 = vpop.f32.mrb[0].mxu0
    %v2293 = vadd.f32 0.0, %v2292
    %v2294 = vpop.f32.mrb[0].mxu0
    %v2295 = vadd.f32 0.0, %v2294
    %2296 = vmatprep.mubr.bf16.mxu0 %v461
    %2297 = vmatmul.mubr.bf16.gmra.mrb[0].mxu0 %v365
    %v2298 = vpop.f32.mrb[0].mxu0
    %v2299 = vadd.f32 0.0, %v2298
    %v2300 = vpop.f32.mrb[0].mxu0
    %v2301 = vadd.f32 0.0, %v2300
    %v2302 = vpop.f32.mrb[0].mxu0
    %v2303 = vadd.f32 0.0, %v2302
    %v2304 = vpop.f32.mrb[0].mxu0
    %v2305 = vadd.f32 0.0, %v2304
    %2306 = vmatprep.mubr.bf16.mxu0 %v462
    %2307 = vmatmul.mubr.bf16.gmra.mrb[0].mxu0 %v366
    %v2308 = vpop.f32.mrb[0].mxu0
    %v2309 = vadd.f32 0.0, %v2308
    %v2310 = vpop.f32.mrb[0].mxu0
    %v2311 = vadd.f32 0.0, %v2310
    %v2312 = vpop.f32.mrb[0].mxu0
    %v2313 = vadd.f32 0.0, %v2312
    %v2314 = vpop.f32.mrb[0].mxu0
    %v2315 = vadd.f32 0.0, %v2314
    %2316 = vmatprep.mubr.bf16.mxu0 %v463
    %2317 = vmatmul.mubr.bf16.gmra.mrb[0].mxu0 %v367
    %v2318 = vpop.f32.mrb[0].mxu0
    %v2319 = vadd.f32 0.0, %v2318
    %v2320 = vpop.f32.mrb[0].mxu0
    %v2321 = vadd.f32 0.0, %v2320
    %v2322 = vpop.f32.mrb[0].mxu0
    %v2323 = vadd.f32 0.0, %v2322
    %v2324 = vpop.f32.mrb[0].mxu0
    %v2325 = vadd.f32 0.0, %v2324
    %2326 = vmatprep.mubr.bf16.mxu0 %v464
    %2327 = vmatmul.mubr.bf16.gmra.mrb[0].mxu0 %v368
    %v2328 = vpop.f32.mrb[0].mxu0
    %v2329 = vadd.f32 0.0, %v2328
    %v2330 = vpop.f32.mrb[0].mxu0
    %v2331 = vadd.f32 0.0, %v2330
    %v2332 = vpop.f32.mrb[0].mxu0
    %v2333 = vadd.f32 0.0, %v2332
    %v2334 = vpop.f32.mrb[0].mxu0
    %v2335 = vadd.f32 0.0, %v2334
    %2336 = vmatprep.mubr.bf16.mxu0 %v465
    %2337 = vmatmul.mubr.bf16.gmra.mrb[0].mxu0 %v369
    %v2338 = vpop.f32.mrb[0].mxu0
    %v2339 = vadd.f32 0.0, %v2338
    %v2340 = vpop.f32.mrb[0].mxu0
    %v2341 = vadd.f32 0.0, %v2340
    %v2342 = vpop.f32.mrb[0].mxu0
    %v2343 = vadd.f32 0.0, %v2342
    %v2344 = vpop.f32.mrb[0].mxu0
    %v2345 = vadd.f32 0.0, %v2344
    %2346 = vmatprep.mubr.bf16.mxu0 %v466
    %2347 = vmatmul.mubr.bf16.gmra.mrb[0].mxu0 %v370
    %v2348 = vpop.f32.mrb[0].mxu0
    %v2349 = vadd.f32 0.0, %v2348
    %v2350 = vpop.f32.mrb[0].mxu0
    %v2351 = vadd.f32 0.0, %v2350
    %v2352 = vpop.f32.mrb[0].mxu0
    %v2353 = vadd.f32 0.0, %v2352
    %v2354 = vpop.f32.mrb[0].mxu0
    %v2355 = vadd.f32 0.0, %v2354
    %2356 = vdwg.mxu0
    %2357 = vmatprep.subr.bf16.mxu0 %v1749
    %2358 = vmatpush1.bf16.msra.mxu0 %v1748
    %2359 = vmatprep.subr.bf16.mxu0 %v1751
    %2360 = vmatpush1.bf16.msra.mxu0 %v1750
    %2361 = vmatprep.subr.bf16.mxu0 %v1753
    %2362 = vmatpush1.bf16.msra.mxu0 %v1752
    %2363 = vmatprep.subr.bf16.mxu0 %v1755
    %2364 = vmatpush1.bf16.msra.mxu0 %v1754
    %2365 = vmatprep.subr.bf16.mxu0 %v1757
    %2366 = vmatpush1.bf16.msra.mxu0 %v1756
    %2367 = vmatprep.subr.bf16.mxu0 %v1759
    %2368 = vmatpush1.bf16.msra.mxu0 %v1758
    %2369 = vmatprep.subr.bf16.mxu0 %v1761
    %2370 = vmatpush1.bf16.msra.mxu0 %v1760
    %2371 = vmatprep.subr.bf16.mxu0 %v1763
    %2372 = vmatpush1.bf16.msra.mxu0 %v1762
    %2373 = vmatprep.subr.bf16.mxu0 %v1765
    %2374 = vmatpush1.bf16.msra.mxu0 %v1764
    %2375 = vmatprep.subr.bf16.mxu0 %v1767
    %2376 = vmatpush1.bf16.msra.mxu0 %v1766
    %2377 = vmatprep.subr.bf16.mxu0 %v1769
    %2378 = vmatpush1.bf16.msra.mxu0 %v1768
    %2379 = vmatprep.subr.bf16.mxu0 %v1771
    %2380 = vmatpush1.bf16.msra.mxu0 %v1770
    %2381 = vmatprep.subr.bf16.mxu0 %v1773
    %2382 = vmatpush1.bf16.msra.mxu0 %v1772
    %2383 = vmatprep.subr.bf16.mxu0 %v1775
    %2384 = vmatpush1.bf16.msra.mxu0 %v1774
    %2385 = vmatprep.subr.bf16.mxu0 %v1777
    %2386 = vmatpush1.bf16.msra.mxu0 %v1776
    %2387 = vmatprep.subr.bf16.mxu0 %v1779
    %2388 = vmatpush1.bf16.msra.mxu0 %v1778
    %2389 = vmatprep.mubr.bf16.mxu0 %v627
    %2390 = vmatmul.mubr.bf16.gmra.mrb[0].mxu0 %v531
    %v2391 = vpop.f32.mrb[0].mxu0
    %v2392 = vadd.f32 %v2039, %v2391
    %v2393 = vpop.f32.mrb[0].mxu0
    %v2394 = vadd.f32 %v2041, %v2393
    %v2395 = vpop.f32.mrb[0].mxu0
    %v2396 = vadd.f32 %v2043, %v2395
    %v2397 = vpop.f32.mrb[0].mxu0
    %v2398 = vadd.f32 %v2045, %v2397
    %2399 = vmatprep.mubr.bf16.mxu0 %v628
    %2400 = vmatmul.mubr.bf16.gmra.mrb[0].mxu0 %v532
    %v2401 = vpop.f32.mrb[0].mxu0
    %v2402 = vadd.f32 %v2049, %v2401
    %v2403 = vpop.f32.mrb[0].mxu0
    %v2404 = vadd.f32 %v2051, %v2403
    %v2405 = vpop.f32.mrb[0].mxu0
    %v2406 = vadd.f32 %v2053, %v2405
    %v2407 = vpop.f32.mrb[0].mxu0
    %v2408 = vadd.f32 %v2055, %v2407
    %2409 = vmatprep.mubr.bf16.mxu0 %v629
    %2410 = vmatmul.mubr.bf16.gmra.mrb[0].mxu0 %v533
    %v2411 = vpop.f32.mrb[0].mxu0
    %v2412 = vadd.f32 %v2059, %v2411
    %v2413 = vpop.f32.mrb[0].mxu0
    %v2414 = vadd.f32 %v2061, %v2413
    %v2415 = vpop.f32.mrb[0].mxu0
    %v2416 = vadd.f32 %v2063, %v2415
    %v2417 = vpop.f32.mrb[0].mxu0
    %v2418 = vadd.f32 %v2065, %v2417
    %2419 = vmatprep.mubr.bf16.mxu0 %v630
    %2420 = vmatmul.mubr.bf16.gmra.mrb[0].mxu0 %v534
    %v2421 = vpop.f32.mrb[0].mxu0
    %v2422 = vadd.f32 %v2069, %v2421
    %v2423 = vpop.f32.mrb[0].mxu0
    %v2424 = vadd.f32 %v2071, %v2423
    %v2425 = vpop.f32.mrb[0].mxu0
    %v2426 = vadd.f32 %v2073, %v2425
    %v2427 = vpop.f32.mrb[0].mxu0
    %v2428 = vadd.f32 %v2075, %v2427
    %2429 = vmatprep.mubr.bf16.mxu0 %v631
    %2430 = vmatmul.mubr.bf16.gmra.mrb[0].mxu0 %v535
    %v2431 = vpop.f32.mrb[0].mxu0
    %v2432 = vadd.f32 %v2079, %v2431
    %v2433 = vpop.f32.mrb[0].mxu0
    %v2434 = vadd.f32 %v2081, %v2433
    %v2435 = vpop.f32.mrb[0].mxu0
    %v2436 = vadd.f32 %v2083, %v2435
    %v2437 = vpop.f32.mrb[0].mxu0
    %v2438 = vadd.f32 %v2085, %v2437
    %2439 = vmatprep.mubr.bf16.mxu0 %v632
    %2440 = vmatmul.mubr.bf16.gmra.mrb[0].mxu0 %v536
    %v2441 = vpop.f32.mrb[0].mxu0
    %v2442 = vadd.f32 %v2089, %v2441
    %v2443 = vpop.f32.mrb[0].mxu0
    %v2444 = vadd.f32 %v2091, %v2443
    %v2445 = vpop.f32.mrb[0].mxu0
    %v2446 = vadd.f32 %v2093, %v2445
    %v2447 = vpop.f32.mrb[0].mxu0
    %v2448 = vadd.f32 %v2095, %v2447
    %2449 = vmatprep.mubr.bf16.mxu0 %v633
    %2450 = vmatmul.mubr.bf16.gmra.mrb[0].mxu0 %v537
    %v2451 = vpop.f32.mrb[0].mxu0
    %v2452 = vadd.f32 %v2099, %v2451
    %v2453 = vpop.f32.mrb[0].mxu0
    %v2454 = vadd.f32 %v2101, %v2453
    %v2455 = vpop.f32.mrb[0].mxu0
    %v2456 = vadd.f32 %v2103, %v2455
    %v2457 = vpop.f32.mrb[0].mxu0
    %v2458 = vadd.f32 %v2105, %v2457
    %2459 = vmatprep.mubr.bf16.mxu0 %v634
    %2460 = vmatmul.mubr.bf16.gmra.mrb[0].mxu0 %v538
    %v2461 = vpop.f32.mrb[0].mxu0
    %v2462 = vadd.f32 %v2109, %v2461
    %v2463 = vpop.f32.mrb[0].mxu0
    %v2464 = vadd.f32 %v2111, %v2463
    %v2465 = vpop.f32.mrb[0].mxu0
    %v2466 = vadd.f32 %v2113, %v2465
    %v2467 = vpop.f32.mrb[0].mxu0
    %v2468 = vadd.f32 %v2115, %v2467
    %2469 = vmatprep.mubr.bf16.mxu0 %v635
    %2470 = vmatmul.mubr.bf16.gmra.mrb[0].mxu0 %v539
    %v2471 = vpop.f32.mrb[0].mxu0
    %v2472 = vadd.f32 %v2119, %v2471
    %v2473 = vpop.f32.mrb[0].mxu0
    %v2474 = vadd.f32 %v2121, %v2473
    %v2475 = vpop.f32.mrb[0].mxu0
    %v2476 = vadd.f32 %v2123, %v2475
    %v2477 = vpop.f32.mrb[0].mxu0
    %v2478 = vadd.f32 %v2125, %v2477
    %2479 = vmatprep.mubr.bf16.mxu0 %v636
    %2480 = vmatmul.mubr.bf16.gmra.mrb[0].mxu0 %v540
    %v2481 = vpop.f32.mrb[0].mxu0
    %v2482 = vadd.f32 %v2129, %v2481
    %v2483 = vpop.f32.mrb[0].mxu0
    %v2484 = vadd.f32 %v2131, %v2483
    %v2485 = vpop.f32.mrb[0].mxu0
    %v2486 = vadd.f32 %v2133, %v2485
    %v2487 = vpop.f32.mrb[0].mxu0
    %v2488 = vadd.f32 %v2135, %v2487
    %2489 = vmatprep.mubr.bf16.mxu0 %v637
    %2490 = vmatmul.mubr.bf16.gmra.mrb[0].mxu0 %v541
    %v2491 = vpop.f32.mrb[0].mxu0
    %v2492 = vadd.f32 %v2139, %v2491
    %v2493 = vpop.f32.mrb[0].mxu0
    %v2494 = vadd.f32 %v2141, %v2493
    %v2495 = vpop.f32.mrb[0].mxu0
    %v2496 = vadd.f32 %v2143, %v2495
    %v2497 = vpop.f32.mrb[0].mxu0
    %v2498 = vadd.f32 %v2145, %v2497
    %2499 = vmatprep.mubr.bf16.mxu0 %v638
    %2500 = vmatmul.mubr.bf16.gmra.mrb[0].mxu0 %v542
    %v2501 = vpop.f32.mrb[0].mxu0
    %v2502 = vadd.f32 %v2149, %v2501
    %v2503 = vpop.f32.mrb[0].mxu0
    %v2504 = vadd.f32 %v2151, %v2503
    %v2505 = vpop.f32.mrb[0].mxu0
    %v2506 = vadd.f32 %v2153, %v2505
    %v2507 = vpop.f32.mrb[0].mxu0
    %v2508 = vadd.f32 %v2155, %v2507
    %2509 = vmatprep.mubr.bf16.mxu0 %v639
    %2510 = vmatmul.mubr.bf16.gmra.mrb[0].mxu0 %v543
    %v2511 = vpop.f32.mrb[0].mxu0
    %v2512 = vadd.f32 %v2159, %v2511
    %v2513 = vpop.f32.mrb[0].mxu0
    %v2514 = vadd.f32 %v2161, %v2513
    %v2515 = vpop.f32.mrb[0].mxu0
    %v2516 = vadd.f32 %v2163, %v2515
    %v2517 = vpop.f32.mrb[0].mxu0
    %v2518 = vadd.f32 %v2165, %v2517
    %2519 = vmatprep.mubr.bf16.mxu0 %v640
    %2520 = vmatmul.mubr.bf16.gmra.mrb[0].mxu0 %v544
    %v2521 = vpop.f32.mrb[0].mxu0
    %v2522 = vadd.f32 %v2169, %v2521
    %v2523 = vpop.f32.mrb[0].mxu0
    %v2524 = vadd.f32 %v2171, %v2523
    %v2525 = vpop.f32.mrb[0].mxu0
    %v2526 = vadd.f32 %v2173, %v2525
    %v2527 = vpop.f32.mrb[0].mxu0
    %v2528 = vadd.f32 %v2175, %v2527
    %2529 = vmatprep.mubr.bf16.mxu0 %v641
    %2530 = vmatmul.mubr.bf16.gmra.mrb[0].mxu0 %v545
    %v2531 = vpop.f32.mrb[0].mxu0
    %v2532 = vadd.f32 %v2179, %v2531
    %v2533 = vpop.f32.mrb[0].mxu0
    %v2534 = vadd.f32 %v2181, %v2533
    %v2535 = vpop.f32.mrb[0].mxu0
    %v2536 = vadd.f32 %v2183, %v2535
    %v2537 = vpop.f32.mrb[0].mxu0
    %v2538 = vadd.f32 %v2185, %v2537
    %2539 = vmatprep.mubr.bf16.mxu0 %v642
    %2540 = vmatmul.mubr.bf16.gmra.mrb[0].mxu0 %v546
    %v2541 = vpop.f32.mrb[0].mxu0
    %v2542 = vadd.f32 %v2189, %v2541
    %v2543 = vpop.f32.mrb[0].mxu0
    %v2544 = vadd.f32 %v2191, %v2543
    %v2545 = vpop.f32.mrb[0].mxu0
    %v2546 = vadd.f32 %v2193, %v2545
    %v2547 = vpop.f32.mrb[0].mxu0
    %v2548 = vadd.f32 %v2195, %v2547
    %2549 = vmatprep.mubr.bf16.mxu0 %v643
    %2550 = vmatmul.mubr.bf16.gmra.mrb[0].mxu0 %v547
    %v2551 = vpop.f32.mrb[0].mxu0
    %v2552 = vadd.f32 %v2199, %v2551
    %v2553 = vpop.f32.mrb[0].mxu0
    %v2554 = vadd.f32 %v2201, %v2553
    %v2555 = vpop.f32.mrb[0].mxu0
    %v2556 = vadd.f32 %v2203, %v2555
    %v2557 = vpop.f32.mrb[0].mxu0
    %v2558 = vadd.f32 %v2205, %v2557
    %2559 = vmatprep.mubr.bf16.mxu0 %v644
    %2560 = vmatmul.mubr.bf16.gmra.mrb[0].mxu0 %v548
    %v2561 = vpop.f32.mrb[0].mxu0
    %v2562 = vadd.f32 %v2209, %v2561
    %v2563 = vpop.f32.mrb[0].mxu0
    %v2564 = vadd.f32 %v2211, %v2563
    %v2565 = vpop.f32.mrb[0].mxu0
    %v2566 = vadd.f32 %v2213, %v2565
    %v2567 = vpop.f32.mrb[0].mxu0
    %v2568 = vadd.f32 %v2215, %v2567
    %2569 = vmatprep.mubr.bf16.mxu0 %v645
    %2570 = vmatmul.mubr.bf16.gmra.mrb[0].mxu0 %v549
    %v2571 = vpop.f32.mrb[0].mxu0
    %v2572 = vadd.f32 %v2219, %v2571
    %v2573 = vpop.f32.mrb[0].mxu0
    %v2574 = vadd.f32 %v2221, %v2573
    %v2575 = vpop.f32.mrb[0].mxu0
    %v2576 = vadd.f32 %v2223, %v2575
    %v2577 = vpop.f32.mrb[0].mxu0
    %v2578 = vadd.f32 %v2225, %v2577
    %2579 = vmatprep.mubr.bf16.mxu0 %v646
    %2580 = vmatmul.mubr.bf16.gmra.mrb[0].mxu0 %v550
    %v2581 = vpop.f32.mrb[0].mxu0
    %v2582 = vadd.f32 %v2229, %v2581
    %v2583 = vpop.f32.mrb[0].mxu0
    %v2584 = vadd.f32 %v2231, %v2583
    %v2585 = vpop.f32.mrb[0].mxu0
    %v2586 = vadd.f32 %v2233, %v2585
    %v2587 = vpop.f32.mrb[0].mxu0
    %v2588 = vadd.f32 %v2235, %v2587
    %2589 = vmatprep.mubr.bf16.mxu0 %v647
    %2590 = vmatmul.mubr.bf16.gmra.mrb[0].mxu0 %v551
    %v2591 = vpop.f32.mrb[0].mxu0
    %v2592 = vadd.f32 %v2239, %v2591
    %v2593 = vpop.f32.mrb[0].mxu0
    %v2594 = vadd.f32 %v2241, %v2593
    %v2595 = vpop.f32.mrb[0].mxu0
    %v2596 = vadd.f32 %v2243, %v2595
    %v2597 = vpop.f32.mrb[0].mxu0
    %v2598 = vadd.f32 %v2245, %v2597
    %2599 = vmatprep.mubr.bf16.mxu0 %v648
    %2600 = vmatmul.mubr.bf16.gmra.mrb[0].mxu0 %v552
    %v2601 = vpop.f32.mrb[0].mxu0
    %v2602 = vadd.f32 %v2249, %v2601
    %v2603 = vpop.f32.mrb[0].mxu0
    %v2604 = vadd.f32 %v2251, %v2603
    %v2605 = vpop.f32.mrb[0].mxu0
    %v2606 = vadd.f32 %v2253, %v2605
    %v2607 = vpop.f32.mrb[0].mxu0
    %v2608 = vadd.f32 %v2255, %v2607
    %2609 = vmatprep.mubr.bf16.mxu0 %v649
    %2610 = vmatmul.mubr.bf16.gmra.mrb[0].mxu0 %v553
    %v2611 = vpop.f32.mrb[0].mxu0
    %v2612 = vadd.f32 %v2259, %v2611
    %v2613 = vpop.f32.mrb[0].mxu0
    %v2614 = vadd.f32 %v2261, %v2613
    %v2615 = vpop.f32.mrb[0].mxu0
    %v2616 = vadd.f32 %v2263, %v2615
    %v2617 = vpop.f32.mrb[0].mxu0
    %v2618 = vadd.f32 %v2265, %v2617
    %2619 = vmatprep.mubr.bf16.mxu0 %v650
    %2620 = vmatmul.mubr.bf16.gmra.mrb[0].mxu0 %v554
    %v2621 = vpop.f32.mrb[0].mxu0
    %v2622 = vadd.f32 %v2269, %v2621
    %v2623 = vpop.f32.mrb[0].mxu0
    %v2624 = vadd.f32 %v2271, %v2623
    %v2625 = vpop.f32.mrb[0].mxu0
    %v2626 = vadd.f32 %v2273, %v2625
    %v2627 = vpop.f32.mrb[0].mxu0
    %v2628 = vadd.f32 %v2275, %v2627
    %2629 = vmatprep.mubr.bf16.mxu0 %v651
    %2630 = vmatmul.mubr.bf16.gmra.mrb[0].mxu0 %v555
    %v2631 = vpop.f32.mrb[0].mxu0
    %v2632 = vadd.f32 %v2279, %v2631
    %v2633 = vpop.f32.mrb[0].mxu0
    %v2634 = vadd.f32 %v2281, %v2633
    %v2635 = vpop.f32.mrb[0].mxu0
    %v2636 = vadd.f32 %v2283, %v2635
    %v2637 = vpop.f32.mrb[0].mxu0
    %v2638 = vadd.f32 %v2285, %v2637
    %2639 = vmatprep.mubr.bf16.mxu0 %v652
    %2640 = vmatmul.mubr.bf16.gmra.mrb[0].mxu0 %v556
    %v2641 = vpop.f32.mrb[0].mxu0
    %v2642 = vadd.f32 %v2289, %v2641
    %v2643 = vpop.f32.mrb[0].mxu0
    %v2644 = vadd.f32 %v2291, %v2643
    %v2645 = vpop.f32.mrb[0].mxu0
    %v2646 = vadd.f32 %v2293, %v2645
    %v2647 = vpop.f32.mrb[0].mxu0
    %v2648 = vadd.f32 %v2295, %v2647
    %2649 = vmatprep.mubr.bf16.mxu0 %v653
    %2650 = vmatmul.mubr.bf16.gmra.mrb[0].mxu0 %v557
    %v2651 = vpop.f32.mrb[0].mxu0
    %v2652 = vadd.f32 %v2299, %v2651
    %v2653 = vpop.f32.mrb[0].mxu0
    %v2654 = vadd.f32 %v2301, %v2653
    %v2655 = vpop.f32.mrb[0].mxu0
    %v2656 = vadd.f32 %v2303, %v2655
    %v2657 = vpop.f32.mrb[0].mxu0
    %v2658 = vadd.f32 %v2305, %v2657
    %2659 = vmatprep.mubr.bf16.mxu0 %v654
    %2660 = vmatmul.mubr.bf16.gmra.mrb[0].mxu0 %v558
    %v2661 = vpop.f32.mrb[0].mxu0
    %v2662 = vadd.f32 %v2309, %v2661
    %v2663 = vpop.f32.mrb[0].mxu0
    %v2664 = vadd.f32 %v2311, %v2663
    %v2665 = vpop.f32.mrb[0].mxu0
    %v2666 = vadd.f32 %v2313, %v2665
    %v2667 = vpop.f32.mrb[0].mxu0
    %v2668 = vadd.f32 %v2315, %v2667
    %2669 = vmatprep.mubr.bf16.mxu0 %v655
    %2670 = vmatmul.mubr.bf16.gmra.mrb[0].mxu0 %v559
    %v2671 = vpop.f32.mrb[0].mxu0
    %v2672 = vadd.f32 %v2319, %v2671
    %v2673 = vpop.f32.mrb[0].mxu0
    %v2674 = vadd.f32 %v2321, %v2673
    %v2675 = vpop.f32.mrb[0].mxu0
    %v2676 = vadd.f32 %v2323, %v2675
    %v2677 = vpop.f32.mrb[0].mxu0
    %v2678 = vadd.f32 %v2325, %v2677
    %2679 = vmatprep.mubr.bf16.mxu0 %v656
    %2680 = vmatmul.mubr.bf16.gmra.mrb[0].mxu0 %v560
    %v2681 = vpop.f32.mrb[0].mxu0
    %v2682 = vadd.f32 %v2329, %v2681
    %v2683 = vpop.f32.mrb[0].mxu0
    %v2684 = vadd.f32 %v2331, %v2683
    %v2685 = vpop.f32.mrb[0].mxu0
    %v2686 = vadd.f32 %v2333, %v2685
    %v2687 = vpop.f32.mrb[0].mxu0
    %v2688 = vadd.f32 %v2335, %v2687
    %2689 = vmatprep.mubr.bf16.mxu0 %v657
    %2690 = vmatmul.mubr.bf16.gmra.mrb[0].mxu0 %v561
    %v2691 = vpop.f32.mrb[0].mxu0
    %v2692 = vadd.f32 %v2339, %v2691
    %v2693 = vpop.f32.mrb[0].mxu0
    %v2694 = vadd.f32 %v2341, %v2693
    %v2695 = vpop.f32.mrb[0].mxu0
    %v2696 = vadd.f32 %v2343, %v2695
    %v2697 = vpop.f32.mrb[0].mxu0
    %v2698 = vadd.f32 %v2345, %v2697
    %2699 = vmatprep.mubr.bf16.mxu0 %v658
    %2700 = vmatmul.mubr.bf16.gmra.mrb[0].mxu0 %v562
    %v2701 = vpop.f32.mrb[0].mxu0
    %v2702 = vadd.f32 %v2349, %v2701
    %v2703 = vpop.f32.mrb[0].mxu0
    %v2704 = vadd.f32 %v2351, %v2703
    %v2705 = vpop.f32.mrb[0].mxu0
    %v2706 = vadd.f32 %v2353, %v2705
    %v2707 = vpop.f32.mrb[0].mxu0
    %v2708 = vadd.f32 %v2355, %v2707
    %2709 = vdwg.mxu0
    %2710 = vmatprep.subr.bf16.mxu0 %v1781
    %2711 = vmatpush1.bf16.msra.mxu0 %v1780
    %2712 = vmatprep.subr.bf16.mxu0 %v1783
    %2713 = vmatpush1.bf16.msra.mxu0 %v1782
    %2714 = vmatprep.subr.bf16.mxu0 %v1785
    %2715 = vmatpush1.bf16.msra.mxu0 %v1784
    %2716 = vmatprep.subr.bf16.mxu0 %v1787
    %2717 = vmatpush1.bf16.msra.mxu0 %v1786
    %2718 = vmatprep.subr.bf16.mxu0 %v1789
    %2719 = vmatpush1.bf16.msra.mxu0 %v1788
    %2720 = vmatprep.subr.bf16.mxu0 %v1791
    %2721 = vmatpush1.bf16.msra.mxu0 %v1790
    %2722 = vmatprep.subr.bf16.mxu0 %v1793
    %2723 = vmatpush1.bf16.msra.mxu0 %v1792
    %2724 = vmatprep.subr.bf16.mxu0 %v1795
    %2725 = vmatpush1.bf16.msra.mxu0 %v1794
    %2726 = vmatprep.subr.bf16.mxu0 %v1797
    %2727 = vmatpush1.bf16.msra.mxu0 %v1796
    %2728 = vmatprep.subr.bf16.mxu0 %v1799
    %2729 = vmatpush1.bf16.msra.mxu0 %v1798
    %2730 = vmatprep.subr.bf16.mxu0 %v1801
    %2731 = vmatpush1.bf16.msra.mxu0 %v1800
    %2732 = vmatprep.subr.bf16.mxu0 %v1803
    %2733 = vmatpush1.bf16.msra.mxu0 %v1802
    %2734 = vmatprep.subr.bf16.mxu0 %v1805
    %2735 = vmatpush1.bf16.msra.mxu0 %v1804
    %2736 = vmatprep.subr.bf16.mxu0 %v1807
    %2737 = vmatpush1.bf16.msra.mxu0 %v1806
    %2738 = vmatprep.subr.bf16.mxu0 %v1809
    %2739 = vmatpush1.bf16.msra.mxu0 %v1808
    %2740 = vmatprep.subr.bf16.mxu0 %v1811
    %2741 = vmatpush1.bf16.msra.mxu0 %v1810
    %2742 = vmatprep.mubr.bf16.mxu0 %v819
    %2743 = vmatmul.mubr.bf16.gmra.mrb[0].mxu0 %v723
    %v2744 = vpop.f32.mrb[0].mxu0
    %v2745 = vadd.f32 %v2392, %v2744
    %v2746 = vpop.f32.mrb[0].mxu0
    %v2747 = vadd.f32 %v2394, %v2746
    %v2748 = vpop.f32.mrb[0].mxu0
    %v2749 = vadd.f32 %v2396, %v2748
    %v2750 = vpop.f32.mrb[0].mxu0
    %v2751 = vadd.f32 %v2398, %v2750
    %2752 = vmatprep.mubr.bf16.mxu0 %v820
    %2753 = vmatmul.mubr.bf16.gmra.mrb[0].mxu0 %v724
    %v2754 = vpop.f32.mrb[0].mxu0
    %v2755 = vadd.f32 %v2402, %v2754
    %v2756 = vpop.f32.mrb[0].mxu0
    %v2757 = vadd.f32 %v2404, %v2756
    %v2758 = vpop.f32.mrb[0].mxu0
    %v2759 = vadd.f32 %v2406, %v2758
    %v2760 = vpop.f32.mrb[0].mxu0
    %v2761 = vadd.f32 %v2408, %v2760
    %2762 = vmatprep.mubr.bf16.mxu0 %v821
    %2763 = vmatmul.mubr.bf16.gmra.mrb[0].mxu0 %v725
    %v2764 = vpop.f32.mrb[0].mxu0
    %v2765 = vadd.f32 %v2412, %v2764
    %v2766 = vpop.f32.mrb[0].mxu0
    %v2767 = vadd.f32 %v2414, %v2766
    %v2768 = vpop.f32.mrb[0].mxu0
    %v2769 = vadd.f32 %v2416, %v2768
    %v2770 = vpop.f32.mrb[0].mxu0
    %v2771 = vadd.f32 %v2418, %v2770
    %2772 = vmatprep.mubr.bf16.mxu0 %v822
    %2773 = vmatmul.mubr.bf16.gmra.mrb[0].mxu0 %v726
    %v2774 = vpop.f32.mrb[0].mxu0
    %v2775 = vadd.f32 %v2422, %v2774
    %v2776 = vpop.f32.mrb[0].mxu0
    %v2777 = vadd.f32 %v2424, %v2776
    %v2778 = vpop.f32.mrb[0].mxu0
    %v2779 = vadd.f32 %v2426, %v2778
    %v2780 = vpop.f32.mrb[0].mxu0
    %v2781 = vadd.f32 %v2428, %v2780
    %2782 = vmatprep.mubr.bf16.mxu0 %v823
    %2783 = vmatmul.mubr.bf16.gmra.mrb[0].mxu0 %v727
    %v2784 = vpop.f32.mrb[0].mxu0
    %v2785 = vadd.f32 %v2432, %v2784
    %v2786 = vpop.f32.mrb[0].mxu0
    %v2787 = vadd.f32 %v2434, %v2786
    %v2788 = vpop.f32.mrb[0].mxu0
    %v2789 = vadd.f32 %v2436, %v2788
    %v2790 = vpop.f32.mrb[0].mxu0
    %v2791 = vadd.f32 %v2438, %v2790
    %2792 = vmatprep.mubr.bf16.mxu0 %v824
    %2793 = vmatmul.mubr.bf16.gmra.mrb[0].mxu0 %v728
    %v2794 = vpop.f32.mrb[0].mxu0
    %v2795 = vadd.f32 %v2442, %v2794
    %v2796 = vpop.f32.mrb[0].mxu0
    %v2797 = vadd.f32 %v2444, %v2796
    %v2798 = vpop.f32.mrb[0].mxu0
    %v2799 = vadd.f32 %v2446, %v2798
    %v2800 = vpop.f32.mrb[0].mxu0
    %v2801 = vadd.f32 %v2448, %v2800
    %2802 = vmatprep.mubr.bf16.mxu0 %v825
    %2803 = vmatmul.mubr.bf16.gmra.mrb[0].mxu0 %v729
    %v2804 = vpop.f32.mrb[0].mxu0
    %v2805 = vadd.f32 %v2452, %v2804
    %v2806 = vpop.f32.mrb[0].mxu0
    %v2807 = vadd.f32 %v2454, %v2806
    %v2808 = vpop.f32.mrb[0].mxu0
    %v2809 = vadd.f32 %v2456, %v2808
    %v2810 = vpop.f32.mrb[0].mxu0
    %v2811 = vadd.f32 %v2458, %v2810
    %2812 = vmatprep.mubr.bf16.mxu0 %v826
    %2813 = vmatmul.mubr.bf16.gmra.mrb[0].mxu0 %v730
    %v2814 = vpop.f32.mrb[0].mxu0
    %v2815 = vadd.f32 %v2462, %v2814
    %v2816 = vpop.f32.mrb[0].mxu0
    %v2817 = vadd.f32 %v2464, %v2816
    %v2818 = vpop.f32.mrb[0].mxu0
    %v2819 = vadd.f32 %v2466, %v2818
    %v2820 = vpop.f32.mrb[0].mxu0
    %v2821 = vadd.f32 %v2468, %v2820
    %2822 = vmatprep.mubr.bf16.mxu0 %v827
    %2823 = vmatmul.mubr.bf16.gmra.mrb[0].mxu0 %v731
    %v2824 = vpop.f32.mrb[0].mxu0
    %v2825 = vadd.f32 %v2472, %v2824
    %v2826 = vpop.f32.mrb[0].mxu0
    %v2827 = vadd.f32 %v2474, %v2826
    %v2828 = vpop.f32.mrb[0].mxu0
    %v2829 = vadd.f32 %v2476, %v2828
    %v2830 = vpop.f32.mrb[0].mxu0
    %v2831 = vadd.f32 %v2478, %v2830
    %2832 = vmatprep.mubr.bf16.mxu0 %v828
    %2833 = vmatmul.mubr.bf16.gmra.mrb[0].mxu0 %v732
    %v2834 = vpop.f32.mrb[0].mxu0
    %v2835 = vadd.f32 %v2482, %v2834
    %v2836 = vpop.f32.mrb[0].mxu0
    %v2837 = vadd.f32 %v2484, %v2836
    %v2838 = vpop.f32.mrb[0].mxu0
    %v2839 = vadd.f32 %v2486, %v2838
    %v2840 = vpop.f32.mrb[0].mxu0
    %v2841 = vadd.f32 %v2488, %v2840
    %2842 = vmatprep.mubr.bf16.mxu0 %v829
    %2843 = vmatmul.mubr.bf16.gmra.mrb[0].mxu0 %v733
    %v2844 = vpop.f32.mrb[0].mxu0
    %v2845 = vadd.f32 %v2492, %v2844
    %v2846 = vpop.f32.mrb[0].mxu0
    %v2847 = vadd.f32 %v2494, %v2846
    %v2848 = vpop.f32.mrb[0].mxu0
    %v2849 = vadd.f32 %v2496, %v2848
    %v2850 = vpop.f32.mrb[0].mxu0
    %v2851 = vadd.f32 %v2498, %v2850
    %2852 = vmatprep.mubr.bf16.mxu0 %v830
    %2853 = vmatmul.mubr.bf16.gmra.mrb[0].mxu0 %v734
    %v2854 = vpop.f32.mrb[0].mxu0
    %v2855 = vadd.f32 %v2502, %v2854
    %v2856 = vpop.f32.mrb[0].mxu0
    %v2857 = vadd.f32 %v2504, %v2856
    %v2858 = vpop.f32.mrb[0].mxu0
    %v2859 = vadd.f32 %v2506, %v2858
    %v2860 = vpop.f32.mrb[0].mxu0
    %v2861 = vadd.f32 %v2508, %v2860
    %2862 = vmatprep.mubr.bf16.mxu0 %v831
    %2863 = vmatmul.mubr.bf16.gmra.mrb[0].mxu0 %v735
    %v2864 = vpop.f32.mrb[0].mxu0
    %v2865 = vadd.f32 %v2512, %v2864
    %v2866 = vpop.f32.mrb[0].mxu0
    %v2867 = vadd.f32 %v2514, %v2866
    %v2868 = vpop.f32.mrb[0].mxu0
    %v2869 = vadd.f32 %v2516, %v2868
    %v2870 = vpop.f32.mrb[0].mxu0
    %v2871 = vadd.f32 %v2518, %v2870
    %2872 = vmatprep.mubr.bf16.mxu0 %v832
    %2873 = vmatmul.mubr.bf16.gmra.mrb[0].mxu0 %v736
    %v2874 = vpop.f32.mrb[0].mxu0
    %v2875 = vadd.f32 %v2522, %v2874
    %v2876 = vpop.f32.mrb[0].mxu0
    %v2877 = vadd.f32 %v2524, %v2876
    %v2878 = vpop.f32.mrb[0].mxu0
    %v2879 = vadd.f32 %v2526, %v2878
    %v2880 = vpop.f32.mrb[0].mxu0
    %v2881 = vadd.f32 %v2528, %v2880
    %2882 = vmatprep.mubr.bf16.mxu0 %v833
    %2883 = vmatmul.mubr.bf16.gmra.mrb[0].mxu0 %v737
    %v2884 = vpop.f32.mrb[0].mxu0
    %v2885 = vadd.f32 %v2532, %v2884
    %v2886 = vpop.f32.mrb[0].mxu0
    %v2887 = vadd.f32 %v2534, %v2886
    %v2888 = vpop.f32.mrb[0].mxu0
    %v2889 = vadd.f32 %v2536, %v2888
    %v2890 = vpop.f32.mrb[0].mxu0
    %v2891 = vadd.f32 %v2538, %v2890
    %2892 = vmatprep.mubr.bf16.mxu0 %v834
    %2893 = vmatmul.mubr.bf16.gmra.mrb[0].mxu0 %v738
    %v2894 = vpop.f32.mrb[0].mxu0
    %v2895 = vadd.f32 %v2542, %v2894
    %v2896 = vpop.f32.mrb[0].mxu0
    %v2897 = vadd.f32 %v2544, %v2896
    %v2898 = vpop.f32.mrb[0].mxu0
    %v2899 = vadd.f32 %v2546, %v2898
    %v2900 = vpop.f32.mrb[0].mxu0
    %v2901 = vadd.f32 %v2548, %v2900
    %2902 = vmatprep.mubr.bf16.mxu0 %v835
    %2903 = vmatmul.mubr.bf16.gmra.mrb[0].mxu0 %v739
    %v2904 = vpop.f32.mrb[0].mxu0
    %v2905 = vadd.f32 %v2552, %v2904
    %v2906 = vpop.f32.mrb[0].mxu0
    %v2907 = vadd.f32 %v2554, %v2906
    %v2908 = vpop.f32.mrb[0].mxu0
    %v2909 = vadd.f32 %v2556, %v2908
    %v2910 = vpop.f32.mrb[0].mxu0
    %v2911 = vadd.f32 %v2558, %v2910
    %2912 = vmatprep.mubr.bf16.mxu0 %v836
    %2913 = vmatmul.mubr.bf16.gmra.mrb[0].mxu0 %v740
    %v2914 = vpop.f32.mrb[0].mxu0
    %v2915 = vadd.f32 %v2562, %v2914
    %v2916 = vpop.f32.mrb[0].mxu0
    %v2917 = vadd.f32 %v2564, %v2916
    %v2918 = vpop.f32.mrb[0].mxu0
    %v2919 = vadd.f32 %v2566, %v2918
    %v2920 = vpop.f32.mrb[0].mxu0
    %v2921 = vadd.f32 %v2568, %v2920
    %2922 = vmatprep.mubr.bf16.mxu0 %v837
    %2923 = vmatmul.mubr.bf16.gmra.mrb[0].mxu0 %v741
    %v2924 = vpop.f32.mrb[0].mxu0
    %v2925 = vadd.f32 %v2572, %v2924
    %v2926 = vpop.f32.mrb[0].mxu0
    %v2927 = vadd.f32 %v2574, %v2926
    %v2928 = vpop.f32.mrb[0].mxu0
    %v2929 = vadd.f32 %v2576, %v2928
    %v2930 = vpop.f32.mrb[0].mxu0
    %v2931 = vadd.f32 %v2578, %v2930
    %2932 = vmatprep.mubr.bf16.mxu0 %v838
    %2933 = vmatmul.mubr.bf16.gmra.mrb[0].mxu0 %v742
    %v2934 = vpop.f32.mrb[0].mxu0
    %v2935 = vadd.f32 %v2582, %v2934
    %v2936 = vpop.f32.mrb[0].mxu0
    %v2937 = vadd.f32 %v2584, %v2936
    %v2938 = vpop.f32.mrb[0].mxu0
    %v2939 = vadd.f32 %v2586, %v2938
    %v2940 = vpop.f32.mrb[0].mxu0
    %v2941 = vadd.f32 %v2588, %v2940
    %2942 = vmatprep.mubr.bf16.mxu0 %v839
    %2943 = vmatmul.mubr.bf16.gmra.mrb[0].mxu0 %v743
    %v2944 = vpop.f32.mrb[0].mxu0
    %v2945 = vadd.f32 %v2592, %v2944
    %v2946 = vpop.f32.mrb[0].mxu0
    %v2947 = vadd.f32 %v2594, %v2946
    %v2948 = vpop.f32.mrb[0].mxu0
    %v2949 = vadd.f32 %v2596, %v2948
    %v2950 = vpop.f32.mrb[0].mxu0
    %v2951 = vadd.f32 %v2598, %v2950
    %2952 = vmatprep.mubr.bf16.mxu0 %v840
    %2953 = vmatmul.mubr.bf16.gmra.mrb[0].mxu0 %v744
    %v2954 = vpop.f32.mrb[0].mxu0
    %v2955 = vadd.f32 %v2602, %v2954
    %v2956 = vpop.f32.mrb[0].mxu0
    %v2957 = vadd.f32 %v2604, %v2956
    %v2958 = vpop.f32.mrb[0].mxu0
    %v2959 = vadd.f32 %v2606, %v2958
    %v2960 = vpop.f32.mrb[0].mxu0
    %v2961 = vadd.f32 %v2608, %v2960
    %2962 = vmatprep.mubr.bf16.mxu0 %v841
    %2963 = vmatmul.mubr.bf16.gmra.mrb[0].mxu0 %v745
    %v2964 = vpop.f32.mrb[0].mxu0
    %v2965 = vadd.f32 %v2612, %v2964
    %v2966 = vpop.f32.mrb[0].mxu0
    %v2967 = vadd.f32 %v2614, %v2966
    %v2968 = vpop.f32.mrb[0].mxu0
    %v2969 = vadd.f32 %v2616, %v2968
    %v2970 = vpop.f32.mrb[0].mxu0
    %v2971 = vadd.f32 %v2618, %v2970
    %2972 = vmatprep.mubr.bf16.mxu0 %v842
    %2973 = vmatmul.mubr.bf16.gmra.mrb[0].mxu0 %v746
    %v2974 = vpop.f32.mrb[0].mxu0
    %v2975 = vadd.f32 %v2622, %v2974
    %v2976 = vpop.f32.mrb[0].mxu0
    %v2977 = vadd.f32 %v2624, %v2976
    %v2978 = vpop.f32.mrb[0].mxu0
    %v2979 = vadd.f32 %v2626, %v2978
    %v2980 = vpop.f32.mrb[0].mxu0
    %v2981 = vadd.f32 %v2628, %v2980
    %2982 = vmatprep.mubr.bf16.mxu0 %v843
    %2983 = vmatmul.mubr.bf16.gmra.mrb[0].mxu0 %v747
    %v2984 = vpop.f32.mrb[0].mxu0
    %v2985 = vadd.f32 %v2632, %v2984
    %v2986 = vpop.f32.mrb[0].mxu0
    %v2987 = vadd.f32 %v2634, %v2986
    %v2988 = vpop.f32.mrb[0].mxu0
    %v2989 = vadd.f32 %v2636, %v2988
    %v2990 = vpop.f32.mrb[0].mxu0
    %v2991 = vadd.f32 %v2638, %v2990
    %2992 = vmatprep.mubr.bf16.mxu0 %v844
    %2993 = vmatmul.mubr.bf16.gmra.mrb[0].mxu0 %v748
    %v2994 = vpop.f32.mrb[0].mxu0
    %v2995 = vadd.f32 %v2642, %v2994
    %v2996 = vpop.f32.mrb[0].mxu0
    %v2997 = vadd.f32 %v2644, %v2996
    %v2998 = vpop.f32.mrb[0].mxu0
    %v2999 = vadd.f32 %v2646, %v2998
    %v3000 = vpop.f32.mrb[0].mxu0
    %v3001 = vadd.f32 %v2648, %v3000
    %3002 = vmatprep.mubr.bf16.mxu0 %v845
    %3003 = vmatmul.mubr.bf16.gmra.mrb[0].mxu0 %v749
    %v3004 = vpop.f32.mrb[0].mxu0
    %v3005 = vadd.f32 %v2652, %v3004
    %v3006 = vpop.f32.mrb[0].mxu0
    %v3007 = vadd.f32 %v2654, %v3006
    %v3008 = vpop.f32.mrb[0].mxu0
    %v3009 = vadd.f32 %v2656, %v3008
    %v3010 = vpop.f32.mrb[0].mxu0
    %v3011 = vadd.f32 %v2658, %v3010
    %3012 = vmatprep.mubr.bf16.mxu0 %v846
    %3013 = vmatmul.mubr.bf16.gmra.mrb[0].mxu0 %v750
    %v3014 = vpop.f32.mrb[0].mxu0
    %v3015 = vadd.f32 %v2662, %v3014
    %v3016 = vpop.f32.mrb[0].mxu0
    %v3017 = vadd.f32 %v2664, %v3016
    %v3018 = vpop.f32.mrb[0].mxu0
    %v3019 = vadd.f32 %v2666, %v3018
    %v3020 = vpop.f32.mrb[0].mxu0
    %v3021 = vadd.f32 %v2668, %v3020
    %3022 = vmatprep.mubr.bf16.mxu0 %v847
    %3023 = vmatmul.mubr.bf16.gmra.mrb[0].mxu0 %v751
    %v3024 = vpop.f32.mrb[0].mxu0
    %v3025 = vadd.f32 %v2672, %v3024
    %v3026 = vpop.f32.mrb[0].mxu0
    %v3027 = vadd.f32 %v2674, %v3026
    %v3028 = vpop.f32.mrb[0].mxu0
    %v3029 = vadd.f32 %v2676, %v3028
    %v3030 = vpop.f32.mrb[0].mxu0
    %v3031 = vadd.f32 %v2678, %v3030
    %3032 = vmatprep.mubr.bf16.mxu0 %v848
    %3033 = vmatmul.mubr.bf16.gmra.mrb[0].mxu0 %v752
    %v3034 = vpop.f32.mrb[0].mxu0
    %v3035 = vadd.f32 %v2682, %v3034
    %v3036 = vpop.f32.mrb[0].mxu0
    %v3037 = vadd.f32 %v2684, %v3036
    %v3038 = vpop.f32.mrb[0].mxu0
    %v3039 = vadd.f32 %v2686, %v3038
    %v3040 = vpop.f32.mrb[0].mxu0
    %v3041 = vadd.f32 %v2688, %v3040
    %3042 = vmatprep.mubr.bf16.mxu0 %v849
    %3043 = vmatmul.mubr.bf16.gmra.mrb[0].mxu0 %v753
    %v3044 = vpop.f32.mrb[0].mxu0
    %v3045 = vadd.f32 %v2692, %v3044
    %v3046 = vpop.f32.mrb[0].mxu0
    %v3047 = vadd.f32 %v2694, %v3046
    %v3048 = vpop.f32.mrb[0].mxu0
    %v3049 = vadd.f32 %v2696, %v3048
    %v3050 = vpop.f32.mrb[0].mxu0
    %v3051 = vadd.f32 %v2698, %v3050
    %3052 = vmatprep.mubr.bf16.mxu0 %v850
    %3053 = vmatmul.mubr.bf16.gmra.mrb[0].mxu0 %v754
    %v3054 = vpop.f32.mrb[0].mxu0
    %v3055 = vadd.f32 %v2702, %v3054
    %v3056 = vpop.f32.mrb[0].mxu0
    %v3057 = vadd.f32 %v2704, %v3056
    %v3058 = vpop.f32.mrb[0].mxu0
    %v3059 = vadd.f32 %v2706, %v3058
    %v3060 = vpop.f32.mrb[0].mxu0
    %v3061 = vadd.f32 %v2708, %v3060
    %3062 = vdwg.mxu0
    %3063 = vmatprep.subr.bf16.mxu0 %v1813
    %3064 = vmatpush1.bf16.msra.mxu0 %v1812
    %3065 = vmatprep.subr.bf16.mxu0 %v1815
    %3066 = vmatpush1.bf16.msra.mxu0 %v1814
    %3067 = vmatprep.subr.bf16.mxu0 %v1817
    %3068 = vmatpush1.bf16.msra.mxu0 %v1816
    %3069 = vmatprep.subr.bf16.mxu0 %v1819
    %3070 = vmatpush1.bf16.msra.mxu0 %v1818
    %3071 = vmatprep.subr.bf16.mxu0 %v1821
    %3072 = vmatpush1.bf16.msra.mxu0 %v1820
    %3073 = vmatprep.subr.bf16.mxu0 %v1823
    %3074 = vmatpush1.bf16.msra.mxu0 %v1822
    %3075 = vmatprep.subr.bf16.mxu0 %v1825
    %3076 = vmatpush1.bf16.msra.mxu0 %v1824
    %3077 = vmatprep.subr.bf16.mxu0 %v1827
    %3078 = vmatpush1.bf16.msra.mxu0 %v1826
    %3079 = vmatprep.subr.bf16.mxu0 %v1829
    %3080 = vmatpush1.bf16.msra.mxu0 %v1828
    %3081 = vmatprep.subr.bf16.mxu0 %v1831
    %3082 = vmatpush1.bf16.msra.mxu0 %v1830
    %3083 = vmatprep.subr.bf16.mxu0 %v1833
    %3084 = vmatpush1.bf16.msra.mxu0 %v1832
    %3085 = vmatprep.subr.bf16.mxu0 %v1835
    %3086 = vmatpush1.bf16.msra.mxu0 %v1834
    %3087 = vmatprep.subr.bf16.mxu0 %v1837
    %3088 = vmatpush1.bf16.msra.mxu0 %v1836
    %3089 = vmatprep.subr.bf16.mxu0 %v1839
    %3090 = vmatpush1.bf16.msra.mxu0 %v1838
    %3091 = vmatprep.subr.bf16.mxu0 %v1841
    %3092 = vmatpush1.bf16.msra.mxu0 %v1840
    %3093 = vmatprep.subr.bf16.mxu0 %v1843
    %3094 = vmatpush1.bf16.msra.mxu0 %v1842
    %3095 = vmatprep.mubr.bf16.mxu0 %v1012
    %3096 = vmatmul.mubr.bf16.gmra.mrb[0].mxu0 %v916
    %v3097 = vpop.f32.mrb[0].mxu0
    %v3098 = vadd.f32 %v2745, %v3097
    %v3099 = vpop.f32.mrb[0].mxu0
    %v3100 = vadd.f32 %v2747, %v3099
    %v3101 = vpop.f32.mrb[0].mxu0
    %v3102 = vadd.f32 %v2749, %v3101
    %v3103 = vpop.f32.mrb[0].mxu0
    %v3104 = vadd.f32 %v2751, %v3103
    %3105 = vmatprep.mubr.bf16.mxu0 %v1013
    %3106 = vmatmul.mubr.bf16.gmra.mrb[0].mxu0 %v917
    %v3107 = vpop.f32.mrb[0].mxu0
    %v3108 = vadd.f32 %v2755, %v3107
    %v3109 = vpop.f32.mrb[0].mxu0
    %v3110 = vadd.f32 %v2757, %v3109
    %v3111 = vpop.f32.mrb[0].mxu0
    %v3112 = vadd.f32 %v2759, %v3111
    %v3113 = vpop.f32.mrb[0].mxu0
    %v3114 = vadd.f32 %v2761, %v3113
    %3115 = vmatprep.mubr.bf16.mxu0 %v1014
    %3116 = vmatmul.mubr.bf16.gmra.mrb[0].mxu0 %v918
    %v3117 = vpop.f32.mrb[0].mxu0
    %v3118 = vadd.f32 %v2765, %v3117
    %v3119 = vpop.f32.mrb[0].mxu0
    %v3120 = vadd.f32 %v2767, %v3119
    %v3121 = vpop.f32.mrb[0].mxu0
    %v3122 = vadd.f32 %v2769, %v3121
    %v3123 = vpop.f32.mrb[0].mxu0
    %v3124 = vadd.f32 %v2771, %v3123
    %3125 = vmatprep.mubr.bf16.mxu0 %v1015
    %3126 = vmatmul.mubr.bf16.gmra.mrb[0].mxu0 %v919
    %v3127 = vpop.f32.mrb[0].mxu0
    %v3128 = vadd.f32 %v2775, %v3127
    %v3129 = vpop.f32.mrb[0].mxu0
    %v3130 = vadd.f32 %v2777, %v3129
    %v3131 = vpop.f32.mrb[0].mxu0
    %v3132 = vadd.f32 %v2779, %v3131
    %v3133 = vpop.f32.mrb[0].mxu0
    %v3134 = vadd.f32 %v2781, %v3133
    %3135 = vmatprep.mubr.bf16.mxu0 %v1016
    %3136 = vmatmul.mubr.bf16.gmra.mrb[0].mxu0 %v920
    %v3137 = vpop.f32.mrb[0].mxu0
    %v3138 = vadd.f32 %v2785, %v3137
    %v3139 = vpop.f32.mrb[0].mxu0
    %v3140 = vadd.f32 %v2787, %v3139
    %v3141 = vpop.f32.mrb[0].mxu0
    %v3142 = vadd.f32 %v2789, %v3141
    %v3143 = vpop.f32.mrb[0].mxu0
    %v3144 = vadd.f32 %v2791, %v3143
    %3145 = vmatprep.mubr.bf16.mxu0 %v1017
    %3146 = vmatmul.mubr.bf16.gmra.mrb[0].mxu0 %v921
    %v3147 = vpop.f32.mrb[0].mxu0
    %v3148 = vadd.f32 %v2795, %v3147
    %v3149 = vpop.f32.mrb[0].mxu0
    %v3150 = vadd.f32 %v2797, %v3149
    %v3151 = vpop.f32.mrb[0].mxu0
    %v3152 = vadd.f32 %v2799, %v3151
    %v3153 = vpop.f32.mrb[0].mxu0
    %v3154 = vadd.f32 %v2801, %v3153
    %3155 = vmatprep.mubr.bf16.mxu0 %v1018
    %3156 = vmatmul.mubr.bf16.gmra.mrb[0].mxu0 %v922
    %v3157 = vpop.f32.mrb[0].mxu0
    %v3158 = vadd.f32 %v2805, %v3157
    %v3159 = vpop.f32.mrb[0].mxu0
    %v3160 = vadd.f32 %v2807, %v3159
    %v3161 = vpop.f32.mrb[0].mxu0
    %v3162 = vadd.f32 %v2809, %v3161
    %v3163 = vpop.f32.mrb[0].mxu0
    %v3164 = vadd.f32 %v2811, %v3163
    %3165 = vmatprep.mubr.bf16.mxu0 %v1019
    %3166 = vmatmul.mubr.bf16.gmra.mrb[0].mxu0 %v923
    %v3167 = vpop.f32.mrb[0].mxu0
    %v3168 = vadd.f32 %v2815, %v3167
    %v3169 = vpop.f32.mrb[0].mxu0
    %v3170 = vadd.f32 %v2817, %v3169
    %v3171 = vpop.f32.mrb[0].mxu0
    %v3172 = vadd.f32 %v2819, %v3171
    %v3173 = vpop.f32.mrb[0].mxu0
    %v3174 = vadd.f32 %v2821, %v3173
    %3175 = vmatprep.mubr.bf16.mxu0 %v1020
    %3176 = vmatmul.mubr.bf16.gmra.mrb[0].mxu0 %v924
    %v3177 = vpop.f32.mrb[0].mxu0
    %v3178 = vadd.f32 %v2825, %v3177
    %v3179 = vpop.f32.mrb[0].mxu0
    %v3180 = vadd.f32 %v2827, %v3179
    %v3181 = vpop.f32.mrb[0].mxu0
    %v3182 = vadd.f32 %v2829, %v3181
    %v3183 = vpop.f32.mrb[0].mxu0
    %v3184 = vadd.f32 %v2831, %v3183
    %3185 = vmatprep.mubr.bf16.mxu0 %v1021
    %3186 = vmatmul.mubr.bf16.gmra.mrb[0].mxu0 %v925
    %v3187 = vpop.f32.mrb[0].mxu0
    %v3188 = vadd.f32 %v2835, %v3187
    %v3189 = vpop.f32.mrb[0].mxu0
    %v3190 = vadd.f32 %v2837, %v3189
    %v3191 = vpop.f32.mrb[0].mxu0
    %v3192 = vadd.f32 %v2839, %v3191
    %v3193 = vpop.f32.mrb[0].mxu0
    %v3194 = vadd.f32 %v2841, %v3193
    %3195 = vmatprep.mubr.bf16.mxu0 %v1022
    %3196 = vmatmul.mubr.bf16.gmra.mrb[0].mxu0 %v926
    %v3197 = vpop.f32.mrb[0].mxu0
    %v3198 = vadd.f32 %v2845, %v3197
    %v3199 = vpop.f32.mrb[0].mxu0
    %v3200 = vadd.f32 %v2847, %v3199
    %v3201 = vpop.f32.mrb[0].mxu0
    %v3202 = vadd.f32 %v2849, %v3201
    %v3203 = vpop.f32.mrb[0].mxu0
    %v3204 = vadd.f32 %v2851, %v3203
    %3205 = vmatprep.mubr.bf16.mxu0 %v1023
    %3206 = vmatmul.mubr.bf16.gmra.mrb[0].mxu0 %v927
    %v3207 = vpop.f32.mrb[0].mxu0
    %v3208 = vadd.f32 %v2855, %v3207
    %v3209 = vpop.f32.mrb[0].mxu0
    %v3210 = vadd.f32 %v2857, %v3209
    %v3211 = vpop.f32.mrb[0].mxu0
    %v3212 = vadd.f32 %v2859, %v3211
    %v3213 = vpop.f32.mrb[0].mxu0
    %v3214 = vadd.f32 %v2861, %v3213
    %3215 = vmatprep.mubr.bf16.mxu0 %v1024
    %3216 = vmatmul.mubr.bf16.gmra.mrb[0].mxu0 %v928
    %v3217 = vpop.f32.mrb[0].mxu0
    %v3218 = vadd.f32 %v2865, %v3217
    %v3219 = vpop.f32.mrb[0].mxu0
    %v3220 = vadd.f32 %v2867, %v3219
    %v3221 = vpop.f32.mrb[0].mxu0
    %v3222 = vadd.f32 %v2869, %v3221
    %v3223 = vpop.f32.mrb[0].mxu0
    %v3224 = vadd.f32 %v2871, %v3223
    %3225 = vmatprep.mubr.bf16.mxu0 %v1025
    %3226 = vmatmul.mubr.bf16.gmra.mrb[0].mxu0 %v929
    %v3227 = vpop.f32.mrb[0].mxu0
    %v3228 = vadd.f32 %v2875, %v3227
    %v3229 = vpop.f32.mrb[0].mxu0
    %v3230 = vadd.f32 %v2877, %v3229
    %v3231 = vpop.f32.mrb[0].mxu0
    %v3232 = vadd.f32 %v2879, %v3231
    %v3233 = vpop.f32.mrb[0].mxu0
    %v3234 = vadd.f32 %v2881, %v3233
    %3235 = vmatprep.mubr.bf16.mxu0 %v1026
    %3236 = vmatmul.mubr.bf16.gmra.mrb[0].mxu0 %v930
    %v3237 = vpop.f32.mrb[0].mxu0
    %v3238 = vadd.f32 %v2885, %v3237
    %v3239 = vpop.f32.mrb[0].mxu0
    %v3240 = vadd.f32 %v2887, %v3239
    %v3241 = vpop.f32.mrb[0].mxu0
    %v3242 = vadd.f32 %v2889, %v3241
    %v3243 = vpop.f32.mrb[0].mxu0
    %v3244 = vadd.f32 %v2891, %v3243
    %3245 = vmatprep.mubr.bf16.mxu0 %v1027
    %3246 = vmatmul.mubr.bf16.gmra.mrb[0].mxu0 %v931
    %v3247 = vpop.f32.mrb[0].mxu0
    %v3248 = vadd.f32 %v2895, %v3247
    %v3249 = vpop.f32.mrb[0].mxu0
    %v3250 = vadd.f32 %v2897, %v3249
    %v3251 = vpop.f32.mrb[0].mxu0
    %v3252 = vadd.f32 %v2899, %v3251
    %v3253 = vpop.f32.mrb[0].mxu0
    %v3254 = vadd.f32 %v2901, %v3253
    %3255 = vmatprep.mubr.bf16.mxu0 %v1028
    %3256 = vmatmul.mubr.bf16.gmra.mrb[0].mxu0 %v932
    %v3257 = vpop.f32.mrb[0].mxu0
    %v3258 = vadd.f32 %v2905, %v3257
    %v3259 = vpop.f32.mrb[0].mxu0
    %v3260 = vadd.f32 %v2907, %v3259
    %v3261 = vpop.f32.mrb[0].mxu0
    %v3262 = vadd.f32 %v2909, %v3261
    %v3263 = vpop.f32.mrb[0].mxu0
    %v3264 = vadd.f32 %v2911, %v3263
    %3265 = vmatprep.mubr.bf16.mxu0 %v1029
    %3266 = vmatmul.mubr.bf16.gmra.mrb[0].mxu0 %v933
    %v3267 = vpop.f32.mrb[0].mxu0
    %v3268 = vadd.f32 %v2915, %v3267
    %v3269 = vpop.f32.mrb[0].mxu0
    %v3270 = vadd.f32 %v2917, %v3269
    %v3271 = vpop.f32.mrb[0].mxu0
    %v3272 = vadd.f32 %v2919, %v3271
    %v3273 = vpop.f32.mrb[0].mxu0
    %v3274 = vadd.f32 %v2921, %v3273
    %3275 = vmatprep.mubr.bf16.mxu0 %v1030
    %3276 = vmatmul.mubr.bf16.gmra.mrb[0].mxu0 %v934
    %v3277 = vpop.f32.mrb[0].mxu0
    %v3278 = vadd.f32 %v2925, %v3277
    %v3279 = vpop.f32.mrb[0].mxu0
    %v3280 = vadd.f32 %v2927, %v3279
    %v3281 = vpop.f32.mrb[0].mxu0
    %v3282 = vadd.f32 %v2929, %v3281
    %v3283 = vpop.f32.mrb[0].mxu0
    %v3284 = vadd.f32 %v2931, %v3283
    %3285 = vmatprep.mubr.bf16.mxu0 %v1031
    %3286 = vmatmul.mubr.bf16.gmra.mrb[0].mxu0 %v935
    %v3287 = vpop.f32.mrb[0].mxu0
    %v3288 = vadd.f32 %v2935, %v3287
    %v3289 = vpop.f32.mrb[0].mxu0
    %v3290 = vadd.f32 %v2937, %v3289
    %v3291 = vpop.f32.mrb[0].mxu0
    %v3292 = vadd.f32 %v2939, %v3291
    %v3293 = vpop.f32.mrb[0].mxu0
    %v3294 = vadd.f32 %v2941, %v3293
    %3295 = vmatprep.mubr.bf16.mxu0 %v1032
    %3296 = vmatmul.mubr.bf16.gmra.mrb[0].mxu0 %v936
    %v3297 = vpop.f32.mrb[0].mxu0
    %v3298 = vadd.f32 %v2945, %v3297
    %v3299 = vpop.f32.mrb[0].mxu0
    %v3300 = vadd.f32 %v2947, %v3299
    %v3301 = vpop.f32.mrb[0].mxu0
    %v3302 = vadd.f32 %v2949, %v3301
    %v3303 = vpop.f32.mrb[0].mxu0
    %v3304 = vadd.f32 %v2951, %v3303
    %3305 = vmatprep.mubr.bf16.mxu0 %v1033
    %3306 = vmatmul.mubr.bf16.gmra.mrb[0].mxu0 %v937
    %v3307 = vpop.f32.mrb[0].mxu0
    %v3308 = vadd.f32 %v2955, %v3307
    %v3309 = vpop.f32.mrb[0].mxu0
    %v3310 = vadd.f32 %v2957, %v3309
    %v3311 = vpop.f32.mrb[0].mxu0
    %v3312 = vadd.f32 %v2959, %v3311
    %v3313 = vpop.f32.mrb[0].mxu0
    %v3314 = vadd.f32 %v2961, %v3313
    %3315 = vmatprep.mubr.bf16.mxu0 %v1034
    %3316 = vmatmul.mubr.bf16.gmra.mrb[0].mxu0 %v938
    %v3317 = vpop.f32.mrb[0].mxu0
    %v3318 = vadd.f32 %v2965, %v3317
    %v3319 = vpop.f32.mrb[0].mxu0
    %v3320 = vadd.f32 %v2967, %v3319
    %v3321 = vpop.f32.mrb[0].mxu0
    %v3322 = vadd.f32 %v2969, %v3321
    %v3323 = vpop.f32.mrb[0].mxu0
    %v3324 = vadd.f32 %v2971, %v3323
    %3325 = vmatprep.mubr.bf16.mxu0 %v1035
    %3326 = vmatmul.mubr.bf16.gmra.mrb[0].mxu0 %v939
    %v3327 = vpop.f32.mrb[0].mxu0
    %v3328 = vadd.f32 %v2975, %v3327
    %v3329 = vpop.f32.mrb[0].mxu0
    %v3330 = vadd.f32 %v2977, %v3329
    %v3331 = vpop.f32.mrb[0].mxu0
    %v3332 = vadd.f32 %v2979, %v3331
    %v3333 = vpop.f32.mrb[0].mxu0
    %v3334 = vadd.f32 %v2981, %v3333
    %3335 = vmatprep.mubr.bf16.mxu0 %v1036
    %3336 = vmatmul.mubr.bf16.gmra.mrb[0].mxu0 %v940
    %v3337 = vpop.f32.mrb[0].mxu0
    %v3338 = vadd.f32 %v2985, %v3337
    %v3339 = vpop.f32.mrb[0].mxu0
    %v3340 = vadd.f32 %v2987, %v3339
    %v3341 = vpop.f32.mrb[0].mxu0
    %v3342 = vadd.f32 %v2989, %v3341
    %v3343 = vpop.f32.mrb[0].mxu0
    %v3344 = vadd.f32 %v2991, %v3343
    %3345 = vmatprep.mubr.bf16.mxu0 %v1037
    %3346 = vmatmul.mubr.bf16.gmra.mrb[0].mxu0 %v941
    %v3347 = vpop.f32.mrb[0].mxu0
    %v3348 = vadd.f32 %v2995, %v3347
    %v3349 = vpop.f32.mrb[0].mxu0
    %v3350 = vadd.f32 %v2997, %v3349
    %v3351 = vpop.f32.mrb[0].mxu0
    %v3352 = vadd.f32 %v2999, %v3351
    %v3353 = vpop.f32.mrb[0].mxu0
    %v3354 = vadd.f32 %v3001, %v3353
    %3355 = vmatprep.mubr.bf16.mxu0 %v1038
    %3356 = vmatmul.mubr.bf16.gmra.mrb[0].mxu0 %v942
    %v3357 = vpop.f32.mrb[0].mxu0
    %v3358 = vadd.f32 %v3005, %v3357
    %v3359 = vpop.f32.mrb[0].mxu0
    %v3360 = vadd.f32 %v3007, %v3359
    %v3361 = vpop.f32.mrb[0].mxu0
    %v3362 = vadd.f32 %v3009, %v3361
    %v3363 = vpop.f32.mrb[0].mxu0
    %v3364 = vadd.f32 %v3011, %v3363
    %3365 = vmatprep.mubr.bf16.mxu0 %v1039
    %3366 = vmatmul.mubr.bf16.gmra.mrb[0].mxu0 %v943
    %v3367 = vpop.f32.mrb[0].mxu0
    %v3368 = vadd.f32 %v3015, %v3367
    %v3369 = vpop.f32.mrb[0].mxu0
    %v3370 = vadd.f32 %v3017, %v3369
    %v3371 = vpop.f32.mrb[0].mxu0
    %v3372 = vadd.f32 %v3019, %v3371
    %v3373 = vpop.f32.mrb[0].mxu0
    %v3374 = vadd.f32 %v3021, %v3373
    %3375 = vmatprep.mubr.bf16.mxu0 %v1040
    %3376 = vmatmul.mubr.bf16.gmra.mrb[0].mxu0 %v944
    %v3377 = vpop.f32.mrb[0].mxu0
    %v3378 = vadd.f32 %v3025, %v3377
    %v3379 = vpop.f32.mrb[0].mxu0
    %v3380 = vadd.f32 %v3027, %v3379
    %v3381 = vpop.f32.mrb[0].mxu0
    %v3382 = vadd.f32 %v3029, %v3381
    %v3383 = vpop.f32.mrb[0].mxu0
    %v3384 = vadd.f32 %v3031, %v3383
    %3385 = vmatprep.mubr.bf16.mxu0 %v1041
    %3386 = vmatmul.mubr.bf16.gmra.mrb[0].mxu0 %v945
    %v3387 = vpop.f32.mrb[0].mxu0
    %v3388 = vadd.f32 %v3035, %v3387
    %v3389 = vpop.f32.mrb[0].mxu0
    %v3390 = vadd.f32 %v3037, %v3389
    %v3391 = vpop.f32.mrb[0].mxu0
    %v3392 = vadd.f32 %v3039, %v3391
    %v3393 = vpop.f32.mrb[0].mxu0
    %v3394 = vadd.f32 %v3041, %v3393
    %3395 = vmatprep.mubr.bf16.mxu0 %v1042
    %3396 = vmatmul.mubr.bf16.gmra.mrb[0].mxu0 %v946
    %v3397 = vpop.f32.mrb[0].mxu0
    %v3398 = vadd.f32 %v3045, %v3397
    %v3399 = vpop.f32.mrb[0].mxu0
    %v3400 = vadd.f32 %v3047, %v3399
    %v3401 = vpop.f32.mrb[0].mxu0
    %v3402 = vadd.f32 %v3049, %v3401
    %v3403 = vpop.f32.mrb[0].mxu0
    %v3404 = vadd.f32 %v3051, %v3403
    %3405 = vmatprep.mubr.bf16.mxu0 %v1043
    %3406 = vmatmul.mubr.bf16.gmra.mrb[0].mxu0 %v947
    %v3407 = vpop.f32.mrb[0].mxu0
    %v3408 = vadd.f32 %v3055, %v3407
    %v3409 = vpop.f32.mrb[0].mxu0
    %v3410 = vadd.f32 %v3057, %v3409
    %v3411 = vpop.f32.mrb[0].mxu0
    %v3412 = vadd.f32 %v3059, %v3411
    %v3413 = vpop.f32.mrb[0].mxu0
    %v3414 = vadd.f32 %v3061, %v3413
    %3415 = vdwg.mxu0
    %3416 = vmatprep.subr.bf16.mxu0 %v1845
    %3417 = vmatpush1.bf16.msra.mxu0 %v1844
    %3418 = vmatprep.subr.bf16.mxu0 %v1847
    %3419 = vmatpush1.bf16.msra.mxu0 %v1846
    %3420 = vmatprep.subr.bf16.mxu0 %v1849
    %3421 = vmatpush1.bf16.msra.mxu0 %v1848
    %3422 = vmatprep.subr.bf16.mxu0 %v1851
    %3423 = vmatpush1.bf16.msra.mxu0 %v1850
    %3424 = vmatprep.subr.bf16.mxu0 %v1853
    %3425 = vmatpush1.bf16.msra.mxu0 %v1852
    %3426 = vmatprep.subr.bf16.mxu0 %v1855
    %3427 = vmatpush1.bf16.msra.mxu0 %v1854
    %3428 = vmatprep.subr.bf16.mxu0 %v1857
    %3429 = vmatpush1.bf16.msra.mxu0 %v1856
    %3430 = vmatprep.subr.bf16.mxu0 %v1859
    %3431 = vmatpush1.bf16.msra.mxu0 %v1858
    %3432 = vmatprep.subr.bf16.mxu0 0
    %3433 = vmatpush1.bf16.msra.mxu0 0
    %3434 = vmatprep.subr.bf16.mxu0 0
    %3435 = vmatpush1.bf16.msra.mxu0 0
    %3436 = vmatprep.subr.bf16.mxu0 0
    %3437 = vmatpush1.bf16.msra.mxu0 0
    %3438 = vmatprep.subr.bf16.mxu0 0
    %3439 = vmatpush1.bf16.msra.mxu0 0
    %3440 = vmatprep.subr.bf16.mxu0 0
    %3441 = vmatpush1.bf16.msra.mxu0 0
    %3442 = vmatprep.subr.bf16.mxu0 0
    %3443 = vmatpush1.bf16.msra.mxu0 0
    %3444 = vmatprep.subr.bf16.mxu0 0
    %3445 = vmatpush1.bf16.msra.mxu0 0
    %3446 = vmatprep.subr.bf16.mxu0 0
    %3447 = vmatpush1.bf16.msra.mxu0 0
    %3448 = vmatprep.mubr.bf16.mxu0 0
    %3449 = vmatmul.mubr.bf16.gmra.mrb[0].mxu0 %v1108
    %v3450 = vpop.f32.mrb[0].mxu0
    %v3451 = vadd.f32 %v3098, %v3450
    %v3452 = vpop.f32.mrb[0].mxu0
    %v3453 = vadd.f32 %v3100, %v3452
    %v3454 = vpop.f32.mrb[0].mxu0
    %v3455 = vadd.f32 %v3102, %v3454
    %v3456 = vpop.f32.mrb[0].mxu0
    %v3457 = vadd.f32 %v3104, %v3456
    %3458 = vmatprep.mubr.bf16.mxu0 0
    %3459 = vmatmul.mubr.bf16.gmra.mrb[0].mxu0 %v1109
    %v3460 = vpop.f32.mrb[0].mxu0
    %v3461 = vadd.f32 %v3108, %v3460
    %v3462 = vpop.f32.mrb[0].mxu0
    %v3463 = vadd.f32 %v3110, %v3462
    %v3464 = vpop.f32.mrb[0].mxu0
    %v3465 = vadd.f32 %v3112, %v3464
    %v3466 = vpop.f32.mrb[0].mxu0
    %v3467 = vadd.f32 %v3114, %v3466
    %3468 = vmatprep.mubr.bf16.mxu0 0
    %3469 = vmatmul.mubr.bf16.gmra.mrb[0].mxu0 %v1110
    %v3470 = vpop.f32.mrb[0].mxu0
    %v3471 = vadd.f32 %v3118, %v3470
    %v3472 = vpop.f32.mrb[0].mxu0
    %v3473 = vadd.f32 %v3120, %v3472
    %v3474 = vpop.f32.mrb[0].mxu0
    %v3475 = vadd.f32 %v3122, %v3474
    %v3476 = vpop.f32.mrb[0].mxu0
    %v3477 = vadd.f32 %v3124, %v3476
    %3478 = vmatprep.mubr.bf16.mxu0 0
    %3479 = vmatmul.mubr.bf16.gmra.mrb[0].mxu0 %v1111
    %v3480 = vpop.f32.mrb[0].mxu0
    %v3481 = vadd.f32 %v3128, %v3480
    %v3482 = vpop.f32.mrb[0].mxu0
    %v3483 = vadd.f32 %v3130, %v3482
    %v3484 = vpop.f32.mrb[0].mxu0
    %v3485 = vadd.f32 %v3132, %v3484
    %v3486 = vpop.f32.mrb[0].mxu0
    %v3487 = vadd.f32 %v3134, %v3486
    %3488 = vmatprep.mubr.bf16.mxu0 0
    %3489 = vmatmul.mubr.bf16.gmra.mrb[0].mxu0 %v1112
    %v3490 = vpop.f32.mrb[0].mxu0
    %v3491 = vadd.f32 %v3138, %v3490
    %v3492 = vpop.f32.mrb[0].mxu0
    %v3493 = vadd.f32 %v3140, %v3492
    %v3494 = vpop.f32.mrb[0].mxu0
    %v3495 = vadd.f32 %v3142, %v3494
    %v3496 = vpop.f32.mrb[0].mxu0
    %v3497 = vadd.f32 %v3144, %v3496
    %3498 = vmatprep.mubr.bf16.mxu0 0
    %3499 = vmatmul.mubr.bf16.gmra.mrb[0].mxu0 %v1113
    %v3500 = vpop.f32.mrb[0].mxu0
    %v3501 = vadd.f32 %v3148, %v3500
    %v3502 = vpop.f32.mrb[0].mxu0
    %v3503 = vadd.f32 %v3150, %v3502
    %v3504 = vpop.f32.mrb[0].mxu0
    %v3505 = vadd.f32 %v3152, %v3504
    %v3506 = vpop.f32.mrb[0].mxu0
    %v3507 = vadd.f32 %v3154, %v3506
    %3508 = vmatprep.mubr.bf16.mxu0 0
    %3509 = vmatmul.mubr.bf16.gmra.mrb[0].mxu0 %v1114
    %v3510 = vpop.f32.mrb[0].mxu0
    %v3511 = vadd.f32 %v3158, %v3510
    %v3512 = vpop.f32.mrb[0].mxu0
    %v3513 = vadd.f32 %v3160, %v3512
    %v3514 = vpop.f32.mrb[0].mxu0
    %v3515 = vadd.f32 %v3162, %v3514
    %v3516 = vpop.f32.mrb[0].mxu0
    %v3517 = vadd.f32 %v3164, %v3516
    %3518 = vmatprep.mubr.bf16.mxu0 0
    %3519 = vmatmul.mubr.bf16.gmra.mrb[0].mxu0 %v1115
    %v3520 = vpop.f32.mrb[0].mxu0
    %v3521 = vadd.f32 %v3168, %v3520
    %v3522 = vpop.f32.mrb[0].mxu0
    %v3523 = vadd.f32 %v3170, %v3522
    %v3524 = vpop.f32.mrb[0].mxu0
    %v3525 = vadd.f32 %v3172, %v3524
    %v3526 = vpop.f32.mrb[0].mxu0
    %v3527 = vadd.f32 %v3174, %v3526
    %3528 = vmatprep.mubr.bf16.mxu0 0
    %3529 = vmatmul.mubr.bf16.gmra.mrb[0].mxu0 %v1116
    %v3530 = vpop.f32.mrb[0].mxu0
    %v3531 = vadd.f32 %v3178, %v3530
    %v3532 = vpop.f32.mrb[0].mxu0
    %v3533 = vadd.f32 %v3180, %v3532
    %v3534 = vpop.f32.mrb[0].mxu0
    %v3535 = vadd.f32 %v3182, %v3534
    %v3536 = vpop.f32.mrb[0].mxu0
    %v3537 = vadd.f32 %v3184, %v3536
    %3538 = vmatprep.mubr.bf16.mxu0 0
    %3539 = vmatmul.mubr.bf16.gmra.mrb[0].mxu0 %v1117
    %v3540 = vpop.f32.mrb[0].mxu0
    %v3541 = vadd.f32 %v3188, %v3540
    %v3542 = vpop.f32.mrb[0].mxu0
    %v3543 = vadd.f32 %v3190, %v3542
    %v3544 = vpop.f32.mrb[0].mxu0
    %v3545 = vadd.f32 %v3192, %v3544
    %v3546 = vpop.f32.mrb[0].mxu0
    %v3547 = vadd.f32 %v3194, %v3546
    %3548 = vmatprep.mubr.bf16.mxu0 0
    %3549 = vmatmul.mubr.bf16.gmra.mrb[0].mxu0 %v1118
    %v3550 = vpop.f32.mrb[0].mxu0
    %v3551 = vadd.f32 %v3198, %v3550
    %v3552 = vpop.f32.mrb[0].mxu0
    %v3553 = vadd.f32 %v3200, %v3552
    %v3554 = vpop.f32.mrb[0].mxu0
    %v3555 = vadd.f32 %v3202, %v3554
    %v3556 = vpop.f32.mrb[0].mxu0
    %v3557 = vadd.f32 %v3204, %v3556
    %3558 = vmatprep.mubr.bf16.mxu0 0
    %3559 = vmatmul.mubr.bf16.gmra.mrb[0].mxu0 %v1119
    %v3560 = vpop.f32.mrb[0].mxu0
    %v3561 = vadd.f32 %v3208, %v3560
    %v3562 = vpop.f32.mrb[0].mxu0
    %v3563 = vadd.f32 %v3210, %v3562
    %v3564 = vpop.f32.mrb[0].mxu0
    %v3565 = vadd.f32 %v3212, %v3564
    %v3566 = vpop.f32.mrb[0].mxu0
    %v3567 = vadd.f32 %v3214, %v3566
    %3568 = vmatprep.mubr.bf16.mxu0 0
    %3569 = vmatmul.mubr.bf16.gmra.mrb[0].mxu0 %v1120
    %v3570 = vpop.f32.mrb[0].mxu0
    %v3571 = vadd.f32 %v3218, %v3570
    %v3572 = vpop.f32.mrb[0].mxu0
    %v3573 = vadd.f32 %v3220, %v3572
    %v3574 = vpop.f32.mrb[0].mxu0
    %v3575 = vadd.f32 %v3222, %v3574
    %v3576 = vpop.f32.mrb[0].mxu0
    %v3577 = vadd.f32 %v3224, %v3576
    %3578 = vmatprep.mubr.bf16.mxu0 0
    %3579 = vmatmul.mubr.bf16.gmra.mrb[0].mxu0 %v1121
    %v3580 = vpop.f32.mrb[0].mxu0
    %v3581 = vadd.f32 %v3228, %v3580
    %v3582 = vpop.f32.mrb[0].mxu0
    %v3583 = vadd.f32 %v3230, %v3582
    %v3584 = vpop.f32.mrb[0].mxu0
    %v3585 = vadd.f32 %v3232, %v3584
    %v3586 = vpop.f32.mrb[0].mxu0
    %v3587 = vadd.f32 %v3234, %v3586
    %3588 = vmatprep.mubr.bf16.mxu0 0
    %3589 = vmatmul.mubr.bf16.gmra.mrb[0].mxu0 %v1122
    %v3590 = vpop.f32.mrb[0].mxu0
    %v3591 = vadd.f32 %v3238, %v3590
    %v3592 = vpop.f32.mrb[0].mxu0
    %v3593 = vadd.f32 %v3240, %v3592
    %v3594 = vpop.f32.mrb[0].mxu0
    %v3595 = vadd.f32 %v3242, %v3594
    %v3596 = vpop.f32.mrb[0].mxu0
    %v3597 = vadd.f32 %v3244, %v3596
    %3598 = vmatprep.mubr.bf16.mxu0 0
    %3599 = vmatmul.mubr.bf16.gmra.mrb[0].mxu0 %v1123
    %v3600 = vpop.f32.mrb[0].mxu0
    %v3601 = vadd.f32 %v3248, %v3600
    %v3602 = vpop.f32.mrb[0].mxu0
    %v3603 = vadd.f32 %v3250, %v3602
    %v3604 = vpop.f32.mrb[0].mxu0
    %v3605 = vadd.f32 %v3252, %v3604
    %v3606 = vpop.f32.mrb[0].mxu0
    %v3607 = vadd.f32 %v3254, %v3606
    %3608 = vmatprep.mubr.bf16.mxu0 0
    %3609 = vmatmul.mubr.bf16.gmra.mrb[0].mxu0 %v1124
    %v3610 = vpop.f32.mrb[0].mxu0
    %v3611 = vadd.f32 %v3258, %v3610
    %v3612 = vpop.f32.mrb[0].mxu0
    %v3613 = vadd.f32 %v3260, %v3612
    %v3614 = vpop.f32.mrb[0].mxu0
    %v3615 = vadd.f32 %v3262, %v3614
    %v3616 = vpop.f32.mrb[0].mxu0
    %v3617 = vadd.f32 %v3264, %v3616
    %3618 = vmatprep.mubr.bf16.mxu0 0
    %3619 = vmatmul.mubr.bf16.gmra.mrb[0].mxu0 %v1125
    %v3620 = vpop.f32.mrb[0].mxu0
    %v3621 = vadd.f32 %v3268, %v3620
    %v3622 = vpop.f32.mrb[0].mxu0
    %v3623 = vadd.f32 %v3270, %v3622
    %v3624 = vpop.f32.mrb[0].mxu0
    %v3625 = vadd.f32 %v3272, %v3624
    %v3626 = vpop.f32.mrb[0].mxu0
    %v3627 = vadd.f32 %v3274, %v3626
    %3628 = vmatprep.mubr.bf16.mxu0 0
    %3629 = vmatmul.mubr.bf16.gmra.mrb[0].mxu0 %v1126
    %v3630 = vpop.f32.mrb[0].mxu0
    %v3631 = vadd.f32 %v3278, %v3630
    %v3632 = vpop.f32.mrb[0].mxu0
    %v3633 = vadd.f32 %v3280, %v3632
    %v3634 = vpop.f32.mrb[0].mxu0
    %v3635 = vadd.f32 %v3282, %v3634
    %v3636 = vpop.f32.mrb[0].mxu0
    %v3637 = vadd.f32 %v3284, %v3636
    %3638 = vmatprep.mubr.bf16.mxu0 0
    %3639 = vmatmul.mubr.bf16.gmra.mrb[0].mxu0 %v1127
    %v3640 = vpop.f32.mrb[0].mxu0
    %v3641 = vadd.f32 %v3288, %v3640
    %v3642 = vpop.f32.mrb[0].mxu0
    %v3643 = vadd.f32 %v3290, %v3642
    %v3644 = vpop.f32.mrb[0].mxu0
    %v3645 = vadd.f32 %v3292, %v3644
    %v3646 = vpop.f32.mrb[0].mxu0
    %v3647 = vadd.f32 %v3294, %v3646
    %3648 = vmatprep.mubr.bf16.mxu0 0
    %3649 = vmatmul.mubr.bf16.gmra.mrb[0].mxu0 %v1128
    %v3650 = vpop.f32.mrb[0].mxu0
    %v3651 = vadd.f32 %v3298, %v3650
    %v3652 = vpop.f32.mrb[0].mxu0
    %v3653 = vadd.f32 %v3300, %v3652
    %v3654 = vpop.f32.mrb[0].mxu0
    %v3655 = vadd.f32 %v3302, %v3654
    %v3656 = vpop.f32.mrb[0].mxu0
    %v3657 = vadd.f32 %v3304, %v3656
    %3658 = vmatprep.mubr.bf16.mxu0 0
    %3659 = vmatmul.mubr.bf16.gmra.mrb[0].mxu0 %v1129
    %v3660 = vpop.f32.mrb[0].mxu0
    %v3661 = vadd.f32 %v3308, %v3660
    %v3662 = vpop.f32.mrb[0].mxu0
    %v3663 = vadd.f32 %v3310, %v3662
    %v3664 = vpop.f32.mrb[0].mxu0
    %v3665 = vadd.f32 %v3312, %v3664
    %v3666 = vpop.f32.mrb[0].mxu0
    %v3667 = vadd.f32 %v3314, %v3666
    %3668 = vmatprep.mubr.bf16.mxu0 0
    %3669 = vmatmul.mubr.bf16.gmra.mrb[0].mxu0 %v1130
    %v3670 = vpop.f32.mrb[0].mxu0
    %v3671 = vadd.f32 %v3318, %v3670
    %v3672 = vpop.f32.mrb[0].mxu0
    %v3673 = vadd.f32 %v3320, %v3672
    %v3674 = vpop.f32.mrb[0].mxu0
    %v3675 = vadd.f32 %v3322, %v3674
    %v3676 = vpop.f32.mrb[0].mxu0
    %v3677 = vadd.f32 %v3324, %v3676
    %3678 = vmatprep.mubr.bf16.mxu0 0
    %3679 = vmatmul.mubr.bf16.gmra.mrb[0].mxu0 %v1131
    %v3680 = vpop.f32.mrb[0].mxu0
    %v3681 = vadd.f32 %v3328, %v3680
    %v3682 = vpop.f32.mrb[0].mxu0
    %v3683 = vadd.f32 %v3330, %v3682
    %v3684 = vpop.f32.mrb[0].mxu0
    %v3685 = vadd.f32 %v3332, %v3684
    %v3686 = vpop.f32.mrb[0].mxu0
    %v3687 = vadd.f32 %v3334, %v3686
    %3688 = vmatprep.mubr.bf16.mxu0 0
    %3689 = vmatmul.mubr.bf16.gmra.mrb[0].mxu0 %v1132
    %v3690 = vpop.f32.mrb[0].mxu0
    %v3691 = vadd.f32 %v3338, %v3690
    %v3692 = vpop.f32.mrb[0].mxu0
    %v3693 = vadd.f32 %v3340, %v3692
    %v3694 = vpop.f32.mrb[0].mxu0
    %v3695 = vadd.f32 %v3342, %v3694
    %v3696 = vpop.f32.mrb[0].mxu0
    %v3697 = vadd.f32 %v3344, %v3696
    %3698 = vmatprep.mubr.bf16.mxu0 0
    %3699 = vmatmul.mubr.bf16.gmra.mrb[0].mxu0 %v1133
    %v3700 = vpop.f32.mrb[0].mxu0
    %v3701 = vadd.f32 %v3348, %v3700
    %v3702 = vpop.f32.mrb[0].mxu0
    %v3703 = vadd.f32 %v3350, %v3702
    %v3704 = vpop.f32.mrb[0].mxu0
    %v3705 = vadd.f32 %v3352, %v3704
    %v3706 = vpop.f32.mrb[0].mxu0
    %v3707 = vadd.f32 %v3354, %v3706
    %3708 = vmatprep.mubr.bf16.mxu0 0
    %3709 = vmatmul.mubr.bf16.gmra.mrb[0].mxu0 %v1134
    %v3710 = vpop.f32.mrb[0].mxu0
    %v3711 = vadd.f32 %v3358, %v3710
    %v3712 = vpop.f32.mrb[0].mxu0
    %v3713 = vadd.f32 %v3360, %v3712
    %v3714 = vpop.f32.mrb[0].mxu0
    %v3715 = vadd.f32 %v3362, %v3714
    %v3716 = vpop.f32.mrb[0].mxu0
    %v3717 = vadd.f32 %v3364, %v3716
    %3718 = vmatprep.mubr.bf16.mxu0 0
    %3719 = vmatmul.mubr.bf16.gmra.mrb[0].mxu0 %v1135
    %v3720 = vpop.f32.mrb[0].mxu0
    %v3721 = vadd.f32 %v3368, %v3720
    %v3722 = vpop.f32.mrb[0].mxu0
    %v3723 = vadd.f32 %v3370, %v3722
    %v3724 = vpop.f32.mrb[0].mxu0
    %v3725 = vadd.f32 %v3372, %v3724
    %v3726 = vpop.f32.mrb[0].mxu0
    %v3727 = vadd.f32 %v3374, %v3726
    %3728 = vmatprep.mubr.bf16.mxu0 0
    %3729 = vmatmul.mubr.bf16.gmra.mrb[0].mxu0 %v1136
    %v3730 = vpop.f32.mrb[0].mxu0
    %v3731 = vadd.f32 %v3378, %v3730
    %v3732 = vpop.f32.mrb[0].mxu0
    %v3733 = vadd.f32 %v3380, %v3732
    %v3734 = vpop.f32.mrb[0].mxu0
    %v3735 = vadd.f32 %v3382, %v3734
    %v3736 = vpop.f32.mrb[0].mxu0
    %v3737 = vadd.f32 %v3384, %v3736
    %3738 = vmatprep.mubr.bf16.mxu0 0
    %3739 = vmatmul.mubr.bf16.gmra.mrb[0].mxu0 %v1137
    %v3740 = vpop.f32.mrb[0].mxu0
    %v3741 = vadd.f32 %v3388, %v3740
    %v3742 = vpop.f32.mrb[0].mxu0
    %v3743 = vadd.f32 %v3390, %v3742
    %v3744 = vpop.f32.mrb[0].mxu0
    %v3745 = vadd.f32 %v3392, %v3744
    %v3746 = vpop.f32.mrb[0].mxu0
    %v3747 = vadd.f32 %v3394, %v3746
    %3748 = vmatprep.mubr.bf16.mxu0 0
    %3749 = vmatmul.mubr.bf16.gmra.mrb[0].mxu0 %v1138
    %v3750 = vpop.f32.mrb[0].mxu0
    %v3751 = vadd.f32 %v3398, %v3750
    %v3752 = vpop.f32.mrb[0].mxu0
    %v3753 = vadd.f32 %v3400, %v3752
    %v3754 = vpop.f32.mrb[0].mxu0
    %v3755 = vadd.f32 %v3402, %v3754
    %v3756 = vpop.f32.mrb[0].mxu0
    %v3757 = vadd.f32 %v3404, %v3756
    %3758 = vmatprep.mubr.bf16.mxu0 0
    %3759 = vmatmul.mubr.bf16.gmra.mrb[0].mxu0 %v1139
    %v3760 = vpop.f32.mrb[0].mxu0
    %v3761 = vadd.f32 %v3408, %v3760
    %v3762 = vpop.f32.mrb[0].mxu0
    %v3763 = vadd.f32 %v3410, %v3762
    %v3764 = vpop.f32.mrb[0].mxu0
    %v3765 = vadd.f32 %v3412, %v3764
    %v3766 = vpop.f32.mrb[0].mxu0
    %v3767 = vadd.f32 %v3414, %v3766
    %3768 = vdwg.mxu0
    %v3769 = vadd.f32 %v3451, %v3455
    %v3770 = vadd.f32 %v3769, %v3461
    %v3771 = vadd.f32 %v3770, %v3465
    %v3772 = vadd.f32 %v3771, %v3471
    %v3773 = vadd.f32 %v3772, %v3475
    %v3774 = vadd.f32 %v3773, %v3481
    %v3775 = vadd.f32 %v3774, %v3485
    %v3776 = vadd.f32 %v3775, %v3491
    %v3777 = vadd.f32 %v3776, %v3495
    %v3778 = vadd.f32 %v3777, %v3501
    %v3779 = vadd.f32 %v3778, %v3505
    %v3780 = vadd.f32 %v3779, %v3511
    %v3781 = vadd.f32 %v3780, %v3515
    %v3782 = vadd.f32 %v3781, %v3521
    %v3783 = vadd.f32 %v3782, %v3525
    %v3784 = vadd.f32 %v3783, %v3531
    %v3785 = vadd.f32 %v3784, %v3535
    %v3786 = vadd.f32 %v3785, %v3541
    %v3787 = vadd.f32 %v3786, %v3545
    %v3788 = vadd.f32 %v3787, %v3551
    %v3789 = vadd.f32 %v3788, %v3555
    %v3790 = vadd.f32 %v3789, %v3561
    %v3791 = vadd.f32 %v3790, %v3565
    %v3792 = vadd.f32 %v3791, %v3571
    %v3793 = vadd.f32 %v3792, %v3575
    %v3794 = vadd.f32 %v3793, %v3581
    %v3795 = vadd.f32 %v3794, %v3585
    %v3796 = vadd.f32 %v3795, %v3591
    %v3797 = vadd.f32 %v3796, %v3595
    %v3798 = vadd.f32 %v3797, %v3601
    %v3799 = vadd.f32 %v3798, %v3605
    %v3800 = vadd.f32 %v3799, %v3611
    %v3801 = vadd.f32 %v3800, %v3615
    %v3802 = vadd.f32 %v3801, %v3621
    %v3803 = vadd.f32 %v3802, %v3625
    %v3804 = vadd.f32 %v3803, %v3631
    %v3805 = vadd.f32 %v3804, %v3635
    %v3806 = vadd.f32 %v3805, %v3641
    %v3807 = vadd.f32 %v3806, %v3645
    %v3808 = vadd.f32 %v3807, %v3651
    %v3809 = vadd.f32 %v3808, %v3655
    %v3810 = vadd.f32 %v3809, %v3661
    %v3811 = vadd.f32 %v3810, %v3665
    %v3812 = vadd.f32 %v3811, %v3671
    %v3813 = vadd.f32 %v3812, %v3675
    %v3814 = vadd.f32 %v3813, %v3681
    %v3815 = vadd.f32 %v3814, %v3685
    %v3816 = vadd.f32 %v3815, %v3691
    %v3817 = vadd.f32 %v3816, %v3695
    %v3818 = vadd.f32 %v3817, %v3701
    %v3819 = vadd.f32 %v3818, %v3705
    %v3820 = vadd.f32 %v3819, %v3711
    %v3821 = vadd.f32 %v3820, %v3715
    %v3822 = vadd.f32 %v3821, %v3721
    %v3823 = vadd.f32 %v3822, %v3725
    %v3824 = vadd.f32 %v3823, %v3731
    %v3825 = vadd.f32 %v3824, %v3735
    %v3826 = vadd.f32 %v3825, %v3741
    %v3827 = vadd.f32 %v3826, %v3745
    %v3828 = vadd.f32 %v3827, %v3751
    %v3829 = vadd.f32 %v3828, %v3755
    %v3830 = vadd.f32 %v3829, %v3761
    %v3831 = vadd.f32 %v3830, %v3765
    %v3832 = vrot.slane %v3831, 4
    %v3833 = vadd.f32 %v3831, %v3832
    %v3834 = vrot.slane %v3833, 2
    %v3835 = vadd.f32 %v3833, %v3834
    %v3836 = vrot.slane %v3835, 1
    %v3837 = vadd.f32 %v3835, %v3836
    %v3838 = vadd.f32 %v3453, %v3457
    %v3839 = vadd.f32 %v3838, %v3463
    %v3840 = vadd.f32 %v3839, %v3467
    %v3841 = vadd.f32 %v3840, %v3473
    %v3842 = vadd.f32 %v3841, %v3477
    %v3843 = vadd.f32 %v3842, %v3483
    %v3844 = vadd.f32 %v3843, %v3487
    %v3845 = vadd.f32 %v3844, %v3493
    %v3846 = vadd.f32 %v3845, %v3497
    %v3847 = vadd.f32 %v3846, %v3503
    %v3848 = vadd.f32 %v3847, %v3507
    %v3849 = vadd.f32 %v3848, %v3513
    %v3850 = vadd.f32 %v3849, %v3517
    %v3851 = vadd.f32 %v3850, %v3523
    %v3852 = vadd.f32 %v3851, %v3527
    %v3853 = vadd.f32 %v3852, %v3533
    %v3854 = vadd.f32 %v3853, %v3537
    %v3855 = vadd.f32 %v3854, %v3543
    %v3856 = vadd.f32 %v3855, %v3547
    %v3857 = vadd.f32 %v3856, %v3553
    %v3858 = vadd.f32 %v3857, %v3557
    %v3859 = vadd.f32 %v3858, %v3563
    %v3860 = vadd.f32 %v3859, %v3567
    %v3861 = vadd.f32 %v3860, %v3573
    %v3862 = vadd.f32 %v3861, %v3577
    %v3863 = vadd.f32 %v3862, %v3583
    %v3864 = vadd.f32 %v3863, %v3587
    %v3865 = vadd.f32 %v3864, %v3593
    %v3866 = vadd.f32 %v3865, %v3597
    %v3867 = vadd.f32 %v3866, %v3603
    %v3868 = vadd.f32 %v3867, %v3607
    %v3869 = vadd.f32 %v3868, %v3613
    %v3870 = vadd.f32 %v3869, %v3617
    %v3871 = vadd.f32 %v3870, %v3623
    %v3872 = vadd.f32 %v3871, %v3627
    %v3873 = vadd.f32 %v3872, %v3633
    %v3874 = vadd.f32 %v3873, %v3637
    %v3875 = vadd.f32 %v3874, %v3643
    %v3876 = vadd.f32 %v3875, %v3647
    %v3877 = vadd.f32 %v3876, %v3653
    %v3878 = vadd.f32 %v3877, %v3657
    %v3879 = vadd.f32 %v3878, %v3663
    %v3880 = vadd.f32 %v3879, %v3667
    %v3881 = vadd.f32 %v3880, %v3673
    %v3882 = vadd.f32 %v3881, %v3677
    %v3883 = vadd.f32 %v3882, %v3683
    %v3884 = vadd.f32 %v3883, %v3687
    %v3885 = vadd.f32 %v3884, %v3693
    %v3886 = vadd.f32 %v3885, %v3697
    %v3887 = vadd.f32 %v3886, %v3703
    %v3888 = vadd.f32 %v3887, %v3707
    %v3889 = vadd.f32 %v3888, %v3713
    %v3890 = vadd.f32 %v3889, %v3717
    %v3891 = vadd.f32 %v3890, %v3723
    %v3892 = vadd.f32 %v3891, %v3727
    %v3893 = vadd.f32 %v3892, %v3733
    %v3894 = vadd.f32 %v3893, %v3737
    %v3895 = vadd.f32 %v3894, %v3743
    %v3896 = vadd.f32 %v3895, %v3747
    %v3897 = vadd.f32 %v3896, %v3753
    %v3898 = vadd.f32 %v3897, %v3757
    %v3899 = vadd.f32 %v3898, %v3763
    %v3900 = vadd.f32 %v3899, %v3767
    %v3901 = vrot.slane %v3900, 4
    %v3902 = vadd.f32 %v3900, %v3901
    %v3903 = vrot.slane %v3902, 2
    %v3904 = vadd.f32 %v3902, %v3903
    %v3905 = vrot.slane %v3904, 1
    %v3906 = vadd.f32 %v3904, %v3905
    %v3907 = vmul.f32 %v3837, 0.001953125
    %v3908 = vmul.f32 %v3906, 0.001953125
    %v3909 = vsub.f32 %v3451, %v3907
    %v3910 = vsub.f32 %v3453, %v3908
    %v3911 = vsub.f32 %v3455, %v3907
    %v3912 = vsub.f32 %v3457, %v3908
    %v3913 = vsub.f32 %v3461, %v3907
    %v3914 = vsub.f32 %v3463, %v3908
    %v3915 = vsub.f32 %v3465, %v3907
    %v3916 = vsub.f32 %v3467, %v3908
    %v3917 = vsub.f32 %v3471, %v3907
    %v3918 = vsub.f32 %v3473, %v3908
    %v3919 = vsub.f32 %v3475, %v3907
    %v3920 = vsub.f32 %v3477, %v3908
    %v3921 = vsub.f32 %v3481, %v3907
    %v3922 = vsub.f32 %v3483, %v3908
    %v3923 = vsub.f32 %v3485, %v3907
    %v3924 = vsub.f32 %v3487, %v3908
    %v3925 = vsub.f32 %v3491, %v3907
    %v3926 = vsub.f32 %v3493, %v3908
    %v3927 = vsub.f32 %v3495, %v3907
    %v3928 = vsub.f32 %v3497, %v3908
    %v3929 = vsub.f32 %v3501, %v3907
    %v3930 = vsub.f32 %v3503, %v3908
    %v3931 = vsub.f32 %v3505, %v3907
    %v3932 = vsub.f32 %v3507, %v3908
    %v3933 = vsub.f32 %v3511, %v3907
    %v3934 = vsub.f32 %v3513, %v3908
    %v3935 = vsub.f32 %v3515, %v3907
    %v3936 = vsub.f32 %v3517, %v3908
    %v3937 = vsub.f32 %v3521, %v3907
    %v3938 = vsub.f32 %v3523, %v3908
    %v3939 = vsub.f32 %v3525, %v3907
    %v3940 = vsub.f32 %v3527, %v3908
    %v3941 = vsub.f32 %v3531, %v3907
    %v3942 = vsub.f32 %v3533, %v3908
    %v3943 = vsub.f32 %v3535, %v3907
    %v3944 = vsub.f32 %v3537, %v3908
    %v3945 = vsub.f32 %v3541, %v3907
    %v3946 = vsub.f32 %v3543, %v3908
    %v3947 = vsub.f32 %v3545, %v3907
    %v3948 = vsub.f32 %v3547, %v3908
    %v3949 = vsub.f32 %v3551, %v3907
    %v3950 = vsub.f32 %v3553, %v3908
    %v3951 = vsub.f32 %v3555, %v3907
    %v3952 = vsub.f32 %v3557, %v3908
    %v3953 = vsub.f32 %v3561, %v3907
    %v3954 = vsub.f32 %v3563, %v3908
    %v3955 = vsub.f32 %v3565, %v3907
    %v3956 = vsub.f32 %v3567, %v3908
    %v3957 = vsub.f32 %v3571, %v3907
    %v3958 = vsub.f32 %v3573, %v3908
    %v3959 = vsub.f32 %v3575, %v3907
    %v3960 = vsub.f32 %v3577, %v3908
    %v3961 = vsub.f32 %v3581, %v3907
    %v3962 = vsub.f32 %v3583, %v3908
    %v3963 = vsub.f32 %v3585, %v3907
    %v3964 = vsub.f32 %v3587, %v3908
    %v3965 = vsub.f32 %v3591, %v3907
    %v3966 = vsub.f32 %v3593, %v3908
    %v3967 = vsub.f32 %v3595, %v3907
    %v3968 = vsub.f32 %v3597, %v3908
    %v3969 = vsub.f32 %v3601, %v3907
    %v3970 = vsub.f32 %v3603, %v3908
    %v3971 = vsub.f32 %v3605, %v3907
    %v3972 = vsub.f32 %v3607, %v3908
    %v3973 = vsub.f32 %v3611, %v3907
    %v3974 = vsub.f32 %v3613, %v3908
    %v3975 = vsub.f32 %v3615, %v3907
    %v3976 = vsub.f32 %v3617, %v3908
    %v3977 = vsub.f32 %v3621, %v3907
    %v3978 = vsub.f32 %v3623, %v3908
    %v3979 = vsub.f32 %v3625, %v3907
    %v3980 = vsub.f32 %v3627, %v3908
    %v3981 = vsub.f32 %v3631, %v3907
    %v3982 = vsub.f32 %v3633, %v3908
    %v3983 = vsub.f32 %v3635, %v3907
    %v3984 = vsub.f32 %v3637, %v3908
    %v3985 = vsub.f32 %v3641, %v3907
    %v3986 = vsub.f32 %v3643, %v3908
    %v3987 = vsub.f32 %v3645, %v3907
    %v3988 = vsub.f32 %v3647, %v3908
    %v3989 = vsub.f32 %v3651, %v3907
    %v3990 = vsub.f32 %v3653, %v3908
    %v3991 = vsub.f32 %v3655, %v3907
    %v3992 = vsub.f32 %v3657, %v3908
    %v3993 = vsub.f32 %v3661, %v3907
    %v3994 = vsub.f32 %v3663, %v3908
    %v3995 = vsub.f32 %v3665, %v3907
    %v3996 = vsub.f32 %v3667, %v3908
    %v3997 = vsub.f32 %v3671, %v3907
    %v3998 = vsub.f32 %v3673, %v3908
    %v3999 = vsub.f32 %v3675, %v3907
    %v4000 = vsub.f32 %v3677, %v3908
    %v4001 = vsub.f32 %v3681, %v3907
    %v4002 = vsub.f32 %v3683, %v3908
    %v4003 = vsub.f32 %v3685, %v3907
    %v4004 = vsub.f32 %v3687, %v3908
    %v4005 = vsub.f32 %v3691, %v3907
    %v4006 = vsub.f32 %v3693, %v3908
    %v4007 = vsub.f32 %v3695, %v3907
    %v4008 = vsub.f32 %v3697, %v3908
    %v4009 = vsub.f32 %v3701, %v3907
    %v4010 = vsub.f32 %v3703, %v3908
    %v4011 = vsub.f32 %v3705, %v3907
    %v4012 = vsub.f32 %v3707, %v3908
    %v4013 = vsub.f32 %v3711, %v3907
    %v4014 = vsub.f32 %v3713, %v3908
    %v4015 = vsub.f32 %v3715, %v3907
    %v4016 = vsub.f32 %v3717, %v3908
    %v4017 = vsub.f32 %v3721, %v3907
    %v4018 = vsub.f32 %v3723, %v3908
    %v4019 = vsub.f32 %v3725, %v3907
    %v4020 = vsub.f32 %v3727, %v3908
    %v4021 = vsub.f32 %v3731, %v3907
    %v4022 = vsub.f32 %v3733, %v3908
    %v4023 = vsub.f32 %v3735, %v3907
    %v4024 = vsub.f32 %v3737, %v3908
    %v4025 = vsub.f32 %v3741, %v3907
    %v4026 = vsub.f32 %v3743, %v3908
    %v4027 = vsub.f32 %v3745, %v3907
    %v4028 = vsub.f32 %v3747, %v3908
    %v4029 = vsub.f32 %v3751, %v3907
    %v4030 = vsub.f32 %v3753, %v3908
    %v4031 = vsub.f32 %v3755, %v3907
    %v4032 = vsub.f32 %v3757, %v3908
    %v4033 = vsub.f32 %v3761, %v3907
    %v4034 = vsub.f32 %v3763, %v3908
    %v4035 = vsub.f32 %v3765, %v3907
    %v4036 = vsub.f32 %v3767, %v3908
    %v4037 = vmul.f32 %v3909, %v3909
    %v4038 = vmul.f32 %v3910, %v3910
    %v4039 = vmul.f32 %v3911, %v3911
    %v4040 = vmul.f32 %v3912, %v3912
    %v4041 = vmul.f32 %v3913, %v3913
    %v4042 = vmul.f32 %v3914, %v3914
    %v4043 = vmul.f32 %v3915, %v3915
    %v4044 = vmul.f32 %v3916, %v3916
    %v4045 = vmul.f32 %v3917, %v3917
    %v4046 = vmul.f32 %v3918, %v3918
    %v4047 = vmul.f32 %v3919, %v3919
    %v4048 = vmul.f32 %v3920, %v3920
    %v4049 = vmul.f32 %v3921, %v3921
    %v4050 = vmul.f32 %v3922, %v3922
    %v4051 = vmul.f32 %v3923, %v3923
    %v4052 = vmul.f32 %v3924, %v3924
    %v4053 = vmul.f32 %v3925, %v3925
    %v4054 = vmul.f32 %v3926, %v3926
    %v4055 = vmul.f32 %v3927, %v3927
    %v4056 = vmul.f32 %v3928, %v3928
    %v4057 = vmul.f32 %v3929, %v3929
    %v4058 = vmul.f32 %v3930, %v3930
    %v4059 = vmul.f32 %v3931, %v3931
    %v4060 = vmul.f32 %v3932, %v3932
    %v4061 = vmul.f32 %v3933, %v3933
    %v4062 = vmul.f32 %v3934, %v3934
    %v4063 = vmul.f32 %v3935, %v3935
    %v4064 = vmul.f32 %v3936, %v3936
    %v4065 = vmul.f32 %v3937, %v3937
    %v4066 = vmul.f32 %v3938, %v3938
    %v4067 = vmul.f32 %v3939, %v3939
    %v4068 = vmul.f32 %v3940, %v3940
    %v4069 = vmul.f32 %v3941, %v3941
    %v4070 = vmul.f32 %v3942, %v3942
    %v4071 = vmul.f32 %v3943, %v3943
    %v4072 = vmul.f32 %v3944, %v3944
    %v4073 = vmul.f32 %v3945, %v3945
    %v4074 = vmul.f32 %v3946, %v3946
    %v4075 = vmul.f32 %v3947, %v3947
    %v4076 = vmul.f32 %v3948, %v3948
    %v4077 = vmul.f32 %v3949, %v3949
    %v4078 = vmul.f32 %v3950, %v3950
    %v4079 = vmul.f32 %v3951, %v3951
    %v4080 = vmul.f32 %v3952, %v3952
    %v4081 = vmul.f32 %v3953, %v3953
    %v4082 = vmul.f32 %v3954, %v3954
    %v4083 = vmul.f32 %v3955, %v3955
    %v4084 = vmul.f32 %v3956, %v3956
    %v4085 = vmul.f32 %v3957, %v3957
    %v4086 = vmul.f32 %v3958, %v3958
    %v4087 = vmul.f32 %v3959, %v3959
    %v4088 = vmul.f32 %v3960, %v3960
    %v4089 = vmul.f32 %v3961, %v3961
    %v4090 = vmul.f32 %v3962, %v3962
    %v4091 = vmul.f32 %v3963, %v3963
    %v4092 = vmul.f32 %v3964, %v3964
    %v4093 = vmul.f32 %v3965, %v3965
    %v4094 = vmul.f32 %v3966, %v3966
    %v4095 = vmul.f32 %v3967, %v3967
    %v4096 = vmul.f32 %v3968, %v3968
    %v4097 = vmul.f32 %v3969, %v3969
    %v4098 = vmul.f32 %v3970, %v3970
    %v4099 = vmul.f32 %v3971, %v3971
    %v4100 = vmul.f32 %v3972, %v3972
    %v4101 = vmul.f32 %v3973, %v3973
    %v4102 = vmul.f32 %v3974, %v3974
    %v4103 = vmul.f32 %v3975, %v3975
    %v4104 = vmul.f32 %v3976, %v3976
    %v4105 = vmul.f32 %v3977, %v3977
    %v4106 = vmul.f32 %v3978, %v3978
    %v4107 = vmul.f32 %v3979, %v3979
    %v4108 = vmul.f32 %v3980, %v3980
    %v4109 = vmul.f32 %v3981, %v3981
    %v4110 = vmul.f32 %v3982, %v3982
    %v4111 = vmul.f32 %v3983, %v3983
    %v4112 = vmul.f32 %v3984, %v3984
    %v4113 = vmul.f32 %v3985, %v3985
    %v4114 = vmul.f32 %v3986, %v3986
    %v4115 = vmul.f32 %v3987, %v3987
    %v4116 = vmul.f32 %v3988, %v3988
    %v4117 = vmul.f32 %v3989, %v3989
    %v4118 = vmul.f32 %v3990, %v3990
    %v4119 = vmul.f32 %v3991, %v3991
    %v4120 = vmul.f32 %v3992, %v3992
    %v4121 = vmul.f32 %v3993, %v3993
    %v4122 = vmul.f32 %v3994, %v3994
    %v4123 = vmul.f32 %v3995, %v3995
    %v4124 = vmul.f32 %v3996, %v3996
    %v4125 = vmul.f32 %v3997, %v3997
    %v4126 = vmul.f32 %v3998, %v3998
    %v4127 = vmul.f32 %v3999, %v3999
    %v4128 = vmul.f32 %v4000, %v4000
    %v4129 = vmul.f32 %v4001, %v4001
    %v4130 = vmul.f32 %v4002, %v4002
    %v4131 = vmul.f32 %v4003, %v4003
    %v4132 = vmul.f32 %v4004, %v4004
    %v4133 = vmul.f32 %v4005, %v4005
    %v4134 = vmul.f32 %v4006, %v4006
    %v4135 = vmul.f32 %v4007, %v4007
    %v4136 = vmul.f32 %v4008, %v4008
    %v4137 = vmul.f32 %v4009, %v4009
    %v4138 = vmul.f32 %v4010, %v4010
    %v4139 = vmul.f32 %v4011, %v4011
    %v4140 = vmul.f32 %v4012, %v4012
    %v4141 = vmul.f32 %v4013, %v4013
    %v4142 = vmul.f32 %v4014, %v4014
    %v4143 = vmul.f32 %v4015, %v4015
    %v4144 = vmul.f32 %v4016, %v4016
    %v4145 = vmul.f32 %v4017, %v4017
    %v4146 = vmul.f32 %v4018, %v4018
    %v4147 = vmul.f32 %v4019, %v4019
    %v4148 = vmul.f32 %v4020, %v4020
    %v4149 = vmul.f32 %v4021, %v4021
    %v4150 = vmul.f32 %v4022, %v4022
    %v4151 = vmul.f32 %v4023, %v4023
    %v4152 = vmul.f32 %v4024, %v4024
    %v4153 = vmul.f32 %v4025, %v4025
    %v4154 = vmul.f32 %v4026, %v4026
    %v4155 = vmul.f32 %v4027, %v4027
    %v4156 = vmul.f32 %v4028, %v4028
    %v4157 = vmul.f32 %v4029, %v4029
    %v4158 = vmul.f32 %v4030, %v4030
    %v4159 = vmul.f32 %v4031, %v4031
    %v4160 = vmul.f32 %v4032, %v4032
    %v4161 = vmul.f32 %v4033, %v4033
    %v4162 = vmul.f32 %v4034, %v4034
    %v4163 = vmul.f32 %v4035, %v4035
    %v4164 = vmul.f32 %v4036, %v4036
    %v4165 = vadd.f32 %v4037, %v4039
    %v4166 = vadd.f32 %v4165, %v4041
    %v4167 = vadd.f32 %v4166, %v4043
    %v4168 = vadd.f32 %v4167, %v4045
    %v4169 = vadd.f32 %v4168, %v4047
    %v4170 = vadd.f32 %v4169, %v4049
    %v4171 = vadd.f32 %v4170, %v4051
    %v4172 = vadd.f32 %v4171, %v4053
    %v4173 = vadd.f32 %v4172, %v4055
    %v4174 = vadd.f32 %v4173, %v4057
    %v4175 = vadd.f32 %v4174, %v4059
    %v4176 = vadd.f32 %v4175, %v4061
    %v4177 = vadd.f32 %v4176, %v4063
    %v4178 = vadd.f32 %v4177, %v4065
    %v4179 = vadd.f32 %v4178, %v4067
    %v4180 = vadd.f32 %v4179, %v4069
    %v4181 = vadd.f32 %v4180, %v4071
    %v4182 = vadd.f32 %v4181, %v4073
    %v4183 = vadd.f32 %v4182, %v4075
    %v4184 = vadd.f32 %v4183, %v4077
    %v4185 = vadd.f32 %v4184, %v4079
    %v4186 = vadd.f32 %v4185, %v4081
    %v4187 = vadd.f32 %v4186, %v4083
    %v4188 = vadd.f32 %v4187, %v4085
    %v4189 = vadd.f32 %v4188, %v4087
    %v4190 = vadd.f32 %v4189, %v4089
    %v4191 = vadd.f32 %v4190, %v4091
    %v4192 = vadd.f32 %v4191, %v4093
    %v4193 = vadd.f32 %v4192, %v4095
    %v4194 = vadd.f32 %v4193, %v4097
    %v4195 = vadd.f32 %v4194, %v4099
    %v4196 = vadd.f32 %v4195, %v4101
    %v4197 = vadd.f32 %v4196, %v4103
    %v4198 = vadd.f32 %v4197, %v4105
    %v4199 = vadd.f32 %v4198, %v4107
    %v4200 = vadd.f32 %v4199, %v4109
    %v4201 = vadd.f32 %v4200, %v4111
    %v4202 = vadd.f32 %v4201, %v4113
    %v4203 = vadd.f32 %v4202, %v4115
    %v4204 = vadd.f32 %v4203, %v4117
    %v4205 = vadd.f32 %v4204, %v4119
    %v4206 = vadd.f32 %v4205, %v4121
    %v4207 = vadd.f32 %v4206, %v4123
    %v4208 = vadd.f32 %v4207, %v4125
    %v4209 = vadd.f32 %v4208, %v4127
    %v4210 = vadd.f32 %v4209, %v4129
    %v4211 = vadd.f32 %v4210, %v4131
    %v4212 = vadd.f32 %v4211, %v4133
    %v4213 = vadd.f32 %v4212, %v4135
    %v4214 = vadd.f32 %v4213, %v4137
    %v4215 = vadd.f32 %v4214, %v4139
    %v4216 = vadd.f32 %v4215, %v4141
    %v4217 = vadd.f32 %v4216, %v4143
    %v4218 = vadd.f32 %v4217, %v4145
    %v4219 = vadd.f32 %v4218, %v4147
    %v4220 = vadd.f32 %v4219, %v4149
    %v4221 = vadd.f32 %v4220, %v4151
    %v4222 = vadd.f32 %v4221, %v4153
    %v4223 = vadd.f32 %v4222, %v4155
    %v4224 = vadd.f32 %v4223, %v4157
    %v4225 = vadd.f32 %v4224, %v4159
    %v4226 = vadd.f32 %v4225, %v4161
    %v4227 = vadd.f32 %v4226, %v4163
    %v4228 = vrot.slane %v4227, 4
    %v4229 = vadd.f32 %v4227, %v4228
    %v4230 = vrot.slane %v4229, 2
    %v4231 = vadd.f32 %v4229, %v4230
    %v4232 = vrot.slane %v4231, 1
    %v4233 = vadd.f32 %v4231, %v4232
    %v4234 = vadd.f32 %v4038, %v4040
    %v4235 = vadd.f32 %v4234, %v4042
    %v4236 = vadd.f32 %v4235, %v4044
    %v4237 = vadd.f32 %v4236, %v4046
    %v4238 = vadd.f32 %v4237, %v4048
    %v4239 = vadd.f32 %v4238, %v4050
    %v4240 = vadd.f32 %v4239, %v4052
    %v4241 = vadd.f32 %v4240, %v4054
    %v4242 = vadd.f32 %v4241, %v4056
    %v4243 = vadd.f32 %v4242, %v4058
    %v4244 = vadd.f32 %v4243, %v4060
    %v4245 = vadd.f32 %v4244, %v4062
    %v4246 = vadd.f32 %v4245, %v4064
    %v4247 = vadd.f32 %v4246, %v4066
    %v4248 = vadd.f32 %v4247, %v4068
    %v4249 = vadd.f32 %v4248, %v4070
    %v4250 = vadd.f32 %v4249, %v4072
    %v4251 = vadd.f32 %v4250, %v4074
    %v4252 = vadd.f32 %v4251, %v4076
    %v4253 = vadd.f32 %v4252, %v4078
    %v4254 = vadd.f32 %v4253, %v4080
    %v4255 = vadd.f32 %v4254, %v4082
    %v4256 = vadd.f32 %v4255, %v4084
    %v4257 = vadd.f32 %v4256, %v4086
    %v4258 = vadd.f32 %v4257, %v4088
    %v4259 = vadd.f32 %v4258, %v4090
    %v4260 = vadd.f32 %v4259, %v4092
    %v4261 = vadd.f32 %v4260, %v4094
    %v4262 = vadd.f32 %v4261, %v4096
    %v4263 = vadd.f32 %v4262, %v4098
    %v4264 = vadd.f32 %v4263, %v4100
    %v4265 = vadd.f32 %v4264, %v4102
    %v4266 = vadd.f32 %v4265, %v4104
    %v4267 = vadd.f32 %v4266, %v4106
    %v4268 = vadd.f32 %v4267, %v4108
    %v4269 = vadd.f32 %v4268, %v4110
    %v4270 = vadd.f32 %v4269, %v4112
    %v4271 = vadd.f32 %v4270, %v4114
    %v4272 = vadd.f32 %v4271, %v4116
    %v4273 = vadd.f32 %v4272, %v4118
    %v4274 = vadd.f32 %v4273, %v4120
    %v4275 = vadd.f32 %v4274, %v4122
    %v4276 = vadd.f32 %v4275, %v4124
    %v4277 = vadd.f32 %v4276, %v4126
    %v4278 = vadd.f32 %v4277, %v4128
    %v4279 = vadd.f32 %v4278, %v4130
    %v4280 = vadd.f32 %v4279, %v4132
    %v4281 = vadd.f32 %v4280, %v4134
    %v4282 = vadd.f32 %v4281, %v4136
    %v4283 = vadd.f32 %v4282, %v4138
    %v4284 = vadd.f32 %v4283, %v4140
    %v4285 = vadd.f32 %v4284, %v4142
    %v4286 = vadd.f32 %v4285, %v4144
    %v4287 = vadd.f32 %v4286, %v4146
    %v4288 = vadd.f32 %v4287, %v4148
    %v4289 = vadd.f32 %v4288, %v4150
    %v4290 = vadd.f32 %v4289, %v4152
    %v4291 = vadd.f32 %v4290, %v4154
    %v4292 = vadd.f32 %v4291, %v4156
    %v4293 = vadd.f32 %v4292, %v4158
    %v4294 = vadd.f32 %v4293, %v4160
    %v4295 = vadd.f32 %v4294, %v4162
    %v4296 = vadd.f32 %v4295, %v4164
    %v4297 = vrot.slane %v4296, 4
    %v4298 = vadd.f32 %v4296, %v4297
    %v4299 = vrot.slane %v4298, 2
    %v4300 = vadd.f32 %v4298, %v4299
    %v4301 = vrot.slane %v4300, 1
    %v4302 = vadd.f32 %v4300, %v4301
    %v4303 = vmul.f32 %v4233, 0.001953125
    %v4304 = vmul.f32 %v4302, 0.001953125
    %v4305 = vld [vmem:[%s2] sm:$0x3]
    %v4306 = vadd.f32 %v4303, 1e-05
    %v4307 = vadd.f32 %v4304, 1e-05
    %v4308 = vrsqrt.pop %v4306
    %v4309 = vrsqrt.pop %v4307
    %v4312 = vcombine.low %v4308, %v4309
    %v4314 = vunpack.c.l.s4 1966171168
    %v4315 = vunpack.c.0.s8 %v4314
    %v4316 = vlaneseq
    %v4317 = vshrl.u32 %v4316, 7
    %v4318 = vsub.s32 %v4315, %v4317
    %v4319 = vrot.slane %v4312, %v4318
    %v4321 = vunpack.c.l.s4 1966171168
    %v4322 = vunpack.c.0.s8 %v4321
    %v4323 = vlaneseq
    %v4324 = vshrl.u32 %v4323, 7
    %v4325 = vsub.s32 %v4322, %v4324
    %v4326 = vrot.slane %v4319, %v4325
    %v4328 = vmul.f32 %v4305, %v4326
    %v4329 = vld [vmem:[%s3] sm:$0x3]
    %v4331 = vlaneseq
    %v4332 = vshrl.u32 %v4331, 7
    %v4333 = vsub.s32 0, %v4332
    %v4334 = vrot.slane %v4328, %v4333
    %v4335 = vlaneseq
    %v4336 = vshrl.u32 %v4335, 7
    %v4337 = vsub.s32 1, %v4336
    %v4338 = vrot.slane %v4328, %v4337
    %v4341 = vmul.f32 %v3907, %v4334
    %v4342 = vmul.f32 %v3908, %v4338
    %v4345 = vcombine.low %v4341, %v4342
    %v4347 = vunpack.c.l.s4 1966171168
    %v4348 = vunpack.c.0.s8 %v4347
    %v4349 = vlaneseq
    %v4350 = vshrl.u32 %v4349, 7
    %v4351 = vsub.s32 %v4348, %v4350
    %v4352 = vrot.slane %v4345, %v4351
    %v4354 = vunpack.c.l.s4 1966171168
    %v4355 = vunpack.c.0.s8 %v4354
    %v4356 = vlaneseq
    %v4357 = vshrl.u32 %v4356, 7
    %v4358 = vsub.s32 %v4355, %v4357
    %v4359 = vrot.slane %v4352, %v4358
    %v4361 = vsub.f32 %v4329, %v4359
    %v4362 = vmul.f32 %v3451, %v4334
    %v4363 = vmul.f32 %v3453, %v4338
    %v4364 = vmul.f32 %v3455, %v4334
    %v4365 = vmul.f32 %v3457, %v4338
    %v4366 = vmul.f32 %v3461, %v4334
    %v4367 = vmul.f32 %v3463, %v4338
    %v4368 = vmul.f32 %v3465, %v4334
    %v4369 = vmul.f32 %v3467, %v4338
    %v4370 = vmul.f32 %v3471, %v4334
    %v4371 = vmul.f32 %v3473, %v4338
    %v4372 = vmul.f32 %v3475, %v4334
    %v4373 = vmul.f32 %v3477, %v4338
    %v4374 = vmul.f32 %v3481, %v4334
    %v4375 = vmul.f32 %v3483, %v4338
    %v4376 = vmul.f32 %v3485, %v4334
    %v4377 = vmul.f32 %v3487, %v4338
    %v4378 = vmul.f32 %v3491, %v4334
    %v4379 = vmul.f32 %v3493, %v4338
    %v4380 = vmul.f32 %v3495, %v4334
    %v4381 = vmul.f32 %v3497, %v4338
    %v4382 = vmul.f32 %v3501, %v4334
    %v4383 = vmul.f32 %v3503, %v4338
    %v4384 = vmul.f32 %v3505, %v4334
    %v4385 = vmul.f32 %v3507, %v4338
    %v4386 = vmul.f32 %v3511, %v4334
    %v4387 = vmul.f32 %v3513, %v4338
    %v4388 = vmul.f32 %v3515, %v4334
    %v4389 = vmul.f32 %v3517, %v4338
    %v4390 = vmul.f32 %v3521, %v4334
    %v4391 = vmul.f32 %v3523, %v4338
    %v4392 = vmul.f32 %v3525, %v4334
    %v4393 = vmul.f32 %v3527, %v4338
    %v4394 = vmul.f32 %v3531, %v4334
    %v4395 = vmul.f32 %v3533, %v4338
    %v4396 = vmul.f32 %v3535, %v4334
    %v4397 = vmul.f32 %v3537, %v4338
    %v4398 = vmul.f32 %v3541, %v4334
    %v4399 = vmul.f32 %v3543, %v4338
    %v4400 = vmul.f32 %v3545, %v4334
    %v4401 = vmul.f32 %v3547, %v4338
    %v4402 = vmul.f32 %v3551, %v4334
    %v4403 = vmul.f32 %v3553, %v4338
    %v4404 = vmul.f32 %v3555, %v4334
    %v4405 = vmul.f32 %v3557, %v4338
    %v4406 = vmul.f32 %v3561, %v4334
    %v4407 = vmul.f32 %v3563, %v4338
    %v4408 = vmul.f32 %v3565, %v4334
    %v4409 = vmul.f32 %v3567, %v4338
    %v4410 = vmul.f32 %v3571, %v4334
    %v4411 = vmul.f32 %v3573, %v4338
    %v4412 = vmul.f32 %v3575, %v4334
    %v4413 = vmul.f32 %v3577, %v4338
    %v4414 = vmul.f32 %v3581, %v4334
    %v4415 = vmul.f32 %v3583, %v4338
    %v4416 = vmul.f32 %v3585, %v4334
    %v4417 = vmul.f32 %v3587, %v4338
    %v4418 = vmul.f32 %v3591, %v4334
    %v4419 = vmul.f32 %v3593, %v4338
    %v4420 = vmul.f32 %v3595, %v4334
    %v4421 = vmul.f32 %v3597, %v4338
    %v4422 = vmul.f32 %v3601, %v4334
    %v4423 = vmul.f32 %v3603, %v4338
    %v4424 = vmul.f32 %v3605, %v4334
    %v4425 = vmul.f32 %v3607, %v4338
    %v4426 = vmul.f32 %v3611, %v4334
    %v4427 = vmul.f32 %v3613, %v4338
    %v4428 = vmul.f32 %v3615, %v4334
    %v4429 = vmul.f32 %v3617, %v4338
    %v4430 = vmul.f32 %v3621, %v4334
    %v4431 = vmul.f32 %v3623, %v4338
    %v4432 = vmul.f32 %v3625, %v4334
    %v4433 = vmul.f32 %v3627, %v4338
    %v4434 = vmul.f32 %v3631, %v4334
    %v4435 = vmul.f32 %v3633, %v4338
    %v4436 = vmul.f32 %v3635, %v4334
    %v4437 = vmul.f32 %v3637, %v4338
    %v4438 = vmul.f32 %v3641, %v4334
    %v4439 = vmul.f32 %v3643, %v4338
    %v4440 = vmul.f32 %v3645, %v4334
    %v4441 = vmul.f32 %v3647, %v4338
    %v4442 = vmul.f32 %v3651, %v4334
    %v4443 = vmul.f32 %v3653, %v4338
    %v4444 = vmul.f32 %v3655, %v4334
    %v4445 = vmul.f32 %v3657, %v4338
    %v4446 = vmul.f32 %v3661, %v4334
    %v4447 = vmul.f32 %v3663, %v4338
    %v4448 = vmul.f32 %v3665, %v4334
    %v4449 = vmul.f32 %v3667, %v4338
    %v4450 = vmul.f32 %v3671, %v4334
    %v4451 = vmul.f32 %v3673, %v4338
    %v4452 = vmul.f32 %v3675, %v4334
    %v4453 = vmul.f32 %v3677, %v4338
    %v4454 = vmul.f32 %v3681, %v4334
    %v4455 = vmul.f32 %v3683, %v4338
    %v4456 = vmul.f32 %v3685, %v4334
    %v4457 = vmul.f32 %v3687, %v4338
    %v4458 = vmul.f32 %v3691, %v4334
    %v4459 = vmul.f32 %v3693, %v4338
    %v4460 = vmul.f32 %v3695, %v4334
    %v4461 = vmul.f32 %v3697, %v4338
    %v4462 = vmul.f32 %v3701, %v4334
    %v4463 = vmul.f32 %v3703, %v4338
    %v4464 = vmul.f32 %v3705, %v4334
    %v4465 = vmul.f32 %v3707, %v4338
    %v4466 = vmul.f32 %v3711, %v4334
    %v4467 = vmul.f32 %v3713, %v4338
    %v4468 = vmul.f32 %v3715, %v4334
    %v4469 = vmul.f32 %v3717, %v4338
    %v4470 = vmul.f32 %v3721, %v4334
    %v4471 = vmul.f32 %v3723, %v4338
    %v4472 = vmul.f32 %v3725, %v4334
    %v4473 = vmul.f32 %v3727, %v4338
    %v4474 = vmul.f32 %v3731, %v4334
    %v4475 = vmul.f32 %v3733, %v4338
    %v4476 = vmul.f32 %v3735, %v4334
    %v4477 = vmul.f32 %v3737, %v4338
    %v4478 = vmul.f32 %v3741, %v4334
    %v4479 = vmul.f32 %v3743, %v4338
    %v4480 = vmul.f32 %v3745, %v4334
    %v4481 = vmul.f32 %v3747, %v4338
    %v4482 = vmul.f32 %v3751, %v4334
    %v4483 = vmul.f32 %v3753, %v4338
    %v4484 = vmul.f32 %v3755, %v4334
    %v4485 = vmul.f32 %v3757, %v4338
    %v4486 = vmul.f32 %v3761, %v4334
    %v4487 = vmul.f32 %v3763, %v4338
    %v4488 = vmul.f32 %v3765, %v4334
    %v4489 = vmul.f32 %v3767, %v4338
    %v4491 = vlaneseq
    %v4492 = vshrl.u32 %v4491, 7
    %v4493 = vsub.s32 0, %v4492
    %v4494 = vrot.slane %v4361, %v4493
    %v4495 = vlaneseq
    %v4496 = vshrl.u32 %v4495, 7
    %v4497 = vsub.s32 1, %v4496
    %v4498 = vrot.slane %v4361, %v4497
    %v4501 = vadd.f32 %v4362, %v4494
    %v4502 = vadd.f32 %v4363, %v4498
    %v4503 = vadd.f32 %v4364, %v4494
    %v4504 = vadd.f32 %v4365, %v4498
    %v4505 = vadd.f32 %v4366, %v4494
    %v4506 = vadd.f32 %v4367, %v4498
    %v4507 = vadd.f32 %v4368, %v4494
    %v4508 = vadd.f32 %v4369, %v4498
    %v4509 = vadd.f32 %v4370, %v4494
    %v4510 = vadd.f32 %v4371, %v4498
    %v4511 = vadd.f32 %v4372, %v4494
    %v4512 = vadd.f32 %v4373, %v4498
    %v4513 = vadd.f32 %v4374, %v4494
    %v4514 = vadd.f32 %v4375, %v4498
    %v4515 = vadd.f32 %v4376, %v4494
    %v4516 = vadd.f32 %v4377, %v4498
    %v4517 = vadd.f32 %v4378, %v4494
    %v4518 = vadd.f32 %v4379, %v4498
    %v4519 = vadd.f32 %v4380, %v4494
    %v4520 = vadd.f32 %v4381, %v4498
    %v4521 = vadd.f32 %v4382, %v4494
    %v4522 = vadd.f32 %v4383, %v4498
    %v4523 = vadd.f32 %v4384, %v4494
    %v4524 = vadd.f32 %v4385, %v4498
    %v4525 = vadd.f32 %v4386, %v4494
    %v4526 = vadd.f32 %v4387, %v4498
    %v4527 = vadd.f32 %v4388, %v4494
    %v4528 = vadd.f32 %v4389, %v4498
    %v4529 = vadd.f32 %v4390, %v4494
    %v4530 = vadd.f32 %v4391, %v4498
    %v4531 = vadd.f32 %v4392, %v4494
    %v4532 = vadd.f32 %v4393, %v4498
    %v4533 = vadd.f32 %v4394, %v4494
    %v4534 = vadd.f32 %v4395, %v4498
    %v4535 = vadd.f32 %v4396, %v4494
    %v4536 = vadd.f32 %v4397, %v4498
    %v4537 = vadd.f32 %v4398, %v4494
    %v4538 = vadd.f32 %v4399, %v4498
    %v4539 = vadd.f32 %v4400, %v4494
    %v4540 = vadd.f32 %v4401, %v4498
    %v4541 = vadd.f32 %v4402, %v4494
    %v4542 = vadd.f32 %v4403, %v4498
    %v4543 = vadd.f32 %v4404, %v4494
    %v4544 = vadd.f32 %v4405, %v4498
    %v4545 = vadd.f32 %v4406, %v4494
    %v4546 = vadd.f32 %v4407, %v4498
    %v4547 = vadd.f32 %v4408, %v4494
    %v4548 = vadd.f32 %v4409, %v4498
    %v4549 = vadd.f32 %v4410, %v4494
    %v4550 = vadd.f32 %v4411, %v4498
    %v4551 = vadd.f32 %v4412, %v4494
    %v4552 = vadd.f32 %v4413, %v4498
    %v4553 = vadd.f32 %v4414, %v4494
    %v4554 = vadd.f32 %v4415, %v4498
    %v4555 = vadd.f32 %v4416, %v4494
    %v4556 = vadd.f32 %v4417, %v4498
    %v4557 = vadd.f32 %v4418, %v4494
    %v4558 = vadd.f32 %v4419, %v4498
    %v4559 = vadd.f32 %v4420, %v4494
    %v4560 = vadd.f32 %v4421, %v4498
    %v4561 = vadd.f32 %v4422, %v4494
    %v4562 = vadd.f32 %v4423, %v4498
    %v4563 = vadd.f32 %v4424, %v4494
    %v4564 = vadd.f32 %v4425, %v4498
    %v4565 = vadd.f32 %v4426, %v4494
    %v4566 = vadd.f32 %v4427, %v4498
    %v4567 = vadd.f32 %v4428, %v4494
    %v4568 = vadd.f32 %v4429, %v4498
    %v4569 = vadd.f32 %v4430, %v4494
    %v4570 = vadd.f32 %v4431, %v4498
    %v4571 = vadd.f32 %v4432, %v4494
    %v4572 = vadd.f32 %v4433, %v4498
    %v4573 = vadd.f32 %v4434, %v4494
    %v4574 = vadd.f32 %v4435, %v4498
    %v4575 = vadd.f32 %v4436, %v4494
    %v4576 = vadd.f32 %v4437, %v4498
    %v4577 = vadd.f32 %v4438, %v4494
    %v4578 = vadd.f32 %v4439, %v4498
    %v4579 = vadd.f32 %v4440, %v4494
    %v4580 = vadd.f32 %v4441, %v4498
    %v4581 = vadd.f32 %v4442, %v4494
    %v4582 = vadd.f32 %v4443, %v4498
    %v4583 = vadd.f32 %v4444, %v4494
    %v4584 = vadd.f32 %v4445, %v4498
    %v4585 = vadd.f32 %v4446, %v4494
    %v4586 = vadd.f32 %v4447, %v4498
    %v4587 = vadd.f32 %v4448, %v4494
    %v4588 = vadd.f32 %v4449, %v4498
    %v4589 = vadd.f32 %v4450, %v4494
    %v4590 = vadd.f32 %v4451, %v4498
    %v4591 = vadd.f32 %v4452, %v4494
    %v4592 = vadd.f32 %v4453, %v4498
    %v4593 = vadd.f32 %v4454, %v4494
    %v4594 = vadd.f32 %v4455, %v4498
    %v4595 = vadd.f32 %v4456, %v4494
    %v4596 = vadd.f32 %v4457, %v4498
    %v4597 = vadd.f32 %v4458, %v4494
    %v4598 = vadd.f32 %v4459, %v4498
    %v4599 = vadd.f32 %v4460, %v4494
    %v4600 = vadd.f32 %v4461, %v4498
    %v4601 = vadd.f32 %v4462, %v4494
    %v4602 = vadd.f32 %v4463, %v4498
    %v4603 = vadd.f32 %v4464, %v4494
    %v4604 = vadd.f32 %v4465, %v4498
    %v4605 = vadd.f32 %v4466, %v4494
    %v4606 = vadd.f32 %v4467, %v4498
    %v4607 = vadd.f32 %v4468, %v4494
    %v4608 = vadd.f32 %v4469, %v4498
    %v4609 = vadd.f32 %v4470, %v4494
    %v4610 = vadd.f32 %v4471, %v4498
    %v4611 = vadd.f32 %v4472, %v4494
    %v4612 = vadd.f32 %v4473, %v4498
    %v4613 = vadd.f32 %v4474, %v4494
    %v4614 = vadd.f32 %v4475, %v4498
    %v4615 = vadd.f32 %v4476, %v4494
    %v4616 = vadd.f32 %v4477, %v4498
    %v4617 = vadd.f32 %v4478, %v4494
    %v4618 = vadd.f32 %v4479, %v4498
    %v4619 = vadd.f32 %v4480, %v4494
    %v4620 = vadd.f32 %v4481, %v4498
    %v4621 = vadd.f32 %v4482, %v4494
    %v4622 = vadd.f32 %v4483, %v4498
    %v4623 = vadd.f32 %v4484, %v4494
    %v4624 = vadd.f32 %v4485, %v4498
    %v4625 = vadd.f32 %v4486, %v4494
    %v4626 = vadd.f32 %v4487, %v4498
    %v4627 = vadd.f32 %v4488, %v4494
    %v4628 = vadd.f32 %v4489, %v4498
    %v4629 = vmax.f32 %v4501, 0.0
    %v4630 = vmax.f32 %v4503, 0.0
    %v4631 = vmax.f32 %v4505, 0.0
    %v4632 = vmax.f32 %v4507, 0.0
    %v4633 = vmax.f32 %v4509, 0.0
    %v4634 = vmax.f32 %v4511, 0.0
    %v4635 = vmax.f32 %v4513, 0.0
    %v4636 = vmax.f32 %v4515, 0.0
    %v4637 = vmax.f32 %v4517, 0.0
    %v4638 = vmax.f32 %v4519, 0.0
    %v4639 = vmax.f32 %v4521, 0.0
    %v4640 = vmax.f32 %v4523, 0.0
    %v4641 = vmax.f32 %v4525, 0.0
    %v4642 = vmax.f32 %v4527, 0.0
    %v4643 = vmax.f32 %v4529, 0.0
    %v4644 = vmax.f32 %v4531, 0.0
    %v4645 = vmax.f32 %v4533, 0.0
    %v4646 = vmax.f32 %v4535, 0.0
    %v4647 = vmax.f32 %v4537, 0.0
    %v4648 = vmax.f32 %v4539, 0.0
    %v4649 = vmax.f32 %v4541, 0.0
    %v4650 = vmax.f32 %v4543, 0.0
    %v4651 = vmax.f32 %v4545, 0.0
    %v4652 = vmax.f32 %v4547, 0.0
    %v4653 = vmax.f32 %v4549, 0.0
    %v4654 = vmax.f32 %v4551, 0.0
    %v4655 = vmax.f32 %v4553, 0.0
    %v4656 = vmax.f32 %v4555, 0.0
    %v4657 = vmax.f32 %v4557, 0.0
    %v4658 = vmax.f32 %v4559, 0.0
    %v4659 = vmax.f32 %v4561, 0.0
    %v4660 = vmax.f32 %v4563, 0.0
    %v4661 = vmax.f32 %v4565, 0.0
    %v4662 = vmax.f32 %v4567, 0.0
    %v4663 = vmax.f32 %v4569, 0.0
    %v4664 = vmax.f32 %v4571, 0.0
    %v4665 = vmax.f32 %v4573, 0.0
    %v4666 = vmax.f32 %v4575, 0.0
    %v4667 = vmax.f32 %v4577, 0.0
    %v4668 = vmax.f32 %v4579, 0.0
    %v4669 = vmax.f32 %v4581, 0.0
    %v4670 = vmax.f32 %v4583, 0.0
    %v4671 = vmax.f32 %v4585, 0.0
    %v4672 = vmax.f32 %v4587, 0.0
    %v4673 = vmax.f32 %v4589, 0.0
    %v4674 = vmax.f32 %v4591, 0.0
    %v4675 = vmax.f32 %v4593, 0.0
    %v4676 = vmax.f32 %v4595, 0.0
    %v4677 = vmax.f32 %v4597, 0.0
    %v4678 = vmax.f32 %v4599, 0.0
    %v4679 = vmax.f32 %v4601, 0.0
    %v4680 = vmax.f32 %v4603, 0.0
    %v4681 = vmax.f32 %v4605, 0.0
    %v4682 = vmax.f32 %v4607, 0.0
    %v4683 = vmax.f32 %v4609, 0.0
    %v4684 = vmax.f32 %v4611, 0.0
    %v4685 = vmax.f32 %v4613, 0.0
    %v4686 = vmax.f32 %v4615, 0.0
    %v4687 = vmax.f32 %v4617, 0.0
    %v4688 = vmax.f32 %v4619, 0.0
    %v4689 = vmax.f32 %v4621, 0.0
    %v4690 = vmax.f32 %v4623, 0.0
    %v4691 = vmax.f32 %v4625, 0.0
    %v4692 = vmax.f32 %v4627, 0.0
    %4693 = vst [vmem:[#allocation3] sm:$0xff] 0.0
    %4694 = vst [vmem:[#allocation3 + $0x8] sm:$0xff] 0.0
    %4695 = vst [vmem:[#allocation3 + $0x10] sm:$0x3] 0.0
    %4696 = vst [vmem:[#allocation3 + $0x1b0] sm:$0xff] 0.0
    %4697 = vst [vmem:[#allocation3 + $0x1b8] sm:$0xff] 0.0
    %4698 = vst [vmem:[#allocation3 + $0x1c0] sm:$0x3] 0.0
    %s4699 = scalar_lea.vmem [#allocation3], 408
    %4700 = vst [vmem:[%s4699] sm:$0xff] 0.0
    %4701 = vst [vmem:[%s4699 + $0x8] sm:$0xff] 0.0
    %4702 = vst [vmem:[%s4699 + $0x10] sm:$0x3] 0.0
    %4703 = vst [vmem:[%s4699 + $0x1b0] sm:$0xff] 0.0
    %4704 = vst [vmem:[%s4699 + $0x1b8] sm:$0xff] 0.0
    %4705 = vst [vmem:[%s4699 + $0x1c0] sm:$0x3] 0.0
    %s4706 = scalar_lea.vmem [#allocation3], 24
    %4707 = vst [vmem:[%s4706] sm:$0x1] 0.0
    %4708 = vst [vmem:[%s4706 + $0x18] sm:$0x1] 0.0
    %4709 = vst [vmem:[%s4706 + $0x30] sm:$0x1] 0.0
    %4710 = vst [vmem:[%s4706 + $0x48] sm:$0x1] 0.0
    %4711 = vst [vmem:[%s4706 + $0x60] sm:$0x1] 0.0
    %4712 = vst [vmem:[%s4706 + $0x78] sm:$0x1] 0.0
    %4713 = vst [vmem:[%s4706 + $0x90] sm:$0x1] 0.0
    %4714 = vst [vmem:[%s4706 + $0xa8] sm:$0x1] 0.0
    %4715 = vst [vmem:[%s4706 + $0xc0] sm:$0x1] 0.0
    %4716 = vst [vmem:[%s4706 + $0xd8] sm:$0x1] 0.0
    %4717 = vst [vmem:[%s4706 + $0xf0] sm:$0x1] 0.0
    %4718 = vst [vmem:[%s4706 + $0x108] sm:$0x1] 0.0
    %4719 = vst [vmem:[%s4706 + $0x120] sm:$0x1] 0.0
    %4720 = vst [vmem:[%s4706 + $0x138] sm:$0x1] 0.0
    %4721 = vst [vmem:[%s4706 + $0x150] sm:$0x1] 0.0
    %4722 = vst [vmem:[%s4706 + $0x168] sm:$0x1] 0.0
    %4723 = vst [vmem:[%s4706 + $0x1b0] sm:$0x1] 0.0
    %4724 = vst [vmem:[%s4706 + $0x1c8] sm:$0x1] 0.0
    %4725 = vst [vmem:[%s4706 + $0x1e0] sm:$0x1] 0.0
    %4726 = vst [vmem:[%s4706 + $0x1f8] sm:$0x1] 0.0
    %4727 = vst [vmem:[%s4706 + $0x210] sm:$0x1] 0.0
    %4728 = vst [vmem:[%s4706 + $0x228] sm:$0x1] 0.0
    %4729 = vst [vmem:[%s4706 + $0x240] sm:$0x1] 0.0
    %4730 = vst [vmem:[%s4706 + $0x258] sm:$0x1] 0.0
    %4731 = vst [vmem:[%s4706 + $0x270] sm:$0x1] 0.0
    %4732 = vst [vmem:[%s4706 + $0x288] sm:$0x1] 0.0
    %4733 = vst [vmem:[%s4706 + $0x2a0] sm:$0x1] 0.0
    %4734 = vst [vmem:[%s4706 + $0x2b8] sm:$0x1] 0.0
    %4735 = vst [vmem:[%s4706 + $0x2d0] sm:$0x1] 0.0
    %4736 = vst [vmem:[%s4706 + $0x2e8] sm:$0x1] 0.0
    %4737 = vst [vmem:[%s4706 + $0x300] sm:$0x1] 0.0
    %4738 = vst [vmem:[%s4706 + $0x318] sm:$0x1] 0.0
    %4739 = vst [vmem:[%s4706 + $0x11] sm:$0x1] 0.0
    %4740 = vst [vmem:[%s4706 + $0x29] sm:$0x1] 0.0
    %4741 = vst [vmem:[%s4706 + $0x41] sm:$0x1] 0.0
    %4742 = vst [vmem:[%s4706 + $0x59] sm:$0x1] 0.0
    %4743 = vst [vmem:[%s4706 + $0x71] sm:$0x1] 0.0
    %4744 = vst [vmem:[%s4706 + $0x89] sm:$0x1] 0.0
    %4745 = vst [vmem:[%s4706 + $0xa1] sm:$0x1] 0.0
    %4746 = vst [vmem:[%s4706 + $0xb9] sm:$0x1] 0.0
    %4747 = vst [vmem:[%s4706 + $0xd1] sm:$0x1] 0.0
    %4748 = vst [vmem:[%s4706 + $0xe9] sm:$0x1] 0.0
    %4749 = vst [vmem:[%s4706 + $0x101] sm:$0x1] 0.0
    %4750 = vst [vmem:[%s4706 + $0x119] sm:$0x1] 0.0
    %4751 = vst [vmem:[%s4706 + $0x131] sm:$0x1] 0.0
    %4752 = vst [vmem:[%s4706 + $0x149] sm:$0x1] 0.0
    %4753 = vst [vmem:[%s4706 + $0x161] sm:$0x1] 0.0
    %4754 = vst [vmem:[%s4706 + $0x179] sm:$0x1] 0.0
    %4755 = vst [vmem:[%s4706 + $0x1c1] sm:$0x1] 0.0
    %4756 = vst [vmem:[%s4706 + $0x1d9] sm:$0x1] 0.0
    %4757 = vst [vmem:[%s4706 + $0x1f1] sm:$0x1] 0.0
    %4758 = vst [vmem:[%s4706 + $0x209] sm:$0x1] 0.0
    %4759 = vst [vmem:[%s4706 + $0x221] sm:$0x1] 0.0
    %4760 = vst [vmem:[%s4706 + $0x239] sm:$0x1] 0.0
    %4761 = vst [vmem:[%s4706 + $0x251] sm:$0x1] 0.0
    %4762 = vst [vmem:[%s4706 + $0x269] sm:$0x1] 0.0
    %4763 = vst [vmem:[%s4706 + $0x281] sm:$0x1] 0.0
    %4764 = vst [vmem:[%s4706 + $0x299] sm:$0x1] 0.0
    %4765 = vst [vmem:[%s4706 + $0x2b1] sm:$0x1] 0.0
    %4766 = vst [vmem:[%s4706 + $0x2c9] sm:$0x1] 0.0
    %4767 = vst [vmem:[%s4706 + $0x2e1] sm:$0x1] 0.0
    %4768 = vst [vmem:[%s4706 + $0x2f9] sm:$0x1] 0.0
    %4769 = vst [vmem:[%s4706 + $0x311] sm:$0x1] 0.0
    %4770 = vst [vmem:[%s4706 + $0x329] sm:$0x1] 0.0
    %4771 = vst [vmem:[%s4706 + $0x1] sm:$0xff] %v4629
    %4772 = vst [vmem:[%s4706 + $0x9] sm:$0xff] %v4630
    %4773 = vst [vmem:[%s4706 + $0x19] sm:$0xff] %v4631
    %4774 = vst [vmem:[%s4706 + $0x21] sm:$0xff] %v4632
    %4775 = vst [vmem:[%s4706 + $0x31] sm:$0xff] %v4633
    %4776 = vst [vmem:[%s4706 + $0x39] sm:$0xff] %v4634
    %4777 = vst [vmem:[%s4706 + $0x49] sm:$0xff] %v4635
    %4778 = vst [vmem:[%s4706 + $0x51] sm:$0xff] %v4636
    %4779 = vst [vmem:[%s4706 + $0x61] sm:$0xff] %v4637
    %4780 = vst [vmem:[%s4706 + $0x69] sm:$0xff] %v4638
    %4781 = vst [vmem:[%s4706 + $0x79] sm:$0xff] %v4639
    %4782 = vst [vmem:[%s4706 + $0x81] sm:$0xff] %v4640
    %4783 = vst [vmem:[%s4706 + $0x91] sm:$0xff] %v4641
    %4784 = vst [vmem:[%s4706 + $0x99] sm:$0xff] %v4642
    %4785 = vst [vmem:[%s4706 + $0xa9] sm:$0xff] %v4643
    %4786 = vst [vmem:[%s4706 + $0xb1] sm:$0xff] %v4644
    %4787 = vst [vmem:[%s4706 + $0xc1] sm:$0xff] %v4645
    %4788 = vst [vmem:[%s4706 + $0xc9] sm:$0xff] %v4646
    %4789 = vst [vmem:[%s4706 + $0xd9] sm:$0xff] %v4647
    %4790 = vst [vmem:[%s4706 + $0xe1] sm:$0xff] %v4648
    %4791 = vst [vmem:[%s4706 + $0xf1] sm:$0xff] %v4649
    %4792 = vst [vmem:[%s4706 + $0xf9] sm:$0xff] %v4650
    %4793 = vst [vmem:[%s4706 + $0x109] sm:$0xff] %v4651
    %4794 = vst [vmem:[%s4706 + $0x111] sm:$0xff] %v4652
    %4795 = vst [vmem:[%s4706 + $0x121] sm:$0xff] %v4653
    %4796 = vst [vmem:[%s4706 + $0x129] sm:$0xff] %v4654
    %4797 = vst [vmem:[%s4706 + $0x139] sm:$0xff] %v4655
    %4798 = vst [vmem:[%s4706 + $0x141] sm:$0xff] %v4656
    %4799 = vst [vmem:[%s4706 + $0x151] sm:$0xff] %v4657
    %4800 = vst [vmem:[%s4706 + $0x159] sm:$0xff] %v4658
    %4801 = vst [vmem:[%s4706 + $0x169] sm:$0xff] %v4659
    %4802 = vst [vmem:[%s4706 + $0x171] sm:$0xff] %v4660
    %4803 = vst [vmem:[%s4706 + $0x1b1] sm:$0xff] %v4661
    %4804 = vst [vmem:[%s4706 + $0x1b9] sm:$0xff] %v4662
    %4805 = vst [vmem:[%s4706 + $0x1c9] sm:$0xff] %v4663
    %4806 = vst [vmem:[%s4706 + $0x1d1] sm:$0xff] %v4664
    %4807 = vst [vmem:[%s4706 + $0x1e1] sm:$0xff] %v4665
    %4808 = vst [vmem:[%s4706 + $0x1e9] sm:$0xff] %v4666
    %4809 = vst [vmem:[%s4706 + $0x1f9] sm:$0xff] %v4667
    %4810 = vst [vmem:[%s4706 + $0x201] sm:$0xff] %v4668
    %4811 = vst [vmem:[%s4706 + $0x211] sm:$0xff] %v4669
    %4812 = vst [vmem:[%s4706 + $0x219] sm:$0xff] %v4670
    %4813 = vst [vmem:[%s4706 + $0x229] sm:$0xff] %v4671
    %4814 = vst [vmem:[%s4706 + $0x231] sm:$0xff] %v4672
    %4815 = vst [vmem:[%s4706 + $0x241] sm:$0xff] %v4673
    %4816 = vst [vmem:[%s4706 + $0x249] sm:$0xff] %v4674
    %4817 = vst [vmem:[%s4706 + $0x259] sm:$0xff] %v4675
    %4818 = vst [vmem:[%s4706 + $0x261] sm:$0xff] %v4676
    %4819 = vst [vmem:[%s4706 + $0x271] sm:$0xff] %v4677
    %4820 = vst [vmem:[%s4706 + $0x279] sm:$0xff] %v4678
    %4821 = vst [vmem:[%s4706 + $0x289] sm:$0xff] %v4679
    %4822 = vst [vmem:[%s4706 + $0x291] sm:$0xff] %v4680
    %4823 = vst [vmem:[%s4706 + $0x2a1] sm:$0xff] %v4681
    %4824 = vst [vmem:[%s4706 + $0x2a9] sm:$0xff] %v4682
    %4825 = vst [vmem:[%s4706 + $0x2b9] sm:$0xff] %v4683
    %4826 = vst [vmem:[%s4706 + $0x2c1] sm:$0xff] %v4684
    %4827 = vst [vmem:[%s4706 + $0x2d1] sm:$0xff] %v4685
    %4828 = vst [vmem:[%s4706 + $0x2d9] sm:$0xff] %v4686
    %4829 = vst [vmem:[%s4706 + $0x2e9] sm:$0xff] %v4687
    %4830 = vst [vmem:[%s4706 + $0x2f1] sm:$0xff] %v4688
    %4831 = vst [vmem:[%s4706 + $0x301] sm:$0xff] %v4689
    %4832 = vst [vmem:[%s4706 + $0x309] sm:$0xff] %v4690
    %4833 = vst [vmem:[%s4706 + $0x319] sm:$0xff] %v4691
    %4834 = vst [vmem:[%s4706 + $0x321] sm:$0xff] %v4692
    %v4835 = vld [vmem:[#allocation3] sm:$0xff]
    %v4836 = vld [vmem:[#allocation3 + $0x8] sm:$0xff]
    %v4837 = vld [vmem:[#allocation3 + $0x18] sm:$0xff]
    %v4838 = vld [vmem:[#allocation3 + $0x20] sm:$0xff]
    %v4839 = vld [vmem:[#allocation3 + $0x30] sm:$0xff]
    %v4840 = vld [vmem:[#allocation3 + $0x38] sm:$0xff]
    %v4841 = vld [vmem:[#allocation3 + $0x48] sm:$0xff]
    %v4842 = vld [vmem:[#allocation3 + $0x50] sm:$0xff]
    %v4843 = vld [vmem:[#allocation3 + $0x60] sm:$0xff]
    %v4844 = vld [vmem:[#allocation3 + $0x68] sm:$0xff]
    %v4845 = vld [vmem:[#allocation3 + $0x78] sm:$0xff]
    %v4846 = vld [vmem:[#allocation3 + $0x80] sm:$0xff]
    %v4847 = vld [vmem:[#allocation3 + $0x90] sm:$0xff]
    %v4848 = vld [vmem:[#allocation3 + $0x98] sm:$0xff]
    %v4849 = vld [vmem:[#allocation3 + $0xa8] sm:$0xff]
    %v4850 = vld [vmem:[#allocation3 + $0xb0] sm:$0xff]
    %v4851 = vld [vmem:[#allocation3 + $0xc0] sm:$0xff]
    %v4852 = vld [vmem:[#allocation3 + $0xc8] sm:$0xff]
    %v4853 = vld [vmem:[#allocation3 + $0xd8] sm:$0xff]
    %v4854 = vld [vmem:[#allocation3 + $0xe0] sm:$0xff]
    %v4855 = vld [vmem:[#allocation3 + $0xf0] sm:$0xff]
    %v4856 = vld [vmem:[#allocation3 + $0xf8] sm:$0xff]
    %v4857 = vld [vmem:[#allocation3 + $0x108] sm:$0xff]
    %v4858 = vld [vmem:[#allocation3 + $0x110] sm:$0xff]
    %v4859 = vld [vmem:[#allocation3 + $0x120] sm:$0xff]
    %v4860 = vld [vmem:[#allocation3 + $0x128] sm:$0xff]
    %v4861 = vld [vmem:[#allocation3 + $0x138] sm:$0xff]
    %v4862 = vld [vmem:[#allocation3 + $0x140] sm:$0xff]
    %v4863 = vld [vmem:[#allocation3 + $0x150] sm:$0xff]
    %v4864 = vld [vmem:[#allocation3 + $0x158] sm:$0xff]
    %v4865 = vld [vmem:[#allocation3 + $0x168] sm:$0xff]
    %v4866 = vld [vmem:[#allocation3 + $0x170] sm:$0xff]
    %v4867 = vld [vmem:[#allocation3 + $0x1b0] sm:$0xff]
    %v4868 = vld [vmem:[#allocation3 + $0x1b8] sm:$0xff]
    %v4869 = vld [vmem:[#allocation3 + $0x1c8] sm:$0xff]
    %v4870 = vld [vmem:[#allocation3 + $0x1d0] sm:$0xff]
    %v4871 = vld [vmem:[#allocation3 + $0x1e0] sm:$0xff]
    %v4872 = vld [vmem:[#allocation3 + $0x1e8] sm:$0xff]
    %v4873 = vld [vmem:[#allocation3 + $0x1f8] sm:$0xff]
    %v4874 = vld [vmem:[#allocation3 + $0x200] sm:$0xff]
    %v4875 = vld [vmem:[#allocation3 + $0x210] sm:$0xff]
    %v4876 = vld [vmem:[#allocation3 + $0x218] sm:$0xff]
    %v4877 = vld [vmem:[#allocation3 + $0x228] sm:$0xff]
    %v4878 = vld [vmem:[#allocation3 + $0x230] sm:$0xff]
    %v4879 = vld [vmem:[#allocation3 + $0x240] sm:$0xff]
    %v4880 = vld [vmem:[#allocation3 + $0x248] sm:$0xff]
    %v4881 = vld [vmem:[#allocation3 + $0x258] sm:$0xff]
    %v4882 = vld [vmem:[#allocation3 + $0x260] sm:$0xff]
    %v4883 = vld [vmem:[#allocation3 + $0x270] sm:$0xff]
    %v4884 = vld [vmem:[#allocation3 + $0x278] sm:$0xff]
    %v4885 = vld [vmem:[#allocation3 + $0x288] sm:$0xff]
    %v4886 = vld [vmem:[#allocation3 + $0x290] sm:$0xff]
    %v4887 = vld [vmem:[#allocation3 + $0x2a0] sm:$0xff]
    %v4888 = vld [vmem:[#allocation3 + $0x2a8] sm:$0xff]
    %v4889 = vld [vmem:[#allocation3 + $0x2b8] sm:$0xff]
    %v4890 = vld [vmem:[#allocation3 + $0x2c0] sm:$0xff]
    %v4891 = vld [vmem:[#allocation3 + $0x2d0] sm:$0xff]
    %v4892 = vld [vmem:[#allocation3 + $0x2d8] sm:$0xff]
    %v4893 = vld [vmem:[#allocation3 + $0x2e8] sm:$0xff]
    %v4894 = vld [vmem:[#allocation3 + $0x2f0] sm:$0xff]
    %v4895 = vld [vmem:[#allocation3 + $0x300] sm:$0xff]
    %v4896 = vld [vmem:[#allocation3 + $0x308] sm:$0xff]
    %v4897 = vld [vmem:[#allocation3 + $0x318] sm:$0xff]
    %v4898 = vld [vmem:[#allocation3 + $0x320] sm:$0xff]
    %v4899 = vpack.c.bf16 %v4836, %v4835
    %v4900 = vpack.c.bf16 %v4838, %v4837
    %v4901 = vpack.c.bf16 %v4840, %v4839
    %v4902 = vpack.c.bf16 %v4842, %v4841
    %v4903 = vpack.c.bf16 %v4844, %v4843
    %v4904 = vpack.c.bf16 %v4846, %v4845
    %v4905 = vpack.c.bf16 %v4848, %v4847
    %v4906 = vpack.c.bf16 %v4850, %v4849
    %v4907 = vpack.c.bf16 %v4852, %v4851
    %v4908 = vpack.c.bf16 %v4854, %v4853
    %v4909 = vpack.c.bf16 %v4856, %v4855
    %v4910 = vpack.c.bf16 %v4858, %v4857
    %v4911 = vpack.c.bf16 %v4860, %v4859
    %v4912 = vpack.c.bf16 %v4862, %v4861
    %v4913 = vpack.c.bf16 %v4864, %v4863
    %v4914 = vpack.c.bf16 %v4866, %v4865
    %v4915 = vpack.c.bf16 %v4868, %v4867
    %v4916 = vpack.c.bf16 %v4870, %v4869
    %v4917 = vpack.c.bf16 %v4872, %v4871
    %v4918 = vpack.c.bf16 %v4874, %v4873
    %v4919 = vpack.c.bf16 %v4876, %v4875
    %v4920 = vpack.c.bf16 %v4878, %v4877
    %v4921 = vpack.c.bf16 %v4880, %v4879
    %v4922 = vpack.c.bf16 %v4882, %v4881
    %v4923 = vpack.c.bf16 %v4884, %v4883
    %v4924 = vpack.c.bf16 %v4886, %v4885
    %v4925 = vpack.c.bf16 %v4888, %v4887
    %v4926 = vpack.c.bf16 %v4890, %v4889
    %v4927 = vpack.c.bf16 %v4892, %v4891
    %v4928 = vpack.c.bf16 %v4894, %v4893
    %v4929 = vpack.c.bf16 %v4896, %v4895
    %v4930 = vpack.c.bf16 %v4898, %v4897
    %v4931 = vld [vmem:[#allocation3 + $0x1] sm:$0xff]
    %v4932 = vld [vmem:[#allocation3 + $0x9] sm:$0xff]
    %v4933 = vld [vmem:[#allocation3 + $0x19] sm:$0xff]
    %v4934 = vld [vmem:[#allocation3 + $0x21] sm:$0xff]
    %v4935 = vld [vmem:[#allocation3 + $0x31] sm:$0xff]
    %v4936 = vld [vmem:[#allocation3 + $0x39] sm:$0xff]
    %v4937 = vld [vmem:[#allocation3 + $0x49] sm:$0xff]
    %v4938 = vld [vmem:[#allocation3 + $0x51] sm:$0xff]
    %v4939 = vld [vmem:[#allocation3 + $0x61] sm:$0xff]
    %v4940 = vld [vmem:[#allocation3 + $0x69] sm:$0xff]
    %v4941 = vld [vmem:[#allocation3 + $0x79] sm:$0xff]
    %v4942 = vld [vmem:[#allocation3 + $0x81] sm:$0xff]
    %v4943 = vld [vmem:[#allocation3 + $0x91] sm:$0xff]
    %v4944 = vld [vmem:[#allocation3 + $0x99] sm:$0xff]
    %v4945 = vld [vmem:[#allocation3 + $0xa9] sm:$0xff]
    %v4946 = vld [vmem:[#allocation3 + $0xb1] sm:$0xff]
    %v4947 = vld [vmem:[#allocation3 + $0xc1] sm:$0xff]
    %v4948 = vld [vmem:[#allocation3 + $0xc9] sm:$0xff]
    %v4949 = vld [vmem:[#allocation3 + $0xd9] sm:$0xff]
    %v4950 = vld [vmem:[#allocation3 + $0xe1] sm:$0xff]
    %v4951 = vld [vmem:[#allocation3 + $0xf1] sm:$0xff]
    %v4952 = vld [vmem:[#allocation3 + $0xf9] sm:$0xff]
    %v4953 = vld [vmem:[#allocation3 + $0x109] sm:$0xff]
    %v4954 = vld [vmem:[#allocation3 + $0x111] sm:$0xff]
    %v4955 = vld [vmem:[#allocation3 + $0x121] sm:$0xff]
    %v4956 = vld [vmem:[#allocation3 + $0x129] sm:$0xff]
    %v4957 = vld [vmem:[#allocation3 + $0x139] sm:$0xff]
    %v4958 = vld [vmem:[#allocation3 + $0x141] sm:$0xff]
    %v4959 = vld [vmem:[#allocation3 + $0x151] sm:$0xff]
    %v4960 = vld [vmem:[#allocation3 + $0x159] sm:$0xff]
    %v4961 = vld [vmem:[#allocation3 + $0x169] sm:$0xff]
    %v4962 = vld [vmem:[#allocation3 + $0x171] sm:$0xff]
    %v4963 = vld [vmem:[#allocation3 + $0x1b1] sm:$0xff]
    %v4964 = vld [vmem:[#allocation3 + $0x1b9] sm:$0xff]
    %v4965 = vld [vmem:[#allocation3 + $0x1c9] sm:$0xff]
    %v4966 = vld [vmem:[#allocation3 + $0x1d1] sm:$0xff]
    %v4967 = vld [vmem:[#allocation3 + $0x1e1] sm:$0xff]
    %v4968 = vld [vmem:[#allocation3 + $0x1e9] sm:$0xff]
    %v4969 = vld [vmem:[#allocation3 + $0x1f9] sm:$0xff]
    %v4970 = vld [vmem:[#allocation3 + $0x201] sm:$0xff]
    %v4971 = vld [vmem:[#allocation3 + $0x211] sm:$0xff]
    %v4972 = vld [vmem:[#allocation3 + $0x219] sm:$0xff]
    %v4973 = vld [vmem:[#allocation3 + $0x229] sm:$0xff]
    %v4974 = vld [vmem:[#allocation3 + $0x231] sm:$0xff]
    %v4975 = vld [vmem:[#allocation3 + $0x241] sm:$0xff]
    %v4976 = vld [vmem:[#allocation3 + $0x249] sm:$0xff]
    %v4977 = vld [vmem:[#allocation3 + $0x259] sm:$0xff]
    %v4978 = vld [vmem:[#allocation3 + $0x261] sm:$0xff]
    %v4979 = vld [vmem:[#allocation3 + $0x271] sm:$0xff]
    %v4980 = vld [vmem:[#allocation3 + $0x279] sm:$0xff]
    %v4981 = vld [vmem:[#allocation3 + $0x289] sm:$0xff]
    %v4982 = vld [vmem:[#allocation3 + $0x291] sm:$0xff]
    %v4983 = vld [vmem:[#allocation3 + $0x2a1] sm:$0xff]
    %v4984 = vld [vmem:[#allocation3 + $0x2a9] sm:$0xff]
    %v4985 = vld [vmem:[#allocation3 + $0x2b9] sm:$0xff]
    %v4986 = vld [vmem:[#allocation3 + $0x2c1] sm:$0xff]
    %v4987 = vld [vmem:[#allocation3 + $0x2d1] sm:$0xff]
    %v4988 = vld [vmem:[#allocation3 + $0x2d9] sm:$0xff]
    %v4989 = vld [vmem:[#allocation3 + $0x2e9] sm:$0xff]
    %v4990 = vld [vmem:[#allocation3 + $0x2f1] sm:$0xff]
    %v4991 = vld [vmem:[#allocation3 + $0x301] sm:$0xff]
    %v4992 = vld [vmem:[#allocation3 + $0x309] sm:$0xff]
    %v4993 = vld [vmem:[#allocation3 + $0x319] sm:$0xff]
    %v4994 = vld [vmem:[#allocation3 + $0x321] sm:$0xff]
    %v4995 = vpack.c.bf16 %v4932, %v4931
    %v4996 = vpack.c.bf16 %v4934, %v4933
    %v4997 = vpack.c.bf16 %v4936, %v4935
    %v4998 = vpack.c.bf16 %v4938, %v4937
    %v4999 = vpack.c.bf16 %v4940, %v4939
    %v5000 = vpack.c.bf16 %v4942, %v4941
    %v5001 = vpack.c.bf16 %v4944, %v4943
    %v5002 = vpack.c.bf16 %v4946, %v4945
    %v5003 = vpack.c.bf16 %v4948, %v4947
    %v5004 = vpack.c.bf16 %v4950, %v4949
    %v5005 = vpack.c.bf16 %v4952, %v4951
    %v5006 = vpack.c.bf16 %v4954, %v4953
    %v5007 = vpack.c.bf16 %v4956, %v4955
    %v5008 = vpack.c.bf16 %v4958, %v4957
    %v5009 = vpack.c.bf16 %v4960, %v4959
    %v5010 = vpack.c.bf16 %v4962, %v4961
    %v5011 = vpack.c.bf16 %v4964, %v4963
    %v5012 = vpack.c.bf16 %v4966, %v4965
    %v5013 = vpack.c.bf16 %v4968, %v4967
    %v5014 = vpack.c.bf16 %v4970, %v4969
    %v5015 = vpack.c.bf16 %v4972, %v4971
    %v5016 = vpack.c.bf16 %v4974, %v4973
    %v5017 = vpack.c.bf16 %v4976, %v4975
    %v5018 = vpack.c.bf16 %v4978, %v4977
    %v5019 = vpack.c.bf16 %v4980, %v4979
    %v5020 = vpack.c.bf16 %v4982, %v4981
    %v5021 = vpack.c.bf16 %v4984, %v4983
    %v5022 = vpack.c.bf16 %v4986, %v4985
    %v5023 = vpack.c.bf16 %v4988, %v4987
    %v5024 = vpack.c.bf16 %v4990, %v4989
    %v5025 = vpack.c.bf16 %v4992, %v4991
    %v5026 = vpack.c.bf16 %v4994, %v4993
    %v5027 = vld [vmem:[#allocation3 + $0x2] sm:$0xff]
    %v5028 = vld [vmem:[#allocation3 + $0xa] sm:$0xff]
    %v5029 = vld [vmem:[#allocation3 + $0x1a] sm:$0xff]
    %v5030 = vld [vmem:[#allocation3 + $0x22] sm:$0xff]
    %v5031 = vld [vmem:[#allocation3 + $0x32] sm:$0xff]
    %v5032 = vld [vmem:[#allocation3 + $0x3a] sm:$0xff]
    %v5033 = vld [vmem:[#allocation3 + $0x4a] sm:$0xff]
    %v5034 = vld [vmem:[#allocation3 + $0x52] sm:$0xff]
    %v5035 = vld [vmem:[#allocation3 + $0x62] sm:$0xff]
    %v5036 = vld [vmem:[#allocation3 + $0x6a] sm:$0xff]
    %v5037 = vld [vmem:[#allocation3 + $0x7a] sm:$0xff]
    %v5038 = vld [vmem:[#allocation3 + $0x82] sm:$0xff]
    %v5039 = vld [vmem:[#allocation3 + $0x92] sm:$0xff]
    %v5040 = vld [vmem:[#allocation3 + $0x9a] sm:$0xff]
    %v5041 = vld [vmem:[#allocation3 + $0xaa] sm:$0xff]
    %v5042 = vld [vmem:[#allocation3 + $0xb2] sm:$0xff]
    %v5043 = vld [vmem:[#allocation3 + $0xc2] sm:$0xff]
    %v5044 = vld [vmem:[#allocation3 + $0xca] sm:$0xff]
    %v5045 = vld [vmem:[#allocation3 + $0xda] sm:$0xff]
    %v5046 = vld [vmem:[#allocation3 + $0xe2] sm:$0xff]
    %v5047 = vld [vmem:[#allocation3 + $0xf2] sm:$0xff]
    %v5048 = vld [vmem:[#allocation3 + $0xfa] sm:$0xff]
    %v5049 = vld [vmem:[#allocation3 + $0x10a] sm:$0xff]
    %v5050 = vld [vmem:[#allocation3 + $0x112] sm:$0xff]
    %v5051 = vld [vmem:[#allocation3 + $0x122] sm:$0xff]
    %v5052 = vld [vmem:[#allocation3 + $0x12a] sm:$0xff]
    %v5053 = vld [vmem:[#allocation3 + $0x13a] sm:$0xff]
    %v5054 = vld [vmem:[#allocation3 + $0x142] sm:$0xff]
    %v5055 = vld [vmem:[#allocation3 + $0x152] sm:$0xff]
    %v5056 = vld [vmem:[#allocation3 + $0x15a] sm:$0xff]
    %v5057 = vld [vmem:[#allocation3 + $0x16a] sm:$0xff]
    %v5058 = vld [vmem:[#allocation3 + $0x172] sm:$0xff]
    %v5059 = vld [vmem:[#allocation3 + $0x1b2] sm:$0xff]
    %v5060 = vld [vmem:[#allocation3 + $0x1ba] sm:$0xff]
    %v5061 = vld [vmem:[#allocation3 + $0x1ca] sm:$0xff]
    %v5062 = vld [vmem:[#allocation3 + $0x1d2] sm:$0xff]
    %v5063 = vld [vmem:[#allocation3 + $0x1e2] sm:$0xff]
    %v5064 = vld [vmem:[#allocation3 + $0x1ea] sm:$0xff]
    %v5065 = vld [vmem:[#allocation3 + $0x1fa] sm:$0xff]
    %v5066 = vld [vmem:[#allocation3 + $0x202] sm:$0xff]
    %v5067 = vld [vmem:[#allocation3 + $0x212] sm:$0xff]
    %v5068 = vld [vmem:[#allocation3 + $0x21a] sm:$0xff]
    %v5069 = vld [vmem:[#allocation3 + $0x22a] sm:$0xff]
    %v5070 = vld [vmem:[#allocation3 + $0x232] sm:$0xff]
    %v5071 = vld [vmem:[#allocation3 + $0x242] sm:$0xff]
    %v5072 = vld [vmem:[#allocation3 + $0x24a] sm:$0xff]
    %v5073 = vld [vmem:[#allocation3 + $0x25a] sm:$0xff]
    %v5074 = vld [vmem:[#allocation3 + $0x262] sm:$0xff]
    %v5075 = vld [vmem:[#allocation3 + $0x272] sm:$0xff]
    %v5076 = vld [vmem:[#allocation3 + $0x27a] sm:$0xff]
    %v5077 = vld [vmem:[#allocation3 + $0x28a] sm:$0xff]
    %v5078 = vld [vmem:[#allocation3 + $0x292] sm:$0xff]
    %v5079 = vld [vmem:[#allocation3 + $0x2a2] sm:$0xff]
    %v5080 = vld [vmem:[#allocation3 + $0x2aa] sm:$0xff]
    %v5081 = vld [vmem:[#allocation3 + $0x2ba] sm:$0xff]
    %v5082 = vld [vmem:[#allocation3 + $0x2c2] sm:$0xff]
    %v5083 = vld [vmem:[#allocation3 + $0x2d2] sm:$0xff]
    %v5084 = vld [vmem:[#allocation3 + $0x2da] sm:$0xff]
    %v5085 = vld [vmem:[#allocation3 + $0x2ea] sm:$0xff]
    %v5086 = vld [vmem:[#allocation3 + $0x2f2] sm:$0xff]
    %v5087 = vld [vmem:[#allocation3 + $0x302] sm:$0xff]
    %v5088 = vld [vmem:[#allocation3 + $0x30a] sm:$0xff]
    %v5089 = vld [vmem:[#allocation3 + $0x31a] sm:$0xff]
    %v5090 = vld [vmem:[#allocation3 + $0x322] sm:$0xff]
    %v5091 = vpack.c.bf16 %v5028, %v5027
    %v5092 = vpack.c.bf16 %v5030, %v5029
    %v5093 = vpack.c.bf16 %v5032, %v5031
    %v5094 = vpack.c.bf16 %v5034, %v5033
    %v5095 = vpack.c.bf16 %v5036, %v5035
    %v5096 = vpack.c.bf16 %v5038, %v5037
    %v5097 = vpack.c.bf16 %v5040, %v5039
    %v5098 = vpack.c.bf16 %v5042, %v5041
    %v5099 = vpack.c.bf16 %v5044, %v5043
    %v5100 = vpack.c.bf16 %v5046, %v5045
    %v5101 = vpack.c.bf16 %v5048, %v5047
    %v5102 = vpack.c.bf16 %v5050, %v5049
    %v5103 = vpack.c.bf16 %v5052, %v5051
    %v5104 = vpack.c.bf16 %v5054, %v5053
    %v5105 = vpack.c.bf16 %v5056, %v5055
    %v5106 = vpack.c.bf16 %v5058, %v5057
    %v5107 = vpack.c.bf16 %v5060, %v5059
    %v5108 = vpack.c.bf16 %v5062, %v5061
    %v5109 = vpack.c.bf16 %v5064, %v5063
    %v5110 = vpack.c.bf16 %v5066, %v5065
    %v5111 = vpack.c.bf16 %v5068, %v5067
    %v5112 = vpack.c.bf16 %v5070, %v5069
    %v5113 = vpack.c.bf16 %v5072, %v5071
    %v5114 = vpack.c.bf16 %v5074, %v5073
    %v5115 = vpack.c.bf16 %v5076, %v5075
    %v5116 = vpack.c.bf16 %v5078, %v5077
    %v5117 = vpack.c.bf16 %v5080, %v5079
    %v5118 = vpack.c.bf16 %v5082, %v5081
    %v5119 = vpack.c.bf16 %v5084, %v5083
    %v5120 = vpack.c.bf16 %v5086, %v5085
    %v5121 = vpack.c.bf16 %v5088, %v5087
    %v5122 = vpack.c.bf16 %v5090, %v5089
    %v5123 = vld [vmem:[%s4706] sm:$0xff]
    %v5124 = vld [vmem:[%s4706 + $0x8] sm:$0xff]
    %v5125 = vld [vmem:[%s4706 + $0x18] sm:$0xff]
    %v5126 = vld [vmem:[%s4706 + $0x20] sm:$0xff]
    %v5127 = vld [vmem:[%s4706 + $0x30] sm:$0xff]
    %v5128 = vld [vmem:[%s4706 + $0x38] sm:$0xff]
    %v5129 = vld [vmem:[%s4706 + $0x48] sm:$0xff]
    %v5130 = vld [vmem:[%s4706 + $0x50] sm:$0xff]
    %v5131 = vld [vmem:[%s4706 + $0x60] sm:$0xff]
    %v5132 = vld [vmem:[%s4706 + $0x68] sm:$0xff]
    %v5133 = vld [vmem:[%s4706 + $0x78] sm:$0xff]
    %v5134 = vld [vmem:[%s4706 + $0x80] sm:$0xff]
    %v5135 = vld [vmem:[%s4706 + $0x90] sm:$0xff]
    %v5136 = vld [vmem:[%s4706 + $0x98] sm:$0xff]
    %v5137 = vld [vmem:[%s4706 + $0xa8] sm:$0xff]
    %v5138 = vld [vmem:[%s4706 + $0xb0] sm:$0xff]
    %v5139 = vld [vmem:[%s4706 + $0xc0] sm:$0xff]
    %v5140 = vld [vmem:[%s4706 + $0xc8] sm:$0xff]
    %v5141 = vld [vmem:[%s4706 + $0xd8] sm:$0xff]
    %v5142 = vld [vmem:[%s4706 + $0xe0] sm:$0xff]
    %v5143 = vld [vmem:[%s4706 + $0xf0] sm:$0xff]
    %v5144 = vld [vmem:[%s4706 + $0xf8] sm:$0xff]
    %v5145 = vld [vmem:[%s4706 + $0x108] sm:$0xff]
    %v5146 = vld [vmem:[%s4706 + $0x110] sm:$0xff]
    %v5147 = vld [vmem:[%s4706 + $0x120] sm:$0xff]
    %v5148 = vld [vmem:[%s4706 + $0x128] sm:$0xff]
    %v5149 = vld [vmem:[%s4706 + $0x138] sm:$0xff]
    %v5150 = vld [vmem:[%s4706 + $0x140] sm:$0xff]
    %v5151 = vld [vmem:[%s4706 + $0x150] sm:$0xff]
    %v5152 = vld [vmem:[%s4706 + $0x158] sm:$0xff]
    %v5153 = vld [vmem:[%s4706 + $0x168] sm:$0xff]
    %v5154 = vld [vmem:[%s4706 + $0x170] sm:$0xff]
    %v5155 = vld [vmem:[%s4706 + $0x1b0] sm:$0xff]
    %v5156 = vld [vmem:[%s4706 + $0x1b8] sm:$0xff]
    %v5157 = vld [vmem:[%s4706 + $0x1c8] sm:$0xff]
    %v5158 = vld [vmem:[%s4706 + $0x1d0] sm:$0xff]
    %v5159 = vld [vmem:[%s4706 + $0x1e0] sm:$0xff]
    %v5160 = vld [vmem:[%s4706 + $0x1e8] sm:$0xff]
    %v5161 = vld [vmem:[%s4706 + $0x1f8] sm:$0xff]
    %v5162 = vld [vmem:[%s4706 + $0x200] sm:$0xff]
    %v5163 = vld [vmem:[%s4706 + $0x210] sm:$0xff]
    %v5164 = vld [vmem:[%s4706 + $0x218] sm:$0xff]
    %v5165 = vld [vmem:[%s4706 + $0x228] sm:$0xff]
    %v5166 = vld [vmem:[%s4706 + $0x230] sm:$0xff]
    %v5167 = vld [vmem:[%s4706 + $0x240] sm:$0xff]
    %v5168 = vld [vmem:[%s4706 + $0x248] sm:$0xff]
    %v5169 = vld [vmem:[%s4706 + $0x258] sm:$0xff]
    %v5170 = vld [vmem:[%s4706 + $0x260] sm:$0xff]
    %v5171 = vld [vmem:[%s4706 + $0x270] sm:$0xff]
    %v5172 = vld [vmem:[%s4706 + $0x278] sm:$0xff]
    %v5173 = vld [vmem:[%s4706 + $0x288] sm:$0xff]
    %v5174 = vld [vmem:[%s4706 + $0x290] sm:$0xff]
    %v5175 = vld [vmem:[%s4706 + $0x2a0] sm:$0xff]
    %v5176 = vld [vmem:[%s4706 + $0x2a8] sm:$0xff]
    %v5177 = vld [vmem:[%s4706 + $0x2b8] sm:$0xff]
    %v5178 = vld [vmem:[%s4706 + $0x2c0] sm:$0xff]
    %v5179 = vld [vmem:[%s4706 + $0x2d0] sm:$0xff]
    %v5180 = vld [vmem:[%s4706 + $0x2d8] sm:$0xff]
    %v5181 = vld [vmem:[%s4706 + $0x2e8] sm:$0xff]
    %v5182 = vld [vmem:[%s4706 + $0x2f0] sm:$0xff]
    %v5183 = vld [vmem:[%s4706 + $0x300] sm:$0xff]
    %v5184 = vld [vmem:[%s4706 + $0x308] sm:$0xff]
    %v5185 = vld [vmem:[%s4706 + $0x318] sm:$0xff]
    %v5186 = vld [vmem:[%s4706 + $0x320] sm:$0xff]
    %v5187 = vpack.c.bf16 %v5124, %v5123
    %v5188 = vpack.c.bf16 %v5126, %v5125
    %v5189 = vpack.c.bf16 %v5128, %v5127
    %v5190 = vpack.c.bf16 %v5130, %v5129
    %v5191 = vpack.c.bf16 %v5132, %v5131
    %v5192 = vpack.c.bf16 %v5134, %v5133
    %v5193 = vpack.c.bf16 %v5136, %v5135
    %v5194 = vpack.c.bf16 %v5138, %v5137
    %v5195 = vpack.c.bf16 %v5140, %v5139
    %v5196 = vpack.c.bf16 %v5142, %v5141
    %v5197 = vpack.c.bf16 %v5144, %v5143
    %v5198 = vpack.c.bf16 %v5146, %v5145
    %v5199 = vpack.c.bf16 %v5148, %v5147
    %v5200 = vpack.c.bf16 %v5150, %v5149
    %v5201 = vpack.c.bf16 %v5152, %v5151
    %v5202 = vpack.c.bf16 %v5154, %v5153
    %v5203 = vpack.c.bf16 %v5156, %v5155
    %v5204 = vpack.c.bf16 %v5158, %v5157
    %v5205 = vpack.c.bf16 %v5160, %v5159
    %v5206 = vpack.c.bf16 %v5162, %v5161
    %v5207 = vpack.c.bf16 %v5164, %v5163
    %v5208 = vpack.c.bf16 %v5166, %v5165
    %v5209 = vpack.c.bf16 %v5168, %v5167
    %v5210 = vpack.c.bf16 %v5170, %v5169
    %v5211 = vpack.c.bf16 %v5172, %v5171
    %v5212 = vpack.c.bf16 %v5174, %v5173
    %v5213 = vpack.c.bf16 %v5176, %v5175
    %v5214 = vpack.c.bf16 %v5178, %v5177
    %v5215 = vpack.c.bf16 %v5180, %v5179
    %v5216 = vpack.c.bf16 %v5182, %v5181
    %v5217 = vpack.c.bf16 %v5184, %v5183
    %v5218 = vpack.c.bf16 %v5186, %v5185
    %v5219 = vld [vmem:[%s4706 + $0x1] sm:$0xff]
    %v5220 = vld [vmem:[%s4706 + $0x9] sm:$0xff]
    %v5221 = vld [vmem:[%s4706 + $0x19] sm:$0xff]
    %v5222 = vld [vmem:[%s4706 + $0x21] sm:$0xff]
    %v5223 = vld [vmem:[%s4706 + $0x31] sm:$0xff]
    %v5224 = vld [vmem:[%s4706 + $0x39] sm:$0xff]
    %v5225 = vld [vmem:[%s4706 + $0x49] sm:$0xff]
    %v5226 = vld [vmem:[%s4706 + $0x51] sm:$0xff]
    %v5227 = vld [vmem:[%s4706 + $0x61] sm:$0xff]
    %v5228 = vld [vmem:[%s4706 + $0x69] sm:$0xff]
    %v5229 = vld [vmem:[%s4706 + $0x79] sm:$0xff]
    %v5230 = vld [vmem:[%s4706 + $0x81] sm:$0xff]
    %v5231 = vld [vmem:[%s4706 + $0x91] sm:$0xff]
    %v5232 = vld [vmem:[%s4706 + $0x99] sm:$0xff]
    %v5233 = vld [vmem:[%s4706 + $0xa9] sm:$0xff]
    %v5234 = vld [vmem:[%s4706 + $0xb1] sm:$0xff]
    %v5235 = vld [vmem:[%s4706 + $0xc1] sm:$0xff]
    %v5236 = vld [vmem:[%s4706 + $0xc9] sm:$0xff]
    %v5237 = vld [vmem:[%s4706 + $0xd9] sm:$0xff]
    %v5238 = vld [vmem:[%s4706 + $0xe1] sm:$0xff]
    %v5239 = vld [vmem:[%s4706 + $0xf1] sm:$0xff]
    %v5240 = vld [vmem:[%s4706 + $0xf9] sm:$0xff]
    %v5241 = vld [vmem:[%s4706 + $0x109] sm:$0xff]
    %v5242 = vld [vmem:[%s4706 + $0x111] sm:$0xff]
    %v5243 = vld [vmem:[%s4706 + $0x121] sm:$0xff]
    %v5244 = vld [vmem:[%s4706 + $0x129] sm:$0xff]
    %v5245 = vld [vmem:[%s4706 + $0x139] sm:$0xff]
    %v5246 = vld [vmem:[%s4706 + $0x141] sm:$0xff]
    %v5247 = vld [vmem:[%s4706 + $0x151] sm:$0xff]
    %v5248 = vld [vmem:[%s4706 + $0x159] sm:$0xff]
    %v5249 = vld [vmem:[%s4706 + $0x169] sm:$0xff]
    %v5250 = vld [vmem:[%s4706 + $0x171] sm:$0xff]
    %v5251 = vld [vmem:[%s4706 + $0x1b1] sm:$0xff]
    %v5252 = vld [vmem:[%s4706 + $0x1b9] sm:$0xff]
    %v5253 = vld [vmem:[%s4706 + $0x1c9] sm:$0xff]
    %v5254 = vld [vmem:[%s4706 + $0x1d1] sm:$0xff]
    %v5255 = vld [vmem:[%s4706 + $0x1e1] sm:$0xff]
    %v5256 = vld [vmem:[%s4706 + $0x1e9] sm:$0xff]
    %v5257 = vld [vmem:[%s4706 + $0x1f9] sm:$0xff]
    %v5258 = vld [vmem:[%s4706 + $0x201] sm:$0xff]
    %v5259 = vld [vmem:[%s4706 + $0x211] sm:$0xff]
    %v5260 = vld [vmem:[%s4706 + $0x219] sm:$0xff]
    %v5261 = vld [vmem:[%s4706 + $0x229] sm:$0xff]
    %v5262 = vld [vmem:[%s4706 + $0x231] sm:$0xff]
    %v5263 = vld [vmem:[%s4706 + $0x241] sm:$0xff]
    %v5264 = vld [vmem:[%s4706 + $0x249] sm:$0xff]
    %v5265 = vld [vmem:[%s4706 + $0x259] sm:$0xff]
    %v5266 = vld [vmem:[%s4706 + $0x261] sm:$0xff]
    %v5267 = vld [vmem:[%s4706 + $0x271] sm:$0xff]
    %v5268 = vld [vmem:[%s4706 + $0x279] sm:$0xff]
    %v5269 = vld [vmem:[%s4706 + $0x289] sm:$0xff]
    %v5270 = vld [vmem:[%s4706 + $0x291] sm:$0xff]
    %v5271 = vld [vmem:[%s4706 + $0x2a1] sm:$0xff]
    %v5272 = vld [vmem:[%s4706 + $0x2a9] sm:$0xff]
    %v5273 = vld [vmem:[%s4706 + $0x2b9] sm:$0xff]
    %v5274 = vld [vmem:[%s4706 + $0x2c1] sm:$0xff]
    %v5275 = vld [vmem:[%s4706 + $0x2d1] sm:$0xff]
    %v5276 = vld [vmem:[%s4706 + $0x2d9] sm:$0xff]
    %v5277 = vld [vmem:[%s4706 + $0x2e9] sm:$0xff]
    %v5278 = vld [vmem:[%s4706 + $0x2f1] sm:$0xff]
    %v5279 = vld [vmem:[%s4706 + $0x301] sm:$0xff]
    %v5280 = vld [vmem:[%s4706 + $0x309] sm:$0xff]
    %v5281 = vld [vmem:[%s4706 + $0x319] sm:$0xff]
    %v5282 = vld [vmem:[%s4706 + $0x321] sm:$0xff]
    %v5283 = vpack.c.bf16 %v5220, %v5219
    %v5284 = vpack.c.bf16 %v5222, %v5221
    %v5285 = vpack.c.bf16 %v5224, %v5223
    %v5286 = vpack.c.bf16 %v5226, %v5225
    %v5287 = vpack.c.bf16 %v5228, %v5227
    %v5288 = vpack.c.bf16 %v5230, %v5229
    %v5289 = vpack.c.bf16 %v5232, %v5231
    %v5290 = vpack.c.bf16 %v5234, %v5233
    %v5291 = vpack.c.bf16 %v5236, %v5235
    %v5292 = vpack.c.bf16 %v5238, %v5237
    %v5293 = vpack.c.bf16 %v5240, %v5239
    %v5294 = vpack.c.bf16 %v5242, %v5241
    %v5295 = vpack.c.bf16 %v5244, %v5243
    %v5296 = vpack.c.bf16 %v5246, %v5245
    %v5297 = vpack.c.bf16 %v5248, %v5247
    %v5298 = vpack.c.bf16 %v5250, %v5249
    %v5299 = vpack.c.bf16 %v5252, %v5251
    %v5300 = vpack.c.bf16 %v5254, %v5253
    %v5301 = vpack.c.bf16 %v5256, %v5255
    %v5302 = vpack.c.bf16 %v5258, %v5257
    %v5303 = vpack.c.bf16 %v5260, %v5259
    %v5304 = vpack.c.bf16 %v5262, %v5261
    %v5305 = vpack.c.bf16 %v5264, %v5263
    %v5306 = vpack.c.bf16 %v5266, %v5265
    %v5307 = vpack.c.bf16 %v5268, %v5267
    %v5308 = vpack.c.bf16 %v5270, %v5269
    %v5309 = vpack.c.bf16 %v5272, %v5271
    %v5310 = vpack.c.bf16 %v5274, %v5273
    %v5311 = vpack.c.bf16 %v5276, %v5275
    %v5312 = vpack.c.bf16 %v5278, %v5277
    %v5313 = vpack.c.bf16 %v5280, %v5279
    %v5314 = vpack.c.bf16 %v5282, %v5281
    %v5315 = vld [vmem:[%s4706 + $0x2] sm:$0xff]
    %v5316 = vld [vmem:[%s4706 + $0xa] sm:$0xff]
    %v5317 = vld [vmem:[%s4706 + $0x1a] sm:$0xff]
    %v5318 = vld [vmem:[%s4706 + $0x22] sm:$0xff]
    %v5319 = vld [vmem:[%s4706 + $0x32] sm:$0xff]
    %v5320 = vld [vmem:[%s4706 + $0x3a] sm:$0xff]
    %v5321 = vld [vmem:[%s4706 + $0x4a] sm:$0xff]
    %v5322 = vld [vmem:[%s4706 + $0x52] sm:$0xff]
    %v5323 = vld [vmem:[%s4706 + $0x62] sm:$0xff]
    %v5324 = vld [vmem:[%s4706 + $0x6a] sm:$0xff]
    %v5325 = vld [vmem:[%s4706 + $0x7a] sm:$0xff]
    %v5326 = vld [vmem:[%s4706 + $0x82] sm:$0xff]
    %v5327 = vld [vmem:[%s4706 + $0x92] sm:$0xff]
    %v5328 = vld [vmem:[%s4706 + $0x9a] sm:$0xff]
    %v5329 = vld [vmem:[%s4706 + $0xaa] sm:$0xff]
    %v5330 = vld [vmem:[%s4706 + $0xb2] sm:$0xff]
    %v5331 = vld [vmem:[%s4706 + $0xc2] sm:$0xff]
    %v5332 = vld [vmem:[%s4706 + $0xca] sm:$0xff]
    %v5333 = vld [vmem:[%s4706 + $0xda] sm:$0xff]
    %v5334 = vld [vmem:[%s4706 + $0xe2] sm:$0xff]
    %v5335 = vld [vmem:[%s4706 + $0xf2] sm:$0xff]
    %v5336 = vld [vmem:[%s4706 + $0xfa] sm:$0xff]
    %v5337 = vld [vmem:[%s4706 + $0x10a] sm:$0xff]
    %v5338 = vld [vmem:[%s4706 + $0x112] sm:$0xff]
    %v5339 = vld [vmem:[%s4706 + $0x122] sm:$0xff]
    %v5340 = vld [vmem:[%s4706 + $0x12a] sm:$0xff]
    %v5341 = vld [vmem:[%s4706 + $0x13a] sm:$0xff]
    %v5342 = vld [vmem:[%s4706 + $0x142] sm:$0xff]
    %v5343 = vld [vmem:[%s4706 + $0x152] sm:$0xff]
    %v5344 = vld [vmem:[%s4706 + $0x15a] sm:$0xff]
    %v5345 = vld [vmem:[%s4706 + $0x16a] sm:$0xff]
    %v5346 = vld [vmem:[%s4706 + $0x172] sm:$0xff]
    %v5347 = vld [vmem:[%s4706 + $0x1b2] sm:$0xff]
    %v5348 = vld [vmem:[%s4706 + $0x1ba] sm:$0xff]
    %v5349 = vld [vmem:[%s4706 + $0x1ca] sm:$0xff]
    %v5350 = vld [vmem:[%s4706 + $0x1d2] sm:$0xff]
    %v5351 = vld [vmem:[%s4706 + $0x1e2] sm:$0xff]
    %v5352 = vld [vmem:[%s4706 + $0x1ea] sm:$0xff]
    %v5353 = vld [vmem:[%s4706 + $0x1fa] sm:$0xff]
    %v5354 = vld [vmem:[%s4706 + $0x202] sm:$0xff]
    %v5355 = vld [vmem:[%s4706 + $0x212] sm:$0xff]
    %v5356 = vld [vmem:[%s4706 + $0x21a] sm:$0xff]
    %v5357 = vld [vmem:[%s4706 + $0x22a] sm:$0xff]
    %v5358 = vld [vmem:[%s4706 + $0x232] sm:$0xff]
    %v5359 = vld [vmem:[%s4706 + $0x242] sm:$0xff]
    %v5360 = vld [vmem:[%s4706 + $0x24a] sm:$0xff]
    %v5361 = vld [vmem:[%s4706 + $0x25a] sm:$0xff]
    %v5362 = vld [vmem:[%s4706 + $0x262] sm:$0xff]
    %v5363 = vld [vmem:[%s4706 + $0x272] sm:$0xff]
    %v5364 = vld [vmem:[%s4706 + $0x27a] sm:$0xff]
    %v5365 = vld [vmem:[%s4706 + $0x28a] sm:$0xff]
    %v5366 = vld [vmem:[%s4706 + $0x292] sm:$0xff]
    %v5367 = vld [vmem:[%s4706 + $0x2a2] sm:$0xff]
    %v5368 = vld [vmem:[%s4706 + $0x2aa] sm:$0xff]
    %v5369 = vld [vmem:[%s4706 + $0x2ba] sm:$0xff]
    %v5370 = vld [vmem:[%s4706 + $0x2c2] sm:$0xff]
    %v5371 = vld [vmem:[%s4706 + $0x2d2] sm:$0xff]
    %v5372 = vld [vmem:[%s4706 + $0x2da] sm:$0xff]
    %v5373 = vld [vmem:[%s4706 + $0x2ea] sm:$0xff]
    %v5374 = vld [vmem:[%s4706 + $0x2f2] sm:$0xff]
    %v5375 = vld [vmem:[%s4706 + $0x302] sm:$0xff]
    %v5376 = vld [vmem:[%s4706 + $0x30a] sm:$0xff]
    %v5377 = vld [vmem:[%s4706 + $0x31a] sm:$0xff]
    %v5378 = vld [vmem:[%s4706 + $0x322] sm:$0xff]
    %v5379 = vpack.c.bf16 %v5316, %v5315
    %v5380 = vpack.c.bf16 %v5318, %v5317
    %v5381 = vpack.c.bf16 %v5320, %v5319
    %v5382 = vpack.c.bf16 %v5322, %v5321
    %v5383 = vpack.c.bf16 %v5324, %v5323
    %v5384 = vpack.c.bf16 %v5326, %v5325
    %v5385 = vpack.c.bf16 %v5328, %v5327
    %v5386 = vpack.c.bf16 %v5330, %v5329
    %v5387 = vpack.c.bf16 %v5332, %v5331
    %v5388 = vpack.c.bf16 %v5334, %v5333
    %v5389 = vpack.c.bf16 %v5336, %v5335
    %v5390 = vpack.c.bf16 %v5338, %v5337
    %v5391 = vpack.c.bf16 %v5340, %v5339
    %v5392 = vpack.c.bf16 %v5342, %v5341
    %v5393 = vpack.c.bf16 %v5344, %v5343
    %v5394 = vpack.c.bf16 %v5346, %v5345
    %v5395 = vpack.c.bf16 %v5348, %v5347
    %v5396 = vpack.c.bf16 %v5350, %v5349
    %v5397 = vpack.c.bf16 %v5352, %v5351
    %v5398 = vpack.c.bf16 %v5354, %v5353
    %v5399 = vpack.c.bf16 %v5356, %v5355
    %v5400 = vpack.c.bf16 %v5358, %v5357
    %v5401 = vpack.c.bf16 %v5360, %v5359
    %v5402 = vpack.c.bf16 %v5362, %v5361
    %v5403 = vpack.c.bf16 %v5364, %v5363
    %v5404 = vpack.c.bf16 %v5366, %v5365
    %v5405 = vpack.c.bf16 %v5368, %v5367
    %v5406 = vpack.c.bf16 %v5370, %v5369
    %v5407 = vpack.c.bf16 %v5372, %v5371
    %v5408 = vpack.c.bf16 %v5374, %v5373
    %v5409 = vpack.c.bf16 %v5376, %v5375
    %v5410 = vpack.c.bf16 %v5378, %v5377
    %s5411 = scalar_lea.vmem [#allocation3], 48
    %v5412 = vld [vmem:[%s5411] sm:$0xff]
    %v5413 = vld [vmem:[%s5411 + $0x8] sm:$0xff]
    %v5414 = vld [vmem:[%s5411 + $0x18] sm:$0xff]
    %v5415 = vld [vmem:[%s5411 + $0x20] sm:$0xff]
    %v5416 = vld [vmem:[%s5411 + $0x30] sm:$0xff]
    %v5417 = vld [vmem:[%s5411 + $0x38] sm:$0xff]
    %v5418 = vld [vmem:[%s5411 + $0x48] sm:$0xff]
    %v5419 = vld [vmem:[%s5411 + $0x50] sm:$0xff]
    %v5420 = vld [vmem:[%s5411 + $0x60] sm:$0xff]
    %v5421 = vld [vmem:[%s5411 + $0x68] sm:$0xff]
    %v5422 = vld [vmem:[%s5411 + $0x78] sm:$0xff]
    %v5423 = vld [vmem:[%s5411 + $0x80] sm:$0xff]
    %v5424 = vld [vmem:[%s5411 + $0x90] sm:$0xff]
    %v5425 = vld [vmem:[%s5411 + $0x98] sm:$0xff]
    %v5426 = vld [vmem:[%s5411 + $0xa8] sm:$0xff]
    %v5427 = vld [vmem:[%s5411 + $0xb0] sm:$0xff]
    %v5428 = vld [vmem:[%s5411 + $0xc0] sm:$0xff]
    %v5429 = vld [vmem:[%s5411 + $0xc8] sm:$0xff]
    %v5430 = vld [vmem:[%s5411 + $0xd8] sm:$0xff]
    %v5431 = vld [vmem:[%s5411 + $0xe0] sm:$0xff]
    %v5432 = vld [vmem:[%s5411 + $0xf0] sm:$0xff]
    %v5433 = vld [vmem:[%s5411 + $0xf8] sm:$0xff]
    %v5434 = vld [vmem:[%s5411 + $0x108] sm:$0xff]
    %v5435 = vld [vmem:[%s5411 + $0x110] sm:$0xff]
    %v5436 = vld [vmem:[%s5411 + $0x120] sm:$0xff]
    %v5437 = vld [vmem:[%s5411 + $0x128] sm:$0xff]
    %v5438 = vld [vmem:[%s5411 + $0x138] sm:$0xff]
    %v5439 = vld [vmem:[%s5411 + $0x140] sm:$0xff]
    %v5440 = vld [vmem:[%s5411 + $0x150] sm:$0xff]
    %v5441 = vld [vmem:[%s5411 + $0x158] sm:$0xff]
    %v5442 = vld [vmem:[%s5411 + $0x168] sm:$0xff]
    %v5443 = vld [vmem:[%s5411 + $0x170] sm:$0xff]
    %v5444 = vld [vmem:[%s5411 + $0x1b0] sm:$0xff]
    %v5445 = vld [vmem:[%s5411 + $0x1b8] sm:$0xff]
    %v5446 = vld [vmem:[%s5411 + $0x1c8] sm:$0xff]
    %v5447 = vld [vmem:[%s5411 + $0x1d0] sm:$0xff]
    %v5448 = vld [vmem:[%s5411 + $0x1e0] sm:$0xff]
    %v5449 = vld [vmem:[%s5411 + $0x1e8] sm:$0xff]
    %v5450 = vld [vmem:[%s5411 + $0x1f8] sm:$0xff]
    %v5451 = vld [vmem:[%s5411 + $0x200] sm:$0xff]
    %v5452 = vld [vmem:[%s5411 + $0x210] sm:$0xff]
    %v5453 = vld [vmem:[%s5411 + $0x218] sm:$0xff]
    %v5454 = vld [vmem:[%s5411 + $0x228] sm:$0xff]
    %v5455 = vld [vmem:[%s5411 + $0x230] sm:$0xff]
    %v5456 = vld [vmem:[%s5411 + $0x240] sm:$0xff]
    %v5457 = vld [vmem:[%s5411 + $0x248] sm:$0xff]
    %v5458 = vld [vmem:[%s5411 + $0x258] sm:$0xff]
    %v5459 = vld [vmem:[%s5411 + $0x260] sm:$0xff]
    %v5460 = vld [vmem:[%s5411 + $0x270] sm:$0xff]
    %v5461 = vld [vmem:[%s5411 + $0x278] sm:$0xff]
    %v5462 = vld [vmem:[%s5411 + $0x288] sm:$0xff]
    %v5463 = vld [vmem:[%s5411 + $0x290] sm:$0xff]
    %v5464 = vld [vmem:[%s5411 + $0x2a0] sm:$0xff]
    %v5465 = vld [vmem:[%s5411 + $0x2a8] sm:$0xff]
    %v5466 = vld [vmem:[%s5411 + $0x2b8] sm:$0xff]
    %v5467 = vld [vmem:[%s5411 + $0x2c0] sm:$0xff]
    %v5468 = vld [vmem:[%s5411 + $0x2d0] sm:$0xff]
    %v5469 = vld [vmem:[%s5411 + $0x2d8] sm:$0xff]
    %v5470 = vld [vmem:[%s5411 + $0x2e8] sm:$0xff]
    %v5471 = vld [vmem:[%s5411 + $0x2f0] sm:$0xff]
    %v5472 = vld [vmem:[%s5411 + $0x300] sm:$0xff]
    %v5473 = vld [vmem:[%s5411 + $0x308] sm:$0xff]
    %v5474 = vld [vmem:[%s5411 + $0x318] sm:$0xff]
    %v5475 = vld [vmem:[%s5411 + $0x320] sm:$0xff]
    %v5476 = vpack.c.bf16 %v5413, %v5412
    %v5477 = vpack.c.bf16 %v5415, %v5414
    %v5478 = vpack.c.bf16 %v5417, %v5416
    %v5479 = vpack.c.bf16 %v5419, %v5418
    %v5480 = vpack.c.bf16 %v5421, %v5420
    %v5481 = vpack.c.bf16 %v5423, %v5422
    %v5482 = vpack.c.bf16 %v5425, %v5424
    %v5483 = vpack.c.bf16 %v5427, %v5426
    %v5484 = vpack.c.bf16 %v5429, %v5428
    %v5485 = vpack.c.bf16 %v5431, %v5430
    %v5486 = vpack.c.bf16 %v5433, %v5432
    %v5487 = vpack.c.bf16 %v5435, %v5434
    %v5488 = vpack.c.bf16 %v5437, %v5436
    %v5489 = vpack.c.bf16 %v5439, %v5438
    %v5490 = vpack.c.bf16 %v5441, %v5440
    %v5491 = vpack.c.bf16 %v5443, %v5442
    %v5492 = vpack.c.bf16 %v5445, %v5444
    %v5493 = vpack.c.bf16 %v5447, %v5446
    %v5494 = vpack.c.bf16 %v5449, %v5448
    %v5495 = vpack.c.bf16 %v5451, %v5450
    %v5496 = vpack.c.bf16 %v5453, %v5452
    %v5497 = vpack.c.bf16 %v5455, %v5454
    %v5498 = vpack.c.bf16 %v5457, %v5456
    %v5499 = vpack.c.bf16 %v5459, %v5458
    %v5500 = vpack.c.bf16 %v5461, %v5460
    %v5501 = vpack.c.bf16 %v5463, %v5462
    %v5502 = vpack.c.bf16 %v5465, %v5464
    %v5503 = vpack.c.bf16 %v5467, %v5466
    %v5504 = vpack.c.bf16 %v5469, %v5468
    %v5505 = vpack.c.bf16 %v5471, %v5470
    %v5506 = vpack.c.bf16 %v5473, %v5472
    %v5507 = vpack.c.bf16 %v5475, %v5474
    %v5508 = vld [vmem:[%s5411 + $0x1] sm:$0xff]
    %v5509 = vld [vmem:[%s5411 + $0x9] sm:$0xff]
    %v5510 = vld [vmem:[%s5411 + $0x19] sm:$0xff]
    %v5511 = vld [vmem:[%s5411 + $0x21] sm:$0xff]
    %v5512 = vld [vmem:[%s5411 + $0x31] sm:$0xff]
    %v5513 = vld [vmem:[%s5411 + $0x39] sm:$0xff]
    %v5514 = vld [vmem:[%s5411 + $0x49] sm:$0xff]
    %v5515 = vld [vmem:[%s5411 + $0x51] sm:$0xff]
    %v5516 = vld [vmem:[%s5411 + $0x61] sm:$0xff]
    %v5517 = vld [vmem:[%s5411 + $0x69] sm:$0xff]
    %v5518 = vld [vmem:[%s5411 + $0x79] sm:$0xff]
    %v5519 = vld [vmem:[%s5411 + $0x81] sm:$0xff]
    %v5520 = vld [vmem:[%s5411 + $0x91] sm:$0xff]
    %v5521 = vld [vmem:[%s5411 + $0x99] sm:$0xff]
    %v5522 = vld [vmem:[%s5411 + $0xa9] sm:$0xff]
    %v5523 = vld [vmem:[%s5411 + $0xb1] sm:$0xff]
    %v5524 = vld [vmem:[%s5411 + $0xc1] sm:$0xff]
    %v5525 = vld [vmem:[%s5411 + $0xc9] sm:$0xff]
    %v5526 = vld [vmem:[%s5411 + $0xd9] sm:$0xff]
    %v5527 = vld [vmem:[%s5411 + $0xe1] sm:$0xff]
    %v5528 = vld [vmem:[%s5411 + $0xf1] sm:$0xff]
    %v5529 = vld [vmem:[%s5411 + $0xf9] sm:$0xff]
    %v5530 = vld [vmem:[%s5411 + $0x109] sm:$0xff]
    %v5531 = vld [vmem:[%s5411 + $0x111] sm:$0xff]
    %v5532 = vld [vmem:[%s5411 + $0x121] sm:$0xff]
    %v5533 = vld [vmem:[%s5411 + $0x129] sm:$0xff]
    %v5534 = vld [vmem:[%s5411 + $0x139] sm:$0xff]
    %v5535 = vld [vmem:[%s5411 + $0x141] sm:$0xff]
    %v5536 = vld [vmem:[%s5411 + $0x151] sm:$0xff]
    %v5537 = vld [vmem:[%s5411 + $0x159] sm:$0xff]
    %v5538 = vld [vmem:[%s5411 + $0x169] sm:$0xff]
    %v5539 = vld [vmem:[%s5411 + $0x171] sm:$0xff]
    %v5540 = vld [vmem:[%s5411 + $0x1b1] sm:$0xff]
    %v5541 = vld [vmem:[%s5411 + $0x1b9] sm:$0xff]
    %v5542 = vld [vmem:[%s5411 + $0x1c9] sm:$0xff]
    %v5543 = vld [vmem:[%s5411 + $0x1d1] sm:$0xff]
    %v5544 = vld [vmem:[%s5411 + $0x1e1] sm:$0xff]
    %v5545 = vld [vmem:[%s5411 + $0x1e9] sm:$0xff]
    %v5546 = vld [vmem:[%s5411 + $0x1f9] sm:$0xff]
    %v5547 = vld [vmem:[%s5411 + $0x201] sm:$0xff]
    %v5548 = vld [vmem:[%s5411 + $0x211] sm:$0xff]
    %v5549 = vld [vmem:[%s5411 + $0x219] sm:$0xff]
    %v5550 = vld [vmem:[%s5411 + $0x229] sm:$0xff]
    %v5551 = vld [vmem:[%s5411 + $0x231] sm:$0xff]
    %v5552 = vld [vmem:[%s5411 + $0x241] sm:$0xff]
    %v5553 = vld [vmem:[%s5411 + $0x249] sm:$0xff]
    %v5554 = vld [vmem:[%s5411 + $0x259] sm:$0xff]
    %v5555 = vld [vmem:[%s5411 + $0x261] sm:$0xff]
    %v5556 = vld [vmem:[%s5411 + $0x271] sm:$0xff]
    %v5557 = vld [vmem:[%s5411 + $0x279] sm:$0xff]
    %v5558 = vld [vmem:[%s5411 + $0x289] sm:$0xff]
    %v5559 = vld [vmem:[%s5411 + $0x291] sm:$0xff]
    %v5560 = vld [vmem:[%s5411 + $0x2a1] sm:$0xff]
    %v5561 = vld [vmem:[%s5411 + $0x2a9] sm:$0xff]
    %v5562 = vld [vmem:[%s5411 + $0x2b9] sm:$0xff]
    %v5563 = vld [vmem:[%s5411 + $0x2c1] sm:$0xff]
    %v5564 = vld [vmem:[%s5411 + $0x2d1] sm:$0xff]
    %v5565 = vld [vmem:[%s5411 + $0x2d9] sm:$0xff]
    %v5566 = vld [vmem:[%s5411 + $0x2e9] sm:$0xff]
    %v5567 = vld [vmem:[%s5411 + $0x2f1] sm:$0xff]
    %v5568 = vld [vmem:[%s5411 + $0x301] sm:$0xff]
    %v5569 = vld [vmem:[%s5411 + $0x309] sm:$0xff]
    %v5570 = vld [vmem:[%s5411 + $0x319] sm:$0xff]
    %v5571 = vld [vmem:[%s5411 + $0x321] sm:$0xff]
    %v5572 = vpack.c.bf16 %v5509, %v5508
    %v5573 = vpack.c.bf16 %v5511, %v5510
    %v5574 = vpack.c.bf16 %v5513, %v5512
    %v5575 = vpack.c.bf16 %v5515, %v5514
    %v5576 = vpack.c.bf16 %v5517, %v5516
    %v5577 = vpack.c.bf16 %v5519, %v5518
    %v5578 = vpack.c.bf16 %v5521, %v5520
    %v5579 = vpack.c.bf16 %v5523, %v5522
    %v5580 = vpack.c.bf16 %v5525, %v5524
    %v5581 = vpack.c.bf16 %v5527, %v5526
    %v5582 = vpack.c.bf16 %v5529, %v5528
    %v5583 = vpack.c.bf16 %v5531, %v5530
    %v5584 = vpack.c.bf16 %v5533, %v5532
    %v5585 = vpack.c.bf16 %v5535, %v5534
    %v5586 = vpack.c.bf16 %v5537, %v5536
    %v5587 = vpack.c.bf16 %v5539, %v5538
    %v5588 = vpack.c.bf16 %v5541, %v5540
    %v5589 = vpack.c.bf16 %v5543, %v5542
    %v5590 = vpack.c.bf16 %v5545, %v5544
    %v5591 = vpack.c.bf16 %v5547, %v5546
    %v5592 = vpack.c.bf16 %v5549, %v5548
    %v5593 = vpack.c.bf16 %v5551, %v5550
    %v5594 = vpack.c.bf16 %v5553, %v5552
    %v5595 = vpack.c.bf16 %v5555, %v5554
    %v5596 = vpack.c.bf16 %v5557, %v5556
    %v5597 = vpack.c.bf16 %v5559, %v5558
    %v5598 = vpack.c.bf16 %v5561, %v5560
    %v5599 = vpack.c.bf16 %v5563, %v5562
    %v5600 = vpack.c.bf16 %v5565, %v5564
    %v5601 = vpack.c.bf16 %v5567, %v5566
    %v5602 = vpack.c.bf16 %v5569, %v5568
    %v5603 = vpack.c.bf16 %v5571, %v5570
    %v5604 = vld [vmem:[%s5411 + $0x2] sm:$0xff]
    %v5605 = vld [vmem:[%s5411 + $0xa] sm:$0xff]
    %v5606 = vld [vmem:[%s5411 + $0x1a] sm:$0xff]
    %v5607 = vld [vmem:[%s5411 + $0x22] sm:$0xff]
    %v5608 = vld [vmem:[%s5411 + $0x32] sm:$0xff]
    %v5609 = vld [vmem:[%s5411 + $0x3a] sm:$0xff]
    %v5610 = vld [vmem:[%s5411 + $0x4a] sm:$0xff]
    %v5611 = vld [vmem:[%s5411 + $0x52] sm:$0xff]
    %v5612 = vld [vmem:[%s5411 + $0x62] sm:$0xff]
    %v5613 = vld [vmem:[%s5411 + $0x6a] sm:$0xff]
    %v5614 = vld [vmem:[%s5411 + $0x7a] sm:$0xff]
    %v5615 = vld [vmem:[%s5411 + $0x82] sm:$0xff]
    %v5616 = vld [vmem:[%s5411 + $0x92] sm:$0xff]
    %v5617 = vld [vmem:[%s5411 + $0x9a] sm:$0xff]
    %v5618 = vld [vmem:[%s5411 + $0xaa] sm:$0xff]
    %v5619 = vld [vmem:[%s5411 + $0xb2] sm:$0xff]
    %v5620 = vld [vmem:[%s5411 + $0xc2] sm:$0xff]
    %v5621 = vld [vmem:[%s5411 + $0xca] sm:$0xff]
    %v5622 = vld [vmem:[%s5411 + $0xda] sm:$0xff]
    %v5623 = vld [vmem:[%s5411 + $0xe2] sm:$0xff]
    %v5624 = vld [vmem:[%s5411 + $0xf2] sm:$0xff]
    %v5625 = vld [vmem:[%s5411 + $0xfa] sm:$0xff]
    %v5626 = vld [vmem:[%s5411 + $0x10a] sm:$0xff]
    %v5627 = vld [vmem:[%s5411 + $0x112] sm:$0xff]
    %v5628 = vld [vmem:[%s5411 + $0x122] sm:$0xff]
    %v5629 = vld [vmem:[%s5411 + $0x12a] sm:$0xff]
    %v5630 = vld [vmem:[%s5411 + $0x13a] sm:$0xff]
    %v5631 = vld [vmem:[%s5411 + $0x142] sm:$0xff]
    %v5632 = vld [vmem:[%s5411 + $0x152] sm:$0xff]
    %v5633 = vld [vmem:[%s5411 + $0x15a] sm:$0xff]
    %v5634 = vld [vmem:[%s5411 + $0x16a] sm:$0xff]
    %v5635 = vld [vmem:[%s5411 + $0x172] sm:$0xff]
    %v5636 = vld [vmem:[%s5411 + $0x1b2] sm:$0xff]
    %v5637 = vld [vmem:[%s5411 + $0x1ba] sm:$0xff]
    %v5638 = vld [vmem:[%s5411 + $0x1ca] sm:$0xff]
    %v5639 = vld [vmem:[%s5411 + $0x1d2] sm:$0xff]
    %v5640 = vld [vmem:[%s5411 + $0x1e2] sm:$0xff]
    %v5641 = vld [vmem:[%s5411 + $0x1ea] sm:$0xff]
    %v5642 = vld [vmem:[%s5411 + $0x1fa] sm:$0xff]
    %v5643 = vld [vmem:[%s5411 + $0x202] sm:$0xff]
    %v5644 = vld [vmem:[%s5411 + $0x212] sm:$0xff]
    %v5645 = vld [vmem:[%s5411 + $0x21a] sm:$0xff]
    %v5646 = vld [vmem:[%s5411 + $0x22a] sm:$0xff]
    %v5647 = vld [vmem:[%s5411 + $0x232] sm:$0xff]
    %v5648 = vld [vmem:[%s5411 + $0x242] sm:$0xff]
    %v5649 = vld [vmem:[%s5411 + $0x24a] sm:$0xff]
    %v5650 = vld [vmem:[%s5411 + $0x25a] sm:$0xff]
    %v5651 = vld [vmem:[%s5411 + $0x262] sm:$0xff]
    %v5652 = vld [vmem:[%s5411 + $0x272] sm:$0xff]
    %v5653 = vld [vmem:[%s5411 + $0x27a] sm:$0xff]
    %v5654 = vld [vmem:[%s5411 + $0x28a] sm:$0xff]
    %v5655 = vld [vmem:[%s5411 + $0x292] sm:$0xff]
    %v5656 = vld [vmem:[%s5411 + $0x2a2] sm:$0xff]
    %v5657 = vld [vmem:[%s5411 + $0x2aa] sm:$0xff]
    %v5658 = vld [vmem:[%s5411 + $0x2ba] sm:$0xff]
    %v5659 = vld [vmem:[%s5411 + $0x2c2] sm:$0xff]
    %v5660 = vld [vmem:[%s5411 + $0x2d2] sm:$0xff]
    %v5661 = vld [vmem:[%s5411 + $0x2da] sm:$0xff]
    %v5662 = vld [vmem:[%s5411 + $0x2ea] sm:$0xff]
    %v5663 = vld [vmem:[%s5411 + $0x2f2] sm:$0xff]
    %v5664 = vld [vmem:[%s5411 + $0x302] sm:$0xff]
    %v5665 = vld [vmem:[%s5411 + $0x30a] sm:$0xff]
    %v5666 = vld [vmem:[%s5411 + $0x31a] sm:$0xff]
    %v5667 = vld [vmem:[%s5411 + $0x322] sm:$0xff]
    %v5668 = vpack.c.bf16 %v5605, %v5604
    %v5669 = vpack.c.bf16 %v5607, %v5606
    %v5670 = vpack.c.bf16 %v5609, %v5608
    %v5671 = vpack.c.bf16 %v5611, %v5610
    %v5672 = vpack.c.bf16 %v5613, %v5612
    %v5673 = vpack.c.bf16 %v5615, %v5614
    %v5674 = vpack.c.bf16 %v5617, %v5616
    %v5675 = vpack.c.bf16 %v5619, %v5618
    %v5676 = vpack.c.bf16 %v5621, %v5620
    %v5677 = vpack.c.bf16 %v5623, %v5622
    %v5678 = vpack.c.bf16 %v5625, %v5624
    %v5679 = vpack.c.bf16 %v5627, %v5626
    %v5680 = vpack.c.bf16 %v5629, %v5628
    %v5681 = vpack.c.bf16 %v5631, %v5630
    %v5682 = vpack.c.bf16 %v5633, %v5632
    %v5683 = vpack.c.bf16 %v5635, %v5634
    %v5684 = vpack.c.bf16 %v5637, %v5636
    %v5685 = vpack.c.bf16 %v5639, %v5638
    %v5686 = vpack.c.bf16 %v5641, %v5640
    %v5687 = vpack.c.bf16 %v5643, %v5642
    %v5688 = vpack.c.bf16 %v5645, %v5644
    %v5689 = vpack.c.bf16 %v5647, %v5646
    %v5690 = vpack.c.bf16 %v5649, %v5648
    %v5691 = vpack.c.bf16 %v5651, %v5650
    %v5692 = vpack.c.bf16 %v5653, %v5652
    %v5693 = vpack.c.bf16 %v5655, %v5654
    %v5694 = vpack.c.bf16 %v5657, %v5656
    %v5695 = vpack.c.bf16 %v5659, %v5658
    %v5696 = vpack.c.bf16 %v5661, %v5660
    %v5697 = vpack.c.bf16 %v5663, %v5662
    %v5698 = vpack.c.bf16 %v5665, %v5664
    %v5699 = vpack.c.bf16 %v5667, %v5666
    %v5700 = vld [vmem:[#allocation9] sm:$0xf]
    %v5701 = vld [vmem:[#allocation9 + $0x4] sm:$0xf]
    %v5702 = vld [vmem:[#allocation9 + $0x8] sm:$0xf]
    %v5703 = vld [vmem:[#allocation9 + $0xc] sm:$0xf]
    %v5704 = vld [vmem:[#allocation9 + $0x10] sm:$0xf]
    %v5705 = vld [vmem:[#allocation9 + $0x14] sm:$0xf]
    %v5706 = vld [vmem:[#allocation9 + $0x18] sm:$0xf]
    %v5707 = vld [vmem:[#allocation9 + $0x1c] sm:$0xf]
    %v5708 = vld [vmem:[#allocation9 + $0x20] sm:$0xf]
    %v5709 = vld [vmem:[#allocation9 + $0x24] sm:$0xf]
    %v5710 = vld [vmem:[#allocation9 + $0x28] sm:$0xf]
    %v5711 = vld [vmem:[#allocation9 + $0x2c] sm:$0xf]
    %v5712 = vld [vmem:[#allocation9 + $0x30] sm:$0xf]
    %v5713 = vld [vmem:[#allocation9 + $0x34] sm:$0xf]
    %v5714 = vld [vmem:[#allocation9 + $0x38] sm:$0xf]
    %v5715 = vld [vmem:[#allocation9 + $0x3c] sm:$0xf]
    %v5716 = vld [vmem:[#allocation9 + $0x40] sm:$0xf]
    %v5717 = vld [vmem:[#allocation9 + $0x44] sm:$0xf]
    %v5718 = vld [vmem:[#allocation9 + $0x48] sm:$0xf]
    %v5719 = vld [vmem:[#allocation9 + $0x4c] sm:$0xf]
    %v5720 = vld [vmem:[#allocation9 + $0x50] sm:$0xf]
    %v5721 = vld [vmem:[#allocation9 + $0x54] sm:$0xf]
    %v5722 = vld [vmem:[#allocation9 + $0x58] sm:$0xf]
    %v5723 = vld [vmem:[#allocation9 + $0x5c] sm:$0xf]
    %v5724 = vld [vmem:[#allocation9 + $0x60] sm:$0xf]
    %v5725 = vld [vmem:[#allocation9 + $0x64] sm:$0xf]
    %v5726 = vld [vmem:[#allocation9 + $0x68] sm:$0xf]
    %v5727 = vld [vmem:[#allocation9 + $0x6c] sm:$0xf]
    %v5728 = vld [vmem:[#allocation9 + $0x70] sm:$0xf]
    %v5729 = vld [vmem:[#allocation9 + $0x74] sm:$0xf]
    %v5730 = vld [vmem:[#allocation9 + $0x78] sm:$0xf]
    %v5731 = vld [vmem:[#allocation9 + $0x7c] sm:$0xf]
    %v5732 = vld [vmem:[#allocation9 + $0x80] sm:$0xf]
    %v5733 = vld [vmem:[#allocation9 + $0x84] sm:$0xf]
    %v5734 = vld [vmem:[#allocation9 + $0x88] sm:$0xf]
    %v5735 = vld [vmem:[#allocation9 + $0x8c] sm:$0xf]
    %v5736 = vld [vmem:[#allocation9 + $0x90] sm:$0xf]
    %v5737 = vld [vmem:[#allocation9 + $0x94] sm:$0xf]
    %v5738 = vld [vmem:[#allocation9 + $0x98] sm:$0xf]
    %v5739 = vld [vmem:[#allocation9 + $0x9c] sm:$0xf]
    %v5740 = vld [vmem:[#allocation9 + $0xa0] sm:$0xf]
    %v5741 = vld [vmem:[#allocation9 + $0xa4] sm:$0xf]
    %v5742 = vld [vmem:[#allocation9 + $0xa8] sm:$0xf]
    %v5743 = vld [vmem:[#allocation9 + $0xac] sm:$0xf]
    %v5744 = vld [vmem:[#allocation9 + $0xb0] sm:$0xf]
    %v5745 = vld [vmem:[#allocation9 + $0xb4] sm:$0xf]
    %v5746 = vld [vmem:[#allocation9 + $0xb8] sm:$0xf]
    %v5747 = vld [vmem:[#allocation9 + $0xbc] sm:$0xf]
    %v5748 = vld [vmem:[#allocation9 + $0xc0] sm:$0xf]
    %v5749 = vld [vmem:[#allocation9 + $0xc4] sm:$0xf]
    %v5750 = vld [vmem:[#allocation9 + $0xc8] sm:$0xf]
    %v5751 = vld [vmem:[#allocation9 + $0xcc] sm:$0xf]
    %v5752 = vld [vmem:[#allocation9 + $0xd0] sm:$0xf]
    %v5753 = vld [vmem:[#allocation9 + $0xd4] sm:$0xf]
    %v5754 = vld [vmem:[#allocation9 + $0xd8] sm:$0xf]
    %v5755 = vld [vmem:[#allocation9 + $0xdc] sm:$0xf]
    %v5756 = vld [vmem:[#allocation9 + $0xe0] sm:$0xf]
    %v5757 = vld [vmem:[#allocation9 + $0xe4] sm:$0xf]
    %v5758 = vld [vmem:[#allocation9 + $0xe8] sm:$0xf]
    %v5759 = vld [vmem:[#allocation9 + $0xec] sm:$0xf]
    %v5760 = vld [vmem:[#allocation9 + $0xf0] sm:$0xf]
    %v5761 = vld [vmem:[#allocation9 + $0xf4] sm:$0xf]
    %v5762 = vld [vmem:[#allocation9 + $0xf8] sm:$0xf]
    %v5763 = vld [vmem:[#allocation9 + $0xfc] sm:$0xf]
    %v5764 = vld [vmem:[#allocation9 + $0x100] sm:$0xf]
    %v5765 = vld [vmem:[#allocation9 + $0x104] sm:$0xf]
    %v5766 = vld [vmem:[#allocation9 + $0x108] sm:$0xf]
    %v5767 = vld [vmem:[#allocation9 + $0x10c] sm:$0xf]
    %v5768 = vld [vmem:[#allocation9 + $0x110] sm:$0xf]
    %v5769 = vld [vmem:[#allocation9 + $0x114] sm:$0xf]
    %v5770 = vld [vmem:[#allocation9 + $0x118] sm:$0xf]
    %v5771 = vld [vmem:[#allocation9 + $0x11c] sm:$0xf]
    %v5772 = vld [vmem:[#allocation9 + $0x120] sm:$0xf]
    %v5773 = vld [vmem:[#allocation9 + $0x124] sm:$0xf]
    %v5774 = vld [vmem:[#allocation9 + $0x128] sm:$0xf]
    %v5775 = vld [vmem:[#allocation9 + $0x12c] sm:$0xf]
    %v5776 = vld [vmem:[#allocation9 + $0x130] sm:$0xf]
    %v5777 = vld [vmem:[#allocation9 + $0x134] sm:$0xf]
    %v5778 = vld [vmem:[#allocation9 + $0x138] sm:$0xf]
    %v5779 = vld [vmem:[#allocation9 + $0x13c] sm:$0xf]
    %v5780 = vld [vmem:[#allocation9 + $0x140] sm:$0xf]
    %v5781 = vld [vmem:[#allocation9 + $0x144] sm:$0xf]
    %v5782 = vld [vmem:[#allocation9 + $0x148] sm:$0xf]
    %v5783 = vld [vmem:[#allocation9 + $0x14c] sm:$0xf]
    %v5784 = vld [vmem:[#allocation9 + $0x150] sm:$0xf]
    %v5785 = vld [vmem:[#allocation9 + $0x154] sm:$0xf]
    %v5786 = vld [vmem:[#allocation9 + $0x158] sm:$0xf]
    %v5787 = vld [vmem:[#allocation9 + $0x15c] sm:$0xf]
    %v5788 = vld [vmem:[#allocation9 + $0x160] sm:$0xf]
    %v5789 = vld [vmem:[#allocation9 + $0x164] sm:$0xf]
    %v5790 = vld [vmem:[#allocation9 + $0x168] sm:$0xf]
    %v5791 = vld [vmem:[#allocation9 + $0x16c] sm:$0xf]
    %v5792 = vld [vmem:[#allocation9 + $0x170] sm:$0xf]
    %v5793 = vld [vmem:[#allocation9 + $0x174] sm:$0xf]
    %v5794 = vld [vmem:[#allocation9 + $0x178] sm:$0xf]
    %v5795 = vld [vmem:[#allocation9 + $0x17c] sm:$0xf]
    %v5796 = vld [vmem:[#allocation9 + $0x180] sm:$0xf]
    %v5797 = vld [vmem:[#allocation9 + $0x184] sm:$0xf]
    %v5798 = vld [vmem:[#allocation9 + $0x188] sm:$0xf]
    %v5799 = vld [vmem:[#allocation9 + $0x18c] sm:$0xf]
    %v5800 = vld [vmem:[#allocation9 + $0x190] sm:$0xf]
    %v5801 = vld [vmem:[#allocation9 + $0x194] sm:$0xf]
    %v5802 = vld [vmem:[#allocation9 + $0x198] sm:$0xf]
    %v5803 = vld [vmem:[#allocation9 + $0x19c] sm:$0xf]
    %v5804 = vld [vmem:[#allocation9 + $0x1a0] sm:$0xf]
    %v5805 = vld [vmem:[#allocation9 + $0x1a4] sm:$0xf]
    %v5806 = vld [vmem:[#allocation9 + $0x1a8] sm:$0xf]
    %v5807 = vld [vmem:[#allocation9 + $0x1ac] sm:$0xf]
    %v5808 = vld [vmem:[#allocation9 + $0x1b0] sm:$0xf]
    %v5809 = vld [vmem:[#allocation9 + $0x1b4] sm:$0xf]
    %v5810 = vld [vmem:[#allocation9 + $0x1b8] sm:$0xf]
    %v5811 = vld [vmem:[#allocation9 + $0x1bc] sm:$0xf]
    %v5812 = vld [vmem:[#allocation9 + $0x1c0] sm:$0xf]
    %v5813 = vld [vmem:[#allocation9 + $0x1c4] sm:$0xf]
    %v5814 = vld [vmem:[#allocation9 + $0x1c8] sm:$0xf]
    %v5815 = vld [vmem:[#allocation9 + $0x1cc] sm:$0xf]
    %v5816 = vld [vmem:[#allocation9 + $0x1d0] sm:$0xf]
    %v5817 = vld [vmem:[#allocation9 + $0x1d4] sm:$0xf]
    %v5818 = vld [vmem:[#allocation9 + $0x1d8] sm:$0xf]
    %v5819 = vld [vmem:[#allocation9 + $0x1dc] sm:$0xf]
    %v5820 = vld [vmem:[#allocation9 + $0x1e0] sm:$0xf]
    %v5821 = vld [vmem:[#allocation9 + $0x1e4] sm:$0xf]
    %v5822 = vld [vmem:[#allocation9 + $0x1e8] sm:$0xf]
    %v5823 = vld [vmem:[#allocation9 + $0x1ec] sm:$0xf]
    %v5824 = vld [vmem:[#allocation9 + $0x1f0] sm:$0xf]
    %v5825 = vld [vmem:[#allocation9 + $0x1f4] sm:$0xf]
    %v5826 = vld [vmem:[#allocation9 + $0x1f8] sm:$0xf]
    %v5827 = vld [vmem:[#allocation9 + $0x1fc] sm:$0xf]
    %v5828 = vld [vmem:[#allocation9 + $0x200] sm:$0xf]
    %v5829 = vld [vmem:[#allocation9 + $0x204] sm:$0xf]
    %v5830 = vld [vmem:[#allocation9 + $0x208] sm:$0xf]
    %v5831 = vld [vmem:[#allocation9 + $0x20c] sm:$0xf]
    %v5832 = vld [vmem:[#allocation9 + $0x210] sm:$0xf]
    %v5833 = vld [vmem:[#allocation9 + $0x214] sm:$0xf]
    %v5834 = vld [vmem:[#allocation9 + $0x218] sm:$0xf]
    %v5835 = vld [vmem:[#allocation9 + $0x21c] sm:$0xf]
    %v5836 = vld [vmem:[#allocation9 + $0x220] sm:$0xf]
    %v5837 = vld [vmem:[#allocation9 + $0x224] sm:$0xf]
    %v5838 = vld [vmem:[#allocation9 + $0x228] sm:$0xf]
    %v5839 = vld [vmem:[#allocation9 + $0x22c] sm:$0xf]
    %v5840 = vld [vmem:[#allocation9 + $0x230] sm:$0xf]
    %v5841 = vld [vmem:[#allocation9 + $0x234] sm:$0xf]
    %v5842 = vld [vmem:[#allocation9 + $0x238] sm:$0xf]
    %v5843 = vld [vmem:[#allocation9 + $0x23c] sm:$0xf]
    %v5988 = vunpack.c.l.b16 %v5700
    %v5989 = vunpack.c.l.b16 %v5701
    %v5990 = vunpack.c.l.b16 %v5702
    %v5991 = vunpack.c.l.b16 %v5703
    %v5992 = vunpack.c.l.b16 %v5704
    %v5993 = vunpack.c.l.b16 %v5705
    %v5994 = vunpack.c.l.b16 %v5706
    %v5995 = vunpack.c.l.b16 %v5707
    %v5996 = vunpack.c.l.b16 %v5708
    %v5997 = vunpack.c.l.b16 %v5709
    %v5998 = vunpack.c.l.b16 %v5710
    %v5999 = vunpack.c.l.b16 %v5711
    %v6000 = vunpack.c.l.b16 %v5712
    %v6001 = vunpack.c.l.b16 %v5713
    %v6002 = vunpack.c.l.b16 %v5714
    %v6003 = vunpack.c.l.b16 %v5715
    %v6004 = vunpack.c.l.b16 %v5716
    %v6005 = vunpack.c.l.b16 %v5717
    %v6006 = vunpack.c.l.b16 %v5718
    %v6007 = vunpack.c.l.b16 %v5719
    %v6008 = vunpack.c.l.b16 %v5720
    %v6009 = vunpack.c.l.b16 %v5721
    %v6010 = vunpack.c.l.b16 %v5722
    %v6011 = vunpack.c.l.b16 %v5723
    %v6012 = vunpack.c.l.b16 %v5724
    %v6013 = vunpack.c.l.b16 %v5725
    %v6014 = vunpack.c.l.b16 %v5726
    %v6015 = vunpack.c.l.b16 %v5727
    %v6016 = vunpack.c.l.b16 %v5728
    %v6017 = vunpack.c.l.b16 %v5729
    %v6018 = vunpack.c.l.b16 %v5730
    %v6019 = vunpack.c.l.b16 %v5731
    %v6020 = vunpack.c.l.b16 %v5732
    %v6021 = vunpack.c.l.b16 %v5733
    %v6022 = vunpack.c.l.b16 %v5734
    %v6023 = vunpack.c.l.b16 %v5735
    %v6024 = vunpack.c.l.b16 %v5736
    %v6025 = vunpack.c.l.b16 %v5737
    %v6026 = vunpack.c.l.b16 %v5738
    %v6027 = vunpack.c.l.b16 %v5739
    %v6028 = vunpack.c.l.b16 %v5740
    %v6029 = vunpack.c.l.b16 %v5741
    %v6030 = vunpack.c.l.b16 %v5742
    %v6031 = vunpack.c.l.b16 %v5743
    %v6032 = vunpack.c.l.b16 %v5744
    %v6033 = vunpack.c.l.b16 %v5745
    %v6034 = vunpack.c.l.b16 %v5746
    %v6035 = vunpack.c.l.b16 %v5747
    %v6036 = vunpack.c.l.b16 %v5748
    %v6037 = vunpack.c.l.b16 %v5749
    %v6038 = vunpack.c.l.b16 %v5750
    %v6039 = vunpack.c.l.b16 %v5751
    %v6040 = vunpack.c.l.b16 %v5752
    %v6041 = vunpack.c.l.b16 %v5753
    %v6042 = vunpack.c.l.b16 %v5754
    %v6043 = vunpack.c.l.b16 %v5755
    %v6044 = vunpack.c.l.b16 %v5756
    %v6045 = vunpack.c.l.b16 %v5757
    %v6046 = vunpack.c.l.b16 %v5758
    %v6047 = vunpack.c.l.b16 %v5759
    %v6048 = vunpack.c.l.b16 %v5760
    %v6049 = vunpack.c.l.b16 %v5761
    %v6050 = vunpack.c.l.b16 %v5762
    %v6051 = vunpack.c.l.b16 %v5763
    %v6052 = vunpack.c.l.b16 %v5764
    %v6053 = vunpack.c.l.b16 %v5765
    %v6054 = vunpack.c.l.b16 %v5766
    %v6055 = vunpack.c.l.b16 %v5767
    %v6056 = vunpack.c.l.b16 %v5768
    %v6057 = vunpack.c.l.b16 %v5769
    %v6058 = vunpack.c.l.b16 %v5770
    %v6059 = vunpack.c.l.b16 %v5771
    %v6060 = vunpack.c.l.b16 %v5772
    %v6061 = vunpack.c.l.b16 %v5773
    %v6062 = vunpack.c.l.b16 %v5774
    %v6063 = vunpack.c.l.b16 %v5775
    %v6064 = vunpack.c.l.b16 %v5776
    %v6065 = vunpack.c.l.b16 %v5777
    %v6066 = vunpack.c.l.b16 %v5778
    %v6067 = vunpack.c.l.b16 %v5779
    %v6068 = vunpack.c.l.b16 %v5780
    %v6069 = vunpack.c.l.b16 %v5781
    %v6070 = vunpack.c.l.b16 %v5782
    %v6071 = vunpack.c.l.b16 %v5783
    %v6072 = vunpack.c.l.b16 %v5784
    %v6073 = vunpack.c.l.b16 %v5785
    %v6074 = vunpack.c.l.b16 %v5786
    %v6075 = vunpack.c.l.b16 %v5787
    %v6076 = vunpack.c.l.b16 %v5788
    %v6077 = vunpack.c.l.b16 %v5789
    %v6078 = vunpack.c.l.b16 %v5790
    %v6079 = vunpack.c.l.b16 %v5791
    %v6080 = vunpack.c.l.b16 %v5792
    %v6081 = vunpack.c.l.b16 %v5793
    %v6082 = vunpack.c.l.b16 %v5794
    %v6083 = vunpack.c.l.b16 %v5795
    %v6084 = vunpack.c.l.b16 %v5796
    %v6085 = vunpack.c.l.b16 %v5797
    %v6086 = vunpack.c.l.b16 %v5798
    %v6087 = vunpack.c.l.b16 %v5799
    %v6088 = vunpack.c.l.b16 %v5800
    %v6089 = vunpack.c.l.b16 %v5801
    %v6090 = vunpack.c.l.b16 %v5802
    %v6091 = vunpack.c.l.b16 %v5803
    %v6092 = vunpack.c.l.b16 %v5804
    %v6093 = vunpack.c.l.b16 %v5805
    %v6094 = vunpack.c.l.b16 %v5806
    %v6095 = vunpack.c.l.b16 %v5807
    %v6096 = vunpack.c.l.b16 %v5808
    %v6097 = vunpack.c.l.b16 %v5809
    %v6098 = vunpack.c.l.b16 %v5810
    %v6099 = vunpack.c.l.b16 %v5811
    %v6100 = vunpack.c.l.b16 %v5812
    %v6101 = vunpack.c.l.b16 %v5813
    %v6102 = vunpack.c.l.b16 %v5814
    %v6103 = vunpack.c.l.b16 %v5815
    %v6104 = vunpack.c.l.b16 %v5816
    %v6105 = vunpack.c.l.b16 %v5817
    %v6106 = vunpack.c.l.b16 %v5818
    %v6107 = vunpack.c.l.b16 %v5819
    %v6108 = vunpack.c.l.b16 %v5820
    %v6109 = vunpack.c.l.b16 %v5821
    %v6110 = vunpack.c.l.b16 %v5822
    %v6111 = vunpack.c.l.b16 %v5823
    %v6112 = vunpack.c.l.b16 %v5824
    %v6113 = vunpack.c.l.b16 %v5825
    %v6114 = vunpack.c.l.b16 %v5826
    %v6115 = vunpack.c.l.b16 %v5827
    %v6116 = vunpack.c.l.b16 %v5828
    %v6117 = vunpack.c.l.b16 %v5829
    %v6118 = vunpack.c.l.b16 %v5830
    %v6119 = vunpack.c.l.b16 %v5831
    %v6120 = vunpack.c.l.b16 %v5832
    %v6121 = vunpack.c.l.b16 %v5833
    %v6122 = vunpack.c.l.b16 %v5834
    %v6123 = vunpack.c.l.b16 %v5835
    %v6124 = vunpack.c.l.b16 %v5836
    %v6125 = vunpack.c.l.b16 %v5837
    %v6126 = vunpack.c.l.b16 %v5838
    %v6127 = vunpack.c.l.b16 %v5839
    %v6128 = vunpack.c.l.b16 %v5840
    %v6129 = vunpack.c.l.b16 %v5841
    %v6130 = vunpack.c.l.b16 %v5842
    %v6131 = vunpack.c.l.b16 %v5843
    %v6132 = vpack.c.b16 %v5989, %v5988
    %v6133 = vpack.c.b16 %v5991, %v5990
    %v6134 = vpack.c.b16 %v5993, %v5992
    %v6135 = vpack.c.b16 %v5995, %v5994
    %v6136 = vpack.c.b16 %v5997, %v5996
    %v6137 = vpack.c.b16 %v5999, %v5998
    %v6138 = vpack.c.b16 %v6001, %v6000
    %v6139 = vpack.c.b16 %v6003, %v6002
    %v6140 = vpack.c.b16 %v6005, %v6004
    %v6141 = vpack.c.b16 %v6007, %v6006
    %v6142 = vpack.c.b16 %v6009, %v6008
    %v6143 = vpack.c.b16 %v6011, %v6010
    %v6144 = vpack.c.b16 %v6013, %v6012
    %v6145 = vpack.c.b16 %v6015, %v6014
    %v6146 = vpack.c.b16 %v6017, %v6016
    %v6147 = vpack.c.b16 %v6019, %v6018
    %v6148 = vpack.c.b16 %v6021, %v6020
    %v6149 = vpack.c.b16 %v6023, %v6022
    %v6150 = vpack.c.b16 %v6025, %v6024
    %v6151 = vpack.c.b16 %v6027, %v6026
    %v6152 = vpack.c.b16 %v6029, %v6028
    %v6153 = vpack.c.b16 %v6031, %v6030
    %v6154 = vpack.c.b16 %v6033, %v6032
    %v6155 = vpack.c.b16 %v6035, %v6034
    %v6156 = vpack.c.b16 %v6037, %v6036
    %v6157 = vpack.c.b16 %v6039, %v6038
    %v6158 = vpack.c.b16 %v6041, %v6040
    %v6159 = vpack.c.b16 %v6043, %v6042
    %v6160 = vpack.c.b16 %v6045, %v6044
    %v6161 = vpack.c.b16 %v6047, %v6046
    %v6162 = vpack.c.b16 %v6049, %v6048
    %v6163 = vpack.c.b16 %v6051, %v6050
    %v6164 = vpack.c.b16 %v6053, %v6052
    %v6165 = vpack.c.b16 %v6055, %v6054
    %v6166 = vpack.c.b16 %v6057, %v6056
    %v6167 = vpack.c.b16 %v6059, %v6058
    %v6168 = vpack.c.b16 %v6061, %v6060
    %v6169 = vpack.c.b16 %v6063, %v6062
    %v6170 = vpack.c.b16 %v6065, %v6064
    %v6171 = vpack.c.b16 %v6067, %v6066
    %v6172 = vpack.c.b16 %v6069, %v6068
    %v6173 = vpack.c.b16 %v6071, %v6070
    %v6174 = vpack.c.b16 %v6073, %v6072
    %v6175 = vpack.c.b16 %v6075, %v6074
    %v6176 = vpack.c.b16 %v6077, %v6076
    %v6177 = vpack.c.b16 %v6079, %v6078
    %v6178 = vpack.c.b16 %v6081, %v6080
    %v6179 = vpack.c.b16 %v6083, %v6082
    %v6180 = vpack.c.b16 %v6085, %v6084
    %v6181 = vpack.c.b16 %v6087, %v6086
    %v6182 = vpack.c.b16 %v6089, %v6088
    %v6183 = vpack.c.b16 %v6091, %v6090
    %v6184 = vpack.c.b16 %v6093, %v6092
    %v6185 = vpack.c.b16 %v6095, %v6094
    %v6186 = vpack.c.b16 %v6097, %v6096
    %v6187 = vpack.c.b16 %v6099, %v6098
    %v6188 = vpack.c.b16 %v6101, %v6100
    %v6189 = vpack.c.b16 %v6103, %v6102
    %v6190 = vpack.c.b16 %v6105, %v6104
    %v6191 = vpack.c.b16 %v6107, %v6106
    %v6192 = vpack.c.b16 %v6109, %v6108
    %v6193 = vpack.c.b16 %v6111, %v6110
    %v6194 = vpack.c.b16 %v6113, %v6112
    %v6195 = vpack.c.b16 %v6115, %v6114
    %v6196 = vpack.c.b16 %v6117, %v6116
    %v6197 = vpack.c.b16 %v6119, %v6118
    %v6198 = vpack.c.b16 %v6121, %v6120
    %v6199 = vpack.c.b16 %v6123, %v6122
    %v6200 = vpack.c.b16 %v6125, %v6124
    %v6201 = vpack.c.b16 %v6127, %v6126
    %v6202 = vpack.c.b16 %v6129, %v6128
    %v6203 = vpack.c.b16 %v6131, %v6130
    %6276 = vmatprep.subr.bf16.mxu0 0
    %6277 = vmatpush1.bf16.msra.mxu0 %v6132
    %6278 = vmatprep.subr.bf16.mxu0 0
    %6279 = vmatpush1.bf16.msra.mxu0 %v6133
    %6280 = vmatprep.subr.bf16.mxu0 0
    %6281 = vmatpush1.bf16.msra.mxu0 %v6134
    %6282 = vmatprep.subr.bf16.mxu0 0
    %6283 = vmatpush1.bf16.msra.mxu0 %v6135
    %6284 = vmatprep.subr.bf16.mxu0 0
    %6285 = vmatpush1.bf16.msra.mxu0 %v6136
    %6286 = vmatprep.subr.bf16.mxu0 0
    %6287 = vmatpush1.bf16.msra.mxu0 %v6137
    %6288 = vmatprep.subr.bf16.mxu0 0
    %6289 = vmatpush1.bf16.msra.mxu0 %v6138
    %6290 = vmatprep.subr.bf16.mxu0 0
    %6291 = vmatpush1.bf16.msra.mxu0 %v6139
    %6292 = vmatprep.subr.bf16.mxu0 0
    %6293 = vmatpush1.bf16.msra.mxu0 %v6140
    %6294 = vmatprep.subr.bf16.mxu0 0
    %6295 = vmatpush1.bf16.msra.mxu0 %v6141
    %6296 = vmatprep.subr.bf16.mxu0 0
    %6297 = vmatpush1.bf16.msra.mxu0 %v6142
    %6298 = vmatprep.subr.bf16.mxu0 0
    %6299 = vmatpush1.bf16.msra.mxu0 %v6143
    %6300 = vmatprep.subr.bf16.mxu0 0
    %6301 = vmatpush1.bf16.msra.mxu0 %v6144
    %6302 = vmatprep.subr.bf16.mxu0 0
    %6303 = vmatpush1.bf16.msra.mxu0 %v6145
    %6304 = vmatprep.subr.bf16.mxu0 0
    %6305 = vmatpush1.bf16.msra.mxu0 %v6146
    %6306 = vmatprep.subr.bf16.mxu0 0
    %6307 = vmatpush1.bf16.msra.mxu0 %v6147
    %6308 = vmatprep.mubr.bf16.mxu0 %v4995
    %6309 = vmatmul.mubr.bf16.gmra.mrb[0].mxu0 %v4899
    %v6310 = vpop.f32.mrb[0].mxu0
    %v6311 = vadd.f32 0.0, %v6310
    %v6312 = vpop.f32.mrb[0].mxu0
    %v6313 = vpop.f32.mrb[0].mxu0
    %v6314 = vadd.f32 0.0, %v6313
    %v6315 = vpop.f32.mrb[0].mxu0
    %6316 = vmatprep.mubr.bf16.mxu0 %v4996
    %6317 = vmatmul.mubr.bf16.gmra.mrb[0].mxu0 %v4900
    %v6318 = vpop.f32.mrb[0].mxu0
    %v6319 = vadd.f32 0.0, %v6318
    %v6320 = vpop.f32.mrb[0].mxu0
    %v6321 = vpop.f32.mrb[0].mxu0
    %v6322 = vadd.f32 0.0, %v6321
    %v6323 = vpop.f32.mrb[0].mxu0
    %6324 = vmatprep.mubr.bf16.mxu0 %v4997
    %6325 = vmatmul.mubr.bf16.gmra.mrb[0].mxu0 %v4901
    %v6326 = vpop.f32.mrb[0].mxu0
    %v6327 = vadd.f32 0.0, %v6326
    %v6328 = vpop.f32.mrb[0].mxu0
    %v6329 = vpop.f32.mrb[0].mxu0
    %v6330 = vadd.f32 0.0, %v6329
    %v6331 = vpop.f32.mrb[0].mxu0
    %6332 = vmatprep.mubr.bf16.mxu0 %v4998
    %6333 = vmatmul.mubr.bf16.gmra.mrb[0].mxu0 %v4902
    %v6334 = vpop.f32.mrb[0].mxu0
    %v6335 = vadd.f32 0.0, %v6334
    %v6336 = vpop.f32.mrb[0].mxu0
    %v6337 = vpop.f32.mrb[0].mxu0
    %v6338 = vadd.f32 0.0, %v6337
    %v6339 = vpop.f32.mrb[0].mxu0
    %6340 = vmatprep.mubr.bf16.mxu0 %v4999
    %6341 = vmatmul.mubr.bf16.gmra.mrb[0].mxu0 %v4903
    %v6342 = vpop.f32.mrb[0].mxu0
    %v6343 = vadd.f32 0.0, %v6342
    %v6344 = vpop.f32.mrb[0].mxu0
    %v6345 = vpop.f32.mrb[0].mxu0
    %v6346 = vadd.f32 0.0, %v6345
    %v6347 = vpop.f32.mrb[0].mxu0
    %6348 = vmatprep.mubr.bf16.mxu0 %v5000
    %6349 = vmatmul.mubr.bf16.gmra.mrb[0].mxu0 %v4904
    %v6350 = vpop.f32.mrb[0].mxu0
    %v6351 = vadd.f32 0.0, %v6350
    %v6352 = vpop.f32.mrb[0].mxu0
    %v6353 = vpop.f32.mrb[0].mxu0
    %v6354 = vadd.f32 0.0, %v6353
    %v6355 = vpop.f32.mrb[0].mxu0
    %6356 = vmatprep.mubr.bf16.mxu0 %v5001
    %6357 = vmatmul.mubr.bf16.gmra.mrb[0].mxu0 %v4905
    %v6358 = vpop.f32.mrb[0].mxu0
    %v6359 = vadd.f32 0.0, %v6358
    %v6360 = vpop.f32.mrb[0].mxu0
    %v6361 = vpop.f32.mrb[0].mxu0
    %v6362 = vadd.f32 0.0, %v6361
    %v6363 = vpop.f32.mrb[0].mxu0
    %6364 = vmatprep.mubr.bf16.mxu0 %v5002
    %6365 = vmatmul.mubr.bf16.gmra.mrb[0].mxu0 %v4906
    %v6366 = vpop.f32.mrb[0].mxu0
    %v6367 = vadd.f32 0.0, %v6366
    %v6368 = vpop.f32.mrb[0].mxu0
    %v6369 = vpop.f32.mrb[0].mxu0
    %v6370 = vadd.f32 0.0, %v6369
    %v6371 = vpop.f32.mrb[0].mxu0
    %6372 = vmatprep.mubr.bf16.mxu0 %v5003
    %6373 = vmatmul.mubr.bf16.gmra.mrb[0].mxu0 %v4907
    %v6374 = vpop.f32.mrb[0].mxu0
    %v6375 = vadd.f32 0.0, %v6374
    %v6376 = vpop.f32.mrb[0].mxu0
    %v6377 = vpop.f32.mrb[0].mxu0
    %v6378 = vadd.f32 0.0, %v6377
    %v6379 = vpop.f32.mrb[0].mxu0
    %6380 = vmatprep.mubr.bf16.mxu0 %v5004
    %6381 = vmatmul.mubr.bf16.gmra.mrb[0].mxu0 %v4908
    %v6382 = vpop.f32.mrb[0].mxu0
    %v6383 = vadd.f32 0.0, %v6382
    %v6384 = vpop.f32.mrb[0].mxu0
    %v6385 = vpop.f32.mrb[0].mxu0
    %v6386 = vadd.f32 0.0, %v6385
    %v6387 = vpop.f32.mrb[0].mxu0
    %6388 = vmatprep.mubr.bf16.mxu0 %v5005
    %6389 = vmatmul.mubr.bf16.gmra.mrb[0].mxu0 %v4909
    %v6390 = vpop.f32.mrb[0].mxu0
    %v6391 = vadd.f32 0.0, %v6390
    %v6392 = vpop.f32.mrb[0].mxu0
    %v6393 = vpop.f32.mrb[0].mxu0
    %v6394 = vadd.f32 0.0, %v6393
    %v6395 = vpop.f32.mrb[0].mxu0
    %6396 = vmatprep.mubr.bf16.mxu0 %v5006
    %6397 = vmatmul.mubr.bf16.gmra.mrb[0].mxu0 %v4910
    %v6398 = vpop.f32.mrb[0].mxu0
    %v6399 = vadd.f32 0.0, %v6398
    %v6400 = vpop.f32.mrb[0].mxu0
    %v6401 = vpop.f32.mrb[0].mxu0
    %v6402 = vadd.f32 0.0, %v6401
    %v6403 = vpop.f32.mrb[0].mxu0
    %6404 = vmatprep.mubr.bf16.mxu0 %v5007
    %6405 = vmatmul.mubr.bf16.gmra.mrb[0].mxu0 %v4911
    %v6406 = vpop.f32.mrb[0].mxu0
    %v6407 = vadd.f32 0.0, %v6406
    %v6408 = vpop.f32.mrb[0].mxu0
    %v6409 = vpop.f32.mrb[0].mxu0
    %v6410 = vadd.f32 0.0, %v6409
    %v6411 = vpop.f32.mrb[0].mxu0
    %6412 = vmatprep.mubr.bf16.mxu0 %v5008
    %6413 = vmatmul.mubr.bf16.gmra.mrb[0].mxu0 %v4912
    %v6414 = vpop.f32.mrb[0].mxu0
    %v6415 = vadd.f32 0.0, %v6414
    %v6416 = vpop.f32.mrb[0].mxu0
    %v6417 = vpop.f32.mrb[0].mxu0
    %v6418 = vadd.f32 0.0, %v6417
    %v6419 = vpop.f32.mrb[0].mxu0
    %6420 = vmatprep.mubr.bf16.mxu0 %v5009
    %6421 = vmatmul.mubr.bf16.gmra.mrb[0].mxu0 %v4913
    %v6422 = vpop.f32.mrb[0].mxu0
    %v6423 = vadd.f32 0.0, %v6422
    %v6424 = vpop.f32.mrb[0].mxu0
    %v6425 = vpop.f32.mrb[0].mxu0
    %v6426 = vadd.f32 0.0, %v6425
    %v6427 = vpop.f32.mrb[0].mxu0
    %6428 = vmatprep.mubr.bf16.mxu0 %v5010
    %6429 = vmatmul.mubr.bf16.gmra.mrb[0].mxu0 %v4914
    %v6430 = vpop.f32.mrb[0].mxu0
    %v6431 = vadd.f32 0.0, %v6430
    %v6432 = vpop.f32.mrb[0].mxu0
    %v6433 = vpop.f32.mrb[0].mxu0
    %v6434 = vadd.f32 0.0, %v6433
    %v6435 = vpop.f32.mrb[0].mxu0
    %6436 = vmatprep.mubr.bf16.mxu0 %v5011
    %6437 = vmatmul.mubr.bf16.gmra.mrb[0].mxu0 %v4915
    %v6438 = vpop.f32.mrb[0].mxu0
    %v6439 = vadd.f32 0.0, %v6438
    %v6440 = vpop.f32.mrb[0].mxu0
    %v6441 = vpop.f32.mrb[0].mxu0
    %v6442 = vadd.f32 0.0, %v6441
    %v6443 = vpop.f32.mrb[0].mxu0
    %6444 = vmatprep.mubr.bf16.mxu0 %v5012
    %6445 = vmatmul.mubr.bf16.gmra.mrb[0].mxu0 %v4916
    %v6446 = vpop.f32.mrb[0].mxu0
    %v6447 = vadd.f32 0.0, %v6446
    %v6448 = vpop.f32.mrb[0].mxu0
    %v6449 = vpop.f32.mrb[0].mxu0
    %v6450 = vadd.f32 0.0, %v6449
    %v6451 = vpop.f32.mrb[0].mxu0
    %6452 = vmatprep.mubr.bf16.mxu0 %v5013
    %6453 = vmatmul.mubr.bf16.gmra.mrb[0].mxu0 %v4917
    %v6454 = vpop.f32.mrb[0].mxu0
    %v6455 = vadd.f32 0.0, %v6454
    %v6456 = vpop.f32.mrb[0].mxu0
    %v6457 = vpop.f32.mrb[0].mxu0
    %v6458 = vadd.f32 0.0, %v6457
    %v6459 = vpop.f32.mrb[0].mxu0
    %6460 = vmatprep.mubr.bf16.mxu0 %v5014
    %6461 = vmatmul.mubr.bf16.gmra.mrb[0].mxu0 %v4918
    %v6462 = vpop.f32.mrb[0].mxu0
    %v6463 = vadd.f32 0.0, %v6462
    %v6464 = vpop.f32.mrb[0].mxu0
    %v6465 = vpop.f32.mrb[0].mxu0
    %v6466 = vadd.f32 0.0, %v6465
    %v6467 = vpop.f32.mrb[0].mxu0
    %6468 = vmatprep.mubr.bf16.mxu0 %v5015
    %6469 = vmatmul.mubr.bf16.gmra.mrb[0].mxu0 %v4919
    %v6470 = vpop.f32.mrb[0].mxu0
    %v6471 = vadd.f32 0.0, %v6470
    %v6472 = vpop.f32.mrb[0].mxu0
    %v6473 = vpop.f32.mrb[0].mxu0
    %v6474 = vadd.f32 0.0, %v6473
    %v6475 = vpop.f32.mrb[0].mxu0
    %6476 = vmatprep.mubr.bf16.mxu0 %v5016
    %6477 = vmatmul.mubr.bf16.gmra.mrb[0].mxu0 %v4920
    %v6478 = vpop.f32.mrb[0].mxu0
    %v6479 = vadd.f32 0.0, %v6478
    %v6480 = vpop.f32.mrb[0].mxu0
    %v6481 = vpop.f32.mrb[0].mxu0
    %v6482 = vadd.f32 0.0, %v6481
    %v6483 = vpop.f32.mrb[0].mxu0
    %6484 = vmatprep.mubr.bf16.mxu0 %v5017
    %6485 = vmatmul.mubr.bf16.gmra.mrb[0].mxu0 %v4921
    %v6486 = vpop.f32.mrb[0].mxu0
    %v6487 = vadd.f32 0.0, %v6486
    %v6488 = vpop.f32.mrb[0].mxu0
    %v6489 = vpop.f32.mrb[0].mxu0
    %v6490 = vadd.f32 0.0, %v6489
    %v6491 = vpop.f32.mrb[0].mxu0
    %6492 = vmatprep.mubr.bf16.mxu0 %v5018
    %6493 = vmatmul.mubr.bf16.gmra.mrb[0].mxu0 %v4922
    %v6494 = vpop.f32.mrb[0].mxu0
    %v6495 = vadd.f32 0.0, %v6494
    %v6496 = vpop.f32.mrb[0].mxu0
    %v6497 = vpop.f32.mrb[0].mxu0
    %v6498 = vadd.f32 0.0, %v6497
    %v6499 = vpop.f32.mrb[0].mxu0
    %6500 = vmatprep.mubr.bf16.mxu0 %v5019
    %6501 = vmatmul.mubr.bf16.gmra.mrb[0].mxu0 %v4923
    %v6502 = vpop.f32.mrb[0].mxu0
    %v6503 = vadd.f32 0.0, %v6502
    %v6504 = vpop.f32.mrb[0].mxu0
    %v6505 = vpop.f32.mrb[0].mxu0
    %v6506 = vadd.f32 0.0, %v6505
    %v6507 = vpop.f32.mrb[0].mxu0
    %6508 = vmatprep.mubr.bf16.mxu0 %v5020
    %6509 = vmatmul.mubr.bf16.gmra.mrb[0].mxu0 %v4924
    %v6510 = vpop.f32.mrb[0].mxu0
    %v6511 = vadd.f32 0.0, %v6510
    %v6512 = vpop.f32.mrb[0].mxu0
    %v6513 = vpop.f32.mrb[0].mxu0
    %v6514 = vadd.f32 0.0, %v6513
    %v6515 = vpop.f32.mrb[0].mxu0
    %6516 = vmatprep.mubr.bf16.mxu0 %v5021
    %6517 = vmatmul.mubr.bf16.gmra.mrb[0].mxu0 %v4925
    %v6518 = vpop.f32.mrb[0].mxu0
    %v6519 = vadd.f32 0.0, %v6518
    %v6520 = vpop.f32.mrb[0].mxu0
    %v6521 = vpop.f32.mrb[0].mxu0
    %v6522 = vadd.f32 0.0, %v6521
    %v6523 = vpop.f32.mrb[0].mxu0
    %6524 = vmatprep.mubr.bf16.mxu0 %v5022
    %6525 = vmatmul.mubr.bf16.gmra.mrb[0].mxu0 %v4926
    %v6526 = vpop.f32.mrb[0].mxu0
    %v6527 = vadd.f32 0.0, %v6526
    %v6528 = vpop.f32.mrb[0].mxu0
    %v6529 = vpop.f32.mrb[0].mxu0
    %v6530 = vadd.f32 0.0, %v6529
    %v6531 = vpop.f32.mrb[0].mxu0
    %6532 = vmatprep.mubr.bf16.mxu0 %v5023
    %6533 = vmatmul.mubr.bf16.gmra.mrb[0].mxu0 %v4927
    %v6534 = vpop.f32.mrb[0].mxu0
    %v6535 = vadd.f32 0.0, %v6534
    %v6536 = vpop.f32.mrb[0].mxu0
    %v6537 = vpop.f32.mrb[0].mxu0
    %v6538 = vadd.f32 0.0, %v6537
    %v6539 = vpop.f32.mrb[0].mxu0
    %6540 = vmatprep.mubr.bf16.mxu0 %v5024
    %6541 = vmatmul.mubr.bf16.gmra.mrb[0].mxu0 %v4928
    %v6542 = vpop.f32.mrb[0].mxu0
    %v6543 = vadd.f32 0.0, %v6542
    %v6544 = vpop.f32.mrb[0].mxu0
    %v6545 = vpop.f32.mrb[0].mxu0
    %v6546 = vadd.f32 0.0, %v6545
    %v6547 = vpop.f32.mrb[0].mxu0
    %6548 = vmatprep.mubr.bf16.mxu0 %v5025
    %6549 = vmatmul.mubr.bf16.gmra.mrb[0].mxu0 %v4929
    %v6550 = vpop.f32.mrb[0].mxu0
    %v6551 = vadd.f32 0.0, %v6550
    %v6552 = vpop.f32.mrb[0].mxu0
    %v6553 = vpop.f32.mrb[0].mxu0
    %v6554 = vadd.f32 0.0, %v6553
    %v6555 = vpop.f32.mrb[0].mxu0
    %6556 = vmatprep.mubr.bf16.mxu0 %v5026
    %6557 = vmatmul.mubr.bf16.gmra.mrb[0].mxu0 %v4930
    %v6558 = vpop.f32.mrb[0].mxu0
    %v6559 = vadd.f32 0.0, %v6558
    %v6560 = vpop.f32.mrb[0].mxu0
    %v6561 = vpop.f32.mrb[0].mxu0
    %v6562 = vadd.f32 0.0, %v6561
    %v6563 = vpop.f32.mrb[0].mxu0
    %6564 = vdwg.mxu0
    %6565 = vmatprep.subr.bf16.mxu0 0
    %6566 = vmatpush1.bf16.msra.mxu0 %v6148
    %6567 = vmatprep.subr.bf16.mxu0 0
    %6568 = vmatpush1.bf16.msra.mxu0 %v6149
    %6569 = vmatprep.subr.bf16.mxu0 0
    %6570 = vmatpush1.bf16.msra.mxu0 %v6150
    %6571 = vmatprep.subr.bf16.mxu0 0
    %6572 = vmatpush1.bf16.msra.mxu0 %v6151
    %6573 = vmatprep.subr.bf16.mxu0 0
    %6574 = vmatpush1.bf16.msra.mxu0 %v6152
    %6575 = vmatprep.subr.bf16.mxu0 0
    %6576 = vmatpush1.bf16.msra.mxu0 %v6153
    %6577 = vmatprep.subr.bf16.mxu0 0
    %6578 = vmatpush1.bf16.msra.mxu0 %v6154
    %6579 = vmatprep.subr.bf16.mxu0 0
    %6580 = vmatpush1.bf16.msra.mxu0 %v6155
    %6581 = vmatprep.subr.bf16.mxu0 0
    %6582 = vmatpush1.bf16.msra.mxu0 %v6156
    %6583 = vmatprep.subr.bf16.mxu0 0
    %6584 = vmatpush1.bf16.msra.mxu0 %v6157
    %6585 = vmatprep.subr.bf16.mxu0 0
    %6586 = vmatpush1.bf16.msra.mxu0 %v6158
    %6587 = vmatprep.subr.bf16.mxu0 0
    %6588 = vmatpush1.bf16.msra.mxu0 %v6159
    %6589 = vmatprep.subr.bf16.mxu0 0
    %6590 = vmatpush1.bf16.msra.mxu0 %v6160
    %6591 = vmatprep.subr.bf16.mxu0 0
    %6592 = vmatpush1.bf16.msra.mxu0 %v6161
    %6593 = vmatprep.subr.bf16.mxu0 0
    %6594 = vmatpush1.bf16.msra.mxu0 %v6162
    %6595 = vmatprep.subr.bf16.mxu0 0
    %6596 = vmatpush1.bf16.msra.mxu0 %v6163
    %6597 = vmatprep.mubr.bf16.mxu0 %v5187
    %6598 = vmatmul.mubr.bf16.gmra.mrb[0].mxu0 %v5091
    %v6599 = vpop.f32.mrb[0].mxu0
    %v6600 = vadd.f32 %v6311, %v6599
    %v6601 = vpop.f32.mrb[0].mxu0
    %v6602 = vpop.f32.mrb[0].mxu0
    %v6603 = vadd.f32 %v6314, %v6602
    %v6604 = vpop.f32.mrb[0].mxu0
    %6605 = vmatprep.mubr.bf16.mxu0 %v5188
    %6606 = vmatmul.mubr.bf16.gmra.mrb[0].mxu0 %v5092
    %v6607 = vpop.f32.mrb[0].mxu0
    %v6608 = vadd.f32 %v6319, %v6607
    %v6609 = vpop.f32.mrb[0].mxu0
    %v6610 = vpop.f32.mrb[0].mxu0
    %v6611 = vadd.f32 %v6322, %v6610
    %v6612 = vpop.f32.mrb[0].mxu0
    %6613 = vmatprep.mubr.bf16.mxu0 %v5189
    %6614 = vmatmul.mubr.bf16.gmra.mrb[0].mxu0 %v5093
    %v6615 = vpop.f32.mrb[0].mxu0
    %v6616 = vadd.f32 %v6327, %v6615
    %v6617 = vpop.f32.mrb[0].mxu0
    %v6618 = vpop.f32.mrb[0].mxu0
    %v6619 = vadd.f32 %v6330, %v6618
    %v6620 = vpop.f32.mrb[0].mxu0
    %6621 = vmatprep.mubr.bf16.mxu0 %v5190
    %6622 = vmatmul.mubr.bf16.gmra.mrb[0].mxu0 %v5094
    %v6623 = vpop.f32.mrb[0].mxu0
    %v6624 = vadd.f32 %v6335, %v6623
    %v6625 = vpop.f32.mrb[0].mxu0
    %v6626 = vpop.f32.mrb[0].mxu0
    %v6627 = vadd.f32 %v6338, %v6626
    %v6628 = vpop.f32.mrb[0].mxu0
    %6629 = vmatprep.mubr.bf16.mxu0 %v5191
    %6630 = vmatmul.mubr.bf16.gmra.mrb[0].mxu0 %v5095
    %v6631 = vpop.f32.mrb[0].mxu0
    %v6632 = vadd.f32 %v6343, %v6631
    %v6633 = vpop.f32.mrb[0].mxu0
    %v6634 = vpop.f32.mrb[0].mxu0
    %v6635 = vadd.f32 %v6346, %v6634
    %v6636 = vpop.f32.mrb[0].mxu0
    %6637 = vmatprep.mubr.bf16.mxu0 %v5192
    %6638 = vmatmul.mubr.bf16.gmra.mrb[0].mxu0 %v5096
    %v6639 = vpop.f32.mrb[0].mxu0
    %v6640 = vadd.f32 %v6351, %v6639
    %v6641 = vpop.f32.mrb[0].mxu0
    %v6642 = vpop.f32.mrb[0].mxu0
    %v6643 = vadd.f32 %v6354, %v6642
    %v6644 = vpop.f32.mrb[0].mxu0
    %6645 = vmatprep.mubr.bf16.mxu0 %v5193
    %6646 = vmatmul.mubr.bf16.gmra.mrb[0].mxu0 %v5097
    %v6647 = vpop.f32.mrb[0].mxu0
    %v6648 = vadd.f32 %v6359, %v6647
    %v6649 = vpop.f32.mrb[0].mxu0
    %v6650 = vpop.f32.mrb[0].mxu0
    %v6651 = vadd.f32 %v6362, %v6650
    %v6652 = vpop.f32.mrb[0].mxu0
    %6653 = vmatprep.mubr.bf16.mxu0 %v5194
    %6654 = vmatmul.mubr.bf16.gmra.mrb[0].mxu0 %v5098
    %v6655 = vpop.f32.mrb[0].mxu0
    %v6656 = vadd.f32 %v6367, %v6655
    %v6657 = vpop.f32.mrb[0].mxu0
    %v6658 = vpop.f32.mrb[0].mxu0
    %v6659 = vadd.f32 %v6370, %v6658
    %v6660 = vpop.f32.mrb[0].mxu0
    %6661 = vmatprep.mubr.bf16.mxu0 %v5195
    %6662 = vmatmul.mubr.bf16.gmra.mrb[0].mxu0 %v5099
    %v6663 = vpop.f32.mrb[0].mxu0
    %v6664 = vadd.f32 %v6375, %v6663
    %v6665 = vpop.f32.mrb[0].mxu0
    %v6666 = vpop.f32.mrb[0].mxu0
    %v6667 = vadd.f32 %v6378, %v6666
    %v6668 = vpop.f32.mrb[0].mxu0
    %6669 = vmatprep.mubr.bf16.mxu0 %v5196
    %6670 = vmatmul.mubr.bf16.gmra.mrb[0].mxu0 %v5100
    %v6671 = vpop.f32.mrb[0].mxu0
    %v6672 = vadd.f32 %v6383, %v6671
    %v6673 = vpop.f32.mrb[0].mxu0
    %v6674 = vpop.f32.mrb[0].mxu0
    %v6675 = vadd.f32 %v6386, %v6674
    %v6676 = vpop.f32.mrb[0].mxu0
    %6677 = vmatprep.mubr.bf16.mxu0 %v5197
    %6678 = vmatmul.mubr.bf16.gmra.mrb[0].mxu0 %v5101
    %v6679 = vpop.f32.mrb[0].mxu0
    %v6680 = vadd.f32 %v6391, %v6679
    %v6681 = vpop.f32.mrb[0].mxu0
    %v6682 = vpop.f32.mrb[0].mxu0
    %v6683 = vadd.f32 %v6394, %v6682
    %v6684 = vpop.f32.mrb[0].mxu0
    %6685 = vmatprep.mubr.bf16.mxu0 %v5198
    %6686 = vmatmul.mubr.bf16.gmra.mrb[0].mxu0 %v5102
    %v6687 = vpop.f32.mrb[0].mxu0
    %v6688 = vadd.f32 %v6399, %v6687
    %v6689 = vpop.f32.mrb[0].mxu0
    %v6690 = vpop.f32.mrb[0].mxu0
    %v6691 = vadd.f32 %v6402, %v6690
    %v6692 = vpop.f32.mrb[0].mxu0
    %6693 = vmatprep.mubr.bf16.mxu0 %v5199
    %6694 = vmatmul.mubr.bf16.gmra.mrb[0].mxu0 %v5103
    %v6695 = vpop.f32.mrb[0].mxu0
    %v6696 = vadd.f32 %v6407, %v6695
    %v6697 = vpop.f32.mrb[0].mxu0
    %v6698 = vpop.f32.mrb[0].mxu0
    %v6699 = vadd.f32 %v6410, %v6698
    %v6700 = vpop.f32.mrb[0].mxu0
    %6701 = vmatprep.mubr.bf16.mxu0 %v5200
    %6702 = vmatmul.mubr.bf16.gmra.mrb[0].mxu0 %v5104
    %v6703 = vpop.f32.mrb[0].mxu0
    %v6704 = vadd.f32 %v6415, %v6703
    %v6705 = vpop.f32.mrb[0].mxu0
    %v6706 = vpop.f32.mrb[0].mxu0
    %v6707 = vadd.f32 %v6418, %v6706
    %v6708 = vpop.f32.mrb[0].mxu0
    %6709 = vmatprep.mubr.bf16.mxu0 %v5201
    %6710 = vmatmul.mubr.bf16.gmra.mrb[0].mxu0 %v5105
    %v6711 = vpop.f32.mrb[0].mxu0
    %v6712 = vadd.f32 %v6423, %v6711
    %v6713 = vpop.f32.mrb[0].mxu0
    %v6714 = vpop.f32.mrb[0].mxu0
    %v6715 = vadd.f32 %v6426, %v6714
    %v6716 = vpop.f32.mrb[0].mxu0
    %6717 = vmatprep.mubr.bf16.mxu0 %v5202
    %6718 = vmatmul.mubr.bf16.gmra.mrb[0].mxu0 %v5106
    %v6719 = vpop.f32.mrb[0].mxu0
    %v6720 = vadd.f32 %v6431, %v6719
    %v6721 = vpop.f32.mrb[0].mxu0
    %v6722 = vpop.f32.mrb[0].mxu0
    %v6723 = vadd.f32 %v6434, %v6722
    %v6724 = vpop.f32.mrb[0].mxu0
    %6725 = vmatprep.mubr.bf16.mxu0 %v5203
    %6726 = vmatmul.mubr.bf16.gmra.mrb[0].mxu0 %v5107
    %v6727 = vpop.f32.mrb[0].mxu0
    %v6728 = vadd.f32 %v6439, %v6727
    %v6729 = vpop.f32.mrb[0].mxu0
    %v6730 = vpop.f32.mrb[0].mxu0
    %v6731 = vadd.f32 %v6442, %v6730
    %v6732 = vpop.f32.mrb[0].mxu0
    %6733 = vmatprep.mubr.bf16.mxu0 %v5204
    %6734 = vmatmul.mubr.bf16.gmra.mrb[0].mxu0 %v5108
    %v6735 = vpop.f32.mrb[0].mxu0
    %v6736 = vadd.f32 %v6447, %v6735
    %v6737 = vpop.f32.mrb[0].mxu0
    %v6738 = vpop.f32.mrb[0].mxu0
    %v6739 = vadd.f32 %v6450, %v6738
    %v6740 = vpop.f32.mrb[0].mxu0
    %6741 = vmatprep.mubr.bf16.mxu0 %v5205
    %6742 = vmatmul.mubr.bf16.gmra.mrb[0].mxu0 %v5109
    %v6743 = vpop.f32.mrb[0].mxu0
    %v6744 = vadd.f32 %v6455, %v6743
    %v6745 = vpop.f32.mrb[0].mxu0
    %v6746 = vpop.f32.mrb[0].mxu0
    %v6747 = vadd.f32 %v6458, %v6746
    %v6748 = vpop.f32.mrb[0].mxu0
    %6749 = vmatprep.mubr.bf16.mxu0 %v5206
    %6750 = vmatmul.mubr.bf16.gmra.mrb[0].mxu0 %v5110
    %v6751 = vpop.f32.mrb[0].mxu0
    %v6752 = vadd.f32 %v6463, %v6751
    %v6753 = vpop.f32.mrb[0].mxu0
    %v6754 = vpop.f32.mrb[0].mxu0
    %v6755 = vadd.f32 %v6466, %v6754
    %v6756 = vpop.f32.mrb[0].mxu0
    %6757 = vmatprep.mubr.bf16.mxu0 %v5207
    %6758 = vmatmul.mubr.bf16.gmra.mrb[0].mxu0 %v5111
    %v6759 = vpop.f32.mrb[0].mxu0
    %v6760 = vadd.f32 %v6471, %v6759
    %v6761 = vpop.f32.mrb[0].mxu0
    %v6762 = vpop.f32.mrb[0].mxu0
    %v6763 = vadd.f32 %v6474, %v6762
    %v6764 = vpop.f32.mrb[0].mxu0
    %6765 = vmatprep.mubr.bf16.mxu0 %v5208
    %6766 = vmatmul.mubr.bf16.gmra.mrb[0].mxu0 %v5112
    %v6767 = vpop.f32.mrb[0].mxu0
    %v6768 = vadd.f32 %v6479, %v6767
    %v6769 = vpop.f32.mrb[0].mxu0
    %v6770 = vpop.f32.mrb[0].mxu0
    %v6771 = vadd.f32 %v6482, %v6770
    %v6772 = vpop.f32.mrb[0].mxu0
    %6773 = vmatprep.mubr.bf16.mxu0 %v5209
    %6774 = vmatmul.mubr.bf16.gmra.mrb[0].mxu0 %v5113
    %v6775 = vpop.f32.mrb[0].mxu0
    %v6776 = vadd.f32 %v6487, %v6775
    %v6777 = vpop.f32.mrb[0].mxu0
    %v6778 = vpop.f32.mrb[0].mxu0
    %v6779 = vadd.f32 %v6490, %v6778
    %v6780 = vpop.f32.mrb[0].mxu0
    %6781 = vmatprep.mubr.bf16.mxu0 %v5210
    %6782 = vmatmul.mubr.bf16.gmra.mrb[0].mxu0 %v5114
    %v6783 = vpop.f32.mrb[0].mxu0
    %v6784 = vadd.f32 %v6495, %v6783
    %v6785 = vpop.f32.mrb[0].mxu0
    %v6786 = vpop.f32.mrb[0].mxu0
    %v6787 = vadd.f32 %v6498, %v6786
    %v6788 = vpop.f32.mrb[0].mxu0
    %6789 = vmatprep.mubr.bf16.mxu0 %v5211
    %6790 = vmatmul.mubr.bf16.gmra.mrb[0].mxu0 %v5115
    %v6791 = vpop.f32.mrb[0].mxu0
    %v6792 = vadd.f32 %v6503, %v6791
    %v6793 = vpop.f32.mrb[0].mxu0
    %v6794 = vpop.f32.mrb[0].mxu0
    %v6795 = vadd.f32 %v6506, %v6794
    %v6796 = vpop.f32.mrb[0].mxu0
    %6797 = vmatprep.mubr.bf16.mxu0 %v5212
    %6798 = vmatmul.mubr.bf16.gmra.mrb[0].mxu0 %v5116
    %v6799 = vpop.f32.mrb[0].mxu0
    %v6800 = vadd.f32 %v6511, %v6799
    %v6801 = vpop.f32.mrb[0].mxu0
    %v6802 = vpop.f32.mrb[0].mxu0
    %v6803 = vadd.f32 %v6514, %v6802
    %v6804 = vpop.f32.mrb[0].mxu0
    %6805 = vmatprep.mubr.bf16.mxu0 %v5213
    %6806 = vmatmul.mubr.bf16.gmra.mrb[0].mxu0 %v5117
    %v6807 = vpop.f32.mrb[0].mxu0
    %v6808 = vadd.f32 %v6519, %v6807
    %v6809 = vpop.f32.mrb[0].mxu0
    %v6810 = vpop.f32.mrb[0].mxu0
    %v6811 = vadd.f32 %v6522, %v6810
    %v6812 = vpop.f32.mrb[0].mxu0
    %6813 = vmatprep.mubr.bf16.mxu0 %v5214
    %6814 = vmatmul.mubr.bf16.gmra.mrb[0].mxu0 %v5118
    %v6815 = vpop.f32.mrb[0].mxu0
    %v6816 = vadd.f32 %v6527, %v6815
    %v6817 = vpop.f32.mrb[0].mxu0
    %v6818 = vpop.f32.mrb[0].mxu0
    %v6819 = vadd.f32 %v6530, %v6818
    %v6820 = vpop.f32.mrb[0].mxu0
    %6821 = vmatprep.mubr.bf16.mxu0 %v5215
    %6822 = vmatmul.mubr.bf16.gmra.mrb[0].mxu0 %v5119
    %v6823 = vpop.f32.mrb[0].mxu0
    %v6824 = vadd.f32 %v6535, %v6823
    %v6825 = vpop.f32.mrb[0].mxu0
    %v6826 = vpop.f32.mrb[0].mxu0
    %v6827 = vadd.f32 %v6538, %v6826
    %v6828 = vpop.f32.mrb[0].mxu0
    %6829 = vmatprep.mubr.bf16.mxu0 %v5216
    %6830 = vmatmul.mubr.bf16.gmra.mrb[0].mxu0 %v5120
    %v6831 = vpop.f32.mrb[0].mxu0
    %v6832 = vadd.f32 %v6543, %v6831
    %v6833 = vpop.f32.mrb[0].mxu0
    %v6834 = vpop.f32.mrb[0].mxu0
    %v6835 = vadd.f32 %v6546, %v6834
    %v6836 = vpop.f32.mrb[0].mxu0
    %6837 = vmatprep.mubr.bf16.mxu0 %v5217
    %6838 = vmatmul.mubr.bf16.gmra.mrb[0].mxu0 %v5121
    %v6839 = vpop.f32.mrb[0].mxu0
    %v6840 = vadd.f32 %v6551, %v6839
    %v6841 = vpop.f32.mrb[0].mxu0
    %v6842 = vpop.f32.mrb[0].mxu0
    %v6843 = vadd.f32 %v6554, %v6842
    %v6844 = vpop.f32.mrb[0].mxu0
    %6845 = vmatprep.mubr.bf16.mxu0 %v5218
    %6846 = vmatmul.mubr.bf16.gmra.mrb[0].mxu0 %v5122
    %v6847 = vpop.f32.mrb[0].mxu0
    %v6848 = vadd.f32 %v6559, %v6847
    %v6849 = vpop.f32.mrb[0].mxu0
    %v6850 = vpop.f32.mrb[0].mxu0
    %v6851 = vadd.f32 %v6562, %v6850
    %v6852 = vpop.f32.mrb[0].mxu0
    %6853 = vdwg.mxu0
    %6854 = vmatprep.subr.bf16.mxu0 0
    %6855 = vmatpush1.bf16.msra.mxu0 %v6164
    %6856 = vmatprep.subr.bf16.mxu0 0
    %6857 = vmatpush1.bf16.msra.mxu0 %v6165
    %6858 = vmatprep.subr.bf16.mxu0 0
    %6859 = vmatpush1.bf16.msra.mxu0 %v6166
    %6860 = vmatprep.subr.bf16.mxu0 0
    %6861 = vmatpush1.bf16.msra.mxu0 %v6167
    %6862 = vmatprep.subr.bf16.mxu0 0
    %6863 = vmatpush1.bf16.msra.mxu0 %v6168
    %6864 = vmatprep.subr.bf16.mxu0 0
    %6865 = vmatpush1.bf16.msra.mxu0 %v6169
    %6866 = vmatprep.subr.bf16.mxu0 0
    %6867 = vmatpush1.bf16.msra.mxu0 %v6170
    %6868 = vmatprep.subr.bf16.mxu0 0
    %6869 = vmatpush1.bf16.msra.mxu0 %v6171
    %6870 = vmatprep.subr.bf16.mxu0 0
    %6871 = vmatpush1.bf16.msra.mxu0 %v6172
    %6872 = vmatprep.subr.bf16.mxu0 0
    %6873 = vmatpush1.bf16.msra.mxu0 %v6173
    %6874 = vmatprep.subr.bf16.mxu0 0
    %6875 = vmatpush1.bf16.msra.mxu0 %v6174
    %6876 = vmatprep.subr.bf16.mxu0 0
    %6877 = vmatpush1.bf16.msra.mxu0 %v6175
    %6878 = vmatprep.subr.bf16.mxu0 0
    %6879 = vmatpush1.bf16.msra.mxu0 %v6176
    %6880 = vmatprep.subr.bf16.mxu0 0
    %6881 = vmatpush1.bf16.msra.mxu0 %v6177
    %6882 = vmatprep.subr.bf16.mxu0 0
    %6883 = vmatpush1.bf16.msra.mxu0 %v6178
    %6884 = vmatprep.subr.bf16.mxu0 0
    %6885 = vmatpush1.bf16.msra.mxu0 %v6179
    %6886 = vmatprep.mubr.bf16.mxu0 %v5379
    %6887 = vmatmul.mubr.bf16.gmra.mrb[0].mxu0 %v5283
    %v6888 = vpop.f32.mrb[0].mxu0
    %v6889 = vadd.f32 %v6600, %v6888
    %v6890 = vpop.f32.mrb[0].mxu0
    %v6891 = vpop.f32.mrb[0].mxu0
    %v6892 = vadd.f32 %v6603, %v6891
    %v6893 = vpop.f32.mrb[0].mxu0
    %6894 = vmatprep.mubr.bf16.mxu0 %v5380
    %6895 = vmatmul.mubr.bf16.gmra.mrb[0].mxu0 %v5284
    %v6896 = vpop.f32.mrb[0].mxu0
    %v6897 = vadd.f32 %v6608, %v6896
    %v6898 = vpop.f32.mrb[0].mxu0
    %v6899 = vpop.f32.mrb[0].mxu0
    %v6900 = vadd.f32 %v6611, %v6899
    %v6901 = vpop.f32.mrb[0].mxu0
    %6902 = vmatprep.mubr.bf16.mxu0 %v5381
    %6903 = vmatmul.mubr.bf16.gmra.mrb[0].mxu0 %v5285
    %v6904 = vpop.f32.mrb[0].mxu0
    %v6905 = vadd.f32 %v6616, %v6904
    %v6906 = vpop.f32.mrb[0].mxu0
    %v6907 = vpop.f32.mrb[0].mxu0
    %v6908 = vadd.f32 %v6619, %v6907
    %v6909 = vpop.f32.mrb[0].mxu0
    %6910 = vmatprep.mubr.bf16.mxu0 %v5382
    %6911 = vmatmul.mubr.bf16.gmra.mrb[0].mxu0 %v5286
    %v6912 = vpop.f32.mrb[0].mxu0
    %v6913 = vadd.f32 %v6624, %v6912
    %v6914 = vpop.f32.mrb[0].mxu0
    %v6915 = vpop.f32.mrb[0].mxu0
    %v6916 = vadd.f32 %v6627, %v6915
    %v6917 = vpop.f32.mrb[0].mxu0
    %6918 = vmatprep.mubr.bf16.mxu0 %v5383
    %6919 = vmatmul.mubr.bf16.gmra.mrb[0].mxu0 %v5287
    %v6920 = vpop.f32.mrb[0].mxu0
    %v6921 = vadd.f32 %v6632, %v6920
    %v6922 = vpop.f32.mrb[0].mxu0
    %v6923 = vpop.f32.mrb[0].mxu0
    %v6924 = vadd.f32 %v6635, %v6923
    %v6925 = vpop.f32.mrb[0].mxu0
    %6926 = vmatprep.mubr.bf16.mxu0 %v5384
    %6927 = vmatmul.mubr.bf16.gmra.mrb[0].mxu0 %v5288
    %v6928 = vpop.f32.mrb[0].mxu0
    %v6929 = vadd.f32 %v6640, %v6928
    %v6930 = vpop.f32.mrb[0].mxu0
    %v6931 = vpop.f32.mrb[0].mxu0
    %v6932 = vadd.f32 %v6643, %v6931
    %v6933 = vpop.f32.mrb[0].mxu0
    %6934 = vmatprep.mubr.bf16.mxu0 %v5385
    %6935 = vmatmul.mubr.bf16.gmra.mrb[0].mxu0 %v5289
    %v6936 = vpop.f32.mrb[0].mxu0
    %v6937 = vadd.f32 %v6648, %v6936
    %v6938 = vpop.f32.mrb[0].mxu0
    %v6939 = vpop.f32.mrb[0].mxu0
    %v6940 = vadd.f32 %v6651, %v6939
    %v6941 = vpop.f32.mrb[0].mxu0
    %6942 = vmatprep.mubr.bf16.mxu0 %v5386
    %6943 = vmatmul.mubr.bf16.gmra.mrb[0].mxu0 %v5290
    %v6944 = vpop.f32.mrb[0].mxu0
    %v6945 = vadd.f32 %v6656, %v6944
    %v6946 = vpop.f32.mrb[0].mxu0
    %v6947 = vpop.f32.mrb[0].mxu0
    %v6948 = vadd.f32 %v6659, %v6947
    %v6949 = vpop.f32.mrb[0].mxu0
    %6950 = vmatprep.mubr.bf16.mxu0 %v5387
    %6951 = vmatmul.mubr.bf16.gmra.mrb[0].mxu0 %v5291
    %v6952 = vpop.f32.mrb[0].mxu0
    %v6953 = vadd.f32 %v6664, %v6952
    %v6954 = vpop.f32.mrb[0].mxu0
    %v6955 = vpop.f32.mrb[0].mxu0
    %v6956 = vadd.f32 %v6667, %v6955
    %v6957 = vpop.f32.mrb[0].mxu0
    %6958 = vmatprep.mubr.bf16.mxu0 %v5388
    %6959 = vmatmul.mubr.bf16.gmra.mrb[0].mxu0 %v5292
    %v6960 = vpop.f32.mrb[0].mxu0
    %v6961 = vadd.f32 %v6672, %v6960
    %v6962 = vpop.f32.mrb[0].mxu0
    %v6963 = vpop.f32.mrb[0].mxu0
    %v6964 = vadd.f32 %v6675, %v6963
    %v6965 = vpop.f32.mrb[0].mxu0
    %6966 = vmatprep.mubr.bf16.mxu0 %v5389
    %6967 = vmatmul.mubr.bf16.gmra.mrb[0].mxu0 %v5293
    %v6968 = vpop.f32.mrb[0].mxu0
    %v6969 = vadd.f32 %v6680, %v6968
    %v6970 = vpop.f32.mrb[0].mxu0
    %v6971 = vpop.f32.mrb[0].mxu0
    %v6972 = vadd.f32 %v6683, %v6971
    %v6973 = vpop.f32.mrb[0].mxu0
    %6974 = vmatprep.mubr.bf16.mxu0 %v5390
    %6975 = vmatmul.mubr.bf16.gmra.mrb[0].mxu0 %v5294
    %v6976 = vpop.f32.mrb[0].mxu0
    %v6977 = vadd.f32 %v6688, %v6976
    %v6978 = vpop.f32.mrb[0].mxu0
    %v6979 = vpop.f32.mrb[0].mxu0
    %v6980 = vadd.f32 %v6691, %v6979
    %v6981 = vpop.f32.mrb[0].mxu0
    %6982 = vmatprep.mubr.bf16.mxu0 %v5391
    %6983 = vmatmul.mubr.bf16.gmra.mrb[0].mxu0 %v5295
    %v6984 = vpop.f32.mrb[0].mxu0
    %v6985 = vadd.f32 %v6696, %v6984
    %v6986 = vpop.f32.mrb[0].mxu0
    %v6987 = vpop.f32.mrb[0].mxu0
    %v6988 = vadd.f32 %v6699, %v6987
    %v6989 = vpop.f32.mrb[0].mxu0
    %6990 = vmatprep.mubr.bf16.mxu0 %v5392
    %6991 = vmatmul.mubr.bf16.gmra.mrb[0].mxu0 %v5296
    %v6992 = vpop.f32.mrb[0].mxu0
    %v6993 = vadd.f32 %v6704, %v6992
    %v6994 = vpop.f32.mrb[0].mxu0
    %v6995 = vpop.f32.mrb[0].mxu0
    %v6996 = vadd.f32 %v6707, %v6995
    %v6997 = vpop.f32.mrb[0].mxu0
    %6998 = vmatprep.mubr.bf16.mxu0 %v5393
    %6999 = vmatmul.mubr.bf16.gmra.mrb[0].mxu0 %v5297
    %v7000 = vpop.f32.mrb[0].mxu0
    %v7001 = vadd.f32 %v6712, %v7000
    %v7002 = vpop.f32.mrb[0].mxu0
    %v7003 = vpop.f32.mrb[0].mxu0
    %v7004 = vadd.f32 %v6715, %v7003
    %v7005 = vpop.f32.mrb[0].mxu0
    %7006 = vmatprep.mubr.bf16.mxu0 %v5394
    %7007 = vmatmul.mubr.bf16.gmra.mrb[0].mxu0 %v5298
    %v7008 = vpop.f32.mrb[0].mxu0
    %v7009 = vadd.f32 %v6720, %v7008
    %v7010 = vpop.f32.mrb[0].mxu0
    %v7011 = vpop.f32.mrb[0].mxu0
    %v7012 = vadd.f32 %v6723, %v7011
    %v7013 = vpop.f32.mrb[0].mxu0
    %7014 = vmatprep.mubr.bf16.mxu0 %v5395
    %7015 = vmatmul.mubr.bf16.gmra.mrb[0].mxu0 %v5299
    %v7016 = vpop.f32.mrb[0].mxu0
    %v7017 = vadd.f32 %v6728, %v7016
    %v7018 = vpop.f32.mrb[0].mxu0
    %v7019 = vpop.f32.mrb[0].mxu0
    %v7020 = vadd.f32 %v6731, %v7019
    %v7021 = vpop.f32.mrb[0].mxu0
    %7022 = vmatprep.mubr.bf16.mxu0 %v5396
    %7023 = vmatmul.mubr.bf16.gmra.mrb[0].mxu0 %v5300
    %v7024 = vpop.f32.mrb[0].mxu0
    %v7025 = vadd.f32 %v6736, %v7024
    %v7026 = vpop.f32.mrb[0].mxu0
    %v7027 = vpop.f32.mrb[0].mxu0
    %v7028 = vadd.f32 %v6739, %v7027
    %v7029 = vpop.f32.mrb[0].mxu0
    %7030 = vmatprep.mubr.bf16.mxu0 %v5397
    %7031 = vmatmul.mubr.bf16.gmra.mrb[0].mxu0 %v5301
    %v7032 = vpop.f32.mrb[0].mxu0
    %v7033 = vadd.f32 %v6744, %v7032
    %v7034 = vpop.f32.mrb[0].mxu0
    %v7035 = vpop.f32.mrb[0].mxu0
    %v7036 = vadd.f32 %v6747, %v7035
    %v7037 = vpop.f32.mrb[0].mxu0
    %7038 = vmatprep.mubr.bf16.mxu0 %v5398
    %7039 = vmatmul.mubr.bf16.gmra.mrb[0].mxu0 %v5302
    %v7040 = vpop.f32.mrb[0].mxu0
    %v7041 = vadd.f32 %v6752, %v7040
    %v7042 = vpop.f32.mrb[0].mxu0
    %v7043 = vpop.f32.mrb[0].mxu0
    %v7044 = vadd.f32 %v6755, %v7043
    %v7045 = vpop.f32.mrb[0].mxu0
    %7046 = vmatprep.mubr.bf16.mxu0 %v5399
    %7047 = vmatmul.mubr.bf16.gmra.mrb[0].mxu0 %v5303
    %v7048 = vpop.f32.mrb[0].mxu0
    %v7049 = vadd.f32 %v6760, %v7048
    %v7050 = vpop.f32.mrb[0].mxu0
    %v7051 = vpop.f32.mrb[0].mxu0
    %v7052 = vadd.f32 %v6763, %v7051
    %v7053 = vpop.f32.mrb[0].mxu0
    %7054 = vmatprep.mubr.bf16.mxu0 %v5400
    %7055 = vmatmul.mubr.bf16.gmra.mrb[0].mxu0 %v5304
    %v7056 = vpop.f32.mrb[0].mxu0
    %v7057 = vadd.f32 %v6768, %v7056
    %v7058 = vpop.f32.mrb[0].mxu0
    %v7059 = vpop.f32.mrb[0].mxu0
    %v7060 = vadd.f32 %v6771, %v7059
    %v7061 = vpop.f32.mrb[0].mxu0
    %7062 = vmatprep.mubr.bf16.mxu0 %v5401
    %7063 = vmatmul.mubr.bf16.gmra.mrb[0].mxu0 %v5305
    %v7064 = vpop.f32.mrb[0].mxu0
    %v7065 = vadd.f32 %v6776, %v7064
    %v7066 = vpop.f32.mrb[0].mxu0
    %v7067 = vpop.f32.mrb[0].mxu0
    %v7068 = vadd.f32 %v6779, %v7067
    %v7069 = vpop.f32.mrb[0].mxu0
    %7070 = vmatprep.mubr.bf16.mxu0 %v5402
    %7071 = vmatmul.mubr.bf16.gmra.mrb[0].mxu0 %v5306
    %v7072 = vpop.f32.mrb[0].mxu0
    %v7073 = vadd.f32 %v6784, %v7072
    %v7074 = vpop.f32.mrb[0].mxu0
    %v7075 = vpop.f32.mrb[0].mxu0
    %v7076 = vadd.f32 %v6787, %v7075
    %v7077 = vpop.f32.mrb[0].mxu0
    %7078 = vmatprep.mubr.bf16.mxu0 %v5403
    %7079 = vmatmul.mubr.bf16.gmra.mrb[0].mxu0 %v5307
    %v7080 = vpop.f32.mrb[0].mxu0
    %v7081 = vadd.f32 %v6792, %v7080
    %v7082 = vpop.f32.mrb[0].mxu0
    %v7083 = vpop.f32.mrb[0].mxu0
    %v7084 = vadd.f32 %v6795, %v7083
    %v7085 = vpop.f32.mrb[0].mxu0
    %7086 = vmatprep.mubr.bf16.mxu0 %v5404
    %7087 = vmatmul.mubr.bf16.gmra.mrb[0].mxu0 %v5308
    %v7088 = vpop.f32.mrb[0].mxu0
    %v7089 = vadd.f32 %v6800, %v7088
    %v7090 = vpop.f32.mrb[0].mxu0
    %v7091 = vpop.f32.mrb[0].mxu0
    %v7092 = vadd.f32 %v6803, %v7091
    %v7093 = vpop.f32.mrb[0].mxu0
    %7094 = vmatprep.mubr.bf16.mxu0 %v5405
    %7095 = vmatmul.mubr.bf16.gmra.mrb[0].mxu0 %v5309
    %v7096 = vpop.f32.mrb[0].mxu0
    %v7097 = vadd.f32 %v6808, %v7096
    %v7098 = vpop.f32.mrb[0].mxu0
    %v7099 = vpop.f32.mrb[0].mxu0
    %v7100 = vadd.f32 %v6811, %v7099
    %v7101 = vpop.f32.mrb[0].mxu0
    %7102 = vmatprep.mubr.bf16.mxu0 %v5406
    %7103 = vmatmul.mubr.bf16.gmra.mrb[0].mxu0 %v5310
    %v7104 = vpop.f32.mrb[0].mxu0
    %v7105 = vadd.f32 %v6816, %v7104
    %v7106 = vpop.f32.mrb[0].mxu0
    %v7107 = vpop.f32.mrb[0].mxu0
    %v7108 = vadd.f32 %v6819, %v7107
    %v7109 = vpop.f32.mrb[0].mxu0
    %7110 = vmatprep.mubr.bf16.mxu0 %v5407
    %7111 = vmatmul.mubr.bf16.gmra.mrb[0].mxu0 %v5311
    %v7112 = vpop.f32.mrb[0].mxu0
    %v7113 = vadd.f32 %v6824, %v7112
    %v7114 = vpop.f32.mrb[0].mxu0
    %v7115 = vpop.f32.mrb[0].mxu0
    %v7116 = vadd.f32 %v6827, %v7115
    %v7117 = vpop.f32.mrb[0].mxu0
    %7118 = vmatprep.mubr.bf16.mxu0 %v5408
    %7119 = vmatmul.mubr.bf16.gmra.mrb[0].mxu0 %v5312
    %v7120 = vpop.f32.mrb[0].mxu0
    %v7121 = vadd.f32 %v6832, %v7120
    %v7122 = vpop.f32.mrb[0].mxu0
    %v7123 = vpop.f32.mrb[0].mxu0
    %v7124 = vadd.f32 %v6835, %v7123
    %v7125 = vpop.f32.mrb[0].mxu0
    %7126 = vmatprep.mubr.bf16.mxu0 %v5409
    %7127 = vmatmul.mubr.bf16.gmra.mrb[0].mxu0 %v5313
    %v7128 = vpop.f32.mrb[0].mxu0
    %v7129 = vadd.f32 %v6840, %v7128
    %v7130 = vpop.f32.mrb[0].mxu0
    %v7131 = vpop.f32.mrb[0].mxu0
    %v7132 = vadd.f32 %v6843, %v7131
    %v7133 = vpop.f32.mrb[0].mxu0
    %7134 = vmatprep.mubr.bf16.mxu0 %v5410
    %7135 = vmatmul.mubr.bf16.gmra.mrb[0].mxu0 %v5314
    %v7136 = vpop.f32.mrb[0].mxu0
    %v7137 = vadd.f32 %v6848, %v7136
    %v7138 = vpop.f32.mrb[0].mxu0
    %v7139 = vpop.f32.mrb[0].mxu0
    %v7140 = vadd.f32 %v6851, %v7139
    %v7141 = vpop.f32.mrb[0].mxu0
    %7142 = vdwg.mxu0
    %7143 = vmatprep.subr.bf16.mxu0 0
    %7144 = vmatpush1.bf16.msra.mxu0 %v6180
    %7145 = vmatprep.subr.bf16.mxu0 0
    %7146 = vmatpush1.bf16.msra.mxu0 %v6181
    %7147 = vmatprep.subr.bf16.mxu0 0
    %7148 = vmatpush1.bf16.msra.mxu0 %v6182
    %7149 = vmatprep.subr.bf16.mxu0 0
    %7150 = vmatpush1.bf16.msra.mxu0 %v6183
    %7151 = vmatprep.subr.bf16.mxu0 0
    %7152 = vmatpush1.bf16.msra.mxu0 %v6184
    %7153 = vmatprep.subr.bf16.mxu0 0
    %7154 = vmatpush1.bf16.msra.mxu0 %v6185
    %7155 = vmatprep.subr.bf16.mxu0 0
    %7156 = vmatpush1.bf16.msra.mxu0 %v6186
    %7157 = vmatprep.subr.bf16.mxu0 0
    %7158 = vmatpush1.bf16.msra.mxu0 %v6187
    %7159 = vmatprep.subr.bf16.mxu0 0
    %7160 = vmatpush1.bf16.msra.mxu0 %v6188
    %7161 = vmatprep.subr.bf16.mxu0 0
    %7162 = vmatpush1.bf16.msra.mxu0 %v6189
    %7163 = vmatprep.subr.bf16.mxu0 0
    %7164 = vmatpush1.bf16.msra.mxu0 %v6190
    %7165 = vmatprep.subr.bf16.mxu0 0
    %7166 = vmatpush1.bf16.msra.mxu0 %v6191
    %7167 = vmatprep.subr.bf16.mxu0 0
    %7168 = vmatpush1.bf16.msra.mxu0 %v6192
    %7169 = vmatprep.subr.bf16.mxu0 0
    %7170 = vmatpush1.bf16.msra.mxu0 %v6193
    %7171 = vmatprep.subr.bf16.mxu0 0
    %7172 = vmatpush1.bf16.msra.mxu0 %v6194
    %7173 = vmatprep.subr.bf16.mxu0 0
    %7174 = vmatpush1.bf16.msra.mxu0 %v6195
    %7175 = vmatprep.mubr.bf16.mxu0 %v5572
    %7176 = vmatmul.mubr.bf16.gmra.mrb[0].mxu0 %v5476
    %v7177 = vpop.f32.mrb[0].mxu0
    %v7178 = vadd.f32 %v6889, %v7177
    %v7179 = vpop.f32.mrb[0].mxu0
    %v7180 = vpop.f32.mrb[0].mxu0
    %v7181 = vadd.f32 %v6892, %v7180
    %v7182 = vpop.f32.mrb[0].mxu0
    %7183 = vmatprep.mubr.bf16.mxu0 %v5573
    %7184 = vmatmul.mubr.bf16.gmra.mrb[0].mxu0 %v5477
    %v7185 = vpop.f32.mrb[0].mxu0
    %v7186 = vadd.f32 %v6897, %v7185
    %v7187 = vpop.f32.mrb[0].mxu0
    %v7188 = vpop.f32.mrb[0].mxu0
    %v7189 = vadd.f32 %v6900, %v7188
    %v7190 = vpop.f32.mrb[0].mxu0
    %7191 = vmatprep.mubr.bf16.mxu0 %v5574
    %7192 = vmatmul.mubr.bf16.gmra.mrb[0].mxu0 %v5478
    %v7193 = vpop.f32.mrb[0].mxu0
    %v7194 = vadd.f32 %v6905, %v7193
    %v7195 = vpop.f32.mrb[0].mxu0
    %v7196 = vpop.f32.mrb[0].mxu0
    %v7197 = vadd.f32 %v6908, %v7196
    %v7198 = vpop.f32.mrb[0].mxu0
    %7199 = vmatprep.mubr.bf16.mxu0 %v5575
    %7200 = vmatmul.mubr.bf16.gmra.mrb[0].mxu0 %v5479
    %v7201 = vpop.f32.mrb[0].mxu0
    %v7202 = vadd.f32 %v6913, %v7201
    %v7203 = vpop.f32.mrb[0].mxu0
    %v7204 = vpop.f32.mrb[0].mxu0
    %v7205 = vadd.f32 %v6916, %v7204
    %v7206 = vpop.f32.mrb[0].mxu0
    %7207 = vmatprep.mubr.bf16.mxu0 %v5576
    %7208 = vmatmul.mubr.bf16.gmra.mrb[0].mxu0 %v5480
    %v7209 = vpop.f32.mrb[0].mxu0
    %v7210 = vadd.f32 %v6921, %v7209
    %v7211 = vpop.f32.mrb[0].mxu0
    %v7212 = vpop.f32.mrb[0].mxu0
    %v7213 = vadd.f32 %v6924, %v7212
    %v7214 = vpop.f32.mrb[0].mxu0
    %7215 = vmatprep.mubr.bf16.mxu0 %v5577
    %7216 = vmatmul.mubr.bf16.gmra.mrb[0].mxu0 %v5481
    %v7217 = vpop.f32.mrb[0].mxu0
    %v7218 = vadd.f32 %v6929, %v7217
    %v7219 = vpop.f32.mrb[0].mxu0
    %v7220 = vpop.f32.mrb[0].mxu0
    %v7221 = vadd.f32 %v6932, %v7220
    %v7222 = vpop.f32.mrb[0].mxu0
    %7223 = vmatprep.mubr.bf16.mxu0 %v5578
    %7224 = vmatmul.mubr.bf16.gmra.mrb[0].mxu0 %v5482
    %v7225 = vpop.f32.mrb[0].mxu0
    %v7226 = vadd.f32 %v6937, %v7225
    %v7227 = vpop.f32.mrb[0].mxu0
    %v7228 = vpop.f32.mrb[0].mxu0
    %v7229 = vadd.f32 %v6940, %v7228
    %v7230 = vpop.f32.mrb[0].mxu0
    %7231 = vmatprep.mubr.bf16.mxu0 %v5579
    %7232 = vmatmul.mubr.bf16.gmra.mrb[0].mxu0 %v5483
    %v7233 = vpop.f32.mrb[0].mxu0
    %v7234 = vadd.f32 %v6945, %v7233
    %v7235 = vpop.f32.mrb[0].mxu0
    %v7236 = vpop.f32.mrb[0].mxu0
    %v7237 = vadd.f32 %v6948, %v7236
    %v7238 = vpop.f32.mrb[0].mxu0
    %7239 = vmatprep.mubr.bf16.mxu0 %v5580
    %7240 = vmatmul.mubr.bf16.gmra.mrb[0].mxu0 %v5484
    %v7241 = vpop.f32.mrb[0].mxu0
    %v7242 = vadd.f32 %v6953, %v7241
    %v7243 = vpop.f32.mrb[0].mxu0
    %v7244 = vpop.f32.mrb[0].mxu0
    %v7245 = vadd.f32 %v6956, %v7244
    %v7246 = vpop.f32.mrb[0].mxu0
    %7247 = vmatprep.mubr.bf16.mxu0 %v5581
    %7248 = vmatmul.mubr.bf16.gmra.mrb[0].mxu0 %v5485
    %v7249 = vpop.f32.mrb[0].mxu0
    %v7250 = vadd.f32 %v6961, %v7249
    %v7251 = vpop.f32.mrb[0].mxu0
    %v7252 = vpop.f32.mrb[0].mxu0
    %v7253 = vadd.f32 %v6964, %v7252
    %v7254 = vpop.f32.mrb[0].mxu0
    %7255 = vmatprep.mubr.bf16.mxu0 %v5582
    %7256 = vmatmul.mubr.bf16.gmra.mrb[0].mxu0 %v5486
    %v7257 = vpop.f32.mrb[0].mxu0
    %v7258 = vadd.f32 %v6969, %v7257
    %v7259 = vpop.f32.mrb[0].mxu0
    %v7260 = vpop.f32.mrb[0].mxu0
    %v7261 = vadd.f32 %v6972, %v7260
    %v7262 = vpop.f32.mrb[0].mxu0
    %7263 = vmatprep.mubr.bf16.mxu0 %v5583
    %7264 = vmatmul.mubr.bf16.gmra.mrb[0].mxu0 %v5487
    %v7265 = vpop.f32.mrb[0].mxu0
    %v7266 = vadd.f32 %v6977, %v7265
    %v7267 = vpop.f32.mrb[0].mxu0
    %v7268 = vpop.f32.mrb[0].mxu0
    %v7269 = vadd.f32 %v6980, %v7268
    %v7270 = vpop.f32.mrb[0].mxu0
    %7271 = vmatprep.mubr.bf16.mxu0 %v5584
    %7272 = vmatmul.mubr.bf16.gmra.mrb[0].mxu0 %v5488
    %v7273 = vpop.f32.mrb[0].mxu0
    %v7274 = vadd.f32 %v6985, %v7273
    %v7275 = vpop.f32.mrb[0].mxu0
    %v7276 = vpop.f32.mrb[0].mxu0
    %v7277 = vadd.f32 %v6988, %v7276
    %v7278 = vpop.f32.mrb[0].mxu0
    %7279 = vmatprep.mubr.bf16.mxu0 %v5585
    %7280 = vmatmul.mubr.bf16.gmra.mrb[0].mxu0 %v5489
    %v7281 = vpop.f32.mrb[0].mxu0
    %v7282 = vadd.f32 %v6993, %v7281
    %v7283 = vpop.f32.mrb[0].mxu0
    %v7284 = vpop.f32.mrb[0].mxu0
    %v7285 = vadd.f32 %v6996, %v7284
    %v7286 = vpop.f32.mrb[0].mxu0
    %7287 = vmatprep.mubr.bf16.mxu0 %v5586
    %7288 = vmatmul.mubr.bf16.gmra.mrb[0].mxu0 %v5490
    %v7289 = vpop.f32.mrb[0].mxu0
    %v7290 = vadd.f32 %v7001, %v7289
    %v7291 = vpop.f32.mrb[0].mxu0
    %v7292 = vpop.f32.mrb[0].mxu0
    %v7293 = vadd.f32 %v7004, %v7292
    %v7294 = vpop.f32.mrb[0].mxu0
    %7295 = vmatprep.mubr.bf16.mxu0 %v5587
    %7296 = vmatmul.mubr.bf16.gmra.mrb[0].mxu0 %v5491
    %v7297 = vpop.f32.mrb[0].mxu0
    %v7298 = vadd.f32 %v7009, %v7297
    %v7299 = vpop.f32.mrb[0].mxu0
    %v7300 = vpop.f32.mrb[0].mxu0
    %v7301 = vadd.f32 %v7012, %v7300
    %v7302 = vpop.f32.mrb[0].mxu0
    %7303 = vmatprep.mubr.bf16.mxu0 %v5588
    %7304 = vmatmul.mubr.bf16.gmra.mrb[0].mxu0 %v5492
    %v7305 = vpop.f32.mrb[0].mxu0
    %v7306 = vadd.f32 %v7017, %v7305
    %v7307 = vpop.f32.mrb[0].mxu0
    %v7308 = vpop.f32.mrb[0].mxu0
    %v7309 = vadd.f32 %v7020, %v7308
    %v7310 = vpop.f32.mrb[0].mxu0
    %7311 = vmatprep.mubr.bf16.mxu0 %v5589
    %7312 = vmatmul.mubr.bf16.gmra.mrb[0].mxu0 %v5493
    %v7313 = vpop.f32.mrb[0].mxu0
    %v7314 = vadd.f32 %v7025, %v7313
    %v7315 = vpop.f32.mrb[0].mxu0
    %v7316 = vpop.f32.mrb[0].mxu0
    %v7317 = vadd.f32 %v7028, %v7316
    %v7318 = vpop.f32.mrb[0].mxu0
    %7319 = vmatprep.mubr.bf16.mxu0 %v5590
    %7320 = vmatmul.mubr.bf16.gmra.mrb[0].mxu0 %v5494
    %v7321 = vpop.f32.mrb[0].mxu0
    %v7322 = vadd.f32 %v7033, %v7321
    %v7323 = vpop.f32.mrb[0].mxu0
    %v7324 = vpop.f32.mrb[0].mxu0
    %v7325 = vadd.f32 %v7036, %v7324
    %v7326 = vpop.f32.mrb[0].mxu0
    %7327 = vmatprep.mubr.bf16.mxu0 %v5591
    %7328 = vmatmul.mubr.bf16.gmra.mrb[0].mxu0 %v5495
    %v7329 = vpop.f32.mrb[0].mxu0
    %v7330 = vadd.f32 %v7041, %v7329
    %v7331 = vpop.f32.mrb[0].mxu0
    %v7332 = vpop.f32.mrb[0].mxu0
    %v7333 = vadd.f32 %v7044, %v7332
    %v7334 = vpop.f32.mrb[0].mxu0
    %7335 = vmatprep.mubr.bf16.mxu0 %v5592
    %7336 = vmatmul.mubr.bf16.gmra.mrb[0].mxu0 %v5496
    %v7337 = vpop.f32.mrb[0].mxu0
    %v7338 = vadd.f32 %v7049, %v7337
    %v7339 = vpop.f32.mrb[0].mxu0
    %v7340 = vpop.f32.mrb[0].mxu0
    %v7341 = vadd.f32 %v7052, %v7340
    %v7342 = vpop.f32.mrb[0].mxu0
    %7343 = vmatprep.mubr.bf16.mxu0 %v5593
    %7344 = vmatmul.mubr.bf16.gmra.mrb[0].mxu0 %v5497
    %v7345 = vpop.f32.mrb[0].mxu0
    %v7346 = vadd.f32 %v7057, %v7345
    %v7347 = vpop.f32.mrb[0].mxu0
    %v7348 = vpop.f32.mrb[0].mxu0
    %v7349 = vadd.f32 %v7060, %v7348
    %v7350 = vpop.f32.mrb[0].mxu0
    %7351 = vmatprep.mubr.bf16.mxu0 %v5594
    %7352 = vmatmul.mubr.bf16.gmra.mrb[0].mxu0 %v5498
    %v7353 = vpop.f32.mrb[0].mxu0
    %v7354 = vadd.f32 %v7065, %v7353
    %v7355 = vpop.f32.mrb[0].mxu0
    %v7356 = vpop.f32.mrb[0].mxu0
    %v7357 = vadd.f32 %v7068, %v7356
    %v7358 = vpop.f32.mrb[0].mxu0
    %7359 = vmatprep.mubr.bf16.mxu0 %v5595
    %7360 = vmatmul.mubr.bf16.gmra.mrb[0].mxu0 %v5499
    %v7361 = vpop.f32.mrb[0].mxu0
    %v7362 = vadd.f32 %v7073, %v7361
    %v7363 = vpop.f32.mrb[0].mxu0
    %v7364 = vpop.f32.mrb[0].mxu0
    %v7365 = vadd.f32 %v7076, %v7364
    %v7366 = vpop.f32.mrb[0].mxu0
    %7367 = vmatprep.mubr.bf16.mxu0 %v5596
    %7368 = vmatmul.mubr.bf16.gmra.mrb[0].mxu0 %v5500
    %v7369 = vpop.f32.mrb[0].mxu0
    %v7370 = vadd.f32 %v7081, %v7369
    %v7371 = vpop.f32.mrb[0].mxu0
    %v7372 = vpop.f32.mrb[0].mxu0
    %v7373 = vadd.f32 %v7084, %v7372
    %v7374 = vpop.f32.mrb[0].mxu0
    %7375 = vmatprep.mubr.bf16.mxu0 %v5597
    %7376 = vmatmul.mubr.bf16.gmra.mrb[0].mxu0 %v5501
    %v7377 = vpop.f32.mrb[0].mxu0
    %v7378 = vadd.f32 %v7089, %v7377
    %v7379 = vpop.f32.mrb[0].mxu0
    %v7380 = vpop.f32.mrb[0].mxu0
    %v7381 = vadd.f32 %v7092, %v7380
    %v7382 = vpop.f32.mrb[0].mxu0
    %7383 = vmatprep.mubr.bf16.mxu0 %v5598
    %7384 = vmatmul.mubr.bf16.gmra.mrb[0].mxu0 %v5502
    %v7385 = vpop.f32.mrb[0].mxu0
    %v7386 = vadd.f32 %v7097, %v7385
    %v7387 = vpop.f32.mrb[0].mxu0
    %v7388 = vpop.f32.mrb[0].mxu0
    %v7389 = vadd.f32 %v7100, %v7388
    %v7390 = vpop.f32.mrb[0].mxu0
    %7391 = vmatprep.mubr.bf16.mxu0 %v5599
    %7392 = vmatmul.mubr.bf16.gmra.mrb[0].mxu0 %v5503
    %v7393 = vpop.f32.mrb[0].mxu0
    %v7394 = vadd.f32 %v7105, %v7393
    %v7395 = vpop.f32.mrb[0].mxu0
    %v7396 = vpop.f32.mrb[0].mxu0
    %v7397 = vadd.f32 %v7108, %v7396
    %v7398 = vpop.f32.mrb[0].mxu0
    %7399 = vmatprep.mubr.bf16.mxu0 %v5600
    %7400 = vmatmul.mubr.bf16.gmra.mrb[0].mxu0 %v5504
    %v7401 = vpop.f32.mrb[0].mxu0
    %v7402 = vadd.f32 %v7113, %v7401
    %v7403 = vpop.f32.mrb[0].mxu0
    %v7404 = vpop.f32.mrb[0].mxu0
    %v7405 = vadd.f32 %v7116, %v7404
    %v7406 = vpop.f32.mrb[0].mxu0
    %7407 = vmatprep.mubr.bf16.mxu0 %v5601
    %7408 = vmatmul.mubr.bf16.gmra.mrb[0].mxu0 %v5505
    %v7409 = vpop.f32.mrb[0].mxu0
    %v7410 = vadd.f32 %v7121, %v7409
    %v7411 = vpop.f32.mrb[0].mxu0
    %v7412 = vpop.f32.mrb[0].mxu0
    %v7413 = vadd.f32 %v7124, %v7412
    %v7414 = vpop.f32.mrb[0].mxu0
    %7415 = vmatprep.mubr.bf16.mxu0 %v5602
    %7416 = vmatmul.mubr.bf16.gmra.mrb[0].mxu0 %v5506
    %v7417 = vpop.f32.mrb[0].mxu0
    %v7418 = vadd.f32 %v7129, %v7417
    %v7419 = vpop.f32.mrb[0].mxu0
    %v7420 = vpop.f32.mrb[0].mxu0
    %v7421 = vadd.f32 %v7132, %v7420
    %v7422 = vpop.f32.mrb[0].mxu0
    %7423 = vmatprep.mubr.bf16.mxu0 %v5603
    %7424 = vmatmul.mubr.bf16.gmra.mrb[0].mxu0 %v5507
    %v7425 = vpop.f32.mrb[0].mxu0
    %v7426 = vadd.f32 %v7137, %v7425
    %v7427 = vpop.f32.mrb[0].mxu0
    %v7428 = vpop.f32.mrb[0].mxu0
    %v7429 = vadd.f32 %v7140, %v7428
    %v7430 = vpop.f32.mrb[0].mxu0
    %7431 = vdwg.mxu0
    %7432 = vmatprep.subr.bf16.mxu0 0
    %7433 = vmatpush1.bf16.msra.mxu0 %v6196
    %7434 = vmatprep.subr.bf16.mxu0 0
    %7435 = vmatpush1.bf16.msra.mxu0 %v6197
    %7436 = vmatprep.subr.bf16.mxu0 0
    %7437 = vmatpush1.bf16.msra.mxu0 %v6198
    %7438 = vmatprep.subr.bf16.mxu0 0
    %7439 = vmatpush1.bf16.msra.mxu0 %v6199
    %7440 = vmatprep.subr.bf16.mxu0 0
    %7441 = vmatpush1.bf16.msra.mxu0 %v6200
    %7442 = vmatprep.subr.bf16.mxu0 0
    %7443 = vmatpush1.bf16.msra.mxu0 %v6201
    %7444 = vmatprep.subr.bf16.mxu0 0
    %7445 = vmatpush1.bf16.msra.mxu0 %v6202
    %7446 = vmatprep.subr.bf16.mxu0 0
    %7447 = vmatpush1.bf16.msra.mxu0 %v6203
    %7448 = vmatprep.subr.bf16.mxu0 0
    %7449 = vmatpush1.bf16.msra.mxu0 0
    %7450 = vmatprep.subr.bf16.mxu0 0
    %7451 = vmatpush1.bf16.msra.mxu0 0
    %7452 = vmatprep.subr.bf16.mxu0 0
    %7453 = vmatpush1.bf16.msra.mxu0 0
    %7454 = vmatprep.subr.bf16.mxu0 0
    %7455 = vmatpush1.bf16.msra.mxu0 0
    %7456 = vmatprep.subr.bf16.mxu0 0
    %7457 = vmatpush1.bf16.msra.mxu0 0
    %7458 = vmatprep.subr.bf16.mxu0 0
    %7459 = vmatpush1.bf16.msra.mxu0 0
    %7460 = vmatprep.subr.bf16.mxu0 0
    %7461 = vmatpush1.bf16.msra.mxu0 0
    %7462 = vmatprep.subr.bf16.mxu0 0
    %7463 = vmatpush1.bf16.msra.mxu0 0
    %7464 = vmatprep.mubr.bf16.mxu0 0
    %7465 = vmatmul.mubr.bf16.gmra.mrb[0].mxu0 %v5668
    %v7466 = vpop.f32.mrb[0].mxu0
    %v7467 = vadd.f32 %v7178, %v7466
    %v7468 = vpop.f32.mrb[0].mxu0
    %v7469 = vpop.f32.mrb[0].mxu0
    %v7470 = vadd.f32 %v7181, %v7469
    %v7471 = vpop.f32.mrb[0].mxu0
    %7472 = vmatprep.mubr.bf16.mxu0 0
    %7473 = vmatmul.mubr.bf16.gmra.mrb[0].mxu0 %v5669
    %v7474 = vpop.f32.mrb[0].mxu0
    %v7475 = vadd.f32 %v7186, %v7474
    %v7476 = vpop.f32.mrb[0].mxu0
    %v7477 = vpop.f32.mrb[0].mxu0
    %v7478 = vadd.f32 %v7189, %v7477
    %v7479 = vpop.f32.mrb[0].mxu0
    %7480 = vmatprep.mubr.bf16.mxu0 0
    %7481 = vmatmul.mubr.bf16.gmra.mrb[0].mxu0 %v5670
    %v7482 = vpop.f32.mrb[0].mxu0
    %v7483 = vadd.f32 %v7194, %v7482
    %v7484 = vpop.f32.mrb[0].mxu0
    %v7485 = vpop.f32.mrb[0].mxu0
    %v7486 = vadd.f32 %v7197, %v7485
    %v7487 = vpop.f32.mrb[0].mxu0
    %7488 = vmatprep.mubr.bf16.mxu0 0
    %7489 = vmatmul.mubr.bf16.gmra.mrb[0].mxu0 %v5671
    %v7490 = vpop.f32.mrb[0].mxu0
    %v7491 = vadd.f32 %v7202, %v7490
    %v7492 = vpop.f32.mrb[0].mxu0
    %v7493 = vpop.f32.mrb[0].mxu0
    %v7494 = vadd.f32 %v7205, %v7493
    %v7495 = vpop.f32.mrb[0].mxu0
    %7496 = vmatprep.mubr.bf16.mxu0 0
    %7497 = vmatmul.mubr.bf16.gmra.mrb[0].mxu0 %v5672
    %v7498 = vpop.f32.mrb[0].mxu0
    %v7499 = vadd.f32 %v7210, %v7498
    %v7500 = vpop.f32.mrb[0].mxu0
    %v7501 = vpop.f32.mrb[0].mxu0
    %v7502 = vadd.f32 %v7213, %v7501
    %v7503 = vpop.f32.mrb[0].mxu0
    %7504 = vmatprep.mubr.bf16.mxu0 0
    %7505 = vmatmul.mubr.bf16.gmra.mrb[0].mxu0 %v5673
    %v7506 = vpop.f32.mrb[0].mxu0
    %v7507 = vadd.f32 %v7218, %v7506
    %v7508 = vpop.f32.mrb[0].mxu0
    %v7509 = vpop.f32.mrb[0].mxu0
    %v7510 = vadd.f32 %v7221, %v7509
    %v7511 = vpop.f32.mrb[0].mxu0
    %7512 = vmatprep.mubr.bf16.mxu0 0
    %7513 = vmatmul.mubr.bf16.gmra.mrb[0].mxu0 %v5674
    %v7514 = vpop.f32.mrb[0].mxu0
    %v7515 = vadd.f32 %v7226, %v7514
    %v7516 = vpop.f32.mrb[0].mxu0
    %v7517 = vpop.f32.mrb[0].mxu0
    %v7518 = vadd.f32 %v7229, %v7517
    %v7519 = vpop.f32.mrb[0].mxu0
    %7520 = vmatprep.mubr.bf16.mxu0 0
    %7521 = vmatmul.mubr.bf16.gmra.mrb[0].mxu0 %v5675
    %v7522 = vpop.f32.mrb[0].mxu0
    %v7523 = vadd.f32 %v7234, %v7522
    %v7524 = vpop.f32.mrb[0].mxu0
    %v7525 = vpop.f32.mrb[0].mxu0
    %v7526 = vadd.f32 %v7237, %v7525
    %v7527 = vpop.f32.mrb[0].mxu0
    %7528 = vmatprep.mubr.bf16.mxu0 0
    %7529 = vmatmul.mubr.bf16.gmra.mrb[0].mxu0 %v5676
    %v7530 = vpop.f32.mrb[0].mxu0
    %v7531 = vadd.f32 %v7242, %v7530
    %v7532 = vpop.f32.mrb[0].mxu0
    %v7533 = vpop.f32.mrb[0].mxu0
    %v7534 = vadd.f32 %v7245, %v7533
    %v7535 = vpop.f32.mrb[0].mxu0
    %7536 = vmatprep.mubr.bf16.mxu0 0
    %7537 = vmatmul.mubr.bf16.gmra.mrb[0].mxu0 %v5677
    %v7538 = vpop.f32.mrb[0].mxu0
    %v7539 = vadd.f32 %v7250, %v7538
    %v7540 = vpop.f32.mrb[0].mxu0
    %v7541 = vpop.f32.mrb[0].mxu0
    %v7542 = vadd.f32 %v7253, %v7541
    %v7543 = vpop.f32.mrb[0].mxu0
    %7544 = vmatprep.mubr.bf16.mxu0 0
    %7545 = vmatmul.mubr.bf16.gmra.mrb[0].mxu0 %v5678
    %v7546 = vpop.f32.mrb[0].mxu0
    %v7547 = vadd.f32 %v7258, %v7546
    %v7548 = vpop.f32.mrb[0].mxu0
    %v7549 = vpop.f32.mrb[0].mxu0
    %v7550 = vadd.f32 %v7261, %v7549
    %v7551 = vpop.f32.mrb[0].mxu0
    %7552 = vmatprep.mubr.bf16.mxu0 0
    %7553 = vmatmul.mubr.bf16.gmra.mrb[0].mxu0 %v5679
    %v7554 = vpop.f32.mrb[0].mxu0
    %v7555 = vadd.f32 %v7266, %v7554
    %v7556 = vpop.f32.mrb[0].mxu0
    %v7557 = vpop.f32.mrb[0].mxu0
    %v7558 = vadd.f32 %v7269, %v7557
    %v7559 = vpop.f32.mrb[0].mxu0
    %7560 = vmatprep.mubr.bf16.mxu0 0
    %7561 = vmatmul.mubr.bf16.gmra.mrb[0].mxu0 %v5680
    %v7562 = vpop.f32.mrb[0].mxu0
    %v7563 = vadd.f32 %v7274, %v7562
    %v7564 = vpop.f32.mrb[0].mxu0
    %v7565 = vpop.f32.mrb[0].mxu0
    %v7566 = vadd.f32 %v7277, %v7565
    %v7567 = vpop.f32.mrb[0].mxu0
    %7568 = vmatprep.mubr.bf16.mxu0 0
    %7569 = vmatmul.mubr.bf16.gmra.mrb[0].mxu0 %v5681
    %v7570 = vpop.f32.mrb[0].mxu0
    %v7571 = vadd.f32 %v7282, %v7570
    %v7572 = vpop.f32.mrb[0].mxu0
    %v7573 = vpop.f32.mrb[0].mxu0
    %v7574 = vadd.f32 %v7285, %v7573
    %v7575 = vpop.f32.mrb[0].mxu0
    %7576 = vmatprep.mubr.bf16.mxu0 0
    %7577 = vmatmul.mubr.bf16.gmra.mrb[0].mxu0 %v5682
    %v7578 = vpop.f32.mrb[0].mxu0
    %v7579 = vadd.f32 %v7290, %v7578
    %v7580 = vpop.f32.mrb[0].mxu0
    %v7581 = vpop.f32.mrb[0].mxu0
    %v7582 = vadd.f32 %v7293, %v7581
    %v7583 = vpop.f32.mrb[0].mxu0
    %7584 = vmatprep.mubr.bf16.mxu0 0
    %7585 = vmatmul.mubr.bf16.gmra.mrb[0].mxu0 %v5683
    %v7586 = vpop.f32.mrb[0].mxu0
    %v7587 = vadd.f32 %v7298, %v7586
    %v7588 = vpop.f32.mrb[0].mxu0
    %v7589 = vpop.f32.mrb[0].mxu0
    %v7590 = vadd.f32 %v7301, %v7589
    %v7591 = vpop.f32.mrb[0].mxu0
    %7592 = vmatprep.mubr.bf16.mxu0 0
    %7593 = vmatmul.mubr.bf16.gmra.mrb[0].mxu0 %v5684
    %v7594 = vpop.f32.mrb[0].mxu0
    %v7595 = vadd.f32 %v7306, %v7594
    %v7596 = vpop.f32.mrb[0].mxu0
    %v7597 = vpop.f32.mrb[0].mxu0
    %v7598 = vadd.f32 %v7309, %v7597
    %v7599 = vpop.f32.mrb[0].mxu0
    %7600 = vmatprep.mubr.bf16.mxu0 0
    %7601 = vmatmul.mubr.bf16.gmra.mrb[0].mxu0 %v5685
    %v7602 = vpop.f32.mrb[0].mxu0
    %v7603 = vadd.f32 %v7314, %v7602
    %v7604 = vpop.f32.mrb[0].mxu0
    %v7605 = vpop.f32.mrb[0].mxu0
    %v7606 = vadd.f32 %v7317, %v7605
    %v7607 = vpop.f32.mrb[0].mxu0
    %7608 = vmatprep.mubr.bf16.mxu0 0
    %7609 = vmatmul.mubr.bf16.gmra.mrb[0].mxu0 %v5686
    %v7610 = vpop.f32.mrb[0].mxu0
    %v7611 = vadd.f32 %v7322, %v7610
    %v7612 = vpop.f32.mrb[0].mxu0
    %v7613 = vpop.f32.mrb[0].mxu0
    %v7614 = vadd.f32 %v7325, %v7613
    %v7615 = vpop.f32.mrb[0].mxu0
    %7616 = vmatprep.mubr.bf16.mxu0 0
    %7617 = vmatmul.mubr.bf16.gmra.mrb[0].mxu0 %v5687
    %v7618 = vpop.f32.mrb[0].mxu0
    %v7619 = vadd.f32 %v7330, %v7618
    %v7620 = vpop.f32.mrb[0].mxu0
    %v7621 = vpop.f32.mrb[0].mxu0
    %v7622 = vadd.f32 %v7333, %v7621
    %v7623 = vpop.f32.mrb[0].mxu0
    %7624 = vmatprep.mubr.bf16.mxu0 0
    %7625 = vmatmul.mubr.bf16.gmra.mrb[0].mxu0 %v5688
    %v7626 = vpop.f32.mrb[0].mxu0
    %v7627 = vadd.f32 %v7338, %v7626
    %v7628 = vpop.f32.mrb[0].mxu0
    %v7629 = vpop.f32.mrb[0].mxu0
    %v7630 = vadd.f32 %v7341, %v7629
    %v7631 = vpop.f32.mrb[0].mxu0
    %7632 = vmatprep.mubr.bf16.mxu0 0
    %7633 = vmatmul.mubr.bf16.gmra.mrb[0].mxu0 %v5689
    %v7634 = vpop.f32.mrb[0].mxu0
    %v7635 = vadd.f32 %v7346, %v7634
    %v7636 = vpop.f32.mrb[0].mxu0
    %v7637 = vpop.f32.mrb[0].mxu0
    %v7638 = vadd.f32 %v7349, %v7637
    %v7639 = vpop.f32.mrb[0].mxu0
    %7640 = vmatprep.mubr.bf16.mxu0 0
    %7641 = vmatmul.mubr.bf16.gmra.mrb[0].mxu0 %v5690
    %v7642 = vpop.f32.mrb[0].mxu0
    %v7643 = vadd.f32 %v7354, %v7642
    %v7644 = vpop.f32.mrb[0].mxu0
    %v7645 = vpop.f32.mrb[0].mxu0
    %v7646 = vadd.f32 %v7357, %v7645
    %v7647 = vpop.f32.mrb[0].mxu0
    %7648 = vmatprep.mubr.bf16.mxu0 0
    %7649 = vmatmul.mubr.bf16.gmra.mrb[0].mxu0 %v5691
    %v7650 = vpop.f32.mrb[0].mxu0
    %v7651 = vadd.f32 %v7362, %v7650
    %v7652 = vpop.f32.mrb[0].mxu0
    %v7653 = vpop.f32.mrb[0].mxu0
    %v7654 = vadd.f32 %v7365, %v7653
    %v7655 = vpop.f32.mrb[0].mxu0
    %7656 = vmatprep.mubr.bf16.mxu0 0
    %7657 = vmatmul.mubr.bf16.gmra.mrb[0].mxu0 %v5692
    %v7658 = vpop.f32.mrb[0].mxu0
    %v7659 = vadd.f32 %v7370, %v7658
    %v7660 = vpop.f32.mrb[0].mxu0
    %v7661 = vpop.f32.mrb[0].mxu0
    %v7662 = vadd.f32 %v7373, %v7661
    %v7663 = vpop.f32.mrb[0].mxu0
    %7664 = vmatprep.mubr.bf16.mxu0 0
    %7665 = vmatmul.mubr.bf16.gmra.mrb[0].mxu0 %v5693
    %v7666 = vpop.f32.mrb[0].mxu0
    %v7667 = vadd.f32 %v7378, %v7666
    %v7668 = vpop.f32.mrb[0].mxu0
    %v7669 = vpop.f32.mrb[0].mxu0
    %v7670 = vadd.f32 %v7381, %v7669
    %v7671 = vpop.f32.mrb[0].mxu0
    %7672 = vmatprep.mubr.bf16.mxu0 0
    %7673 = vmatmul.mubr.bf16.gmra.mrb[0].mxu0 %v5694
    %v7674 = vpop.f32.mrb[0].mxu0
    %v7675 = vadd.f32 %v7386, %v7674
    %v7676 = vpop.f32.mrb[0].mxu0
    %v7677 = vpop.f32.mrb[0].mxu0
    %v7678 = vadd.f32 %v7389, %v7677
    %v7679 = vpop.f32.mrb[0].mxu0
    %7680 = vmatprep.mubr.bf16.mxu0 0
    %7681 = vmatmul.mubr.bf16.gmra.mrb[0].mxu0 %v5695
    %v7682 = vpop.f32.mrb[0].mxu0
    %v7683 = vadd.f32 %v7394, %v7682
    %v7684 = vpop.f32.mrb[0].mxu0
    %v7685 = vpop.f32.mrb[0].mxu0
    %v7686 = vadd.f32 %v7397, %v7685
    %v7687 = vpop.f32.mrb[0].mxu0
    %7688 = vmatprep.mubr.bf16.mxu0 0
    %7689 = vmatmul.mubr.bf16.gmra.mrb[0].mxu0 %v5696
    %v7690 = vpop.f32.mrb[0].mxu0
    %v7691 = vadd.f32 %v7402, %v7690
    %v7692 = vpop.f32.mrb[0].mxu0
    %v7693 = vpop.f32.mrb[0].mxu0
    %v7694 = vadd.f32 %v7405, %v7693
    %v7695 = vpop.f32.mrb[0].mxu0
    %7696 = vmatprep.mubr.bf16.mxu0 0
    %7697 = vmatmul.mubr.bf16.gmra.mrb[0].mxu0 %v5697
    %v7698 = vpop.f32.mrb[0].mxu0
    %v7699 = vadd.f32 %v7410, %v7698
    %v7700 = vpop.f32.mrb[0].mxu0
    %v7701 = vpop.f32.mrb[0].mxu0
    %v7702 = vadd.f32 %v7413, %v7701
    %v7703 = vpop.f32.mrb[0].mxu0
    %7704 = vmatprep.mubr.bf16.mxu0 0
    %7705 = vmatmul.mubr.bf16.gmra.mrb[0].mxu0 %v5698
    %v7706 = vpop.f32.mrb[0].mxu0
    %v7707 = vadd.f32 %v7418, %v7706
    %v7708 = vpop.f32.mrb[0].mxu0
    %v7709 = vpop.f32.mrb[0].mxu0
    %v7710 = vadd.f32 %v7421, %v7709
    %v7711 = vpop.f32.mrb[0].mxu0
    %7712 = vmatprep.mubr.bf16.mxu0 0
    %7713 = vmatmul.mubr.bf16.gmra.mrb[0].mxu0 %v5699
    %v7714 = vpop.f32.mrb[0].mxu0
    %v7715 = vadd.f32 %v7426, %v7714
    %v7716 = vpop.f32.mrb[0].mxu0
    %v7717 = vpop.f32.mrb[0].mxu0
    %v7718 = vadd.f32 %v7429, %v7717
    %v7719 = vpop.f32.mrb[0].mxu0
    %7720 = vdwg.mxu0
    %v7721 = vadd.f32 %v7467, %v7470
    %v7722 = vadd.f32 %v7721, %v7475
    %v7723 = vadd.f32 %v7722, %v7478
    %v7724 = vadd.f32 %v7723, %v7483
    %v7725 = vadd.f32 %v7724, %v7486
    %v7726 = vadd.f32 %v7725, %v7491
    %v7727 = vadd.f32 %v7726, %v7494
    %v7728 = vadd.f32 %v7727, %v7499
    %v7729 = vadd.f32 %v7728, %v7502
    %v7730 = vadd.f32 %v7729, %v7507
    %v7731 = vadd.f32 %v7730, %v7510
    %v7732 = vadd.f32 %v7731, %v7515
    %v7733 = vadd.f32 %v7732, %v7518
    %v7734 = vadd.f32 %v7733, %v7523
    %v7735 = vadd.f32 %v7734, %v7526
    %v7736 = vadd.f32 %v7735, %v7531
    %v7737 = vadd.f32 %v7736, %v7534
    %v7738 = vadd.f32 %v7737, %v7539
    %v7739 = vadd.f32 %v7738, %v7542
    %v7740 = vadd.f32 %v7739, %v7547
    %v7741 = vadd.f32 %v7740, %v7550
    %v7742 = vadd.f32 %v7741, %v7555
    %v7743 = vadd.f32 %v7742, %v7558
    %v7744 = vadd.f32 %v7743, %v7563
    %v7745 = vadd.f32 %v7744, %v7566
    %v7746 = vadd.f32 %v7745, %v7571
    %v7747 = vadd.f32 %v7746, %v7574
    %v7748 = vadd.f32 %v7747, %v7579
    %v7749 = vadd.f32 %v7748, %v7582
    %v7750 = vadd.f32 %v7749, %v7587
    %v7751 = vadd.f32 %v7750, %v7590
    %v7752 = vadd.f32 %v7751, %v7595
    %v7753 = vadd.f32 %v7752, %v7598
    %v7754 = vadd.f32 %v7753, %v7603
    %v7755 = vadd.f32 %v7754, %v7606
    %v7756 = vadd.f32 %v7755, %v7611
    %v7757 = vadd.f32 %v7756, %v7614
    %v7758 = vadd.f32 %v7757, %v7619
    %v7759 = vadd.f32 %v7758, %v7622
    %v7760 = vadd.f32 %v7759, %v7627
    %v7761 = vadd.f32 %v7760, %v7630
    %v7762 = vadd.f32 %v7761, %v7635
    %v7763 = vadd.f32 %v7762, %v7638
    %v7764 = vadd.f32 %v7763, %v7643
    %v7765 = vadd.f32 %v7764, %v7646
    %v7766 = vadd.f32 %v7765, %v7651
    %v7767 = vadd.f32 %v7766, %v7654
    %v7768 = vadd.f32 %v7767, %v7659
    %v7769 = vadd.f32 %v7768, %v7662
    %v7770 = vadd.f32 %v7769, %v7667
    %v7771 = vadd.f32 %v7770, %v7670
    %v7772 = vadd.f32 %v7771, %v7675
    %v7773 = vadd.f32 %v7772, %v7678
    %v7774 = vadd.f32 %v7773, %v7683
    %v7775 = vadd.f32 %v7774, %v7686
    %v7776 = vadd.f32 %v7775, %v7691
    %v7777 = vadd.f32 %v7776, %v7694
    %v7778 = vadd.f32 %v7777, %v7699
    %v7779 = vadd.f32 %v7778, %v7702
    %v7780 = vadd.f32 %v7779, %v7707
    %v7781 = vadd.f32 %v7780, %v7710
    %v7782 = vadd.f32 %v7781, %v7715
    %v7783 = vadd.f32 %v7782, %v7718
    %v7784 = vrot.slane %v7783, 4
    %v7785 = vadd.f32 %v7783, %v7784
    %v7786 = vrot.slane %v7785, 2
    %v7787 = vadd.f32 %v7785, %v7786
    %v7788 = vrot.slane %v7787, 1
    %v7789 = vadd.f32 %v7787, %v7788
    %v7790 = vmul.f32 %v7789, 0.001953125
    %v7791 = vsub.f32 %v7467, %v7790
    %v7792 = vsub.f32 %v7470, %v7790
    %v7793 = vsub.f32 %v7475, %v7790
    %v7794 = vsub.f32 %v7478, %v7790
    %v7795 = vsub.f32 %v7483, %v7790
    %v7796 = vsub.f32 %v7486, %v7790
    %v7797 = vsub.f32 %v7491, %v7790
    %v7798 = vsub.f32 %v7494, %v7790
    %v7799 = vsub.f32 %v7499, %v7790
    %v7800 = vsub.f32 %v7502, %v7790
    %v7801 = vsub.f32 %v7507, %v7790
    %v7802 = vsub.f32 %v7510, %v7790
    %v7803 = vsub.f32 %v7515, %v7790
    %v7804 = vsub.f32 %v7518, %v7790
    %v7805 = vsub.f32 %v7523, %v7790
    %v7806 = vsub.f32 %v7526, %v7790
    %v7807 = vsub.f32 %v7531, %v7790
    %v7808 = vsub.f32 %v7534, %v7790
    %v7809 = vsub.f32 %v7539, %v7790
    %v7810 = vsub.f32 %v7542, %v7790
    %v7811 = vsub.f32 %v7547, %v7790
    %v7812 = vsub.f32 %v7550, %v7790
    %v7813 = vsub.f32 %v7555, %v7790
    %v7814 = vsub.f32 %v7558, %v7790
    %v7815 = vsub.f32 %v7563, %v7790
    %v7816 = vsub.f32 %v7566, %v7790
    %v7817 = vsub.f32 %v7571, %v7790
    %v7818 = vsub.f32 %v7574, %v7790
    %v7819 = vsub.f32 %v7579, %v7790
    %v7820 = vsub.f32 %v7582, %v7790
    %v7821 = vsub.f32 %v7587, %v7790
    %v7822 = vsub.f32 %v7590, %v7790
    %v7823 = vsub.f32 %v7595, %v7790
    %v7824 = vsub.f32 %v7598, %v7790
    %v7825 = vsub.f32 %v7603, %v7790
    %v7826 = vsub.f32 %v7606, %v7790
    %v7827 = vsub.f32 %v7611, %v7790
    %v7828 = vsub.f32 %v7614, %v7790
    %v7829 = vsub.f32 %v7619, %v7790
    %v7830 = vsub.f32 %v7622, %v7790
    %v7831 = vsub.f32 %v7627, %v7790
    %v7832 = vsub.f32 %v7630, %v7790
    %v7833 = vsub.f32 %v7635, %v7790
    %v7834 = vsub.f32 %v7638, %v7790
    %v7835 = vsub.f32 %v7643, %v7790
    %v7836 = vsub.f32 %v7646, %v7790
    %v7837 = vsub.f32 %v7651, %v7790
    %v7838 = vsub.f32 %v7654, %v7790
    %v7839 = vsub.f32 %v7659, %v7790
    %v7840 = vsub.f32 %v7662, %v7790
    %v7841 = vsub.f32 %v7667, %v7790
    %v7842 = vsub.f32 %v7670, %v7790
    %v7843 = vsub.f32 %v7675, %v7790
    %v7844 = vsub.f32 %v7678, %v7790
    %v7845 = vsub.f32 %v7683, %v7790
    %v7846 = vsub.f32 %v7686, %v7790
    %v7847 = vsub.f32 %v7691, %v7790
    %v7848 = vsub.f32 %v7694, %v7790
    %v7849 = vsub.f32 %v7699, %v7790
    %v7850 = vsub.f32 %v7702, %v7790
    %v7851 = vsub.f32 %v7707, %v7790
    %v7852 = vsub.f32 %v7710, %v7790
    %v7853 = vsub.f32 %v7715, %v7790
    %v7854 = vsub.f32 %v7718, %v7790
    %v7855 = vmul.f32 %v7791, %v7791
    %v7856 = vmul.f32 %v7792, %v7792
    %v7857 = vmul.f32 %v7793, %v7793
    %v7858 = vmul.f32 %v7794, %v7794
    %v7859 = vmul.f32 %v7795, %v7795
    %v7860 = vmul.f32 %v7796, %v7796
    %v7861 = vmul.f32 %v7797, %v7797
    %v7862 = vmul.f32 %v7798, %v7798
    %v7863 = vmul.f32 %v7799, %v7799
    %v7864 = vmul.f32 %v7800, %v7800
    %v7865 = vmul.f32 %v7801, %v7801
    %v7866 = vmul.f32 %v7802, %v7802
    %v7867 = vmul.f32 %v7803, %v7803
    %v7868 = vmul.f32 %v7804, %v7804
    %v7869 = vmul.f32 %v7805, %v7805
    %v7870 = vmul.f32 %v7806, %v7806
    %v7871 = vmul.f32 %v7807, %v7807
    %v7872 = vmul.f32 %v7808, %v7808
    %v7873 = vmul.f32 %v7809, %v7809
    %v7874 = vmul.f32 %v7810, %v7810
    %v7875 = vmul.f32 %v7811, %v7811
    %v7876 = vmul.f32 %v7812, %v7812
    %v7877 = vmul.f32 %v7813, %v7813
    %v7878 = vmul.f32 %v7814, %v7814
    %v7879 = vmul.f32 %v7815, %v7815
    %v7880 = vmul.f32 %v7816, %v7816
    %v7881 = vmul.f32 %v7817, %v7817
    %v7882 = vmul.f32 %v7818, %v7818
    %v7883 = vmul.f32 %v7819, %v7819
    %v7884 = vmul.f32 %v7820, %v7820
    %v7885 = vmul.f32 %v7821, %v7821
    %v7886 = vmul.f32 %v7822, %v7822
    %v7887 = vmul.f32 %v7823, %v7823
    %v7888 = vmul.f32 %v7824, %v7824
    %v7889 = vmul.f32 %v7825, %v7825
    %v7890 = vmul.f32 %v7826, %v7826
    %v7891 = vmul.f32 %v7827, %v7827
    %v7892 = vmul.f32 %v7828, %v7828
    %v7893 = vmul.f32 %v7829, %v7829
    %v7894 = vmul.f32 %v7830, %v7830
    %v7895 = vmul.f32 %v7831, %v7831
    %v7896 = vmul.f32 %v7832, %v7832
    %v7897 = vmul.f32 %v7833, %v7833
    %v7898 = vmul.f32 %v7834, %v7834
    %v7899 = vmul.f32 %v7835, %v7835
    %v7900 = vmul.f32 %v7836, %v7836
    %v7901 = vmul.f32 %v7837, %v7837
    %v7902 = vmul.f32 %v7838, %v7838
    %v7903 = vmul.f32 %v7839, %v7839
    %v7904 = vmul.f32 %v7840, %v7840
    %v7905 = vmul.f32 %v7841, %v7841
    %v7906 = vmul.f32 %v7842, %v7842
    %v7907 = vmul.f32 %v7843, %v7843
    %v7908 = vmul.f32 %v7844, %v7844
    %v7909 = vmul.f32 %v7845, %v7845
    %v7910 = vmul.f32 %v7846, %v7846
    %v7911 = vmul.f32 %v7847, %v7847
    %v7912 = vmul.f32 %v7848, %v7848
    %v7913 = vmul.f32 %v7849, %v7849
    %v7914 = vmul.f32 %v7850, %v7850
    %v7915 = vmul.f32 %v7851, %v7851
    %v7916 = vmul.f32 %v7852, %v7852
    %v7917 = vmul.f32 %v7853, %v7853
    %v7918 = vmul.f32 %v7854, %v7854
    %v7919 = vadd.f32 %v7855, %v7856
    %v7920 = vadd.f32 %v7919, %v7857
    %v7921 = vadd.f32 %v7920, %v7858
    %v7922 = vadd.f32 %v7921, %v7859
    %v7923 = vadd.f32 %v7922, %v7860
    %v7924 = vadd.f32 %v7923, %v7861
    %v7925 = vadd.f32 %v7924, %v7862
    %v7926 = vadd.f32 %v7925, %v7863
    %v7927 = vadd.f32 %v7926, %v7864
    %v7928 = vadd.f32 %v7927, %v7865
    %v7929 = vadd.f32 %v7928, %v7866
    %v7930 = vadd.f32 %v7929, %v7867
    %v7931 = vadd.f32 %v7930, %v7868
    %v7932 = vadd.f32 %v7931, %v7869
    %v7933 = vadd.f32 %v7932, %v7870
    %v7934 = vadd.f32 %v7933, %v7871
    %v7935 = vadd.f32 %v7934, %v7872
    %v7936 = vadd.f32 %v7935, %v7873
    %v7937 = vadd.f32 %v7936, %v7874
    %v7938 = vadd.f32 %v7937, %v7875
    %v7939 = vadd.f32 %v7938, %v7876
    %v7940 = vadd.f32 %v7939, %v7877
    %v7941 = vadd.f32 %v7940, %v7878
    %v7942 = vadd.f32 %v7941, %v7879
    %v7943 = vadd.f32 %v7942, %v7880
    %v7944 = vadd.f32 %v7943, %v7881
    %v7945 = vadd.f32 %v7944, %v7882
    %v7946 = vadd.f32 %v7945, %v7883
    %v7947 = vadd.f32 %v7946, %v7884
    %v7948 = vadd.f32 %v7947, %v7885
    %v7949 = vadd.f32 %v7948, %v7886
    %v7950 = vadd.f32 %v7949, %v7887
    %v7951 = vadd.f32 %v7950, %v7888
    %v7952 = vadd.f32 %v7951, %v7889
    %v7953 = vadd.f32 %v7952, %v7890
    %v7954 = vadd.f32 %v7953, %v7891
    %v7955 = vadd.f32 %v7954, %v7892
    %v7956 = vadd.f32 %v7955, %v7893
    %v7957 = vadd.f32 %v7956, %v7894
    %v7958 = vadd.f32 %v7957, %v7895
    %v7959 = vadd.f32 %v7958, %v7896
    %v7960 = vadd.f32 %v7959, %v7897
    %v7961 = vadd.f32 %v7960, %v7898
    %v7962 = vadd.f32 %v7961, %v7899
    %v7963 = vadd.f32 %v7962, %v7900
    %v7964 = vadd.f32 %v7963, %v7901
    %v7965 = vadd.f32 %v7964, %v7902
    %v7966 = vadd.f32 %v7965, %v7903
    %v7967 = vadd.f32 %v7966, %v7904
    %v7968 = vadd.f32 %v7967, %v7905
    %v7969 = vadd.f32 %v7968, %v7906
    %v7970 = vadd.f32 %v7969, %v7907
    %v7971 = vadd.f32 %v7970, %v7908
    %v7972 = vadd.f32 %v7971, %v7909
    %v7973 = vadd.f32 %v7972, %v7910
    %v7974 = vadd.f32 %v7973, %v7911
    %v7975 = vadd.f32 %v7974, %v7912
    %v7976 = vadd.f32 %v7975, %v7913
    %v7977 = vadd.f32 %v7976, %v7914
    %v7978 = vadd.f32 %v7977, %v7915
    %v7979 = vadd.f32 %v7978, %v7916
    %v7980 = vadd.f32 %v7979, %v7917
    %v7981 = vadd.f32 %v7980, %v7918
    %v7982 = vrot.slane %v7981, 4
    %v7983 = vadd.f32 %v7981, %v7982
    %v7984 = vrot.slane %v7983, 2
    %v7985 = vadd.f32 %v7983, %v7984
    %v7986 = vrot.slane %v7985, 1
    %v7987 = vadd.f32 %v7985, %v7986
    %v7988 = vmul.f32 %v7987, 0.001953125
    %v7989 = vld [vmem:[%s5] sm:$0x1]
    %v7990 = vadd.f32 %v7988, 1e-05
    %v7991 = vrsqrt.pop %v7990
    %v7992 = vmul.f32 %v7989, %v7991
    %v7993 = vld [vmem:[%s6] sm:$0x1]
    %v7994 = vmul.f32 %v7790, %v7992
    %v7995 = vsub.f32 %v7993, %v7994
    %v7997 = vlaneseq
    %v7998 = vshrl.u32 %v7997, 7
    %v7999 = vsub.s32 0, %v7998
    %v8000 = vrot.slane %v7992, %v7999
    %v8002 = vmul.f32 %v7467, %v8000
    %v8003 = vmul.f32 %v7470, %v8000
    %v8004 = vmul.f32 %v7475, %v8000
    %v8005 = vmul.f32 %v7478, %v8000
    %v8006 = vmul.f32 %v7483, %v8000
    %v8007 = vmul.f32 %v7486, %v8000
    %v8008 = vmul.f32 %v7491, %v8000
    %v8009 = vmul.f32 %v7494, %v8000
    %v8010 = vmul.f32 %v7499, %v8000
    %v8011 = vmul.f32 %v7502, %v8000
    %v8012 = vmul.f32 %v7507, %v8000
    %v8013 = vmul.f32 %v7510, %v8000
    %v8014 = vmul.f32 %v7515, %v8000
    %v8015 = vmul.f32 %v7518, %v8000
    %v8016 = vmul.f32 %v7523, %v8000
    %v8017 = vmul.f32 %v7526, %v8000
    %v8018 = vmul.f32 %v7531, %v8000
    %v8019 = vmul.f32 %v7534, %v8000
    %v8020 = vmul.f32 %v7539, %v8000
    %v8021 = vmul.f32 %v7542, %v8000
    %v8022 = vmul.f32 %v7547, %v8000
    %v8023 = vmul.f32 %v7550, %v8000
    %v8024 = vmul.f32 %v7555, %v8000
    %v8025 = vmul.f32 %v7558, %v8000
    %v8026 = vmul.f32 %v7563, %v8000
    %v8027 = vmul.f32 %v7566, %v8000
    %v8028 = vmul.f32 %v7571, %v8000
    %v8029 = vmul.f32 %v7574, %v8000
    %v8030 = vmul.f32 %v7579, %v8000
    %v8031 = vmul.f32 %v7582, %v8000
    %v8032 = vmul.f32 %v7587, %v8000
    %v8033 = vmul.f32 %v7590, %v8000
    %v8034 = vmul.f32 %v7595, %v8000
    %v8035 = vmul.f32 %v7598, %v8000
    %v8036 = vmul.f32 %v7603, %v8000
    %v8037 = vmul.f32 %v7606, %v8000
    %v8038 = vmul.f32 %v7611, %v8000
    %v8039 = vmul.f32 %v7614, %v8000
    %v8040 = vmul.f32 %v7619, %v8000
    %v8041 = vmul.f32 %v7622, %v8000
    %v8042 = vmul.f32 %v7627, %v8000
    %v8043 = vmul.f32 %v7630, %v8000
    %v8044 = vmul.f32 %v7635, %v8000
    %v8045 = vmul.f32 %v7638, %v8000
    %v8046 = vmul.f32 %v7643, %v8000
    %v8047 = vmul.f32 %v7646, %v8000
    %v8048 = vmul.f32 %v7651, %v8000
    %v8049 = vmul.f32 %v7654, %v8000
    %v8050 = vmul.f32 %v7659, %v8000
    %v8051 = vmul.f32 %v7662, %v8000
    %v8052 = vmul.f32 %v7667, %v8000
    %v8053 = vmul.f32 %v7670, %v8000
    %v8054 = vmul.f32 %v7675, %v8000
    %v8055 = vmul.f32 %v7678, %v8000
    %v8056 = vmul.f32 %v7683, %v8000
    %v8057 = vmul.f32 %v7686, %v8000
    %v8058 = vmul.f32 %v7691, %v8000
    %v8059 = vmul.f32 %v7694, %v8000
    %v8060 = vmul.f32 %v7699, %v8000
    %v8061 = vmul.f32 %v7702, %v8000
    %v8062 = vmul.f32 %v7707, %v8000
    %v8063 = vmul.f32 %v7710, %v8000
    %v8064 = vmul.f32 %v7715, %v8000
    %v8065 = vmul.f32 %v7718, %v8000
    %v8067 = vlaneseq
    %v8068 = vshrl.u32 %v8067, 7
    %v8069 = vsub.s32 0, %v8068
    %v8070 = vrot.slane %v7995, %v8069
    %v8072 = vadd.f32 %v8002, %v8070
    %v8073 = vadd.f32 %v8003, %v8070
    %v8074 = vadd.f32 %v8004, %v8070
    %v8075 = vadd.f32 %v8005, %v8070
    %v8076 = vadd.f32 %v8006, %v8070
    %v8077 = vadd.f32 %v8007, %v8070
    %v8078 = vadd.f32 %v8008, %v8070
    %v8079 = vadd.f32 %v8009, %v8070
    %v8080 = vadd.f32 %v8010, %v8070
    %v8081 = vadd.f32 %v8011, %v8070
    %v8082 = vadd.f32 %v8012, %v8070
    %v8083 = vadd.f32 %v8013, %v8070
    %v8084 = vadd.f32 %v8014, %v8070
    %v8085 = vadd.f32 %v8015, %v8070
    %v8086 = vadd.f32 %v8016, %v8070
    %v8087 = vadd.f32 %v8017, %v8070
    %v8088 = vadd.f32 %v8018, %v8070
    %v8089 = vadd.f32 %v8019, %v8070
    %v8090 = vadd.f32 %v8020, %v8070
    %v8091 = vadd.f32 %v8021, %v8070
    %v8092 = vadd.f32 %v8022, %v8070
    %v8093 = vadd.f32 %v8023, %v8070
    %v8094 = vadd.f32 %v8024, %v8070
    %v8095 = vadd.f32 %v8025, %v8070
    %v8096 = vadd.f32 %v8026, %v8070
    %v8097 = vadd.f32 %v8027, %v8070
    %v8098 = vadd.f32 %v8028, %v8070
    %v8099 = vadd.f32 %v8029, %v8070
    %v8100 = vadd.f32 %v8030, %v8070
    %v8101 = vadd.f32 %v8031, %v8070
    %v8102 = vadd.f32 %v8032, %v8070
    %v8103 = vadd.f32 %v8033, %v8070
    %v8104 = vadd.f32 %v8034, %v8070
    %v8105 = vadd.f32 %v8035, %v8070
    %v8106 = vadd.f32 %v8036, %v8070
    %v8107 = vadd.f32 %v8037, %v8070
    %v8108 = vadd.f32 %v8038, %v8070
    %v8109 = vadd.f32 %v8039, %v8070
    %v8110 = vadd.f32 %v8040, %v8070
    %v8111 = vadd.f32 %v8041, %v8070
    %v8112 = vadd.f32 %v8042, %v8070
    %v8113 = vadd.f32 %v8043, %v8070
    %v8114 = vadd.f32 %v8044, %v8070
    %v8115 = vadd.f32 %v8045, %v8070
    %v8116 = vadd.f32 %v8046, %v8070
    %v8117 = vadd.f32 %v8047, %v8070
    %v8118 = vadd.f32 %v8048, %v8070
    %v8119 = vadd.f32 %v8049, %v8070
    %v8120 = vadd.f32 %v8050, %v8070
    %v8121 = vadd.f32 %v8051, %v8070
    %v8122 = vadd.f32 %v8052, %v8070
    %v8123 = vadd.f32 %v8053, %v8070
    %v8124 = vadd.f32 %v8054, %v8070
    %v8125 = vadd.f32 %v8055, %v8070
    %v8126 = vadd.f32 %v8056, %v8070
    %v8127 = vadd.f32 %v8057, %v8070
    %v8128 = vadd.f32 %v8058, %v8070
    %v8129 = vadd.f32 %v8059, %v8070
    %v8130 = vadd.f32 %v8060, %v8070
    %v8131 = vadd.f32 %v8061, %v8070
    %v8132 = vadd.f32 %v8062, %v8070
    %v8133 = vadd.f32 %v8063, %v8070
    %v8134 = vadd.f32 %v8064, %v8070
    %v8135 = vadd.f32 %v8065, %v8070
    %v8136 = vadd.f32 %v8072, %v4502
    %v8137 = vadd.f32 %v8073, %v4504
    %v8138 = vadd.f32 %v8074, %v4506
    %v8139 = vadd.f32 %v8075, %v4508
    %v8140 = vadd.f32 %v8076, %v4510
    %v8141 = vadd.f32 %v8077, %v4512
    %v8142 = vadd.f32 %v8078, %v4514
    %v8143 = vadd.f32 %v8079, %v4516
    %v8144 = vadd.f32 %v8080, %v4518
    %v8145 = vadd.f32 %v8081, %v4520
    %v8146 = vadd.f32 %v8082, %v4522
    %v8147 = vadd.f32 %v8083, %v4524
    %v8148 = vadd.f32 %v8084, %v4526
    %v8149 = vadd.f32 %v8085, %v4528
    %v8150 = vadd.f32 %v8086, %v4530
    %v8151 = vadd.f32 %v8087, %v4532
    %v8152 = vadd.f32 %v8088, %v4534
    %v8153 = vadd.f32 %v8089, %v4536
    %v8154 = vadd.f32 %v8090, %v4538
    %v8155 = vadd.f32 %v8091, %v4540
    %v8156 = vadd.f32 %v8092, %v4542
    %v8157 = vadd.f32 %v8093, %v4544
    %v8158 = vadd.f32 %v8094, %v4546
    %v8159 = vadd.f32 %v8095, %v4548
    %v8160 = vadd.f32 %v8096, %v4550
    %v8161 = vadd.f32 %v8097, %v4552
    %v8162 = vadd.f32 %v8098, %v4554
    %v8163 = vadd.f32 %v8099, %v4556
    %v8164 = vadd.f32 %v8100, %v4558
    %v8165 = vadd.f32 %v8101, %v4560
    %v8166 = vadd.f32 %v8102, %v4562
    %v8167 = vadd.f32 %v8103, %v4564
    %v8168 = vadd.f32 %v8104, %v4566
    %v8169 = vadd.f32 %v8105, %v4568
    %v8170 = vadd.f32 %v8106, %v4570
    %v8171 = vadd.f32 %v8107, %v4572
    %v8172 = vadd.f32 %v8108, %v4574
    %v8173 = vadd.f32 %v8109, %v4576
    %v8174 = vadd.f32 %v8110, %v4578
    %v8175 = vadd.f32 %v8111, %v4580
    %v8176 = vadd.f32 %v8112, %v4582
    %v8177 = vadd.f32 %v8113, %v4584
    %v8178 = vadd.f32 %v8114, %v4586
    %v8179 = vadd.f32 %v8115, %v4588
    %v8180 = vadd.f32 %v8116, %v4590
    %v8181 = vadd.f32 %v8117, %v4592
    %v8182 = vadd.f32 %v8118, %v4594
    %v8183 = vadd.f32 %v8119, %v4596
    %v8184 = vadd.f32 %v8120, %v4598
    %v8185 = vadd.f32 %v8121, %v4600
    %v8186 = vadd.f32 %v8122, %v4602
    %v8187 = vadd.f32 %v8123, %v4604
    %v8188 = vadd.f32 %v8124, %v4606
    %v8189 = vadd.f32 %v8125, %v4608
    %v8190 = vadd.f32 %v8126, %v4610
    %v8191 = vadd.f32 %v8127, %v4612
    %v8192 = vadd.f32 %v8128, %v4614
    %v8193 = vadd.f32 %v8129, %v4616
    %v8194 = vadd.f32 %v8130, %v4618
    %v8195 = vadd.f32 %v8131, %v4620
    %v8196 = vadd.f32 %v8132, %v4622
    %v8197 = vadd.f32 %v8133, %v4624
    %v8198 = vadd.f32 %v8134, %v4626
    %v8199 = vadd.f32 %v8135, %v4628
    %v8200 = vmax.f32 %v8136, 0.0
    %v8201 = vmax.f32 %v8137, 0.0
    %v8202 = vmax.f32 %v8138, 0.0
    %v8203 = vmax.f32 %v8139, 0.0
    %v8204 = vmax.f32 %v8140, 0.0
    %v8205 = vmax.f32 %v8141, 0.0
    %v8206 = vmax.f32 %v8142, 0.0
    %v8207 = vmax.f32 %v8143, 0.0
    %v8208 = vmax.f32 %v8144, 0.0
    %v8209 = vmax.f32 %v8145, 0.0
    %v8210 = vmax.f32 %v8146, 0.0
    %v8211 = vmax.f32 %v8147, 0.0
    %v8212 = vmax.f32 %v8148, 0.0
    %v8213 = vmax.f32 %v8149, 0.0
    %v8214 = vmax.f32 %v8150, 0.0
    %v8215 = vmax.f32 %v8151, 0.0
    %v8216 = vmax.f32 %v8152, 0.0
    %v8217 = vmax.f32 %v8153, 0.0
    %v8218 = vmax.f32 %v8154, 0.0
    %v8219 = vmax.f32 %v8155, 0.0
    %v8220 = vmax.f32 %v8156, 0.0
    %v8221 = vmax.f32 %v8157, 0.0
    %v8222 = vmax.f32 %v8158, 0.0
    %v8223 = vmax.f32 %v8159, 0.0
    %v8224 = vmax.f32 %v8160, 0.0
    %v8225 = vmax.f32 %v8161, 0.0
    %v8226 = vmax.f32 %v8162, 0.0
    %v8227 = vmax.f32 %v8163, 0.0
    %v8228 = vmax.f32 %v8164, 0.0
    %v8229 = vmax.f32 %v8165, 0.0
    %v8230 = vmax.f32 %v8166, 0.0
    %v8231 = vmax.f32 %v8167, 0.0
    %v8232 = vmax.f32 %v8168, 0.0
    %v8233 = vmax.f32 %v8169, 0.0
    %v8234 = vmax.f32 %v8170, 0.0
    %v8235 = vmax.f32 %v8171, 0.0
    %v8236 = vmax.f32 %v8172, 0.0
    %v8237 = vmax.f32 %v8173, 0.0
    %v8238 = vmax.f32 %v8174, 0.0
    %v8239 = vmax.f32 %v8175, 0.0
    %v8240 = vmax.f32 %v8176, 0.0
    %v8241 = vmax.f32 %v8177, 0.0
    %v8242 = vmax.f32 %v8178, 0.0
    %v8243 = vmax.f32 %v8179, 0.0
    %v8244 = vmax.f32 %v8180, 0.0
    %v8245 = vmax.f32 %v8181, 0.0
    %v8246 = vmax.f32 %v8182, 0.0
    %v8247 = vmax.f32 %v8183, 0.0
    %v8248 = vmax.f32 %v8184, 0.0
    %v8249 = vmax.f32 %v8185, 0.0
    %v8250 = vmax.f32 %v8186, 0.0
    %v8251 = vmax.f32 %v8187, 0.0
    %v8252 = vmax.f32 %v8188, 0.0
    %v8253 = vmax.f32 %v8189, 0.0
    %v8254 = vmax.f32 %v8190, 0.0
    %v8255 = vmax.f32 %v8191, 0.0
    %v8256 = vmax.f32 %v8192, 0.0
    %v8257 = vmax.f32 %v8193, 0.0
    %v8258 = vmax.f32 %v8194, 0.0
    %v8259 = vmax.f32 %v8195, 0.0
    %v8260 = vmax.f32 %v8196, 0.0
    %v8261 = vmax.f32 %v8197, 0.0
    %v8262 = vmax.f32 %v8198, 0.0
    %v8263 = vmax.f32 %v8199, 0.0
    %8264 = vst [vmem:[#allocation10] sm:$0xff] %v8200
    %8265 = vst [vmem:[#allocation10 + $0x8] sm:$0xff] %v8201
    %8266 = vst [vmem:[#allocation10 + $0x10] sm:$0xff] %v8202
    %8267 = vst [vmem:[#allocation10 + $0x18] sm:$0xff] %v8203
    %8268 = vst [vmem:[#allocation10 + $0x20] sm:$0xff] %v8204
    %8269 = vst [vmem:[#allocation10 + $0x28] sm:$0xff] %v8205
    %8270 = vst [vmem:[#allocation10 + $0x30] sm:$0xff] %v8206
    %8271 = vst [vmem:[#allocation10 + $0x38] sm:$0xff] %v8207
    %8272 = vst [vmem:[#allocation10 + $0x40] sm:$0xff] %v8208
    %8273 = vst [vmem:[#allocation10 + $0x48] sm:$0xff] %v8209
    %8274 = vst [vmem:[#allocation10 + $0x50] sm:$0xff] %v8210
    %8275 = vst [vmem:[#allocation10 + $0x58] sm:$0xff] %v8211
    %8276 = vst [vmem:[#allocation10 + $0x60] sm:$0xff] %v8212
    %8277 = vst [vmem:[#allocation10 + $0x68] sm:$0xff] %v8213
    %8278 = vst [vmem:[#allocation10 + $0x70] sm:$0xff] %v8214
    %8279 = vst [vmem:[#allocation10 + $0x78] sm:$0xff] %v8215
    %8280 = vst [vmem:[#allocation10 + $0x80] sm:$0xff] %v8216
    %8281 = vst [vmem:[#allocation10 + $0x88] sm:$0xff] %v8217
    %8282 = vst [vmem:[#allocation10 + $0x90] sm:$0xff] %v8218
    %8283 = vst [vmem:[#allocation10 + $0x98] sm:$0xff] %v8219
    %8284 = vst [vmem:[#allocation10 + $0xa0] sm:$0xff] %v8220
    %8285 = vst [vmem:[#allocation10 + $0xa8] sm:$0xff] %v8221
    %8286 = vst [vmem:[#allocation10 + $0xb0] sm:$0xff] %v8222
    %8287 = vst [vmem:[#allocation10 + $0xb8] sm:$0xff] %v8223
    %8288 = vst [vmem:[#allocation10 + $0xc0] sm:$0xff] %v8224
    %8289 = vst [vmem:[#allocation10 + $0xc8] sm:$0xff] %v8225
    %8290 = vst [vmem:[#allocation10 + $0xd0] sm:$0xff] %v8226
    %8291 = vst [vmem:[#allocation10 + $0xd8] sm:$0xff] %v8227
    %8292 = vst [vmem:[#allocation10 + $0xe0] sm:$0xff] %v8228
    %8293 = vst [vmem:[#allocation10 + $0xe8] sm:$0xff] %v8229
    %8294 = vst [vmem:[#allocation10 + $0xf0] sm:$0xff] %v8230
    %8295 = vst [vmem:[#allocation10 + $0xf8] sm:$0xff] %v8231
    %8296 = vst [vmem:[#allocation10 + $0x100] sm:$0xff] %v8232
    %8297 = vst [vmem:[#allocation10 + $0x108] sm:$0xff] %v8233
    %8298 = vst [vmem:[#allocation10 + $0x110] sm:$0xff] %v8234
    %8299 = vst [vmem:[#allocation10 + $0x118] sm:$0xff] %v8235
    %8300 = vst [vmem:[#allocation10 + $0x120] sm:$0xff] %v8236
    %8301 = vst [vmem:[#allocation10 + $0x128] sm:$0xff] %v8237
    %8302 = vst [vmem:[#allocation10 + $0x130] sm:$0xff] %v8238
    %8303 = vst [vmem:[#allocation10 + $0x138] sm:$0xff] %v8239
    %8304 = vst [vmem:[#allocation10 + $0x140] sm:$0xff] %v8240
    %8305 = vst [vmem:[#allocation10 + $0x148] sm:$0xff] %v8241
    %8306 = vst [vmem:[#allocation10 + $0x150] sm:$0xff] %v8242
    %8307 = vst [vmem:[#allocation10 + $0x158] sm:$0xff] %v8243
    %8308 = vst [vmem:[#allocation10 + $0x160] sm:$0xff] %v8244
    %8309 = vst [vmem:[#allocation10 + $0x168] sm:$0xff] %v8245
    %8310 = vst [vmem:[#allocation10 + $0x170] sm:$0xff] %v8246
    %8311 = vst [vmem:[#allocation10 + $0x178] sm:$0xff] %v8247
    %8312 = vst [vmem:[#allocation10 + $0x180] sm:$0xff] %v8248
    %8313 = vst [vmem:[#allocation10 + $0x188] sm:$0xff] %v8249
    %8314 = vst [vmem:[#allocation10 + $0x190] sm:$0xff] %v8250
    %8315 = vst [vmem:[#allocation10 + $0x198] sm:$0xff] %v8251
    %8316 = vst [vmem:[#allocation10 + $0x1a0] sm:$0xff] %v8252
    %8317 = vst [vmem:[#allocation10 + $0x1a8] sm:$0xff] %v8253
    %8318 = vst [vmem:[#allocation10 + $0x1b0] sm:$0xff] %v8254
    %8319 = vst [vmem:[#allocation10 + $0x1b8] sm:$0xff] %v8255
    %8320 = vst [vmem:[#allocation10 + $0x1c0] sm:$0xff] %v8256
    %8321 = vst [vmem:[#allocation10 + $0x1c8] sm:$0xff] %v8257
    %8322 = vst [vmem:[#allocation10 + $0x1d0] sm:$0xff] %v8258
    %8323 = vst [vmem:[#allocation10 + $0x1d8] sm:$0xff] %v8259
    %8324 = vst [vmem:[#allocation10 + $0x1e0] sm:$0xff] %v8260
    %8325 = vst [vmem:[#allocation10 + $0x1e8] sm:$0xff] %v8261
    %8326 = vst [vmem:[#allocation10 + $0x1f0] sm:$0xff] %v8262
    %8327 = vst [vmem:[#allocation10 + $0x1f8] sm:$0xff] %v8263
    // Predicated region
    $region42: #{tpu_custom_call.1} parent=1 // pred_check
      _
    $region43: #{tpu_custom_call.1} parent=1 // pred_check_branch
      %8329 = sbr.rel (0) target = $region45
    $region44: #{tpu_custom_call.1} parent=1 // pred_region
      %s8331 = ssub.s32 8192, 8192
      %8332 = vsyncadd [#allocation6], %s8331
      %s8333 = sshll.u32 [#allocation10], 4
      %s8334 = int_to_ptr.vmem [resolvable:$true] %s8333
      %8339 = dma.vmem_to_hbm [thread:$0]  %s8334, 8192, %s7, [#allocation6], 128, 128, 8
    $region45: #{tpu_custom_call.1} parent=1 // pred_fallthru
      _
    // Predicated region
    $region46: #{tpu_custom_call.1} parent=1 // pred_check
      _
    $region47: #{tpu_custom_call.1} parent=1 // pred_check_branch
      %8341 = sbr.rel (0) target = $region49
    $region48: #{tpu_custom_call.1} parent=1 // pred_region
      %8342 = dma.done [#allocation6], 8192
    $region49: #{tpu_custom_call.1} parent=1 // pred_fallthru
      _
    %8343 = vsyncpa [#allocation5], 1
    %8344 = vsyncpa [#allocation8], 1
    %8345 = vsyncpa [#allocation6], 1

</llo_original>
